<compile_context>
chip_gen: v6e
topology: v6e:2x2x1
jax: 0.10.0
libtpu: 0.0.40
codegen_flags: <defaults>
</compile_context>

<pallas_src>
import jax
import jax.numpy as jnp
from jax.experimental import pallas as pl

# ----------------------------- model dims -----------------------------------
B = 2          # batch
S = 8          # source sequence length
T_MAX = 8      # max decode steps
V_IN = 16      # input vocab size
V_TGT = 16     # target vocab size
E = 16         # embedding dim
H = 32         # hidden dim
SOS_ID = 1
EOS_ID = 2

_BF = jnp.bfloat16
_F32 = jnp.float32


def _dot(a, b):
    # bf16 MXU operands, f32 accumulation (casts are no-ops if already bf16).
    return jnp.dot(a.astype(_BF), b.astype(_BF), preferred_element_type=_F32)


def _gru_step(h, gx, whh_b, bhn_b):
    """PyTorch-style GRU step with the r/z hidden biases pre-folded into gx.

    h     : (B, H)  previous hidden state (f32)
    gx    : (B, 3H) x@W_ih + b_ih (+ b_hr, b_hz folded in), gate order r,z,n
    whh_b : (H, 3H) fused hidden->hidden weights (bf16, loaded once)
    bhn_b : (B, H)  pre-broadcast b_hn (stays inside r*(...))
    """
    gh = _dot(h, whh_b)                                       # one MXU push
    rz = jax.nn.sigmoid(gx[:, :2 * H] + gh[:, :2 * H])        # one sigmoid push
    r = rz[:, :H]
    z = rz[:, H:]
    n = jnp.tanh(gx[:, 2 * H:] + r * (gh[:, 2 * H:] + bhn_b))
    return (1.0 - z) * n + z * h


# ------------------------- fused seq2seq kernel ------------------------------
def seq2seq_kernel(
        x_tok_ref,                                            # (S, B) int32
        enc_emb_ref, enc_wih_ref, enc_whh_ref, enc_bih_ref, enc_bhh_ref,
        winit_ref, binit_ref,
        dec_emb_ref,
        wih1_ref, whh1_ref, bih1_ref, bhh1_ref,
        watt_ref,
        wih2_ref, whh2_ref, bih2_ref, bhh2_ref,
        wout_ref, bout_ref,
        preds_ref, attn_ref):                                 # lane-dense outputs
    # ---- weights: load once, cast MXU operands to bf16 once ------------------
    enc_whh_b = enc_whh_ref[...].astype(_BF)
    whh1_b = whh1_ref[...].astype(_BF)
    whh2_b = whh2_ref[...].astype(_BF)
    wih2_b = wih2_ref[...].astype(_BF)
    wout_b = wout_ref[...].astype(_BF)
    winit_b = winit_ref[...].astype(_BF)
    watt_t_b = watt_ref[...].T.astype(_BF)                    # (H,H), transposed once

    # ---- biases: fold b_hr/b_hz into the input side; pre-broadcast the rest --
    def fold_rz(bih, bhh):
        return jnp.concatenate(
            [bih[:, :2 * H] + bhh[:, :2 * H], bih[:, 2 * H:]], axis=-1)

    enc_bias_row = fold_rz(enc_bih_ref[...], enc_bhh_ref[...])        # (1,3H)
    enc_bhn_b = jnp.broadcast_to(enc_bhh_ref[:, 2 * H:], (B, H))
    bhn1_b = jnp.broadcast_to(bhh1_ref[:, 2 * H:], (B, H))
    bhn2_b = jnp.broadcast_to(bhh2_ref[:, 2 * H:], (B, H))
    bias2_b = jnp.broadcast_to(fold_rz(bih2_ref[...], bhh2_ref[...]), (B, 3 * H))
    bout_b = jnp.broadcast_to(bout_ref[...], (B, V_TGT))
    binit_b = jnp.broadcast_to(binit_ref[...], (B, H))

    # ---- encoder: one-hot @ (emb @ W_ih) fused table, time-major gx ----------
    tok_sb = x_tok_ref[...]                                            # (S, B)
    onehot_src = (jax.lax.broadcasted_iota(jnp.int32, (S, B, V_IN), 2)
                  == tok_sb[:, :, None]).astype(_F32).reshape(S * B, V_IN)
    enc_table = _dot(enc_emb_ref[...], enc_wih_ref[...])               # (V_IN,3H)
    gx_all = (_dot(onehot_src, enc_table) + enc_bias_row).reshape(S, B, 3 * H)

    # ---- encoder recurrence (unrolled).  Attention keys and stage-2 input
    #      projections are produced here (MXU slack) so the decode loop never
    #      touches W_att / W_ih2 and ctx is never materialized. ---------------
    h = jnp.zeros((B, H), _F32)
    key_cols, ih2_rows = [], []
    for t in range(S):
        h = _gru_step(h, gx_all[t], enc_whh_b, enc_bhn_b)
        key_cols.append(_dot(h, watt_t_b))        # (B,H)  == keysT[:, :, t]
        ih2_rows.append(_dot(h, wih2_b))          # (B,3H) == states_ih2[:, t, :]
    last_hidden = h
    keysT_b = jnp.stack(key_cols, axis=2).astype(_BF)          # (B, H, S)
    ih2_b = jnp.stack(ih2_rows, axis=1).astype(_BF)            # (B, S, 3H)

    # ---- decoder init state + precomputed one-hot -> gx1 table ---------------
    h_dec = jnp.tanh(_dot(last_hidden, winit_b) + binit_b)             # (B, H)
    gx1_table_b = (_dot(dec_emb_ref[...], wih1_ref[...])
                   + fold_rz(bih1_ref[...], bhh1_ref[...])).astype(_BF)  # (V,3H)

    scale = 1.0 / float(H) ** 0.5
    iota_v = jax.lax.broadcasted_iota(jnp.int32, (B, V_TGT), 1)
    prev = (iota_v == SOS_ID).astype(_F32)                     # SOS one-hot

    # ---- conditional decoder, greedy, fully unrolled (6 MXU pushes / step) ---
    logits_steps, alpha_steps = [], []
    for t in range(T_MAX):
        # stage-1 GRU: embedding + input projection = one table matmul
        gx1 = _dot(prev, gx1_table_b)                                  # push 1
        h1 = _gru_step(h_dec, gx1, whh1_b, bhn1_b)                     # push 2

        # attention against precomputed keys; softmax denom on the EUP
        scores = jnp.einsum('bqh,bhs->bqs', h1[:, None, :].astype(_BF),
                            keysT_b,
                            preferred_element_type=_F32)[:, 0, :] * scale  # push 3
        m = jnp.max(scores, axis=-1, keepdims=True)
        e = jnp.exp(scores - m)
        alpha = e * pl.reciprocal(jnp.sum(e, axis=-1, keepdims=True),
                                  approx=True)                         # (B, S)

        # stage-2 GRU: context folded through W_ih2 (associativity, ctx never built)
        gx2 = jnp.einsum('bqs,bsg->bqg', alpha[:, None, :].astype(_BF),
                         ih2_b,
                         preferred_element_type=_F32)[:, 0, :] + bias2_b   # push 4
        h2 = _gru_step(h1, gx2, whh2_b, bhn2_b)                        # push 5

        logits = _dot(h2, wout_b) + bout_b                             # push 6

        logits_steps.append(logits)
        alpha_steps.append(alpha)

        # greedy argmax -> next-step one-hot (first-max tie-break)
        mx = jnp.max(logits, axis=-1, keepdims=True)
        cand = jnp.where(logits == mx, iota_v, V_TGT)
        idx = jnp.min(cand, axis=-1, keepdims=True)
        prev = (iota_v == idx).astype(_F32)
        h_dec = h2

    # ---- single lane-dense writeback -----------------------------------------
    preds_ref[...] = jnp.concatenate(logits_steps, axis=-1)    # (B, T*V) = (2,128)
    attn_ref[...] = jnp.concatenate(alpha_steps, axis=-1)      # (B, T*S) = (2, 64)


def run_seq2seq(x_tokens, p):
    """x_tokens: (B, S) int32 -> (preds (B,T,V_TGT), attn (B,T,S))."""
    out_shape = (jax.ShapeDtypeStruct((B, T_MAX * V_TGT), jnp.float32),
                 jax.ShapeDtypeStruct((B, T_MAX * S), jnp.float32))
    preds_flat, attn_flat = pl.pallas_call(
        seq2seq_kernel,
        out_shape=out_shape,
        # whole arrays resident in VMEM (default specs, no grid): the entire
        # model (~60 KB weights + activations) fits trivially on v5e/v6e/v7x.
    )(x_tokens.T,                     # time-major tokens (tiny wrapper transpose)
      p["enc_emb"], p["enc_wih"], p["enc_whh"], p["enc_bih"], p["enc_bhh"],
      p["dec_winit"], p["dec_binit"],
      p["dec_emb"],
      p["dec_wih1"], p["dec_whh1"], p["dec_bih1"], p["dec_bhh1"],
      p["dec_watt"],
      p["dec_wih2"], p["dec_whh2"], p["dec_bih2"], p["dec_bhh2"],
      p["dec_wout"], p["dec_bout"])
    return (preds_flat.reshape(B, T_MAX, V_TGT),
            attn_flat.reshape(B, T_MAX, S))


# ------------------------------ parameters -----------------------------------
def init_params(key):
    ks = iter(jax.random.split(key, 32))

    def w(shape, scale=0.1):
        return (scale * jax.random.normal(next(ks), shape)).astype(jnp.float32)

    return {
        # encoder (GRU gates fused along the last dim, order r,z,n)
        "enc_emb": w((V_IN, E)),
        "enc_wih": w((E, 3 * H)),
        "enc_whh": w((H, 3 * H)),
        "enc_bih": w((1, 3 * H)),
        "enc_bhh": w((1, 3 * H)),
        # decoder init-state projection
        "dec_winit": w((H, H)),
        "dec_binit": w((1, H)),
        # decoder
        "dec_emb": w((V_TGT, E)),
        "dec_wih1": w((E, 3 * H)),
        "dec_whh1": w((H, 3 * H)),
        "dec_bih1": w((1, 3 * H)),
        "dec_bhh1": w((1, 3 * H)),
        "dec_watt": w((H, H)),
        "dec_wih2": w((H, 3 * H)),
        "dec_whh2": w((H, 3 * H)),
        "dec_bih2": w((1, 3 * H)),
        "dec_bhh2": w((1, 3 * H)),
        "dec_wout": w((H, V_TGT)),
        "dec_bout": w((1, V_TGT)),
    }


# ------------------------------ forward pass ----------------------------------
@jax.jit
def conditional_seq2seq_forward(params, x_tokens):
    """x_tokens: (B, S) int32 source token ids.

    Returns (preds, lens, attn_weights) like the PyTorch module:
      preds : (B, T_MAX, V_TGT) f32 logits
      lens  : (B,) int32 greedy decode lengths (up to and incl. EOS)
      attn  : (B, T_MAX, S) f32 attention weights
    """
    preds, attn = run_seq2seq(x_tokens, params)

    # lengths: position of first EOS (+1), else T_MAX (same first-max
    # tie-breaking as the in-kernel greedy argmax).
    tokens = jnp.argmax(preds, axis=-1)                        # (B, T)
    is_eos = tokens == EOS_ID
    lens = jnp.where(is_eos.any(axis=1),
                     jnp.argmax(is_eos, axis=1) + 1,
                     T_MAX).astype(jnp.int32)
    return preds, lens, attn


# ------------------------------------ main ------------------------------------
if __name__ == "__main__":
    key = jax.random.PRNGKey(0)
    pkey, xkey = jax.random.split(key)
    params = init_params(pkey)
    x = jax.random.randint(xkey, (B, S), minval=3, maxval=V_IN, dtype=jnp.int32)

    preds, lens, attn = conditional_seq2seq_forward(params, x)
    jax.block_until_ready((preds, lens, attn))

    assert preds.shape == (B, T_MAX, V_TGT)
    assert lens.shape == (B,)
    assert attn.shape == (B, T_MAX, S)
    # attention rows must sum to ~1 (approx EUP reciprocal in the softmax)
    assert jnp.allclose(jnp.sum(attn, axis=-1), 1.0, atol=5e-3)

    print("KERNEL_OK")
</pallas_src>

<mosaic_0001>
module attributes {stable_mosaic.version = 11 : i64} {
  func.func @seq2seq_kernel(%arg0: memref<8x2xi32, #tpu.memory_space<vmem>>, %arg1: memref<16x16xf32, #tpu.memory_space<vmem>>, %arg2: memref<16x96xf32, #tpu.memory_space<vmem>>, %arg3: memref<32x96xf32, #tpu.memory_space<vmem>>, %arg4: memref<1x96xf32, #tpu.memory_space<vmem>>, %arg5: memref<1x96xf32, #tpu.memory_space<vmem>>, %arg6: memref<32x32xf32, #tpu.memory_space<vmem>>, %arg7: memref<1x32xf32, #tpu.memory_space<vmem>>, %arg8: memref<16x16xf32, #tpu.memory_space<vmem>>, %arg9: memref<16x96xf32, #tpu.memory_space<vmem>>, %arg10: memref<32x96xf32, #tpu.memory_space<vmem>>, %arg11: memref<1x96xf32, #tpu.memory_space<vmem>>, %arg12: memref<1x96xf32, #tpu.memory_space<vmem>>, %arg13: memref<32x32xf32, #tpu.memory_space<vmem>>, %arg14: memref<32x96xf32, #tpu.memory_space<vmem>>, %arg15: memref<32x96xf32, #tpu.memory_space<vmem>>, %arg16: memref<1x96xf32, #tpu.memory_space<vmem>>, %arg17: memref<1x96xf32, #tpu.memory_space<vmem>>, %arg18: memref<32x16xf32, #tpu.memory_space<vmem>>, %arg19: memref<1x16xf32, #tpu.memory_space<vmem>>, %arg20: memref<2x128xf32, #tpu.memory_space<vmem>>, %arg21: memref<2x64xf32, #tpu.memory_space<vmem>>) attributes {dimension_semantics = [], scalar_prefetch = 0 : i64, scratch_operands = 0 : i64, tpu.core_type = #tpu.core_type<tc>} {
    %c0 = arith.constant 0 : index
    %c0_0 = arith.constant 0 : index
    %0 = vector.load %arg3[%c0, %c0_0] : memref<32x96xf32, #tpu.memory_space<vmem>>, vector<32x96xf32>
    %1 = arith.truncf %0 : vector<32x96xf32> to vector<32x96xbf16>
    %c0_1 = arith.constant 0 : index
    %c0_2 = arith.constant 0 : index
    %2 = vector.load %arg10[%c0_1, %c0_2] : memref<32x96xf32, #tpu.memory_space<vmem>>, vector<32x96xf32>
    %3 = arith.truncf %2 : vector<32x96xf32> to vector<32x96xbf16>
    %c0_3 = arith.constant 0 : index
    %c0_4 = arith.constant 0 : index
    %4 = vector.load %arg15[%c0_3, %c0_4] : memref<32x96xf32, #tpu.memory_space<vmem>>, vector<32x96xf32>
    %5 = arith.truncf %4 : vector<32x96xf32> to vector<32x96xbf16>
    %c0_5 = arith.constant 0 : index
    %c0_6 = arith.constant 0 : index
    %6 = vector.load %arg14[%c0_5, %c0_6] : memref<32x96xf32, #tpu.memory_space<vmem>>, vector<32x96xf32>
    %7 = arith.truncf %6 : vector<32x96xf32> to vector<32x96xbf16>
    %c0_7 = arith.constant 0 : index
    %c0_8 = arith.constant 0 : index
    %8 = vector.load %arg18[%c0_7, %c0_8] : memref<32x16xf32, #tpu.memory_space<vmem>>, vector<32x16xf32>
    %9 = arith.truncf %8 : vector<32x16xf32> to vector<32x16xbf16>
    %c0_9 = arith.constant 0 : index
    %c0_10 = arith.constant 0 : index
    %10 = vector.load %arg6[%c0_9, %c0_10] : memref<32x32xf32, #tpu.memory_space<vmem>>, vector<32x32xf32>
    %11 = arith.truncf %10 : vector<32x32xf32> to vector<32x32xbf16>
    %c0_11 = arith.constant 0 : index
    %c0_12 = arith.constant 0 : index
    %12 = vector.load %arg13[%c0_11, %c0_12] : memref<32x32xf32, #tpu.memory_space<vmem>>, vector<32x32xf32>
    %13 = tpu.transpose %12, [1, 0] : vector<32x32xf32> -> vector<32x32xf32>
    %14 = arith.truncf %13 : vector<32x32xf32> to vector<32x32xbf16>
    %c0_13 = arith.constant 0 : index
    %c0_14 = arith.constant 0 : index
    %15 = vector.load %arg4[%c0_13, %c0_14] : memref<1x96xf32, #tpu.memory_space<vmem>>, vector<1x96xf32>
    %c0_15 = arith.constant 0 : index
    %c0_16 = arith.constant 0 : index
    %16 = vector.load %arg5[%c0_15, %c0_16] : memref<1x96xf32, #tpu.memory_space<vmem>>, vector<1x96xf32>
    %17 = vector.extract_strided_slice %15 {offsets = [0, 0], sizes = [1, 64], strides = [1, 1]} : vector<1x96xf32> to vector<1x64xf32>
    %18 = vector.extract_strided_slice %16 {offsets = [0, 0], sizes = [1, 64], strides = [1, 1]} : vector<1x96xf32> to vector<1x64xf32>
    %19 = arith.addf %17, %18 : vector<1x64xf32>
    %20 = vector.extract_strided_slice %15 {offsets = [0, 64], sizes = [1, 32], strides = [1, 1]} : vector<1x96xf32> to vector<1x32xf32>
    %21 = tpu.concatenate %19, %20 in 1 : vector<1x64xf32>, vector<1x32xf32> -> vector<1x96xf32>
    %c0_17 = arith.constant 0 : index
    %c64 = arith.constant 64 : index
    %22 = vector.load %arg5[%c0_17, %c64] : memref<1x96xf32, #tpu.memory_space<vmem>>, vector<1x32xf32>
    %23 = vector.shape_cast %22 : vector<1x32xf32> to vector<1x32xf32>
    %24 = vector.broadcast %23 : vector<1x32xf32> to vector<2x32xf32>
    %c0_18 = arith.constant 0 : index
    %c64_19 = arith.constant 64 : index
    %25 = vector.load %arg12[%c0_18, %c64_19] : memref<1x96xf32, #tpu.memory_space<vmem>>, vector<1x32xf32>
    %26 = vector.shape_cast %25 : vector<1x32xf32> to vector<1x32xf32>
    %27 = vector.broadcast %26 : vector<1x32xf32> to vector<2x32xf32>
    %c0_20 = arith.constant 0 : index
    %c64_21 = arith.constant 64 : index
    %28 = vector.load %arg17[%c0_20, %c64_21] : memref<1x96xf32, #tpu.memory_space<vmem>>, vector<1x32xf32>
    %29 = vector.shape_cast %28 : vector<1x32xf32> to vector<1x32xf32>
    %30 = vector.broadcast %29 : vector<1x32xf32> to vector<2x32xf32>
    %c0_22 = arith.constant 0 : index
    %c0_23 = arith.constant 0 : index
    %31 = vector.load %arg16[%c0_22, %c0_23] : memref<1x96xf32, #tpu.memory_space<vmem>>, vector<1x96xf32>
    %c0_24 = arith.constant 0 : index
    %c0_25 = arith.constant 0 : index
    %32 = vector.load %arg17[%c0_24, %c0_25] : memref<1x96xf32, #tpu.memory_space<vmem>>, vector<1x96xf32>
    %33 = vector.extract_strided_slice %31 {offsets = [0, 0], sizes = [1, 64], strides = [1, 1]} : vector<1x96xf32> to vector<1x64xf32>
    %34 = vector.extract_strided_slice %32 {offsets = [0, 0], sizes = [1, 64], strides = [1, 1]} : vector<1x96xf32> to vector<1x64xf32>
    %35 = arith.addf %33, %34 : vector<1x64xf32>
    %36 = vector.extract_strided_slice %31 {offsets = [0, 64], sizes = [1, 32], strides = [1, 1]} : vector<1x96xf32> to vector<1x32xf32>
    %37 = tpu.concatenate %35, %36 in 1 : vector<1x64xf32>, vector<1x32xf32> -> vector<1x96xf32>
    %38 = vector.shape_cast %37 : vector<1x96xf32> to vector<1x96xf32>
    %39 = vector.broadcast %38 : vector<1x96xf32> to vector<2x96xf32>
    %c0_26 = arith.constant 0 : index
    %c0_27 = arith.constant 0 : index
    %40 = vector.load %arg19[%c0_26, %c0_27] : memref<1x16xf32, #tpu.memory_space<vmem>>, vector<1x16xf32>
    %41 = vector.shape_cast %40 : vector<1x16xf32> to vector<1x16xf32>
    %42 = vector.broadcast %41 : vector<1x16xf32> to vector<2x16xf32>
    %c0_28 = arith.constant 0 : index
    %c0_29 = arith.constant 0 : index
    %43 = vector.load %arg7[%c0_28, %c0_29] : memref<1x32xf32, #tpu.memory_space<vmem>>, vector<1x32xf32>
    %44 = vector.shape_cast %43 : vector<1x32xf32> to vector<1x32xf32>
    %45 = vector.broadcast %44 : vector<1x32xf32> to vector<2x32xf32>
    %c0_30 = arith.constant 0 : index
    %c0_31 = arith.constant 0 : index
    %46 = vector.load %arg0[%c0_30, %c0_31] : memref<8x2xi32, #tpu.memory_space<vmem>>, vector<8x2xi32>
    %47 = tpu.iota {dimensions = array<i32: 2>} : vector<8x2x16xi32>
    %48 = vector.shape_cast %46 : vector<8x2xi32> to vector<8x2x1xi32>
    %49 = vector.broadcast %48 : vector<8x2x1xi32> to vector<8x2x16xi32>
    %50 = arith.cmpi eq, %47, %49 : vector<8x2x16xi32>
    %51 = arith.extui %50 : vector<8x2x16xi1> to vector<8x2x16xi32>
    %52 = arith.sitofp %51 : vector<8x2x16xi32> to vector<8x2x16xf32>
    %53 = vector.shape_cast %52 : vector<8x2x16xf32> to vector<16x16xf32>
    %c0_32 = arith.constant 0 : index
    %c0_33 = arith.constant 0 : index
    %54 = vector.load %arg1[%c0_32, %c0_33] : memref<16x16xf32, #tpu.memory_space<vmem>>, vector<16x16xf32>
    %c0_34 = arith.constant 0 : index
    %c0_35 = arith.constant 0 : index
    %55 = vector.load %arg2[%c0_34, %c0_35] : memref<16x96xf32, #tpu.memory_space<vmem>>, vector<16x96xf32>
    %56 = arith.truncf %54 : vector<16x16xf32> to vector<16x16xbf16>
    %57 = arith.truncf %55 : vector<16x96xf32> to vector<16x96xbf16>
    %cst = arith.constant dense<0.000000e+00> : vector<16x96xf32>
    %58 = tpu.matmul %56, %57, %cst {dimension_numbers = #tpu.dot_dimension_numbers<[1], [0], [0], [1], [0, 0, 1, 1], [], []>} : vector<16x16xbf16>, vector<16x96xbf16>, vector<16x96xf32> -> vector<16x96xf32>
    %59 = arith.truncf %53 : vector<16x16xf32> to vector<16x16xbf16>
    %60 = arith.truncf %58 : vector<16x96xf32> to vector<16x96xbf16>
    %cst_36 = arith.constant dense<0.000000e+00> : vector<16x96xf32>
    %61 = tpu.matmul %59, %60, %cst_36 {dimension_numbers = #tpu.dot_dimension_numbers<[1], [0], [0], [1], [0, 0, 1, 1], [], []>} : vector<16x16xbf16>, vector<16x96xbf16>, vector<16x96xf32> -> vector<16x96xf32>
    %62 = vector.broadcast %21 : vector<1x96xf32> to vector<16x96xf32>
    %63 = arith.addf %61, %62 : vector<16x96xf32>
    %64 = vector.shape_cast %63 : vector<16x96xf32> to vector<8x2x96xf32>
    %cst_37 = arith.constant 0.000000e+00 : f32
    %65 = vector.broadcast %cst_37 : f32 to vector<2x32xf32>
    %66 = vector.extract_strided_slice %64 {offsets = [0, 0, 0], sizes = [1, 2, 96], strides = [1, 1, 1]} : vector<8x2x96xf32> to vector<1x2x96xf32>
    %67 = vector.shape_cast %66 : vector<1x2x96xf32> to vector<2x96xf32>
    %68 = arith.truncf %65 : vector<2x32xf32> to vector<2x32xbf16>
    %cst_38 = arith.constant dense<0.000000e+00> : vector<2x96xf32>
    %69 = tpu.matmul %68, %1, %cst_38 {dimension_numbers = #tpu.dot_dimension_numbers<[1], [0], [0], [1], [0, 0, 1, 1], [], []>} : vector<2x32xbf16>, vector<32x96xbf16>, vector<2x96xf32> -> vector<2x96xf32>
    %70 = vector.extract_strided_slice %67 {offsets = [0, 0], sizes = [2, 64], strides = [1, 1]} : vector<2x96xf32> to vector<2x64xf32>
    %71 = vector.extract_strided_slice %69 {offsets = [0, 0], sizes = [2, 64], strides = [1, 1]} : vector<2x96xf32> to vector<2x64xf32>
    %72 = arith.addf %70, %71 : vector<2x64xf32>
    %73 = arith.negf %72 : vector<2x64xf32>
    %74 = math.exp %73 : vector<2x64xf32>
    %cst_39 = arith.constant 1.000000e+00 : f32
    %75 = vector.broadcast %cst_39 : f32 to vector<2x64xf32>
    %76 = arith.addf %75, %74 : vector<2x64xf32>
    %77 = arith.divf %75, %76 : vector<2x64xf32>
    %78 = vector.extract_strided_slice %77 {offsets = [0, 0], sizes = [2, 32], strides = [1, 1]} : vector<2x64xf32> to vector<2x32xf32>
    %79 = vector.extract_strided_slice %77 {offsets = [0, 32], sizes = [2, 32], strides = [1, 1]} : vector<2x64xf32> to vector<2x32xf32>
    %80 = vector.extract_strided_slice %67 {offsets = [0, 64], sizes = [2, 32], strides = [1, 1]} : vector<2x96xf32> to vector<2x32xf32>
    %81 = vector.extract_strided_slice %69 {offsets = [0, 64], sizes = [2, 32], strides = [1, 1]} : vector<2x96xf32> to vector<2x32xf32>
    %82 = arith.addf %81, %24 : vector<2x32xf32>
    %83 = arith.mulf %78, %82 : vector<2x32xf32>
    %84 = arith.addf %80, %83 : vector<2x32xf32>
    %85 = math.tanh %84 : vector<2x32xf32>
    %cst_40 = arith.constant 1.000000e+00 : f32
    %86 = vector.broadcast %cst_40 : f32 to vector<2x32xf32>
    %87 = arith.subf %86, %79 : vector<2x32xf32>
    %88 = arith.mulf %87, %85 : vector<2x32xf32>
    %89 = arith.mulf %79, %65 : vector<2x32xf32>
    %90 = arith.addf %88, %89 : vector<2x32xf32>
    %91 = arith.truncf %90 : vector<2x32xf32> to vector<2x32xbf16>
    %cst_41 = arith.constant dense<0.000000e+00> : vector<2x32xf32>
    %92 = tpu.matmul %91, %14, %cst_41 {dimension_numbers = #tpu.dot_dimension_numbers<[1], [0], [0], [1], [0, 0, 1, 1], [], []>} : vector<2x32xbf16>, vector<32x32xbf16>, vector<2x32xf32> -> vector<2x32xf32>
    %93 = arith.truncf %90 : vector<2x32xf32> to vector<2x32xbf16>
    %cst_42 = arith.constant dense<0.000000e+00> : vector<2x96xf32>
    %94 = tpu.matmul %93, %7, %cst_42 {dimension_numbers = #tpu.dot_dimension_numbers<[1], [0], [0], [1], [0, 0, 1, 1], [], []>} : vector<2x32xbf16>, vector<32x96xbf16>, vector<2x96xf32> -> vector<2x96xf32>
    %95 = vector.extract_strided_slice %64 {offsets = [1, 0, 0], sizes = [1, 2, 96], strides = [1, 1, 1]} : vector<8x2x96xf32> to vector<1x2x96xf32>
    %96 = vector.shape_cast %95 : vector<1x2x96xf32> to vector<2x96xf32>
    %97 = arith.truncf %90 : vector<2x32xf32> to vector<2x32xbf16>
    %cst_43 = arith.constant dense<0.000000e+00> : vector<2x96xf32>
    %98 = tpu.matmul %97, %1, %cst_43 {dimension_numbers = #tpu.dot_dimension_numbers<[1], [0], [0], [1], [0, 0, 1, 1], [], []>} : vector<2x32xbf16>, vector<32x96xbf16>, vector<2x96xf32> -> vector<2x96xf32>
    %99 = vector.extract_strided_slice %96 {offsets = [0, 0], sizes = [2, 64], strides = [1, 1]} : vector<2x96xf32> to vector<2x64xf32>
    %100 = vector.extract_strided_slice %98 {offsets = [0, 0], sizes = [2, 64], strides = [1, 1]} : vector<2x96xf32> to vector<2x64xf32>
    %101 = arith.addf %99, %100 : vector<2x64xf32>
    %102 = arith.negf %101 : vector<2x64xf32>
    %103 = math.exp %102 : vector<2x64xf32>
    %cst_44 = arith.constant 1.000000e+00 : f32
    %104 = vector.broadcast %cst_44 : f32 to vector<2x64xf32>
    %105 = arith.addf %104, %103 : vector<2x64xf32>
    %106 = arith.divf %104, %105 : vector<2x64xf32>
    %107 = vector.extract_strided_slice %106 {offsets = [0, 0], sizes = [2, 32], strides = [1, 1]} : vector<2x64xf32> to vector<2x32xf32>
    %108 = vector.extract_strided_slice %106 {offsets = [0, 32], sizes = [2, 32], strides = [1, 1]} : vector<2x64xf32> to vector<2x32xf32>
    %109 = vector.extract_strided_slice %96 {offsets = [0, 64], sizes = [2, 32], strides = [1, 1]} : vector<2x96xf32> to vector<2x32xf32>
    %110 = vector.extract_strided_slice %98 {offsets = [0, 64], sizes = [2, 32], strides = [1, 1]} : vector<2x96xf32> to vector<2x32xf32>
    %111 = arith.addf %110, %24 : vector<2x32xf32>
    %112 = arith.mulf %107, %111 : vector<2x32xf32>
    %113 = arith.addf %109, %112 : vector<2x32xf32>
    %114 = math.tanh %113 : vector<2x32xf32>
    %cst_45 = arith.constant 1.000000e+00 : f32
    %115 = vector.broadcast %cst_45 : f32 to vector<2x32xf32>
    %116 = arith.subf %115, %108 : vector<2x32xf32>
    %117 = arith.mulf %116, %114 : vector<2x32xf32>
    %118 = arith.mulf %108, %90 : vector<2x32xf32>
    %119 = arith.addf %117, %118 : vector<2x32xf32>
    %120 = arith.truncf %119 : vector<2x32xf32> to vector<2x32xbf16>
    %cst_46 = arith.constant dense<0.000000e+00> : vector<2x32xf32>
    %121 = tpu.matmul %120, %14, %cst_46 {dimension_numbers = #tpu.dot_dimension_numbers<[1], [0], [0], [1], [0, 0, 1, 1], [], []>} : vector<2x32xbf16>, vector<32x32xbf16>, vector<2x32xf32> -> vector<2x32xf32>
    %122 = arith.truncf %119 : vector<2x32xf32> to vector<2x32xbf16>
    %cst_47 = arith.constant dense<0.000000e+00> : vector<2x96xf32>
    %123 = tpu.matmul %122, %7, %cst_47 {dimension_numbers = #tpu.dot_dimension_numbers<[1], [0], [0], [1], [0, 0, 1, 1], [], []>} : vector<2x32xbf16>, vector<32x96xbf16>, vector<2x96xf32> -> vector<2x96xf32>
    %124 = vector.extract_strided_slice %64 {offsets = [2, 0, 0], sizes = [1, 2, 96], strides = [1, 1, 1]} : vector<8x2x96xf32> to vector<1x2x96xf32>
    %125 = vector.shape_cast %124 : vector<1x2x96xf32> to vector<2x96xf32>
    %126 = arith.truncf %119 : vector<2x32xf32> to vector<2x32xbf16>
    %cst_48 = arith.constant dense<0.000000e+00> : vector<2x96xf32>
    %127 = tpu.matmul %126, %1, %cst_48 {dimension_numbers = #tpu.dot_dimension_numbers<[1], [0], [0], [1], [0, 0, 1, 1], [], []>} : vector<2x32xbf16>, vector<32x96xbf16>, vector<2x96xf32> -> vector<2x96xf32>
    %128 = vector.extract_strided_slice %125 {offsets = [0, 0], sizes = [2, 64], strides = [1, 1]} : vector<2x96xf32> to vector<2x64xf32>
    %129 = vector.extract_strided_slice %127 {offsets = [0, 0], sizes = [2, 64], strides = [1, 1]} : vector<2x96xf32> to vector<2x64xf32>
    %130 = arith.addf %128, %129 : vector<2x64xf32>
    %131 = arith.negf %130 : vector<2x64xf32>
    %132 = math.exp %131 : vector<2x64xf32>
    %cst_49 = arith.constant 1.000000e+00 : f32
    %133 = vector.broadcast %cst_49 : f32 to vector<2x64xf32>
    %134 = arith.addf %133, %132 : vector<2x64xf32>
    %135 = arith.divf %133, %134 : vector<2x64xf32>
    %136 = vector.extract_strided_slice %135 {offsets = [0, 0], sizes = [2, 32], strides = [1, 1]} : vector<2x64xf32> to vector<2x32xf32>
    %137 = vector.extract_strided_slice %135 {offsets = [0, 32], sizes = [2, 32], strides = [1, 1]} : vector<2x64xf32> to vector<2x32xf32>
    %138 = vector.extract_strided_slice %125 {offsets = [0, 64], sizes = [2, 32], strides = [1, 1]} : vector<2x96xf32> to vector<2x32xf32>
    %139 = vector.extract_strided_slice %127 {offsets = [0, 64], sizes = [2, 32], strides = [1, 1]} : vector<2x96xf32> to vector<2x32xf32>
    %140 = arith.addf %139, %24 : vector<2x32xf32>
    %141 = arith.mulf %136, %140 : vector<2x32xf32>
    %142 = arith.addf %138, %141 : vector<2x32xf32>
    %143 = math.tanh %142 : vector<2x32xf32>
    %cst_50 = arith.constant 1.000000e+00 : f32
    %144 = vector.broadcast %cst_50 : f32 to vector<2x32xf32>
    %145 = arith.subf %144, %137 : vector<2x32xf32>
    %146 = arith.mulf %145, %143 : vector<2x32xf32>
    %147 = arith.mulf %137, %119 : vector<2x32xf32>
    %148 = arith.addf %146, %147 : vector<2x32xf32>
    %149 = arith.truncf %148 : vector<2x32xf32> to vector<2x32xbf16>
    %cst_51 = arith.constant dense<0.000000e+00> : vector<2x32xf32>
    %150 = tpu.matmul %149, %14, %cst_51 {dimension_numbers = #tpu.dot_dimension_numbers<[1], [0], [0], [1], [0, 0, 1, 1], [], []>} : vector<2x32xbf16>, vector<32x32xbf16>, vector<2x32xf32> -> vector<2x32xf32>
    %151 = arith.truncf %148 : vector<2x32xf32> to vector<2x32xbf16>
    %cst_52 = arith.constant dense<0.000000e+00> : vector<2x96xf32>
    %152 = tpu.matmul %151, %7, %cst_52 {dimension_numbers = #tpu.dot_dimension_numbers<[1], [0], [0], [1], [0, 0, 1, 1], [], []>} : vector<2x32xbf16>, vector<32x96xbf16>, vector<2x96xf32> -> vector<2x96xf32>
    %153 = vector.extract_strided_slice %64 {offsets = [3, 0, 0], sizes = [1, 2, 96], strides = [1, 1, 1]} : vector<8x2x96xf32> to vector<1x2x96xf32>
    %154 = vector.shape_cast %153 : vector<1x2x96xf32> to vector<2x96xf32>
    %155 = arith.truncf %148 : vector<2x32xf32> to vector<2x32xbf16>
    %cst_53 = arith.constant dense<0.000000e+00> : vector<2x96xf32>
    %156 = tpu.matmul %155, %1, %cst_53 {dimension_numbers = #tpu.dot_dimension_numbers<[1], [0], [0], [1], [0, 0, 1, 1], [], []>} : vector<2x32xbf16>, vector<32x96xbf16>, vector<2x96xf32> -> vector<2x96xf32>
    %157 = vector.extract_strided_slice %154 {offsets = [0, 0], sizes = [2, 64], strides = [1, 1]} : vector<2x96xf32> to vector<2x64xf32>
    %158 = vector.extract_strided_slice %156 {offsets = [0, 0], sizes = [2, 64], strides = [1, 1]} : vector<2x96xf32> to vector<2x64xf32>
    %159 = arith.addf %157, %158 : vector<2x64xf32>
    %160 = arith.negf %159 : vector<2x64xf32>
    %161 = math.exp %160 : vector<2x64xf32>
    %cst_54 = arith.constant 1.000000e+00 : f32
    %162 = vector.broadcast %cst_54 : f32 to vector<2x64xf32>
    %163 = arith.addf %162, %161 : vector<2x64xf32>
    %164 = arith.divf %162, %163 : vector<2x64xf32>
    %165 = vector.extract_strided_slice %164 {offsets = [0, 0], sizes = [2, 32], strides = [1, 1]} : vector<2x64xf32> to vector<2x32xf32>
    %166 = vector.extract_strided_slice %164 {offsets = [0, 32], sizes = [2, 32], strides = [1, 1]} : vector<2x64xf32> to vector<2x32xf32>
    %167 = vector.extract_strided_slice %154 {offsets = [0, 64], sizes = [2, 32], strides = [1, 1]} : vector<2x96xf32> to vector<2x32xf32>
    %168 = vector.extract_strided_slice %156 {offsets = [0, 64], sizes = [2, 32], strides = [1, 1]} : vector<2x96xf32> to vector<2x32xf32>
    %169 = arith.addf %168, %24 : vector<2x32xf32>
    %170 = arith.mulf %165, %169 : vector<2x32xf32>
    %171 = arith.addf %167, %170 : vector<2x32xf32>
    %172 = math.tanh %171 : vector<2x32xf32>
    %cst_55 = arith.constant 1.000000e+00 : f32
    %173 = vector.broadcast %cst_55 : f32 to vector<2x32xf32>
    %174 = arith.subf %173, %166 : vector<2x32xf32>
    %175 = arith.mulf %174, %172 : vector<2x32xf32>
    %176 = arith.mulf %166, %148 : vector<2x32xf32>
    %177 = arith.addf %175, %176 : vector<2x32xf32>
    %178 = arith.truncf %177 : vector<2x32xf32> to vector<2x32xbf16>
    %cst_56 = arith.constant dense<0.000000e+00> : vector<2x32xf32>
    %179 = tpu.matmul %178, %14, %cst_56 {dimension_numbers = #tpu.dot_dimension_numbers<[1], [0], [0], [1], [0, 0, 1, 1], [], []>} : vector<2x32xbf16>, vector<32x32xbf16>, vector<2x32xf32> -> vector<2x32xf32>
    %180 = arith.truncf %177 : vector<2x32xf32> to vector<2x32xbf16>
    %cst_57 = arith.constant dense<0.000000e+00> : vector<2x96xf32>
    %181 = tpu.matmul %180, %7, %cst_57 {dimension_numbers = #tpu.dot_dimension_numbers<[1], [0], [0], [1], [0, 0, 1, 1], [], []>} : vector<2x32xbf16>, vector<32x96xbf16>, vector<2x96xf32> -> vector<2x96xf32>
    %182 = vector.extract_strided_slice %64 {offsets = [4, 0, 0], sizes = [1, 2, 96], strides = [1, 1, 1]} : vector<8x2x96xf32> to vector<1x2x96xf32>
    %183 = vector.shape_cast %182 : vector<1x2x96xf32> to vector<2x96xf32>
    %184 = arith.truncf %177 : vector<2x32xf32> to vector<2x32xbf16>
    %cst_58 = arith.constant dense<0.000000e+00> : vector<2x96xf32>
    %185 = tpu.matmul %184, %1, %cst_58 {dimension_numbers = #tpu.dot_dimension_numbers<[1], [0], [0], [1], [0, 0, 1, 1], [], []>} : vector<2x32xbf16>, vector<32x96xbf16>, vector<2x96xf32> -> vector<2x96xf32>
    %186 = vector.extract_strided_slice %183 {offsets = [0, 0], sizes = [2, 64], strides = [1, 1]} : vector<2x96xf32> to vector<2x64xf32>
    %187 = vector.extract_strided_slice %185 {offsets = [0, 0], sizes = [2, 64], strides = [1, 1]} : vector<2x96xf32> to vector<2x64xf32>
    %188 = arith.addf %186, %187 : vector<2x64xf32>
    %189 = arith.negf %188 : vector<2x64xf32>
    %190 = math.exp %189 : vector<2x64xf32>
    %cst_59 = arith.constant 1.000000e+00 : f32
    %191 = vector.broadcast %cst_59 : f32 to vector<2x64xf32>
    %192 = arith.addf %191, %190 : vector<2x64xf32>
    %193 = arith.divf %191, %192 : vector<2x64xf32>
    %194 = vector.extract_strided_slice %193 {offsets = [0, 0], sizes = [2, 32], strides = [1, 1]} : vector<2x64xf32> to vector<2x32xf32>
    %195 = vector.extract_strided_slice %193 {offsets = [0, 32], sizes = [2, 32], strides = [1, 1]} : vector<2x64xf32> to vector<2x32xf32>
    %196 = vector.extract_strided_slice %183 {offsets = [0, 64], sizes = [2, 32], strides = [1, 1]} : vector<2x96xf32> to vector<2x32xf32>
    %197 = vector.extract_strided_slice %185 {offsets = [0, 64], sizes = [2, 32], strides = [1, 1]} : vector<2x96xf32> to vector<2x32xf32>
    %198 = arith.addf %197, %24 : vector<2x32xf32>
    %199 = arith.mulf %194, %198 : vector<2x32xf32>
    %200 = arith.addf %196, %199 : vector<2x32xf32>
    %201 = math.tanh %200 : vector<2x32xf32>
    %cst_60 = arith.constant 1.000000e+00 : f32
    %202 = vector.broadcast %cst_60 : f32 to vector<2x32xf32>
    %203 = arith.subf %202, %195 : vector<2x32xf32>
    %204 = arith.mulf %203, %201 : vector<2x32xf32>
    %205 = arith.mulf %195, %177 : vector<2x32xf32>
    %206 = arith.addf %204, %205 : vector<2x32xf32>
    %207 = arith.truncf %206 : vector<2x32xf32> to vector<2x32xbf16>
    %cst_61 = arith.constant dense<0.000000e+00> : vector<2x32xf32>
    %208 = tpu.matmul %207, %14, %cst_61 {dimension_numbers = #tpu.dot_dimension_numbers<[1], [0], [0], [1], [0, 0, 1, 1], [], []>} : vector<2x32xbf16>, vector<32x32xbf16>, vector<2x32xf32> -> vector<2x32xf32>
    %209 = arith.truncf %206 : vector<2x32xf32> to vector<2x32xbf16>
    %cst_62 = arith.constant dense<0.000000e+00> : vector<2x96xf32>
    %210 = tpu.matmul %209, %7, %cst_62 {dimension_numbers = #tpu.dot_dimension_numbers<[1], [0], [0], [1], [0, 0, 1, 1], [], []>} : vector<2x32xbf16>, vector<32x96xbf16>, vector<2x96xf32> -> vector<2x96xf32>
    %211 = vector.extract_strided_slice %64 {offsets = [5, 0, 0], sizes = [1, 2, 96], strides = [1, 1, 1]} : vector<8x2x96xf32> to vector<1x2x96xf32>
    %212 = vector.shape_cast %211 : vector<1x2x96xf32> to vector<2x96xf32>
    %213 = arith.truncf %206 : vector<2x32xf32> to vector<2x32xbf16>
    %cst_63 = arith.constant dense<0.000000e+00> : vector<2x96xf32>
    %214 = tpu.matmul %213, %1, %cst_63 {dimension_numbers = #tpu.dot_dimension_numbers<[1], [0], [0], [1], [0, 0, 1, 1], [], []>} : vector<2x32xbf16>, vector<32x96xbf16>, vector<2x96xf32> -> vector<2x96xf32>
    %215 = vector.extract_strided_slice %212 {offsets = [0, 0], sizes = [2, 64], strides = [1, 1]} : vector<2x96xf32> to vector<2x64xf32>
    %216 = vector.extract_strided_slice %214 {offsets = [0, 0], sizes = [2, 64], strides = [1, 1]} : vector<2x96xf32> to vector<2x64xf32>
    %217 = arith.addf %215, %216 : vector<2x64xf32>
    %218 = arith.negf %217 : vector<2x64xf32>
    %219 = math.exp %218 : vector<2x64xf32>
    %cst_64 = arith.constant 1.000000e+00 : f32
    %220 = vector.broadcast %cst_64 : f32 to vector<2x64xf32>
    %221 = arith.addf %220, %219 : vector<2x64xf32>
    %222 = arith.divf %220, %221 : vector<2x64xf32>
    %223 = vector.extract_strided_slice %222 {offsets = [0, 0], sizes = [2, 32], strides = [1, 1]} : vector<2x64xf32> to vector<2x32xf32>
    %224 = vector.extract_strided_slice %222 {offsets = [0, 32], sizes = [2, 32], strides = [1, 1]} : vector<2x64xf32> to vector<2x32xf32>
    %225 = vector.extract_strided_slice %212 {offsets = [0, 64], sizes = [2, 32], strides = [1, 1]} : vector<2x96xf32> to vector<2x32xf32>
    %226 = vector.extract_strided_slice %214 {offsets = [0, 64], sizes = [2, 32], strides = [1, 1]} : vector<2x96xf32> to vector<2x32xf32>
    %227 = arith.addf %226, %24 : vector<2x32xf32>
    %228 = arith.mulf %223, %227 : vector<2x32xf32>
    %229 = arith.addf %225, %228 : vector<2x32xf32>
    %230 = math.tanh %229 : vector<2x32xf32>
    %cst_65 = arith.constant 1.000000e+00 : f32
    %231 = vector.broadcast %cst_65 : f32 to vector<2x32xf32>
    %232 = arith.subf %231, %224 : vector<2x32xf32>
    %233 = arith.mulf %232, %230 : vector<2x32xf32>
    %234 = arith.mulf %224, %206 : vector<2x32xf32>
    %235 = arith.addf %233, %234 : vector<2x32xf32>
    %236 = arith.truncf %235 : vector<2x32xf32> to vector<2x32xbf16>
    %cst_66 = arith.constant dense<0.000000e+00> : vector<2x32xf32>
    %237 = tpu.matmul %236, %14, %cst_66 {dimension_numbers = #tpu.dot_dimension_numbers<[1], [0], [0], [1], [0, 0, 1, 1], [], []>} : vector<2x32xbf16>, vector<32x32xbf16>, vector<2x32xf32> -> vector<2x32xf32>
    %238 = arith.truncf %235 : vector<2x32xf32> to vector<2x32xbf16>
    %cst_67 = arith.constant dense<0.000000e+00> : vector<2x96xf32>
    %239 = tpu.matmul %238, %7, %cst_67 {dimension_numbers = #tpu.dot_dimension_numbers<[1], [0], [0], [1], [0, 0, 1, 1], [], []>} : vector<2x32xbf16>, vector<32x96xbf16>, vector<2x96xf32> -> vector<2x96xf32>
    %240 = vector.extract_strided_slice %64 {offsets = [6, 0, 0], sizes = [1, 2, 96], strides = [1, 1, 1]} : vector<8x2x96xf32> to vector<1x2x96xf32>
    %241 = vector.shape_cast %240 : vector<1x2x96xf32> to vector<2x96xf32>
    %242 = arith.truncf %235 : vector<2x32xf32> to vector<2x32xbf16>
    %cst_68 = arith.constant dense<0.000000e+00> : vector<2x96xf32>
    %243 = tpu.matmul %242, %1, %cst_68 {dimension_numbers = #tpu.dot_dimension_numbers<[1], [0], [0], [1], [0, 0, 1, 1], [], []>} : vector<2x32xbf16>, vector<32x96xbf16>, vector<2x96xf32> -> vector<2x96xf32>
    %244 = vector.extract_strided_slice %241 {offsets = [0, 0], sizes = [2, 64], strides = [1, 1]} : vector<2x96xf32> to vector<2x64xf32>
    %245 = vector.extract_strided_slice %243 {offsets = [0, 0], sizes = [2, 64], strides = [1, 1]} : vector<2x96xf32> to vector<2x64xf32>
    %246 = arith.addf %244, %245 : vector<2x64xf32>
    %247 = arith.negf %246 : vector<2x64xf32>
    %248 = math.exp %247 : vector<2x64xf32>
    %cst_69 = arith.constant 1.000000e+00 : f32
    %249 = vector.broadcast %cst_69 : f32 to vector<2x64xf32>
    %250 = arith.addf %249, %248 : vector<2x64xf32>
    %251 = arith.divf %249, %250 : vector<2x64xf32>
    %252 = vector.extract_strided_slice %251 {offsets = [0, 0], sizes = [2, 32], strides = [1, 1]} : vector<2x64xf32> to vector<2x32xf32>
    %253 = vector.extract_strided_slice %251 {offsets = [0, 32], sizes = [2, 32], strides = [1, 1]} : vector<2x64xf32> to vector<2x32xf32>
    %254 = vector.extract_strided_slice %241 {offsets = [0, 64], sizes = [2, 32], strides = [1, 1]} : vector<2x96xf32> to vector<2x32xf32>
    %255 = vector.extract_strided_slice %243 {offsets = [0, 64], sizes = [2, 32], strides = [1, 1]} : vector<2x96xf32> to vector<2x32xf32>
    %256 = arith.addf %255, %24 : vector<2x32xf32>
    %257 = arith.mulf %252, %256 : vector<2x32xf32>
    %258 = arith.addf %254, %257 : vector<2x32xf32>
    %259 = math.tanh %258 : vector<2x32xf32>
    %cst_70 = arith.constant 1.000000e+00 : f32
    %260 = vector.broadcast %cst_70 : f32 to vector<2x32xf32>
    %261 = arith.subf %260, %253 : vector<2x32xf32>
    %262 = arith.mulf %261, %259 : vector<2x32xf32>
    %263 = arith.mulf %253, %235 : vector<2x32xf32>
    %264 = arith.addf %262, %263 : vector<2x32xf32>
    %265 = arith.truncf %264 : vector<2x32xf32> to vector<2x32xbf16>
    %cst_71 = arith.constant dense<0.000000e+00> : vector<2x32xf32>
    %266 = tpu.matmul %265, %14, %cst_71 {dimension_numbers = #tpu.dot_dimension_numbers<[1], [0], [0], [1], [0, 0, 1, 1], [], []>} : vector<2x32xbf16>, vector<32x32xbf16>, vector<2x32xf32> -> vector<2x32xf32>
    %267 = arith.truncf %264 : vector<2x32xf32> to vector<2x32xbf16>
    %cst_72 = arith.constant dense<0.000000e+00> : vector<2x96xf32>
    %268 = tpu.matmul %267, %7, %cst_72 {dimension_numbers = #tpu.dot_dimension_numbers<[1], [0], [0], [1], [0, 0, 1, 1], [], []>} : vector<2x32xbf16>, vector<32x96xbf16>, vector<2x96xf32> -> vector<2x96xf32>
    %269 = vector.extract_strided_slice %64 {offsets = [7, 0, 0], sizes = [1, 2, 96], strides = [1, 1, 1]} : vector<8x2x96xf32> to vector<1x2x96xf32>
    %270 = vector.shape_cast %269 : vector<1x2x96xf32> to vector<2x96xf32>
    %271 = arith.truncf %264 : vector<2x32xf32> to vector<2x32xbf16>
    %cst_73 = arith.constant dense<0.000000e+00> : vector<2x96xf32>
    %272 = tpu.matmul %271, %1, %cst_73 {dimension_numbers = #tpu.dot_dimension_numbers<[1], [0], [0], [1], [0, 0, 1, 1], [], []>} : vector<2x32xbf16>, vector<32x96xbf16>, vector<2x96xf32> -> vector<2x96xf32>
    %273 = vector.extract_strided_slice %270 {offsets = [0, 0], sizes = [2, 64], strides = [1, 1]} : vector<2x96xf32> to vector<2x64xf32>
    %274 = vector.extract_strided_slice %272 {offsets = [0, 0], sizes = [2, 64], strides = [1, 1]} : vector<2x96xf32> to vector<2x64xf32>
    %275 = arith.addf %273, %274 : vector<2x64xf32>
    %276 = arith.negf %275 : vector<2x64xf32>
    %277 = math.exp %276 : vector<2x64xf32>
    %cst_74 = arith.constant 1.000000e+00 : f32
    %278 = vector.broadcast %cst_74 : f32 to vector<2x64xf32>
    %279 = arith.addf %278, %277 : vector<2x64xf32>
    %280 = arith.divf %278, %279 : vector<2x64xf32>
    %281 = vector.extract_strided_slice %280 {offsets = [0, 0], sizes = [2, 32], strides = [1, 1]} : vector<2x64xf32> to vector<2x32xf32>
    %282 = vector.extract_strided_slice %280 {offsets = [0, 32], sizes = [2, 32], strides = [1, 1]} : vector<2x64xf32> to vector<2x32xf32>
    %283 = vector.extract_strided_slice %270 {offsets = [0, 64], sizes = [2, 32], strides = [1, 1]} : vector<2x96xf32> to vector<2x32xf32>
    %284 = vector.extract_strided_slice %272 {offsets = [0, 64], sizes = [2, 32], strides = [1, 1]} : vector<2x96xf32> to vector<2x32xf32>
    %285 = arith.addf %284, %24 : vector<2x32xf32>
    %286 = arith.mulf %281, %285 : vector<2x32xf32>
    %287 = arith.addf %283, %286 : vector<2x32xf32>
    %288 = math.tanh %287 : vector<2x32xf32>
    %cst_75 = arith.constant 1.000000e+00 : f32
    %289 = vector.broadcast %cst_75 : f32 to vector<2x32xf32>
    %290 = arith.subf %289, %282 : vector<2x32xf32>
    %291 = arith.mulf %290, %288 : vector<2x32xf32>
    %292 = arith.mulf %282, %264 : vector<2x32xf32>
    %293 = arith.addf %291, %292 : vector<2x32xf32>
    %294 = arith.truncf %293 : vector<2x32xf32> to vector<2x32xbf16>
    %cst_76 = arith.constant dense<0.000000e+00> : vector<2x32xf32>
    %295 = tpu.matmul %294, %14, %cst_76 {dimension_numbers = #tpu.dot_dimension_numbers<[1], [0], [0], [1], [0, 0, 1, 1], [], []>} : vector<2x32xbf16>, vector<32x32xbf16>, vector<2x32xf32> -> vector<2x32xf32>
    %296 = arith.truncf %293 : vector<2x32xf32> to vector<2x32xbf16>
    %cst_77 = arith.constant dense<0.000000e+00> : vector<2x96xf32>
    %297 = tpu.matmul %296, %7, %cst_77 {dimension_numbers = #tpu.dot_dimension_numbers<[1], [0], [0], [1], [0, 0, 1, 1], [], []>} : vector<2x32xbf16>, vector<32x96xbf16>, vector<2x96xf32> -> vector<2x96xf32>
    %298 = vector.shape_cast %92 : vector<2x32xf32> to vector<2x32x1xf32>
    %299 = vector.shape_cast %121 : vector<2x32xf32> to vector<2x32x1xf32>
    %300 = vector.shape_cast %150 : vector<2x32xf32> to vector<2x32x1xf32>
    %301 = vector.shape_cast %179 : vector<2x32xf32> to vector<2x32x1xf32>
    %302 = vector.shape_cast %208 : vector<2x32xf32> to vector<2x32x1xf32>
    %303 = vector.shape_cast %237 : vector<2x32xf32> to vector<2x32x1xf32>
    %304 = vector.shape_cast %266 : vector<2x32xf32> to vector<2x32x1xf32>
    %305 = vector.shape_cast %295 : vector<2x32xf32> to vector<2x32x1xf32>
    %306 = tpu.concatenate %298, %299, %300, %301, %302, %303, %304, %305 in 2 : vector<2x32x1xf32>, vector<2x32x1xf32>, vector<2x32x1xf32>, vector<2x32x1xf32>, vector<2x32x1xf32>, vector<2x32x1xf32>, vector<2x32x1xf32>, vector<2x32x1xf32> -> vector<2x32x8xf32>
    %307 = arith.truncf %306 : vector<2x32x8xf32> to vector<2x32x8xbf16>
    %308 = vector.shape_cast %94 : vector<2x96xf32> to vector<2x1x96xf32>
    %309 = vector.shape_cast %123 : vector<2x96xf32> to vector<2x1x96xf32>
    %310 = vector.shape_cast %152 : vector<2x96xf32> to vector<2x1x96xf32>
    %311 = vector.shape_cast %181 : vector<2x96xf32> to vector<2x1x96xf32>
    %312 = vector.shape_cast %210 : vector<2x96xf32> to vector<2x1x96xf32>
    %313 = vector.shape_cast %239 : vector<2x96xf32> to vector<2x1x96xf32>
    %314 = vector.shape_cast %268 : vector<2x96xf32> to vector<2x1x96xf32>
    %315 = vector.shape_cast %297 : vector<2x96xf32> to vector<2x1x96xf32>
    %316 = tpu.concatenate %308, %309, %310, %311, %312, %313, %314, %315 in 1 : vector<2x1x96xf32>, vector<2x1x96xf32>, vector<2x1x96xf32>, vector<2x1x96xf32>, vector<2x1x96xf32>, vector<2x1x96xf32>, vector<2x1x96xf32>, vector<2x1x96xf32> -> vector<2x8x96xf32>
    %317 = arith.truncf %316 : vector<2x8x96xf32> to vector<2x8x96xbf16>
    %318 = arith.truncf %293 : vector<2x32xf32> to vector<2x32xbf16>
    %cst_78 = arith.constant dense<0.000000e+00> : vector<2x32xf32>
    %319 = tpu.matmul %318, %11, %cst_78 {dimension_numbers = #tpu.dot_dimension_numbers<[1], [0], [0], [1], [0, 0, 1, 1], [], []>} : vector<2x32xbf16>, vector<32x32xbf16>, vector<2x32xf32> -> vector<2x32xf32>
    %320 = arith.addf %319, %45 : vector<2x32xf32>
    %321 = math.tanh %320 : vector<2x32xf32>
    %c0_79 = arith.constant 0 : index
    %c0_80 = arith.constant 0 : index
    %322 = vector.load %arg8[%c0_79, %c0_80] : memref<16x16xf32, #tpu.memory_space<vmem>>, vector<16x16xf32>
    %c0_81 = arith.constant 0 : index
    %c0_82 = arith.constant 0 : index
    %323 = vector.load %arg9[%c0_81, %c0_82] : memref<16x96xf32, #tpu.memory_space<vmem>>, vector<16x96xf32>
    %324 = arith.truncf %322 : vector<16x16xf32> to vector<16x16xbf16>
    %325 = arith.truncf %323 : vector<16x96xf32> to vector<16x96xbf16>
    %cst_83 = arith.constant dense<0.000000e+00> : vector<16x96xf32>
    %326 = tpu.matmul %324, %325, %cst_83 {dimension_numbers = #tpu.dot_dimension_numbers<[1], [0], [0], [1], [0, 0, 1, 1], [], []>} : vector<16x16xbf16>, vector<16x96xbf16>, vector<16x96xf32> -> vector<16x96xf32>
    %c0_84 = arith.constant 0 : index
    %c0_85 = arith.constant 0 : index
    %327 = vector.load %arg11[%c0_84, %c0_85] : memref<1x96xf32, #tpu.memory_space<vmem>>, vector<1x96xf32>
    %c0_86 = arith.constant 0 : index
    %c0_87 = arith.constant 0 : index
    %328 = vector.load %arg12[%c0_86, %c0_87] : memref<1x96xf32, #tpu.memory_space<vmem>>, vector<1x96xf32>
    %329 = vector.extract_strided_slice %327 {offsets = [0, 0], sizes = [1, 64], strides = [1, 1]} : vector<1x96xf32> to vector<1x64xf32>
    %330 = vector.extract_strided_slice %328 {offsets = [0, 0], sizes = [1, 64], strides = [1, 1]} : vector<1x96xf32> to vector<1x64xf32>
    %331 = arith.addf %329, %330 : vector<1x64xf32>
    %332 = vector.extract_strided_slice %327 {offsets = [0, 64], sizes = [1, 32], strides = [1, 1]} : vector<1x96xf32> to vector<1x32xf32>
    %333 = tpu.concatenate %331, %332 in 1 : vector<1x64xf32>, vector<1x32xf32> -> vector<1x96xf32>
    %334 = vector.broadcast %333 : vector<1x96xf32> to vector<16x96xf32>
    %335 = arith.addf %326, %334 : vector<16x96xf32>
    %336 = arith.truncf %335 : vector<16x96xf32> to vector<16x96xbf16>
    %337 = tpu.iota {dimensions = array<i32: 1>} : vector<2x16xi32>
    %c1_i32 = arith.constant 1 : i32
    %338 = vector.broadcast %c1_i32 : i32 to vector<2x16xi32>
    %339 = arith.cmpi eq, %337, %338 : vector<2x16xi32>
    %340 = arith.extui %339 : vector<2x16xi1> to vector<2x16xi32>
    %341 = arith.sitofp %340 : vector<2x16xi32> to vector<2x16xf32>
    %342 = arith.truncf %341 : vector<2x16xf32> to vector<2x16xbf16>
    %cst_88 = arith.constant dense<0.000000e+00> : vector<2x96xf32>
    %343 = tpu.matmul %342, %336, %cst_88 {dimension_numbers = #tpu.dot_dimension_numbers<[1], [0], [0], [1], [0, 0, 1, 1], [], []>} : vector<2x16xbf16>, vector<16x96xbf16>, vector<2x96xf32> -> vector<2x96xf32>
    %344 = arith.truncf %321 : vector<2x32xf32> to vector<2x32xbf16>
    %cst_89 = arith.constant dense<0.000000e+00> : vector<2x96xf32>
    %345 = tpu.matmul %344, %3, %cst_89 {dimension_numbers = #tpu.dot_dimension_numbers<[1], [0], [0], [1], [0, 0, 1, 1], [], []>} : vector<2x32xbf16>, vector<32x96xbf16>, vector<2x96xf32> -> vector<2x96xf32>
    %346 = vector.extract_strided_slice %343 {offsets = [0, 0], sizes = [2, 64], strides = [1, 1]} : vector<2x96xf32> to vector<2x64xf32>
    %347 = vector.extract_strided_slice %345 {offsets = [0, 0], sizes = [2, 64], strides = [1, 1]} : vector<2x96xf32> to vector<2x64xf32>
    %348 = arith.addf %346, %347 : vector<2x64xf32>
    %349 = arith.negf %348 : vector<2x64xf32>
    %350 = math.exp %349 : vector<2x64xf32>
    %cst_90 = arith.constant 1.000000e+00 : f32
    %351 = vector.broadcast %cst_90 : f32 to vector<2x64xf32>
    %352 = arith.addf %351, %350 : vector<2x64xf32>
    %353 = arith.divf %351, %352 : vector<2x64xf32>
    %354 = vector.extract_strided_slice %353 {offsets = [0, 0], sizes = [2, 32], strides = [1, 1]} : vector<2x64xf32> to vector<2x32xf32>
    %355 = vector.extract_strided_slice %353 {offsets = [0, 32], sizes = [2, 32], strides = [1, 1]} : vector<2x64xf32> to vector<2x32xf32>
    %356 = vector.extract_strided_slice %343 {offsets = [0, 64], sizes = [2, 32], strides = [1, 1]} : vector<2x96xf32> to vector<2x32xf32>
    %357 = vector.extract_strided_slice %345 {offsets = [0, 64], sizes = [2, 32], strides = [1, 1]} : vector<2x96xf32> to vector<2x32xf32>
    %358 = arith.addf %357, %27 : vector<2x32xf32>
    %359 = arith.mulf %354, %358 : vector<2x32xf32>
    %360 = arith.addf %356, %359 : vector<2x32xf32>
    %361 = math.tanh %360 : vector<2x32xf32>
    %cst_91 = arith.constant 1.000000e+00 : f32
    %362 = vector.broadcast %cst_91 : f32 to vector<2x32xf32>
    %363 = arith.subf %362, %355 : vector<2x32xf32>
    %364 = arith.mulf %363, %361 : vector<2x32xf32>
    %365 = arith.mulf %355, %321 : vector<2x32xf32>
    %366 = arith.addf %364, %365 : vector<2x32xf32>
    %367 = vector.shape_cast %366 : vector<2x32xf32> to vector<2x1x32xf32>
    %368 = arith.truncf %367 : vector<2x1x32xf32> to vector<2x1x32xbf16>
    "tpu.trace_start"() <{level = 10 : i32, message = "bqh,bhs->bqs"}> : () -> ()
    %cst_92 = arith.constant dense<0.000000e+00> : vector<2x1x8xf32>
    %369 = tpu.matmul %368, %307, %cst_92 {dimension_numbers = #tpu.dot_dimension_numbers<[2], [1], [1], [2], [0, 0, 0, 1, 1, 2], [0], [0]>} : vector<2x1x32xbf16>, vector<2x32x8xbf16>, vector<2x1x8xf32> -> vector<2x1x8xf32>
    "tpu.trace_stop"() : () -> ()
    %370 = vector.shape_cast %369 : vector<2x1x8xf32> to vector<2x8xf32>
    %cst_93 = arith.constant 0.176776692 : f32
    %371 = vector.broadcast %cst_93 : f32 to vector<2x8xf32>
    %372 = arith.mulf %370, %371 : vector<2x8xf32>
    %cst_94 = arith.constant dense<0xFF800000> : vector<2xf32>
    %373 = vector.multi_reduction <maximumf>, %372, %cst_94 [1] : vector<2x8xf32> to vector<2xf32>
    %374 = vector.shape_cast %373 : vector<2xf32> to vector<2x1xf32>
    %375 = vector.broadcast %374 : vector<2x1xf32> to vector<2x8xf32>
    %376 = arith.subf %372, %375 : vector<2x8xf32>
    %377 = math.exp %376 : vector<2x8xf32>
    %cst_95 = arith.constant dense<0.000000e+00> : vector<2xf32>
    %378 = vector.multi_reduction <add>, %377, %cst_95 [1] : vector<2x8xf32> to vector<2xf32>
    %379 = vector.shape_cast %378 : vector<2xf32> to vector<2x1xf32>
    %380 = tpu.reciprocal %379 {approx = true} : vector<2x1xf32> -> vector<2x1xf32>
    %381 = vector.broadcast %380 : vector<2x1xf32> to vector<2x8xf32>
    %382 = arith.mulf %377, %381 : vector<2x8xf32>
    %383 = vector.shape_cast %382 : vector<2x8xf32> to vector<2x1x8xf32>
    %384 = arith.truncf %383 : vector<2x1x8xf32> to vector<2x1x8xbf16>
    "tpu.trace_start"() <{level = 10 : i32, message = "bqs,bsg->bqg"}> : () -> ()
    %cst_96 = arith.constant dense<0.000000e+00> : vector<2x1x96xf32>
    %385 = tpu.matmul %384, %317, %cst_96 {dimension_numbers = #tpu.dot_dimension_numbers<[2], [1], [1], [2], [0, 0, 0, 1, 1, 2], [0], [0]>} : vector<2x1x8xbf16>, vector<2x8x96xbf16>, vector<2x1x96xf32> -> vector<2x1x96xf32>
    "tpu.trace_stop"() : () -> ()
    %386 = vector.shape_cast %385 : vector<2x1x96xf32> to vector<2x96xf32>
    %387 = arith.addf %386, %39 : vector<2x96xf32>
    %388 = arith.truncf %366 : vector<2x32xf32> to vector<2x32xbf16>
    %cst_97 = arith.constant dense<0.000000e+00> : vector<2x96xf32>
    %389 = tpu.matmul %388, %5, %cst_97 {dimension_numbers = #tpu.dot_dimension_numbers<[1], [0], [0], [1], [0, 0, 1, 1], [], []>} : vector<2x32xbf16>, vector<32x96xbf16>, vector<2x96xf32> -> vector<2x96xf32>
    %390 = vector.extract_strided_slice %387 {offsets = [0, 0], sizes = [2, 64], strides = [1, 1]} : vector<2x96xf32> to vector<2x64xf32>
    %391 = vector.extract_strided_slice %389 {offsets = [0, 0], sizes = [2, 64], strides = [1, 1]} : vector<2x96xf32> to vector<2x64xf32>
    %392 = arith.addf %390, %391 : vector<2x64xf32>
    %393 = arith.negf %392 : vector<2x64xf32>
    %394 = math.exp %393 : vector<2x64xf32>
    %cst_98 = arith.constant 1.000000e+00 : f32
    %395 = vector.broadcast %cst_98 : f32 to vector<2x64xf32>
    %396 = arith.addf %395, %394 : vector<2x64xf32>
    %397 = arith.divf %395, %396 : vector<2x64xf32>
    %398 = vector.extract_strided_slice %397 {offsets = [0, 0], sizes = [2, 32], strides = [1, 1]} : vector<2x64xf32> to vector<2x32xf32>
    %399 = vector.extract_strided_slice %397 {offsets = [0, 32], sizes = [2, 32], strides = [1, 1]} : vector<2x64xf32> to vector<2x32xf32>
    %400 = vector.extract_strided_slice %387 {offsets = [0, 64], sizes = [2, 32], strides = [1, 1]} : vector<2x96xf32> to vector<2x32xf32>
    %401 = vector.extract_strided_slice %389 {offsets = [0, 64], sizes = [2, 32], strides = [1, 1]} : vector<2x96xf32> to vector<2x32xf32>
    %402 = arith.addf %401, %30 : vector<2x32xf32>
    %403 = arith.mulf %398, %402 : vector<2x32xf32>
    %404 = arith.addf %400, %403 : vector<2x32xf32>
    %405 = math.tanh %404 : vector<2x32xf32>
    %cst_99 = arith.constant 1.000000e+00 : f32
    %406 = vector.broadcast %cst_99 : f32 to vector<2x32xf32>
    %407 = arith.subf %406, %399 : vector<2x32xf32>
    %408 = arith.mulf %407, %405 : vector<2x32xf32>
    %409 = arith.mulf %399, %366 : vector<2x32xf32>
    %410 = arith.addf %408, %409 : vector<2x32xf32>
    %411 = arith.truncf %410 : vector<2x32xf32> to vector<2x32xbf16>
    %cst_100 = arith.constant dense<0.000000e+00> : vector<2x16xf32>
    %412 = tpu.matmul %411, %9, %cst_100 {dimension_numbers = #tpu.dot_dimension_numbers<[1], [0], [0], [1], [0, 0, 1, 1], [], []>} : vector<2x32xbf16>, vector<32x16xbf16>, vector<2x16xf32> -> vector<2x16xf32>
    %413 = arith.addf %412, %42 : vector<2x16xf32>
    %cst_101 = arith.constant dense<0xFF800000> : vector<2xf32>
    %414 = vector.multi_reduction <maximumf>, %413, %cst_101 [1] : vector<2x16xf32> to vector<2xf32>
    %415 = vector.shape_cast %414 : vector<2xf32> to vector<2x1xf32>
    %416 = vector.broadcast %415 : vector<2x1xf32> to vector<2x16xf32>
    %417 = arith.cmpf oeq, %413, %416 : vector<2x16xf32>
    %c16_i32 = arith.constant 16 : i32
    %418 = vector.broadcast %c16_i32 : i32 to vector<2x16xi32>
    %419 = arith.select %417, %337, %418 : vector<2x16xi1>, vector<2x16xi32>
    %cst_102 = arith.constant dense<2147483647> : vector<2xi32>
    %420 = vector.multi_reduction <minsi>, %419, %cst_102 [1] : vector<2x16xi32> to vector<2xi32>
    %421 = vector.shape_cast %420 : vector<2xi32> to vector<2x1xi32>
    %422 = vector.broadcast %421 : vector<2x1xi32> to vector<2x16xi32>
    %423 = arith.cmpi eq, %337, %422 : vector<2x16xi32>
    %424 = arith.extui %423 : vector<2x16xi1> to vector<2x16xi32>
    %425 = arith.sitofp %424 : vector<2x16xi32> to vector<2x16xf32>
    %426 = arith.truncf %425 : vector<2x16xf32> to vector<2x16xbf16>
    %cst_103 = arith.constant dense<0.000000e+00> : vector<2x96xf32>
    %427 = tpu.matmul %426, %336, %cst_103 {dimension_numbers = #tpu.dot_dimension_numbers<[1], [0], [0], [1], [0, 0, 1, 1], [], []>} : vector<2x16xbf16>, vector<16x96xbf16>, vector<2x96xf32> -> vector<2x96xf32>
    %428 = arith.truncf %410 : vector<2x32xf32> to vector<2x32xbf16>
    %cst_104 = arith.constant dense<0.000000e+00> : vector<2x96xf32>
    %429 = tpu.matmul %428, %3, %cst_104 {dimension_numbers = #tpu.dot_dimension_numbers<[1], [0], [0], [1], [0, 0, 1, 1], [], []>} : vector<2x32xbf16>, vector<32x96xbf16>, vector<2x96xf32> -> vector<2x96xf32>
    %430 = vector.extract_strided_slice %427 {offsets = [0, 0], sizes = [2, 64], strides = [1, 1]} : vector<2x96xf32> to vector<2x64xf32>
    %431 = vector.extract_strided_slice %429 {offsets = [0, 0], sizes = [2, 64], strides = [1, 1]} : vector<2x96xf32> to vector<2x64xf32>
    %432 = arith.addf %430, %431 : vector<2x64xf32>
    %433 = arith.negf %432 : vector<2x64xf32>
    %434 = math.exp %433 : vector<2x64xf32>
    %cst_105 = arith.constant 1.000000e+00 : f32
    %435 = vector.broadcast %cst_105 : f32 to vector<2x64xf32>
    %436 = arith.addf %435, %434 : vector<2x64xf32>
    %437 = arith.divf %435, %436 : vector<2x64xf32>
    %438 = vector.extract_strided_slice %437 {offsets = [0, 0], sizes = [2, 32], strides = [1, 1]} : vector<2x64xf32> to vector<2x32xf32>
    %439 = vector.extract_strided_slice %437 {offsets = [0, 32], sizes = [2, 32], strides = [1, 1]} : vector<2x64xf32> to vector<2x32xf32>
    %440 = vector.extract_strided_slice %427 {offsets = [0, 64], sizes = [2, 32], strides = [1, 1]} : vector<2x96xf32> to vector<2x32xf32>
    %441 = vector.extract_strided_slice %429 {offsets = [0, 64], sizes = [2, 32], strides = [1, 1]} : vector<2x96xf32> to vector<2x32xf32>
    %442 = arith.addf %441, %27 : vector<2x32xf32>
    %443 = arith.mulf %438, %442 : vector<2x32xf32>
    %444 = arith.addf %440, %443 : vector<2x32xf32>
    %445 = math.tanh %444 : vector<2x32xf32>
    %cst_106 = arith.constant 1.000000e+00 : f32
    %446 = vector.broadcast %cst_106 : f32 to vector<2x32xf32>
    %447 = arith.subf %446, %439 : vector<2x32xf32>
    %448 = arith.mulf %447, %445 : vector<2x32xf32>
    %449 = arith.mulf %439, %410 : vector<2x32xf32>
    %450 = arith.addf %448, %449 : vector<2x32xf32>
    %451 = vector.shape_cast %450 : vector<2x32xf32> to vector<2x1x32xf32>
    %452 = arith.truncf %451 : vector<2x1x32xf32> to vector<2x1x32xbf16>
    "tpu.trace_start"() <{level = 10 : i32, message = "bqh,bhs->bqs"}> : () -> ()
    %cst_107 = arith.constant dense<0.000000e+00> : vector<2x1x8xf32>
    %453 = tpu.matmul %452, %307, %cst_107 {dimension_numbers = #tpu.dot_dimension_numbers<[2], [1], [1], [2], [0, 0, 0, 1, 1, 2], [0], [0]>} : vector<2x1x32xbf16>, vector<2x32x8xbf16>, vector<2x1x8xf32> -> vector<2x1x8xf32>
    "tpu.trace_stop"() : () -> ()
    %454 = vector.shape_cast %453 : vector<2x1x8xf32> to vector<2x8xf32>
    %cst_108 = arith.constant 0.176776692 : f32
    %455 = vector.broadcast %cst_108 : f32 to vector<2x8xf32>
    %456 = arith.mulf %454, %455 : vector<2x8xf32>
    %cst_109 = arith.constant dense<0xFF800000> : vector<2xf32>
    %457 = vector.multi_reduction <maximumf>, %456, %cst_109 [1] : vector<2x8xf32> to vector<2xf32>
    %458 = vector.shape_cast %457 : vector<2xf32> to vector<2x1xf32>
    %459 = vector.broadcast %458 : vector<2x1xf32> to vector<2x8xf32>
    %460 = arith.subf %456, %459 : vector<2x8xf32>
    %461 = math.exp %460 : vector<2x8xf32>
    %cst_110 = arith.constant dense<0.000000e+00> : vector<2xf32>
    %462 = vector.multi_reduction <add>, %461, %cst_110 [1] : vector<2x8xf32> to vector<2xf32>
    %463 = vector.shape_cast %462 : vector<2xf32> to vector<2x1xf32>
    %464 = tpu.reciprocal %463 {approx = true} : vector<2x1xf32> -> vector<2x1xf32>
    %465 = vector.broadcast %464 : vector<2x1xf32> to vector<2x8xf32>
    %466 = arith.mulf %461, %465 : vector<2x8xf32>
    %467 = vector.shape_cast %466 : vector<2x8xf32> to vector<2x1x8xf32>
    %468 = arith.truncf %467 : vector<2x1x8xf32> to vector<2x1x8xbf16>
    "tpu.trace_start"() <{level = 10 : i32, message = "bqs,bsg->bqg"}> : () -> ()
    %cst_111 = arith.constant dense<0.000000e+00> : vector<2x1x96xf32>
    %469 = tpu.matmul %468, %317, %cst_111 {dimension_numbers = #tpu.dot_dimension_numbers<[2], [1], [1], [2], [0, 0, 0, 1, 1, 2], [0], [0]>} : vector<2x1x8xbf16>, vector<2x8x96xbf16>, vector<2x1x96xf32> -> vector<2x1x96xf32>
    "tpu.trace_stop"() : () -> ()
    %470 = vector.shape_cast %469 : vector<2x1x96xf32> to vector<2x96xf32>
    %471 = arith.addf %470, %39 : vector<2x96xf32>
    %472 = arith.truncf %450 : vector<2x32xf32> to vector<2x32xbf16>
    %cst_112 = arith.constant dense<0.000000e+00> : vector<2x96xf32>
    %473 = tpu.matmul %472, %5, %cst_112 {dimension_numbers = #tpu.dot_dimension_numbers<[1], [0], [0], [1], [0, 0, 1, 1], [], []>} : vector<2x32xbf16>, vector<32x96xbf16>, vector<2x96xf32> -> vector<2x96xf32>
    %474 = vector.extract_strided_slice %471 {offsets = [0, 0], sizes = [2, 64], strides = [1, 1]} : vector<2x96xf32> to vector<2x64xf32>
    %475 = vector.extract_strided_slice %473 {offsets = [0, 0], sizes = [2, 64], strides = [1, 1]} : vector<2x96xf32> to vector<2x64xf32>
    %476 = arith.addf %474, %475 : vector<2x64xf32>
    %477 = arith.negf %476 : vector<2x64xf32>
    %478 = math.exp %477 : vector<2x64xf32>
    %cst_113 = arith.constant 1.000000e+00 : f32
    %479 = vector.broadcast %cst_113 : f32 to vector<2x64xf32>
    %480 = arith.addf %479, %478 : vector<2x64xf32>
    %481 = arith.divf %479, %480 : vector<2x64xf32>
    %482 = vector.extract_strided_slice %481 {offsets = [0, 0], sizes = [2, 32], strides = [1, 1]} : vector<2x64xf32> to vector<2x32xf32>
    %483 = vector.extract_strided_slice %481 {offsets = [0, 32], sizes = [2, 32], strides = [1, 1]} : vector<2x64xf32> to vector<2x32xf32>
    %484 = vector.extract_strided_slice %471 {offsets = [0, 64], sizes = [2, 32], strides = [1, 1]} : vector<2x96xf32> to vector<2x32xf32>
    %485 = vector.extract_strided_slice %473 {offsets = [0, 64], sizes = [2, 32], strides = [1, 1]} : vector<2x96xf32> to vector<2x32xf32>
    %486 = arith.addf %485, %30 : vector<2x32xf32>
    %487 = arith.mulf %482, %486 : vector<2x32xf32>
    %488 = arith.addf %484, %487 : vector<2x32xf32>
    %489 = math.tanh %488 : vector<2x32xf32>
    %cst_114 = arith.constant 1.000000e+00 : f32
    %490 = vector.broadcast %cst_114 : f32 to vector<2x32xf32>
    %491 = arith.subf %490, %483 : vector<2x32xf32>
    %492 = arith.mulf %491, %489 : vector<2x32xf32>
    %493 = arith.mulf %483, %450 : vector<2x32xf32>
    %494 = arith.addf %492, %493 : vector<2x32xf32>
    %495 = arith.truncf %494 : vector<2x32xf32> to vector<2x32xbf16>
    %cst_115 = arith.constant dense<0.000000e+00> : vector<2x16xf32>
    %496 = tpu.matmul %495, %9, %cst_115 {dimension_numbers = #tpu.dot_dimension_numbers<[1], [0], [0], [1], [0, 0, 1, 1], [], []>} : vector<2x32xbf16>, vector<32x16xbf16>, vector<2x16xf32> -> vector<2x16xf32>
    %497 = arith.addf %496, %42 : vector<2x16xf32>
    %cst_116 = arith.constant dense<0xFF800000> : vector<2xf32>
    %498 = vector.multi_reduction <maximumf>, %497, %cst_116 [1] : vector<2x16xf32> to vector<2xf32>
    %499 = vector.shape_cast %498 : vector<2xf32> to vector<2x1xf32>
    %500 = vector.broadcast %499 : vector<2x1xf32> to vector<2x16xf32>
    %501 = arith.cmpf oeq, %497, %500 : vector<2x16xf32>
    %c16_i32_117 = arith.constant 16 : i32
    %502 = vector.broadcast %c16_i32_117 : i32 to vector<2x16xi32>
    %503 = arith.select %501, %337, %502 : vector<2x16xi1>, vector<2x16xi32>
    %cst_118 = arith.constant dense<2147483647> : vector<2xi32>
    %504 = vector.multi_reduction <minsi>, %503, %cst_118 [1] : vector<2x16xi32> to vector<2xi32>
    %505 = vector.shape_cast %504 : vector<2xi32> to vector<2x1xi32>
    %506 = vector.broadcast %505 : vector<2x1xi32> to vector<2x16xi32>
    %507 = arith.cmpi eq, %337, %506 : vector<2x16xi32>
    %508 = arith.extui %507 : vector<2x16xi1> to vector<2x16xi32>
    %509 = arith.sitofp %508 : vector<2x16xi32> to vector<2x16xf32>
    %510 = arith.truncf %509 : vector<2x16xf32> to vector<2x16xbf16>
    %cst_119 = arith.constant dense<0.000000e+00> : vector<2x96xf32>
    %511 = tpu.matmul %510, %336, %cst_119 {dimension_numbers = #tpu.dot_dimension_numbers<[1], [0], [0], [1], [0, 0, 1, 1], [], []>} : vector<2x16xbf16>, vector<16x96xbf16>, vector<2x96xf32> -> vector<2x96xf32>
    %512 = arith.truncf %494 : vector<2x32xf32> to vector<2x32xbf16>
    %cst_120 = arith.constant dense<0.000000e+00> : vector<2x96xf32>
    %513 = tpu.matmul %512, %3, %cst_120 {dimension_numbers = #tpu.dot_dimension_numbers<[1], [0], [0], [1], [0, 0, 1, 1], [], []>} : vector<2x32xbf16>, vector<32x96xbf16>, vector<2x96xf32> -> vector<2x96xf32>
    %514 = vector.extract_strided_slice %511 {offsets = [0, 0], sizes = [2, 64], strides = [1, 1]} : vector<2x96xf32> to vector<2x64xf32>
    %515 = vector.extract_strided_slice %513 {offsets = [0, 0], sizes = [2, 64], strides = [1, 1]} : vector<2x96xf32> to vector<2x64xf32>
    %516 = arith.addf %514, %515 : vector<2x64xf32>
    %517 = arith.negf %516 : vector<2x64xf32>
    %518 = math.exp %517 : vector<2x64xf32>
    %cst_121 = arith.constant 1.000000e+00 : f32
    %519 = vector.broadcast %cst_121 : f32 to vector<2x64xf32>
    %520 = arith.addf %519, %518 : vector<2x64xf32>
    %521 = arith.divf %519, %520 : vector<2x64xf32>
    %522 = vector.extract_strided_slice %521 {offsets = [0, 0], sizes = [2, 32], strides = [1, 1]} : vector<2x64xf32> to vector<2x32xf32>
    %523 = vector.extract_strided_slice %521 {offsets = [0, 32], sizes = [2, 32], strides = [1, 1]} : vector<2x64xf32> to vector<2x32xf32>
    %524 = vector.extract_strided_slice %511 {offsets = [0, 64], sizes = [2, 32], strides = [1, 1]} : vector<2x96xf32> to vector<2x32xf32>
    %525 = vector.extract_strided_slice %513 {offsets = [0, 64], sizes = [2, 32], strides = [1, 1]} : vector<2x96xf32> to vector<2x32xf32>
    %526 = arith.addf %525, %27 : vector<2x32xf32>
    %527 = arith.mulf %522, %526 : vector<2x32xf32>
    %528 = arith.addf %524, %527 : vector<2x32xf32>
    %529 = math.tanh %528 : vector<2x32xf32>
    %cst_122 = arith.constant 1.000000e+00 : f32
    %530 = vector.broadcast %cst_122 : f32 to vector<2x32xf32>
    %531 = arith.subf %530, %523 : vector<2x32xf32>
    %532 = arith.mulf %531, %529 : vector<2x32xf32>
    %533 = arith.mulf %523, %494 : vector<2x32xf32>
    %534 = arith.addf %532, %533 : vector<2x32xf32>
    %535 = vector.shape_cast %534 : vector<2x32xf32> to vector<2x1x32xf32>
    %536 = arith.truncf %535 : vector<2x1x32xf32> to vector<2x1x32xbf16>
    "tpu.trace_start"() <{level = 10 : i32, message = "bqh,bhs->bqs"}> : () -> ()
    %cst_123 = arith.constant dense<0.000000e+00> : vector<2x1x8xf32>
    %537 = tpu.matmul %536, %307, %cst_123 {dimension_numbers = #tpu.dot_dimension_numbers<[2], [1], [1], [2], [0, 0, 0, 1, 1, 2], [0], [0]>} : vector<2x1x32xbf16>, vector<2x32x8xbf16>, vector<2x1x8xf32> -> vector<2x1x8xf32>
    "tpu.trace_stop"() : () -> ()
    %538 = vector.shape_cast %537 : vector<2x1x8xf32> to vector<2x8xf32>
    %cst_124 = arith.constant 0.176776692 : f32
    %539 = vector.broadcast %cst_124 : f32 to vector<2x8xf32>
    %540 = arith.mulf %538, %539 : vector<2x8xf32>
    %cst_125 = arith.constant dense<0xFF800000> : vector<2xf32>
    %541 = vector.multi_reduction <maximumf>, %540, %cst_125 [1] : vector<2x8xf32> to vector<2xf32>
    %542 = vector.shape_cast %541 : vector<2xf32> to vector<2x1xf32>
    %543 = vector.broadcast %542 : vector<2x1xf32> to vector<2x8xf32>
    %544 = arith.subf %540, %543 : vector<2x8xf32>
    %545 = math.exp %544 : vector<2x8xf32>
    %cst_126 = arith.constant dense<0.000000e+00> : vector<2xf32>
    %546 = vector.multi_reduction <add>, %545, %cst_126 [1] : vector<2x8xf32> to vector<2xf32>
    %547 = vector.shape_cast %546 : vector<2xf32> to vector<2x1xf32>
    %548 = tpu.reciprocal %547 {approx = true} : vector<2x1xf32> -> vector<2x1xf32>
    %549 = vector.broadcast %548 : vector<2x1xf32> to vector<2x8xf32>
    %550 = arith.mulf %545, %549 : vector<2x8xf32>
    %551 = vector.shape_cast %550 : vector<2x8xf32> to vector<2x1x8xf32>
    %552 = arith.truncf %551 : vector<2x1x8xf32> to vector<2x1x8xbf16>
    "tpu.trace_start"() <{level = 10 : i32, message = "bqs,bsg->bqg"}> : () -> ()
    %cst_127 = arith.constant dense<0.000000e+00> : vector<2x1x96xf32>
    %553 = tpu.matmul %552, %317, %cst_127 {dimension_numbers = #tpu.dot_dimension_numbers<[2], [1], [1], [2], [0, 0, 0, 1, 1, 2], [0], [0]>} : vector<2x1x8xbf16>, vector<2x8x96xbf16>, vector<2x1x96xf32> -> vector<2x1x96xf32>
    "tpu.trace_stop"() : () -> ()
    %554 = vector.shape_cast %553 : vector<2x1x96xf32> to vector<2x96xf32>
    %555 = arith.addf %554, %39 : vector<2x96xf32>
    %556 = arith.truncf %534 : vector<2x32xf32> to vector<2x32xbf16>
    %cst_128 = arith.constant dense<0.000000e+00> : vector<2x96xf32>
    %557 = tpu.matmul %556, %5, %cst_128 {dimension_numbers = #tpu.dot_dimension_numbers<[1], [0], [0], [1], [0, 0, 1, 1], [], []>} : vector<2x32xbf16>, vector<32x96xbf16>, vector<2x96xf32> -> vector<2x96xf32>
    %558 = vector.extract_strided_slice %555 {offsets = [0, 0], sizes = [2, 64], strides = [1, 1]} : vector<2x96xf32> to vector<2x64xf32>
    %559 = vector.extract_strided_slice %557 {offsets = [0, 0], sizes = [2, 64], strides = [1, 1]} : vector<2x96xf32> to vector<2x64xf32>
    %560 = arith.addf %558, %559 : vector<2x64xf32>
    %561 = arith.negf %560 : vector<2x64xf32>
    %562 = math.exp %561 : vector<2x64xf32>
    %cst_129 = arith.constant 1.000000e+00 : f32
    %563 = vector.broadcast %cst_129 : f32 to vector<2x64xf32>
    %564 = arith.addf %563, %562 : vector<2x64xf32>
    %565 = arith.divf %563, %564 : vector<2x64xf32>
    %566 = vector.extract_strided_slice %565 {offsets = [0, 0], sizes = [2, 32], strides = [1, 1]} : vector<2x64xf32> to vector<2x32xf32>
    %567 = vector.extract_strided_slice %565 {offsets = [0, 32], sizes = [2, 32], strides = [1, 1]} : vector<2x64xf32> to vector<2x32xf32>
    %568 = vector.extract_strided_slice %555 {offsets = [0, 64], sizes = [2, 32], strides = [1, 1]} : vector<2x96xf32> to vector<2x32xf32>
    %569 = vector.extract_strided_slice %557 {offsets = [0, 64], sizes = [2, 32], strides = [1, 1]} : vector<2x96xf32> to vector<2x32xf32>
    %570 = arith.addf %569, %30 : vector<2x32xf32>
    %571 = arith.mulf %566, %570 : vector<2x32xf32>
    %572 = arith.addf %568, %571 : vector<2x32xf32>
    %573 = math.tanh %572 : vector<2x32xf32>
    %cst_130 = arith.constant 1.000000e+00 : f32
    %574 = vector.broadcast %cst_130 : f32 to vector<2x32xf32>
    %575 = arith.subf %574, %567 : vector<2x32xf32>
    %576 = arith.mulf %575, %573 : vector<2x32xf32>
    %577 = arith.mulf %567, %534 : vector<2x32xf32>
    %578 = arith.addf %576, %577 : vector<2x32xf32>
    %579 = arith.truncf %578 : vector<2x32xf32> to vector<2x32xbf16>
    %cst_131 = arith.constant dense<0.000000e+00> : vector<2x16xf32>
    %580 = tpu.matmul %579, %9, %cst_131 {dimension_numbers = #tpu.dot_dimension_numbers<[1], [0], [0], [1], [0, 0, 1, 1], [], []>} : vector<2x32xbf16>, vector<32x16xbf16>, vector<2x16xf32> -> vector<2x16xf32>
    %581 = arith.addf %580, %42 : vector<2x16xf32>
    %cst_132 = arith.constant dense<0xFF800000> : vector<2xf32>
    %582 = vector.multi_reduction <maximumf>, %581, %cst_132 [1] : vector<2x16xf32> to vector<2xf32>
    %583 = vector.shape_cast %582 : vector<2xf32> to vector<2x1xf32>
    %584 = vector.broadcast %583 : vector<2x1xf32> to vector<2x16xf32>
    %585 = arith.cmpf oeq, %581, %584 : vector<2x16xf32>
    %c16_i32_133 = arith.constant 16 : i32
    %586 = vector.broadcast %c16_i32_133 : i32 to vector<2x16xi32>
    %587 = arith.select %585, %337, %586 : vector<2x16xi1>, vector<2x16xi32>
    %cst_134 = arith.constant dense<2147483647> : vector<2xi32>
    %588 = vector.multi_reduction <minsi>, %587, %cst_134 [1] : vector<2x16xi32> to vector<2xi32>
    %589 = vector.shape_cast %588 : vector<2xi32> to vector<2x1xi32>
    %590 = vector.broadcast %589 : vector<2x1xi32> to vector<2x16xi32>
    %591 = arith.cmpi eq, %337, %590 : vector<2x16xi32>
    %592 = arith.extui %591 : vector<2x16xi1> to vector<2x16xi32>
    %593 = arith.sitofp %592 : vector<2x16xi32> to vector<2x16xf32>
    %594 = arith.truncf %593 : vector<2x16xf32> to vector<2x16xbf16>
    %cst_135 = arith.constant dense<0.000000e+00> : vector<2x96xf32>
    %595 = tpu.matmul %594, %336, %cst_135 {dimension_numbers = #tpu.dot_dimension_numbers<[1], [0], [0], [1], [0, 0, 1, 1], [], []>} : vector<2x16xbf16>, vector<16x96xbf16>, vector<2x96xf32> -> vector<2x96xf32>
    %596 = arith.truncf %578 : vector<2x32xf32> to vector<2x32xbf16>
    %cst_136 = arith.constant dense<0.000000e+00> : vector<2x96xf32>
    %597 = tpu.matmul %596, %3, %cst_136 {dimension_numbers = #tpu.dot_dimension_numbers<[1], [0], [0], [1], [0, 0, 1, 1], [], []>} : vector<2x32xbf16>, vector<32x96xbf16>, vector<2x96xf32> -> vector<2x96xf32>
    %598 = vector.extract_strided_slice %595 {offsets = [0, 0], sizes = [2, 64], strides = [1, 1]} : vector<2x96xf32> to vector<2x64xf32>
    %599 = vector.extract_strided_slice %597 {offsets = [0, 0], sizes = [2, 64], strides = [1, 1]} : vector<2x96xf32> to vector<2x64xf32>
    %600 = arith.addf %598, %599 : vector<2x64xf32>
    %601 = arith.negf %600 : vector<2x64xf32>
    %602 = math.exp %601 : vector<2x64xf32>
    %cst_137 = arith.constant 1.000000e+00 : f32
    %603 = vector.broadcast %cst_137 : f32 to vector<2x64xf32>
    %604 = arith.addf %603, %602 : vector<2x64xf32>
    %605 = arith.divf %603, %604 : vector<2x64xf32>
    %606 = vector.extract_strided_slice %605 {offsets = [0, 0], sizes = [2, 32], strides = [1, 1]} : vector<2x64xf32> to vector<2x32xf32>
    %607 = vector.extract_strided_slice %605 {offsets = [0, 32], sizes = [2, 32], strides = [1, 1]} : vector<2x64xf32> to vector<2x32xf32>
    %608 = vector.extract_strided_slice %595 {offsets = [0, 64], sizes = [2, 32], strides = [1, 1]} : vector<2x96xf32> to vector<2x32xf32>
    %609 = vector.extract_strided_slice %597 {offsets = [0, 64], sizes = [2, 32], strides = [1, 1]} : vector<2x96xf32> to vector<2x32xf32>
    %610 = arith.addf %609, %27 : vector<2x32xf32>
    %611 = arith.mulf %606, %610 : vector<2x32xf32>
    %612 = arith.addf %608, %611 : vector<2x32xf32>
    %613 = math.tanh %612 : vector<2x32xf32>
    %cst_138 = arith.constant 1.000000e+00 : f32
    %614 = vector.broadcast %cst_138 : f32 to vector<2x32xf32>
    %615 = arith.subf %614, %607 : vector<2x32xf32>
    %616 = arith.mulf %615, %613 : vector<2x32xf32>
    %617 = arith.mulf %607, %578 : vector<2x32xf32>
    %618 = arith.addf %616, %617 : vector<2x32xf32>
    %619 = vector.shape_cast %618 : vector<2x32xf32> to vector<2x1x32xf32>
    %620 = arith.truncf %619 : vector<2x1x32xf32> to vector<2x1x32xbf16>
    "tpu.trace_start"() <{level = 10 : i32, message = "bqh,bhs->bqs"}> : () -> ()
    %cst_139 = arith.constant dense<0.000000e+00> : vector<2x1x8xf32>
    %621 = tpu.matmul %620, %307, %cst_139 {dimension_numbers = #tpu.dot_dimension_numbers<[2], [1], [1], [2], [0, 0, 0, 1, 1, 2], [0], [0]>} : vector<2x1x32xbf16>, vector<2x32x8xbf16>, vector<2x1x8xf32> -> vector<2x1x8xf32>
    "tpu.trace_stop"() : () -> ()
    %622 = vector.shape_cast %621 : vector<2x1x8xf32> to vector<2x8xf32>
    %cst_140 = arith.constant 0.176776692 : f32
    %623 = vector.broadcast %cst_140 : f32 to vector<2x8xf32>
    %624 = arith.mulf %622, %623 : vector<2x8xf32>
    %cst_141 = arith.constant dense<0xFF800000> : vector<2xf32>
    %625 = vector.multi_reduction <maximumf>, %624, %cst_141 [1] : vector<2x8xf32> to vector<2xf32>
    %626 = vector.shape_cast %625 : vector<2xf32> to vector<2x1xf32>
    %627 = vector.broadcast %626 : vector<2x1xf32> to vector<2x8xf32>
    %628 = arith.subf %624, %627 : vector<2x8xf32>
    %629 = math.exp %628 : vector<2x8xf32>
    %cst_142 = arith.constant dense<0.000000e+00> : vector<2xf32>
    %630 = vector.multi_reduction <add>, %629, %cst_142 [1] : vector<2x8xf32> to vector<2xf32>
    %631 = vector.shape_cast %630 : vector<2xf32> to vector<2x1xf32>
    %632 = tpu.reciprocal %631 {approx = true} : vector<2x1xf32> -> vector<2x1xf32>
    %633 = vector.broadcast %632 : vector<2x1xf32> to vector<2x8xf32>
    %634 = arith.mulf %629, %633 : vector<2x8xf32>
    %635 = vector.shape_cast %634 : vector<2x8xf32> to vector<2x1x8xf32>
    %636 = arith.truncf %635 : vector<2x1x8xf32> to vector<2x1x8xbf16>
    "tpu.trace_start"() <{level = 10 : i32, message = "bqs,bsg->bqg"}> : () -> ()
    %cst_143 = arith.constant dense<0.000000e+00> : vector<2x1x96xf32>
    %637 = tpu.matmul %636, %317, %cst_143 {dimension_numbers = #tpu.dot_dimension_numbers<[2], [1], [1], [2], [0, 0, 0, 1, 1, 2], [0], [0]>} : vector<2x1x8xbf16>, vector<2x8x96xbf16>, vector<2x1x96xf32> -> vector<2x1x96xf32>
    "tpu.trace_stop"() : () -> ()
    %638 = vector.shape_cast %637 : vector<2x1x96xf32> to vector<2x96xf32>
    %639 = arith.addf %638, %39 : vector<2x96xf32>
    %640 = arith.truncf %618 : vector<2x32xf32> to vector<2x32xbf16>
    %cst_144 = arith.constant dense<0.000000e+00> : vector<2x96xf32>
    %641 = tpu.matmul %640, %5, %cst_144 {dimension_numbers = #tpu.dot_dimension_numbers<[1], [0], [0], [1], [0, 0, 1, 1], [], []>} : vector<2x32xbf16>, vector<32x96xbf16>, vector<2x96xf32> -> vector<2x96xf32>
    %642 = vector.extract_strided_slice %639 {offsets = [0, 0], sizes = [2, 64], strides = [1, 1]} : vector<2x96xf32> to vector<2x64xf32>
    %643 = vector.extract_strided_slice %641 {offsets = [0, 0], sizes = [2, 64], strides = [1, 1]} : vector<2x96xf32> to vector<2x64xf32>
    %644 = arith.addf %642, %643 : vector<2x64xf32>
    %645 = arith.negf %644 : vector<2x64xf32>
    %646 = math.exp %645 : vector<2x64xf32>
    %cst_145 = arith.constant 1.000000e+00 : f32
    %647 = vector.broadcast %cst_145 : f32 to vector<2x64xf32>
    %648 = arith.addf %647, %646 : vector<2x64xf32>
    %649 = arith.divf %647, %648 : vector<2x64xf32>
    %650 = vector.extract_strided_slice %649 {offsets = [0, 0], sizes = [2, 32], strides = [1, 1]} : vector<2x64xf32> to vector<2x32xf32>
    %651 = vector.extract_strided_slice %649 {offsets = [0, 32], sizes = [2, 32], strides = [1, 1]} : vector<2x64xf32> to vector<2x32xf32>
    %652 = vector.extract_strided_slice %639 {offsets = [0, 64], sizes = [2, 32], strides = [1, 1]} : vector<2x96xf32> to vector<2x32xf32>
    %653 = vector.extract_strided_slice %641 {offsets = [0, 64], sizes = [2, 32], strides = [1, 1]} : vector<2x96xf32> to vector<2x32xf32>
    %654 = arith.addf %653, %30 : vector<2x32xf32>
    %655 = arith.mulf %650, %654 : vector<2x32xf32>
    %656 = arith.addf %652, %655 : vector<2x32xf32>
    %657 = math.tanh %656 : vector<2x32xf32>
    %cst_146 = arith.constant 1.000000e+00 : f32
    %658 = vector.broadcast %cst_146 : f32 to vector<2x32xf32>
    %659 = arith.subf %658, %651 : vector<2x32xf32>
    %660 = arith.mulf %659, %657 : vector<2x32xf32>
    %661 = arith.mulf %651, %618 : vector<2x32xf32>
    %662 = arith.addf %660, %661 : vector<2x32xf32>
    %663 = arith.truncf %662 : vector<2x32xf32> to vector<2x32xbf16>
    %cst_147 = arith.constant dense<0.000000e+00> : vector<2x16xf32>
    %664 = tpu.matmul %663, %9, %cst_147 {dimension_numbers = #tpu.dot_dimension_numbers<[1], [0], [0], [1], [0, 0, 1, 1], [], []>} : vector<2x32xbf16>, vector<32x16xbf16>, vector<2x16xf32> -> vector<2x16xf32>
    %665 = arith.addf %664, %42 : vector<2x16xf32>
    %cst_148 = arith.constant dense<0xFF800000> : vector<2xf32>
    %666 = vector.multi_reduction <maximumf>, %665, %cst_148 [1] : vector<2x16xf32> to vector<2xf32>
    %667 = vector.shape_cast %666 : vector<2xf32> to vector<2x1xf32>
    %668 = vector.broadcast %667 : vector<2x1xf32> to vector<2x16xf32>
    %669 = arith.cmpf oeq, %665, %668 : vector<2x16xf32>
    %c16_i32_149 = arith.constant 16 : i32
    %670 = vector.broadcast %c16_i32_149 : i32 to vector<2x16xi32>
    %671 = arith.select %669, %337, %670 : vector<2x16xi1>, vector<2x16xi32>
    %cst_150 = arith.constant dense<2147483647> : vector<2xi32>
    %672 = vector.multi_reduction <minsi>, %671, %cst_150 [1] : vector<2x16xi32> to vector<2xi32>
    %673 = vector.shape_cast %672 : vector<2xi32> to vector<2x1xi32>
    %674 = vector.broadcast %673 : vector<2x1xi32> to vector<2x16xi32>
    %675 = arith.cmpi eq, %337, %674 : vector<2x16xi32>
    %676 = arith.extui %675 : vector<2x16xi1> to vector<2x16xi32>
    %677 = arith.sitofp %676 : vector<2x16xi32> to vector<2x16xf32>
    %678 = arith.truncf %677 : vector<2x16xf32> to vector<2x16xbf16>
    %cst_151 = arith.constant dense<0.000000e+00> : vector<2x96xf32>
    %679 = tpu.matmul %678, %336, %cst_151 {dimension_numbers = #tpu.dot_dimension_numbers<[1], [0], [0], [1], [0, 0, 1, 1], [], []>} : vector<2x16xbf16>, vector<16x96xbf16>, vector<2x96xf32> -> vector<2x96xf32>
    %680 = arith.truncf %662 : vector<2x32xf32> to vector<2x32xbf16>
    %cst_152 = arith.constant dense<0.000000e+00> : vector<2x96xf32>
    %681 = tpu.matmul %680, %3, %cst_152 {dimension_numbers = #tpu.dot_dimension_numbers<[1], [0], [0], [1], [0, 0, 1, 1], [], []>} : vector<2x32xbf16>, vector<32x96xbf16>, vector<2x96xf32> -> vector<2x96xf32>
    %682 = vector.extract_strided_slice %679 {offsets = [0, 0], sizes = [2, 64], strides = [1, 1]} : vector<2x96xf32> to vector<2x64xf32>
    %683 = vector.extract_strided_slice %681 {offsets = [0, 0], sizes = [2, 64], strides = [1, 1]} : vector<2x96xf32> to vector<2x64xf32>
    %684 = arith.addf %682, %683 : vector<2x64xf32>
    %685 = arith.negf %684 : vector<2x64xf32>
    %686 = math.exp %685 : vector<2x64xf32>
    %cst_153 = arith.constant 1.000000e+00 : f32
    %687 = vector.broadcast %cst_153 : f32 to vector<2x64xf32>
    %688 = arith.addf %687, %686 : vector<2x64xf32>
    %689 = arith.divf %687, %688 : vector<2x64xf32>
    %690 = vector.extract_strided_slice %689 {offsets = [0, 0], sizes = [2, 32], strides = [1, 1]} : vector<2x64xf32> to vector<2x32xf32>
    %691 = vector.extract_strided_slice %689 {offsets = [0, 32], sizes = [2, 32], strides = [1, 1]} : vector<2x64xf32> to vector<2x32xf32>
    %692 = vector.extract_strided_slice %679 {offsets = [0, 64], sizes = [2, 32], strides = [1, 1]} : vector<2x96xf32> to vector<2x32xf32>
    %693 = vector.extract_strided_slice %681 {offsets = [0, 64], sizes = [2, 32], strides = [1, 1]} : vector<2x96xf32> to vector<2x32xf32>
    %694 = arith.addf %693, %27 : vector<2x32xf32>
    %695 = arith.mulf %690, %694 : vector<2x32xf32>
    %696 = arith.addf %692, %695 : vector<2x32xf32>
    %697 = math.tanh %696 : vector<2x32xf32>
    %cst_154 = arith.constant 1.000000e+00 : f32
    %698 = vector.broadcast %cst_154 : f32 to vector<2x32xf32>
    %699 = arith.subf %698, %691 : vector<2x32xf32>
    %700 = arith.mulf %699, %697 : vector<2x32xf32>
    %701 = arith.mulf %691, %662 : vector<2x32xf32>
    %702 = arith.addf %700, %701 : vector<2x32xf32>
    %703 = vector.shape_cast %702 : vector<2x32xf32> to vector<2x1x32xf32>
    %704 = arith.truncf %703 : vector<2x1x32xf32> to vector<2x1x32xbf16>
    "tpu.trace_start"() <{level = 10 : i32, message = "bqh,bhs->bqs"}> : () -> ()
    %cst_155 = arith.constant dense<0.000000e+00> : vector<2x1x8xf32>
    %705 = tpu.matmul %704, %307, %cst_155 {dimension_numbers = #tpu.dot_dimension_numbers<[2], [1], [1], [2], [0, 0, 0, 1, 1, 2], [0], [0]>} : vector<2x1x32xbf16>, vector<2x32x8xbf16>, vector<2x1x8xf32> -> vector<2x1x8xf32>
    "tpu.trace_stop"() : () -> ()
    %706 = vector.shape_cast %705 : vector<2x1x8xf32> to vector<2x8xf32>
    %cst_156 = arith.constant 0.176776692 : f32
    %707 = vector.broadcast %cst_156 : f32 to vector<2x8xf32>
    %708 = arith.mulf %706, %707 : vector<2x8xf32>
    %cst_157 = arith.constant dense<0xFF800000> : vector<2xf32>
    %709 = vector.multi_reduction <maximumf>, %708, %cst_157 [1] : vector<2x8xf32> to vector<2xf32>
    %710 = vector.shape_cast %709 : vector<2xf32> to vector<2x1xf32>
    %711 = vector.broadcast %710 : vector<2x1xf32> to vector<2x8xf32>
    %712 = arith.subf %708, %711 : vector<2x8xf32>
    %713 = math.exp %712 : vector<2x8xf32>
    %cst_158 = arith.constant dense<0.000000e+00> : vector<2xf32>
    %714 = vector.multi_reduction <add>, %713, %cst_158 [1] : vector<2x8xf32> to vector<2xf32>
    %715 = vector.shape_cast %714 : vector<2xf32> to vector<2x1xf32>
    %716 = tpu.reciprocal %715 {approx = true} : vector<2x1xf32> -> vector<2x1xf32>
    %717 = vector.broadcast %716 : vector<2x1xf32> to vector<2x8xf32>
    %718 = arith.mulf %713, %717 : vector<2x8xf32>
    %719 = vector.shape_cast %718 : vector<2x8xf32> to vector<2x1x8xf32>
    %720 = arith.truncf %719 : vector<2x1x8xf32> to vector<2x1x8xbf16>
    "tpu.trace_start"() <{level = 10 : i32, message = "bqs,bsg->bqg"}> : () -> ()
    %cst_159 = arith.constant dense<0.000000e+00> : vector<2x1x96xf32>
    %721 = tpu.matmul %720, %317, %cst_159 {dimension_numbers = #tpu.dot_dimension_numbers<[2], [1], [1], [2], [0, 0, 0, 1, 1, 2], [0], [0]>} : vector<2x1x8xbf16>, vector<2x8x96xbf16>, vector<2x1x96xf32> -> vector<2x1x96xf32>
    "tpu.trace_stop"() : () -> ()
    %722 = vector.shape_cast %721 : vector<2x1x96xf32> to vector<2x96xf32>
    %723 = arith.addf %722, %39 : vector<2x96xf32>
    %724 = arith.truncf %702 : vector<2x32xf32> to vector<2x32xbf16>
    %cst_160 = arith.constant dense<0.000000e+00> : vector<2x96xf32>
    %725 = tpu.matmul %724, %5, %cst_160 {dimension_numbers = #tpu.dot_dimension_numbers<[1], [0], [0], [1], [0, 0, 1, 1], [], []>} : vector<2x32xbf16>, vector<32x96xbf16>, vector<2x96xf32> -> vector<2x96xf32>
    %726 = vector.extract_strided_slice %723 {offsets = [0, 0], sizes = [2, 64], strides = [1, 1]} : vector<2x96xf32> to vector<2x64xf32>
    %727 = vector.extract_strided_slice %725 {offsets = [0, 0], sizes = [2, 64], strides = [1, 1]} : vector<2x96xf32> to vector<2x64xf32>
    %728 = arith.addf %726, %727 : vector<2x64xf32>
    %729 = arith.negf %728 : vector<2x64xf32>
    %730 = math.exp %729 : vector<2x64xf32>
    %cst_161 = arith.constant 1.000000e+00 : f32
    %731 = vector.broadcast %cst_161 : f32 to vector<2x64xf32>
    %732 = arith.addf %731, %730 : vector<2x64xf32>
    %733 = arith.divf %731, %732 : vector<2x64xf32>
    %734 = vector.extract_strided_slice %733 {offsets = [0, 0], sizes = [2, 32], strides = [1, 1]} : vector<2x64xf32> to vector<2x32xf32>
    %735 = vector.extract_strided_slice %733 {offsets = [0, 32], sizes = [2, 32], strides = [1, 1]} : vector<2x64xf32> to vector<2x32xf32>
    %736 = vector.extract_strided_slice %723 {offsets = [0, 64], sizes = [2, 32], strides = [1, 1]} : vector<2x96xf32> to vector<2x32xf32>
    %737 = vector.extract_strided_slice %725 {offsets = [0, 64], sizes = [2, 32], strides = [1, 1]} : vector<2x96xf32> to vector<2x32xf32>
    %738 = arith.addf %737, %30 : vector<2x32xf32>
    %739 = arith.mulf %734, %738 : vector<2x32xf32>
    %740 = arith.addf %736, %739 : vector<2x32xf32>
    %741 = math.tanh %740 : vector<2x32xf32>
    %cst_162 = arith.constant 1.000000e+00 : f32
    %742 = vector.broadcast %cst_162 : f32 to vector<2x32xf32>
    %743 = arith.subf %742, %735 : vector<2x32xf32>
    %744 = arith.mulf %743, %741 : vector<2x32xf32>
    %745 = arith.mulf %735, %702 : vector<2x32xf32>
    %746 = arith.addf %744, %745 : vector<2x32xf32>
    %747 = arith.truncf %746 : vector<2x32xf32> to vector<2x32xbf16>
    %cst_163 = arith.constant dense<0.000000e+00> : vector<2x16xf32>
    %748 = tpu.matmul %747, %9, %cst_163 {dimension_numbers = #tpu.dot_dimension_numbers<[1], [0], [0], [1], [0, 0, 1, 1], [], []>} : vector<2x32xbf16>, vector<32x16xbf16>, vector<2x16xf32> -> vector<2x16xf32>
    %749 = arith.addf %748, %42 : vector<2x16xf32>
    %cst_164 = arith.constant dense<0xFF800000> : vector<2xf32>
    %750 = vector.multi_reduction <maximumf>, %749, %cst_164 [1] : vector<2x16xf32> to vector<2xf32>
    %751 = vector.shape_cast %750 : vector<2xf32> to vector<2x1xf32>
    %752 = vector.broadcast %751 : vector<2x1xf32> to vector<2x16xf32>
    %753 = arith.cmpf oeq, %749, %752 : vector<2x16xf32>
    %c16_i32_165 = arith.constant 16 : i32
    %754 = vector.broadcast %c16_i32_165 : i32 to vector<2x16xi32>
    %755 = arith.select %753, %337, %754 : vector<2x16xi1>, vector<2x16xi32>
    %cst_166 = arith.constant dense<2147483647> : vector<2xi32>
    %756 = vector.multi_reduction <minsi>, %755, %cst_166 [1] : vector<2x16xi32> to vector<2xi32>
    %757 = vector.shape_cast %756 : vector<2xi32> to vector<2x1xi32>
    %758 = vector.broadcast %757 : vector<2x1xi32> to vector<2x16xi32>
    %759 = arith.cmpi eq, %337, %758 : vector<2x16xi32>
    %760 = arith.extui %759 : vector<2x16xi1> to vector<2x16xi32>
    %761 = arith.sitofp %760 : vector<2x16xi32> to vector<2x16xf32>
    %762 = arith.truncf %761 : vector<2x16xf32> to vector<2x16xbf16>
    %cst_167 = arith.constant dense<0.000000e+00> : vector<2x96xf32>
    %763 = tpu.matmul %762, %336, %cst_167 {dimension_numbers = #tpu.dot_dimension_numbers<[1], [0], [0], [1], [0, 0, 1, 1], [], []>} : vector<2x16xbf16>, vector<16x96xbf16>, vector<2x96xf32> -> vector<2x96xf32>
    %764 = arith.truncf %746 : vector<2x32xf32> to vector<2x32xbf16>
    %cst_168 = arith.constant dense<0.000000e+00> : vector<2x96xf32>
    %765 = tpu.matmul %764, %3, %cst_168 {dimension_numbers = #tpu.dot_dimension_numbers<[1], [0], [0], [1], [0, 0, 1, 1], [], []>} : vector<2x32xbf16>, vector<32x96xbf16>, vector<2x96xf32> -> vector<2x96xf32>
    %766 = vector.extract_strided_slice %763 {offsets = [0, 0], sizes = [2, 64], strides = [1, 1]} : vector<2x96xf32> to vector<2x64xf32>
    %767 = vector.extract_strided_slice %765 {offsets = [0, 0], sizes = [2, 64], strides = [1, 1]} : vector<2x96xf32> to vector<2x64xf32>
    %768 = arith.addf %766, %767 : vector<2x64xf32>
    %769 = arith.negf %768 : vector<2x64xf32>
    %770 = math.exp %769 : vector<2x64xf32>
    %cst_169 = arith.constant 1.000000e+00 : f32
    %771 = vector.broadcast %cst_169 : f32 to vector<2x64xf32>
    %772 = arith.addf %771, %770 : vector<2x64xf32>
    %773 = arith.divf %771, %772 : vector<2x64xf32>
    %774 = vector.extract_strided_slice %773 {offsets = [0, 0], sizes = [2, 32], strides = [1, 1]} : vector<2x64xf32> to vector<2x32xf32>
    %775 = vector.extract_strided_slice %773 {offsets = [0, 32], sizes = [2, 32], strides = [1, 1]} : vector<2x64xf32> to vector<2x32xf32>
    %776 = vector.extract_strided_slice %763 {offsets = [0, 64], sizes = [2, 32], strides = [1, 1]} : vector<2x96xf32> to vector<2x32xf32>
    %777 = vector.extract_strided_slice %765 {offsets = [0, 64], sizes = [2, 32], strides = [1, 1]} : vector<2x96xf32> to vector<2x32xf32>
    %778 = arith.addf %777, %27 : vector<2x32xf32>
    %779 = arith.mulf %774, %778 : vector<2x32xf32>
    %780 = arith.addf %776, %779 : vector<2x32xf32>
    %781 = math.tanh %780 : vector<2x32xf32>
    %cst_170 = arith.constant 1.000000e+00 : f32
    %782 = vector.broadcast %cst_170 : f32 to vector<2x32xf32>
    %783 = arith.subf %782, %775 : vector<2x32xf32>
    %784 = arith.mulf %783, %781 : vector<2x32xf32>
    %785 = arith.mulf %775, %746 : vector<2x32xf32>
    %786 = arith.addf %784, %785 : vector<2x32xf32>
    %787 = vector.shape_cast %786 : vector<2x32xf32> to vector<2x1x32xf32>
    %788 = arith.truncf %787 : vector<2x1x32xf32> to vector<2x1x32xbf16>
    "tpu.trace_start"() <{level = 10 : i32, message = "bqh,bhs->bqs"}> : () -> ()
    %cst_171 = arith.constant dense<0.000000e+00> : vector<2x1x8xf32>
    %789 = tpu.matmul %788, %307, %cst_171 {dimension_numbers = #tpu.dot_dimension_numbers<[2], [1], [1], [2], [0, 0, 0, 1, 1, 2], [0], [0]>} : vector<2x1x32xbf16>, vector<2x32x8xbf16>, vector<2x1x8xf32> -> vector<2x1x8xf32>
    "tpu.trace_stop"() : () -> ()
    %790 = vector.shape_cast %789 : vector<2x1x8xf32> to vector<2x8xf32>
    %cst_172 = arith.constant 0.176776692 : f32
    %791 = vector.broadcast %cst_172 : f32 to vector<2x8xf32>
    %792 = arith.mulf %790, %791 : vector<2x8xf32>
    %cst_173 = arith.constant dense<0xFF800000> : vector<2xf32>
    %793 = vector.multi_reduction <maximumf>, %792, %cst_173 [1] : vector<2x8xf32> to vector<2xf32>
    %794 = vector.shape_cast %793 : vector<2xf32> to vector<2x1xf32>
    %795 = vector.broadcast %794 : vector<2x1xf32> to vector<2x8xf32>
    %796 = arith.subf %792, %795 : vector<2x8xf32>
    %797 = math.exp %796 : vector<2x8xf32>
    %cst_174 = arith.constant dense<0.000000e+00> : vector<2xf32>
    %798 = vector.multi_reduction <add>, %797, %cst_174 [1] : vector<2x8xf32> to vector<2xf32>
    %799 = vector.shape_cast %798 : vector<2xf32> to vector<2x1xf32>
    %800 = tpu.reciprocal %799 {approx = true} : vector<2x1xf32> -> vector<2x1xf32>
    %801 = vector.broadcast %800 : vector<2x1xf32> to vector<2x8xf32>
    %802 = arith.mulf %797, %801 : vector<2x8xf32>
    %803 = vector.shape_cast %802 : vector<2x8xf32> to vector<2x1x8xf32>
    %804 = arith.truncf %803 : vector<2x1x8xf32> to vector<2x1x8xbf16>
    "tpu.trace_start"() <{level = 10 : i32, message = "bqs,bsg->bqg"}> : () -> ()
    %cst_175 = arith.constant dense<0.000000e+00> : vector<2x1x96xf32>
    %805 = tpu.matmul %804, %317, %cst_175 {dimension_numbers = #tpu.dot_dimension_numbers<[2], [1], [1], [2], [0, 0, 0, 1, 1, 2], [0], [0]>} : vector<2x1x8xbf16>, vector<2x8x96xbf16>, vector<2x1x96xf32> -> vector<2x1x96xf32>
    "tpu.trace_stop"() : () -> ()
    %806 = vector.shape_cast %805 : vector<2x1x96xf32> to vector<2x96xf32>
    %807 = arith.addf %806, %39 : vector<2x96xf32>
    %808 = arith.truncf %786 : vector<2x32xf32> to vector<2x32xbf16>
    %cst_176 = arith.constant dense<0.000000e+00> : vector<2x96xf32>
    %809 = tpu.matmul %808, %5, %cst_176 {dimension_numbers = #tpu.dot_dimension_numbers<[1], [0], [0], [1], [0, 0, 1, 1], [], []>} : vector<2x32xbf16>, vector<32x96xbf16>, vector<2x96xf32> -> vector<2x96xf32>
    %810 = vector.extract_strided_slice %807 {offsets = [0, 0], sizes = [2, 64], strides = [1, 1]} : vector<2x96xf32> to vector<2x64xf32>
    %811 = vector.extract_strided_slice %809 {offsets = [0, 0], sizes = [2, 64], strides = [1, 1]} : vector<2x96xf32> to vector<2x64xf32>
    %812 = arith.addf %810, %811 : vector<2x64xf32>
    %813 = arith.negf %812 : vector<2x64xf32>
    %814 = math.exp %813 : vector<2x64xf32>
    %cst_177 = arith.constant 1.000000e+00 : f32
    %815 = vector.broadcast %cst_177 : f32 to vector<2x64xf32>
    %816 = arith.addf %815, %814 : vector<2x64xf32>
    %817 = arith.divf %815, %816 : vector<2x64xf32>
    %818 = vector.extract_strided_slice %817 {offsets = [0, 0], sizes = [2, 32], strides = [1, 1]} : vector<2x64xf32> to vector<2x32xf32>
    %819 = vector.extract_strided_slice %817 {offsets = [0, 32], sizes = [2, 32], strides = [1, 1]} : vector<2x64xf32> to vector<2x32xf32>
    %820 = vector.extract_strided_slice %807 {offsets = [0, 64], sizes = [2, 32], strides = [1, 1]} : vector<2x96xf32> to vector<2x32xf32>
    %821 = vector.extract_strided_slice %809 {offsets = [0, 64], sizes = [2, 32], strides = [1, 1]} : vector<2x96xf32> to vector<2x32xf32>
    %822 = arith.addf %821, %30 : vector<2x32xf32>
    %823 = arith.mulf %818, %822 : vector<2x32xf32>
    %824 = arith.addf %820, %823 : vector<2x32xf32>
    %825 = math.tanh %824 : vector<2x32xf32>
    %cst_178 = arith.constant 1.000000e+00 : f32
    %826 = vector.broadcast %cst_178 : f32 to vector<2x32xf32>
    %827 = arith.subf %826, %819 : vector<2x32xf32>
    %828 = arith.mulf %827, %825 : vector<2x32xf32>
    %829 = arith.mulf %819, %786 : vector<2x32xf32>
    %830 = arith.addf %828, %829 : vector<2x32xf32>
    %831 = arith.truncf %830 : vector<2x32xf32> to vector<2x32xbf16>
    %cst_179 = arith.constant dense<0.000000e+00> : vector<2x16xf32>
    %832 = tpu.matmul %831, %9, %cst_179 {dimension_numbers = #tpu.dot_dimension_numbers<[1], [0], [0], [1], [0, 0, 1, 1], [], []>} : vector<2x32xbf16>, vector<32x16xbf16>, vector<2x16xf32> -> vector<2x16xf32>
    %833 = arith.addf %832, %42 : vector<2x16xf32>
    %cst_180 = arith.constant dense<0xFF800000> : vector<2xf32>
    %834 = vector.multi_reduction <maximumf>, %833, %cst_180 [1] : vector<2x16xf32> to vector<2xf32>
    %835 = vector.shape_cast %834 : vector<2xf32> to vector<2x1xf32>
    %836 = vector.broadcast %835 : vector<2x1xf32> to vector<2x16xf32>
    %837 = arith.cmpf oeq, %833, %836 : vector<2x16xf32>
    %c16_i32_181 = arith.constant 16 : i32
    %838 = vector.broadcast %c16_i32_181 : i32 to vector<2x16xi32>
    %839 = arith.select %837, %337, %838 : vector<2x16xi1>, vector<2x16xi32>
    %cst_182 = arith.constant dense<2147483647> : vector<2xi32>
    %840 = vector.multi_reduction <minsi>, %839, %cst_182 [1] : vector<2x16xi32> to vector<2xi32>
    %841 = vector.shape_cast %840 : vector<2xi32> to vector<2x1xi32>
    %842 = vector.broadcast %841 : vector<2x1xi32> to vector<2x16xi32>
    %843 = arith.cmpi eq, %337, %842 : vector<2x16xi32>
    %844 = arith.extui %843 : vector<2x16xi1> to vector<2x16xi32>
    %845 = arith.sitofp %844 : vector<2x16xi32> to vector<2x16xf32>
    %846 = arith.truncf %845 : vector<2x16xf32> to vector<2x16xbf16>
    %cst_183 = arith.constant dense<0.000000e+00> : vector<2x96xf32>
    %847 = tpu.matmul %846, %336, %cst_183 {dimension_numbers = #tpu.dot_dimension_numbers<[1], [0], [0], [1], [0, 0, 1, 1], [], []>} : vector<2x16xbf16>, vector<16x96xbf16>, vector<2x96xf32> -> vector<2x96xf32>
    %848 = arith.truncf %830 : vector<2x32xf32> to vector<2x32xbf16>
    %cst_184 = arith.constant dense<0.000000e+00> : vector<2x96xf32>
    %849 = tpu.matmul %848, %3, %cst_184 {dimension_numbers = #tpu.dot_dimension_numbers<[1], [0], [0], [1], [0, 0, 1, 1], [], []>} : vector<2x32xbf16>, vector<32x96xbf16>, vector<2x96xf32> -> vector<2x96xf32>
    %850 = vector.extract_strided_slice %847 {offsets = [0, 0], sizes = [2, 64], strides = [1, 1]} : vector<2x96xf32> to vector<2x64xf32>
    %851 = vector.extract_strided_slice %849 {offsets = [0, 0], sizes = [2, 64], strides = [1, 1]} : vector<2x96xf32> to vector<2x64xf32>
    %852 = arith.addf %850, %851 : vector<2x64xf32>
    %853 = arith.negf %852 : vector<2x64xf32>
    %854 = math.exp %853 : vector<2x64xf32>
    %cst_185 = arith.constant 1.000000e+00 : f32
    %855 = vector.broadcast %cst_185 : f32 to vector<2x64xf32>
    %856 = arith.addf %855, %854 : vector<2x64xf32>
    %857 = arith.divf %855, %856 : vector<2x64xf32>
    %858 = vector.extract_strided_slice %857 {offsets = [0, 0], sizes = [2, 32], strides = [1, 1]} : vector<2x64xf32> to vector<2x32xf32>
    %859 = vector.extract_strided_slice %857 {offsets = [0, 32], sizes = [2, 32], strides = [1, 1]} : vector<2x64xf32> to vector<2x32xf32>
    %860 = vector.extract_strided_slice %847 {offsets = [0, 64], sizes = [2, 32], strides = [1, 1]} : vector<2x96xf32> to vector<2x32xf32>
    %861 = vector.extract_strided_slice %849 {offsets = [0, 64], sizes = [2, 32], strides = [1, 1]} : vector<2x96xf32> to vector<2x32xf32>
    %862 = arith.addf %861, %27 : vector<2x32xf32>
    %863 = arith.mulf %858, %862 : vector<2x32xf32>
    %864 = arith.addf %860, %863 : vector<2x32xf32>
    %865 = math.tanh %864 : vector<2x32xf32>
    %cst_186 = arith.constant 1.000000e+00 : f32
    %866 = vector.broadcast %cst_186 : f32 to vector<2x32xf32>
    %867 = arith.subf %866, %859 : vector<2x32xf32>
    %868 = arith.mulf %867, %865 : vector<2x32xf32>
    %869 = arith.mulf %859, %830 : vector<2x32xf32>
    %870 = arith.addf %868, %869 : vector<2x32xf32>
    %871 = vector.shape_cast %870 : vector<2x32xf32> to vector<2x1x32xf32>
    %872 = arith.truncf %871 : vector<2x1x32xf32> to vector<2x1x32xbf16>
    "tpu.trace_start"() <{level = 10 : i32, message = "bqh,bhs->bqs"}> : () -> ()
    %cst_187 = arith.constant dense<0.000000e+00> : vector<2x1x8xf32>
    %873 = tpu.matmul %872, %307, %cst_187 {dimension_numbers = #tpu.dot_dimension_numbers<[2], [1], [1], [2], [0, 0, 0, 1, 1, 2], [0], [0]>} : vector<2x1x32xbf16>, vector<2x32x8xbf16>, vector<2x1x8xf32> -> vector<2x1x8xf32>
    "tpu.trace_stop"() : () -> ()
    %874 = vector.shape_cast %873 : vector<2x1x8xf32> to vector<2x8xf32>
    %cst_188 = arith.constant 0.176776692 : f32
    %875 = vector.broadcast %cst_188 : f32 to vector<2x8xf32>
    %876 = arith.mulf %874, %875 : vector<2x8xf32>
    %cst_189 = arith.constant dense<0xFF800000> : vector<2xf32>
    %877 = vector.multi_reduction <maximumf>, %876, %cst_189 [1] : vector<2x8xf32> to vector<2xf32>
    %878 = vector.shape_cast %877 : vector<2xf32> to vector<2x1xf32>
    %879 = vector.broadcast %878 : vector<2x1xf32> to vector<2x8xf32>
    %880 = arith.subf %876, %879 : vector<2x8xf32>
    %881 = math.exp %880 : vector<2x8xf32>
    %cst_190 = arith.constant dense<0.000000e+00> : vector<2xf32>
    %882 = vector.multi_reduction <add>, %881, %cst_190 [1] : vector<2x8xf32> to vector<2xf32>
    %883 = vector.shape_cast %882 : vector<2xf32> to vector<2x1xf32>
    %884 = tpu.reciprocal %883 {approx = true} : vector<2x1xf32> -> vector<2x1xf32>
    %885 = vector.broadcast %884 : vector<2x1xf32> to vector<2x8xf32>
    %886 = arith.mulf %881, %885 : vector<2x8xf32>
    %887 = vector.shape_cast %886 : vector<2x8xf32> to vector<2x1x8xf32>
    %888 = arith.truncf %887 : vector<2x1x8xf32> to vector<2x1x8xbf16>
    "tpu.trace_start"() <{level = 10 : i32, message = "bqs,bsg->bqg"}> : () -> ()
    %cst_191 = arith.constant dense<0.000000e+00> : vector<2x1x96xf32>
    %889 = tpu.matmul %888, %317, %cst_191 {dimension_numbers = #tpu.dot_dimension_numbers<[2], [1], [1], [2], [0, 0, 0, 1, 1, 2], [0], [0]>} : vector<2x1x8xbf16>, vector<2x8x96xbf16>, vector<2x1x96xf32> -> vector<2x1x96xf32>
    "tpu.trace_stop"() : () -> ()
    %890 = vector.shape_cast %889 : vector<2x1x96xf32> to vector<2x96xf32>
    %891 = arith.addf %890, %39 : vector<2x96xf32>
    %892 = arith.truncf %870 : vector<2x32xf32> to vector<2x32xbf16>
    %cst_192 = arith.constant dense<0.000000e+00> : vector<2x96xf32>
    %893 = tpu.matmul %892, %5, %cst_192 {dimension_numbers = #tpu.dot_dimension_numbers<[1], [0], [0], [1], [0, 0, 1, 1], [], []>} : vector<2x32xbf16>, vector<32x96xbf16>, vector<2x96xf32> -> vector<2x96xf32>
    %894 = vector.extract_strided_slice %891 {offsets = [0, 0], sizes = [2, 64], strides = [1, 1]} : vector<2x96xf32> to vector<2x64xf32>
    %895 = vector.extract_strided_slice %893 {offsets = [0, 0], sizes = [2, 64], strides = [1, 1]} : vector<2x96xf32> to vector<2x64xf32>
    %896 = arith.addf %894, %895 : vector<2x64xf32>
    %897 = arith.negf %896 : vector<2x64xf32>
    %898 = math.exp %897 : vector<2x64xf32>
    %cst_193 = arith.constant 1.000000e+00 : f32
    %899 = vector.broadcast %cst_193 : f32 to vector<2x64xf32>
    %900 = arith.addf %899, %898 : vector<2x64xf32>
    %901 = arith.divf %899, %900 : vector<2x64xf32>
    %902 = vector.extract_strided_slice %901 {offsets = [0, 0], sizes = [2, 32], strides = [1, 1]} : vector<2x64xf32> to vector<2x32xf32>
    %903 = vector.extract_strided_slice %901 {offsets = [0, 32], sizes = [2, 32], strides = [1, 1]} : vector<2x64xf32> to vector<2x32xf32>
    %904 = vector.extract_strided_slice %891 {offsets = [0, 64], sizes = [2, 32], strides = [1, 1]} : vector<2x96xf32> to vector<2x32xf32>
    %905 = vector.extract_strided_slice %893 {offsets = [0, 64], sizes = [2, 32], strides = [1, 1]} : vector<2x96xf32> to vector<2x32xf32>
    %906 = arith.addf %905, %30 : vector<2x32xf32>
    %907 = arith.mulf %902, %906 : vector<2x32xf32>
    %908 = arith.addf %904, %907 : vector<2x32xf32>
    %909 = math.tanh %908 : vector<2x32xf32>
    %cst_194 = arith.constant 1.000000e+00 : f32
    %910 = vector.broadcast %cst_194 : f32 to vector<2x32xf32>
    %911 = arith.subf %910, %903 : vector<2x32xf32>
    %912 = arith.mulf %911, %909 : vector<2x32xf32>
    %913 = arith.mulf %903, %870 : vector<2x32xf32>
    %914 = arith.addf %912, %913 : vector<2x32xf32>
    %915 = arith.truncf %914 : vector<2x32xf32> to vector<2x32xbf16>
    %cst_195 = arith.constant dense<0.000000e+00> : vector<2x16xf32>
    %916 = tpu.matmul %915, %9, %cst_195 {dimension_numbers = #tpu.dot_dimension_numbers<[1], [0], [0], [1], [0, 0, 1, 1], [], []>} : vector<2x32xbf16>, vector<32x16xbf16>, vector<2x16xf32> -> vector<2x16xf32>
    %917 = arith.addf %916, %42 : vector<2x16xf32>
    %cst_196 = arith.constant dense<0xFF800000> : vector<2xf32>
    %918 = vector.multi_reduction <maximumf>, %917, %cst_196 [1] : vector<2x16xf32> to vector<2xf32>
    %919 = vector.shape_cast %918 : vector<2xf32> to vector<2x1xf32>
    %920 = vector.broadcast %919 : vector<2x1xf32> to vector<2x16xf32>
    %921 = arith.cmpf oeq, %917, %920 : vector<2x16xf32>
    %c16_i32_197 = arith.constant 16 : i32
    %922 = vector.broadcast %c16_i32_197 : i32 to vector<2x16xi32>
    %923 = arith.select %921, %337, %922 : vector<2x16xi1>, vector<2x16xi32>
    %cst_198 = arith.constant dense<2147483647> : vector<2xi32>
    %924 = vector.multi_reduction <minsi>, %923, %cst_198 [1] : vector<2x16xi32> to vector<2xi32>
    %925 = vector.shape_cast %924 : vector<2xi32> to vector<2x1xi32>
    %926 = vector.broadcast %925 : vector<2x1xi32> to vector<2x16xi32>
    %927 = arith.cmpi eq, %337, %926 : vector<2x16xi32>
    %928 = arith.extui %927 : vector<2x16xi1> to vector<2x16xi32>
    %929 = arith.sitofp %928 : vector<2x16xi32> to vector<2x16xf32>
    %930 = arith.truncf %929 : vector<2x16xf32> to vector<2x16xbf16>
    %cst_199 = arith.constant dense<0.000000e+00> : vector<2x96xf32>
    %931 = tpu.matmul %930, %336, %cst_199 {dimension_numbers = #tpu.dot_dimension_numbers<[1], [0], [0], [1], [0, 0, 1, 1], [], []>} : vector<2x16xbf16>, vector<16x96xbf16>, vector<2x96xf32> -> vector<2x96xf32>
    %932 = arith.truncf %914 : vector<2x32xf32> to vector<2x32xbf16>
    %cst_200 = arith.constant dense<0.000000e+00> : vector<2x96xf32>
    %933 = tpu.matmul %932, %3, %cst_200 {dimension_numbers = #tpu.dot_dimension_numbers<[1], [0], [0], [1], [0, 0, 1, 1], [], []>} : vector<2x32xbf16>, vector<32x96xbf16>, vector<2x96xf32> -> vector<2x96xf32>
    %934 = vector.extract_strided_slice %931 {offsets = [0, 0], sizes = [2, 64], strides = [1, 1]} : vector<2x96xf32> to vector<2x64xf32>
    %935 = vector.extract_strided_slice %933 {offsets = [0, 0], sizes = [2, 64], strides = [1, 1]} : vector<2x96xf32> to vector<2x64xf32>
    %936 = arith.addf %934, %935 : vector<2x64xf32>
    %937 = arith.negf %936 : vector<2x64xf32>
    %938 = math.exp %937 : vector<2x64xf32>
    %cst_201 = arith.constant 1.000000e+00 : f32
    %939 = vector.broadcast %cst_201 : f32 to vector<2x64xf32>
    %940 = arith.addf %939, %938 : vector<2x64xf32>
    %941 = arith.divf %939, %940 : vector<2x64xf32>
    %942 = vector.extract_strided_slice %941 {offsets = [0, 0], sizes = [2, 32], strides = [1, 1]} : vector<2x64xf32> to vector<2x32xf32>
    %943 = vector.extract_strided_slice %941 {offsets = [0, 32], sizes = [2, 32], strides = [1, 1]} : vector<2x64xf32> to vector<2x32xf32>
    %944 = vector.extract_strided_slice %931 {offsets = [0, 64], sizes = [2, 32], strides = [1, 1]} : vector<2x96xf32> to vector<2x32xf32>
    %945 = vector.extract_strided_slice %933 {offsets = [0, 64], sizes = [2, 32], strides = [1, 1]} : vector<2x96xf32> to vector<2x32xf32>
    %946 = arith.addf %945, %27 : vector<2x32xf32>
    %947 = arith.mulf %942, %946 : vector<2x32xf32>
    %948 = arith.addf %944, %947 : vector<2x32xf32>
    %949 = math.tanh %948 : vector<2x32xf32>
    %cst_202 = arith.constant 1.000000e+00 : f32
    %950 = vector.broadcast %cst_202 : f32 to vector<2x32xf32>
    %951 = arith.subf %950, %943 : vector<2x32xf32>
    %952 = arith.mulf %951, %949 : vector<2x32xf32>
    %953 = arith.mulf %943, %914 : vector<2x32xf32>
    %954 = arith.addf %952, %953 : vector<2x32xf32>
    %955 = vector.shape_cast %954 : vector<2x32xf32> to vector<2x1x32xf32>
    %956 = arith.truncf %955 : vector<2x1x32xf32> to vector<2x1x32xbf16>
    "tpu.trace_start"() <{level = 10 : i32, message = "bqh,bhs->bqs"}> : () -> ()
    %cst_203 = arith.constant dense<0.000000e+00> : vector<2x1x8xf32>
    %957 = tpu.matmul %956, %307, %cst_203 {dimension_numbers = #tpu.dot_dimension_numbers<[2], [1], [1], [2], [0, 0, 0, 1, 1, 2], [0], [0]>} : vector<2x1x32xbf16>, vector<2x32x8xbf16>, vector<2x1x8xf32> -> vector<2x1x8xf32>
    "tpu.trace_stop"() : () -> ()
    %958 = vector.shape_cast %957 : vector<2x1x8xf32> to vector<2x8xf32>
    %cst_204 = arith.constant 0.176776692 : f32
    %959 = vector.broadcast %cst_204 : f32 to vector<2x8xf32>
    %960 = arith.mulf %958, %959 : vector<2x8xf32>
    %cst_205 = arith.constant dense<0xFF800000> : vector<2xf32>
    %961 = vector.multi_reduction <maximumf>, %960, %cst_205 [1] : vector<2x8xf32> to vector<2xf32>
    %962 = vector.shape_cast %961 : vector<2xf32> to vector<2x1xf32>
    %963 = vector.broadcast %962 : vector<2x1xf32> to vector<2x8xf32>
    %964 = arith.subf %960, %963 : vector<2x8xf32>
    %965 = math.exp %964 : vector<2x8xf32>
    %cst_206 = arith.constant dense<0.000000e+00> : vector<2xf32>
    %966 = vector.multi_reduction <add>, %965, %cst_206 [1] : vector<2x8xf32> to vector<2xf32>
    %967 = vector.shape_cast %966 : vector<2xf32> to vector<2x1xf32>
    %968 = tpu.reciprocal %967 {approx = true} : vector<2x1xf32> -> vector<2x1xf32>
    %969 = vector.broadcast %968 : vector<2x1xf32> to vector<2x8xf32>
    %970 = arith.mulf %965, %969 : vector<2x8xf32>
    %971 = vector.shape_cast %970 : vector<2x8xf32> to vector<2x1x8xf32>
    %972 = arith.truncf %971 : vector<2x1x8xf32> to vector<2x1x8xbf16>
    "tpu.trace_start"() <{level = 10 : i32, message = "bqs,bsg->bqg"}> : () -> ()
    %cst_207 = arith.constant dense<0.000000e+00> : vector<2x1x96xf32>
    %973 = tpu.matmul %972, %317, %cst_207 {dimension_numbers = #tpu.dot_dimension_numbers<[2], [1], [1], [2], [0, 0, 0, 1, 1, 2], [0], [0]>} : vector<2x1x8xbf16>, vector<2x8x96xbf16>, vector<2x1x96xf32> -> vector<2x1x96xf32>
    "tpu.trace_stop"() : () -> ()
    %974 = vector.shape_cast %973 : vector<2x1x96xf32> to vector<2x96xf32>
    %975 = arith.addf %974, %39 : vector<2x96xf32>
    %976 = arith.truncf %954 : vector<2x32xf32> to vector<2x32xbf16>
    %cst_208 = arith.constant dense<0.000000e+00> : vector<2x96xf32>
    %977 = tpu.matmul %976, %5, %cst_208 {dimension_numbers = #tpu.dot_dimension_numbers<[1], [0], [0], [1], [0, 0, 1, 1], [], []>} : vector<2x32xbf16>, vector<32x96xbf16>, vector<2x96xf32> -> vector<2x96xf32>
    %978 = vector.extract_strided_slice %975 {offsets = [0, 0], sizes = [2, 64], strides = [1, 1]} : vector<2x96xf32> to vector<2x64xf32>
    %979 = vector.extract_strided_slice %977 {offsets = [0, 0], sizes = [2, 64], strides = [1, 1]} : vector<2x96xf32> to vector<2x64xf32>
    %980 = arith.addf %978, %979 : vector<2x64xf32>
    %981 = arith.negf %980 : vector<2x64xf32>
    %982 = math.exp %981 : vector<2x64xf32>
    %cst_209 = arith.constant 1.000000e+00 : f32
    %983 = vector.broadcast %cst_209 : f32 to vector<2x64xf32>
    %984 = arith.addf %983, %982 : vector<2x64xf32>
    %985 = arith.divf %983, %984 : vector<2x64xf32>
    %986 = vector.extract_strided_slice %985 {offsets = [0, 0], sizes = [2, 32], strides = [1, 1]} : vector<2x64xf32> to vector<2x32xf32>
    %987 = vector.extract_strided_slice %985 {offsets = [0, 32], sizes = [2, 32], strides = [1, 1]} : vector<2x64xf32> to vector<2x32xf32>
    %988 = vector.extract_strided_slice %975 {offsets = [0, 64], sizes = [2, 32], strides = [1, 1]} : vector<2x96xf32> to vector<2x32xf32>
    %989 = vector.extract_strided_slice %977 {offsets = [0, 64], sizes = [2, 32], strides = [1, 1]} : vector<2x96xf32> to vector<2x32xf32>
    %990 = arith.addf %989, %30 : vector<2x32xf32>
    %991 = arith.mulf %986, %990 : vector<2x32xf32>
    %992 = arith.addf %988, %991 : vector<2x32xf32>
    %993 = math.tanh %992 : vector<2x32xf32>
    %cst_210 = arith.constant 1.000000e+00 : f32
    %994 = vector.broadcast %cst_210 : f32 to vector<2x32xf32>
    %995 = arith.subf %994, %987 : vector<2x32xf32>
    %996 = arith.mulf %995, %993 : vector<2x32xf32>
    %997 = arith.mulf %987, %954 : vector<2x32xf32>
    %998 = arith.addf %996, %997 : vector<2x32xf32>
    %999 = arith.truncf %998 : vector<2x32xf32> to vector<2x32xbf16>
    %cst_211 = arith.constant dense<0.000000e+00> : vector<2x16xf32>
    %1000 = tpu.matmul %999, %9, %cst_211 {dimension_numbers = #tpu.dot_dimension_numbers<[1], [0], [0], [1], [0, 0, 1, 1], [], []>} : vector<2x32xbf16>, vector<32x16xbf16>, vector<2x16xf32> -> vector<2x16xf32>
    %1001 = arith.addf %1000, %42 : vector<2x16xf32>
    %1002 = tpu.concatenate %413, %497, %581, %665, %749, %833, %917, %1001 in 1 : vector<2x16xf32>, vector<2x16xf32>, vector<2x16xf32>, vector<2x16xf32>, vector<2x16xf32>, vector<2x16xf32>, vector<2x16xf32>, vector<2x16xf32> -> vector<2x128xf32>
    %c0_212 = arith.constant 0 : index
    %c0_213 = arith.constant 0 : index
    %1003 = vector.load %arg20[%c0_212, %c0_213] : memref<2x128xf32, #tpu.memory_space<vmem>>, vector<2x128xf32>
    tpu.vector_store %arg20[%c0_212, %c0_213], %1002 {strides = array<i32>} : memref<2x128xf32, #tpu.memory_space<vmem>>, vector<2x128xf32>,
    %1004 = tpu.concatenate %382, %466, %550, %634, %718, %802, %886, %970 in 1 : vector<2x8xf32>, vector<2x8xf32>, vector<2x8xf32>, vector<2x8xf32>, vector<2x8xf32>, vector<2x8xf32>, vector<2x8xf32>, vector<2x8xf32> -> vector<2x64xf32>
    %c0_214 = arith.constant 0 : index
    %c0_215 = arith.constant 0 : index
    %1005 = vector.load %arg21[%c0_214, %c0_215] : memref<2x64xf32, #tpu.memory_space<vmem>>, vector<2x64xf32>
    tpu.vector_store %arg21[%c0_214, %c0_215], %1004 {strides = array<i32>} : memref<2x64xf32, #tpu.memory_space<vmem>>, vector<2x64xf32>,
    return
  }
}

</mosaic_0001>

<llo_original>
// kernel: conditional_seq2seq_forward.1
$region0: #{conditional_seq2seq_forward.1}
  #allocation0 [shape = 'u32[]', space=smem, size = 0x4, offset = 0x4, fixed_abs, tag = 'smem constant byte address 0x4 - core index']
  #allocation1 [shape = 'u32[144,128]{1,0:T(1,128)}', space=vmem, size = 0x12000, scoped, tag = 'internal scratch']
  %s0 = inlined_call_operand.vmem [shape: s32[8,2], index: 0, kind: input, shape index: {}]
  %s1 = inlined_call_operand.hbm [shape: f32[16,16], index: 1, kind: input, shape index: {}]
  %s2 = inlined_call_operand.hbm [shape: f32[16,96], index: 2, kind: input, shape index: {}]
  %s3 = inlined_call_operand.vmem [shape: f32[32,96], index: 3, kind: input, shape index: {}]
  %s4 = inlined_call_operand.vmem [shape: f32[1,96], index: 4, kind: input, shape index: {}]
  %s5 = inlined_call_operand.vmem [shape: f32[1,96], index: 5, kind: input, shape index: {}]
  %s6 = inlined_call_operand.vmem [shape: f32[32,32], index: 6, kind: input, shape index: {}]
  %s7 = inlined_call_operand.hbm [shape: f32[1,32], index: 7, kind: input, shape index: {}]
  %s8 = inlined_call_operand.hbm [shape: f32[16,16], index: 8, kind: input, shape index: {}]
  %s9 = inlined_call_operand.hbm [shape: f32[16,96], index: 9, kind: input, shape index: {}]
  %s10 = inlined_call_operand.hbm [shape: f32[32,96], index: 10, kind: input, shape index: {}]
  %s11 = inlined_call_operand.hbm [shape: f32[1,96], index: 11, kind: input, shape index: {}]
  %s12 = inlined_call_operand.hbm [shape: f32[1,96], index: 12, kind: input, shape index: {}]
  %s13 = inlined_call_operand.hbm [shape: f32[32,32], index: 13, kind: input, shape index: {}]
  %s14 = inlined_call_operand.hbm [shape: f32[32,96], index: 14, kind: input, shape index: {}]
  %s15 = inlined_call_operand.hbm [shape: f32[32,96], index: 15, kind: input, shape index: {}]
  %s16 = inlined_call_operand.hbm [shape: f32[1,96], index: 16, kind: input, shape index: {}]
  %s17 = inlined_call_operand.hbm [shape: f32[1,96], index: 17, kind: input, shape index: {}]
  %s18 = inlined_call_operand.vmem [shape: f32[32,16], index: 18, kind: input, shape index: {}]
  %s19 = inlined_call_operand.hbm [shape: f32[1,16], index: 19, kind: input, shape index: {}]
  %s20 = inlined_call_operand.vmem [shape: f32[2,128], index: 20, kind: output, shape index: {0}]
  %s21 = inlined_call_operand.vmem [shape: f32[2,64], index: 21, kind: output, shape index: {1}]
  %22 = xla_tuple %s20, %s21
  %s23 = sld [smem:[#allocation0]]
  $region154: #{conditional_seq2seq_forward.1} parent=0
    _
  %s25 = ssub.s32 1, %s23
  %s26 = scalar_select 0, %s25, %s23
  $region1: #{conditional_seq2seq_forward.1} parent=0
    #allocation2 [shape = 'u8[8192]{0}', space=vmem, size = 0x2000, scoped, tag = 'input window, operand 1, single buffered']
    #allocation3 [shape = 's32[1]{0}', space=sflag, size = 0x4, scoped, tag = 'scoped memory for conditional_seq2seq_forward.1']
    #allocation4 [shape = 'u8[8192]{0}', space=vmem, size = 0x2000, scoped, tag = 'input window, operand 2, single buffered']
    #allocation5 [shape = 's32[1]{0}', space=sflag, size = 0x4, scoped, tag = 'scoped memory for conditional_seq2seq_forward.1']
    #allocation6 [shape = 'u8[512]{0}', space=vmem, size = 0x400, scoped, tag = 'input window, operand 7, single buffered']
    #allocation7 [shape = 'u8[8192]{0}', space=vmem, size = 0x2000, scoped, tag = 'input window, operand 8, single buffered']
    #allocation8 [shape = 's32[1]{0}', space=sflag, size = 0x4, scoped, tag = 'scoped memory for conditional_seq2seq_forward.1']
    #allocation9 [shape = 'u8[8192]{0}', space=vmem, size = 0x2000, scoped, tag = 'input window, operand 9, single buffered']
    #allocation10 [shape = 'u8[16384]{0}', space=vmem, size = 0x4000, scoped, tag = 'input window, operand 10, single buffered']
    #allocation11 [shape = 's32[1]{0}', space=sflag, size = 0x4, scoped, tag = 'scoped memory for conditional_seq2seq_forward.1']
    #allocation12 [shape = 'u8[512]{0}', space=vmem, size = 0x400, scoped, tag = 'input window, operand 11, single buffered']
    #allocation13 [shape = 'u8[512]{0}', space=vmem, size = 0x400, scoped, tag = 'input window, operand 12, single buffered']
    #allocation14 [shape = 's32[1]{0}', space=sflag, size = 0x4, scoped, tag = 'scoped memory for conditional_seq2seq_forward.1']
    #allocation15 [shape = 'u8[16384]{0}', space=vmem, size = 0x4000, scoped, tag = 'input window, operand 13, single buffered']
    #allocation16 [shape = 'u8[16384]{0}', space=vmem, size = 0x4000, scoped, tag = 'input window, operand 14, single buffered']
    #allocation17 [shape = 's32[1]{0}', space=sflag, size = 0x4, scoped, tag = 'scoped memory for conditional_seq2seq_forward.1']
    #allocation18 [shape = 'u8[16384]{0}', space=vmem, size = 0x4000, scoped, tag = 'input window, operand 15, single buffered']
    #allocation19 [shape = 'u8[512]{0}', space=vmem, size = 0x400, scoped, tag = 'input window, operand 16, single buffered']
    #allocation20 [shape = 's32[1]{0}', space=sflag, size = 0x4, scoped, tag = 'scoped memory for conditional_seq2seq_forward.1']
    #allocation21 [shape = 'u8[512]{0}', space=vmem, size = 0x400, scoped, tag = 'input window, operand 17, single buffered']
    #allocation22 [shape = 'u8[512]{0}', space=vmem, size = 0x400, scoped, tag = 'input window, operand 19, single buffered']
    #allocation23 [shape = 's32[1]{0}', space=sflag, size = 0x4, scoped, tag = 'scoped memory for conditional_seq2seq_forward.1']
    %27 = vsyncpa [#allocation3], 0
    %28 = vsyncpa [#allocation5], 0
    %29 = vsyncpa [#allocation8], 0
    %30 = vsyncpa [#allocation11], 0
    %31 = vsyncpa [#allocation14], 0
    %32 = vsyncpa [#allocation17], 0
    %33 = vsyncpa [#allocation20], 0
    %34 = vsyncpa [#allocation23], 0
    // Predicated region
    $region2: #{conditional_seq2seq_forward.1} parent=1 // pred_check
      _
    $region3: #{conditional_seq2seq_forward.1} parent=1 // pred_check_branch
      %36 = sbr.rel (0) target = $region5
    $region4: #{conditional_seq2seq_forward.1} parent=1 // pred_region
      _
    $region5: #{conditional_seq2seq_forward.1} parent=1 // pred_fallthru
      _
    // Predicated region
    $region6: #{conditional_seq2seq_forward.1} parent=1 // pred_check
      _
    $region7: #{conditional_seq2seq_forward.1} parent=1 // pred_check_branch
      %38 = sbr.rel (0) target = $region9
    $region8: #{conditional_seq2seq_forward.1} parent=1 // pred_region
      %s40 = ssub.s32 256, 256
      %41 = vsyncadd [#allocation3], %s40
      %s42 = sshll.u32 [#allocation2], 4
      %s43 = int_to_ptr.vmem [resolvable:$true] %s42
      %48 = dma.hbm_to_vmem [thread:$0]  %s1, 256, %s43, [#allocation3], 128, 128, 8
    $region9: #{conditional_seq2seq_forward.1} parent=1 // pred_fallthru
      _
    // Predicated region
    $region10: #{conditional_seq2seq_forward.1} parent=1 // pred_check
      _
    $region11: #{conditional_seq2seq_forward.1} parent=1 // pred_check_branch
      %50 = sbr.rel (0) target = $region13
    $region12: #{conditional_seq2seq_forward.1} parent=1 // pred_region
      %s52 = ssub.s32 256, 256
      %53 = vsyncadd [#allocation5], %s52
      %s54 = sshll.u32 [#allocation4], 4
      %s55 = int_to_ptr.vmem [resolvable:$true] %s54
      %60 = dma.hbm_to_vmem [thread:$0]  %s2, 256, %s55, [#allocation5], 128, 128, 8
    $region13: #{conditional_seq2seq_forward.1} parent=1 // pred_fallthru
      _
    // Predicated region
    $region14: #{conditional_seq2seq_forward.1} parent=1 // pred_check
      _
    $region15: #{conditional_seq2seq_forward.1} parent=1 // pred_check_branch
      %62 = sbr.rel (0) target = $region17
    $region16: #{conditional_seq2seq_forward.1} parent=1 // pred_region
      _
    $region17: #{conditional_seq2seq_forward.1} parent=1 // pred_fallthru
      _
    // Predicated region
    $region18: #{conditional_seq2seq_forward.1} parent=1 // pred_check
      _
    $region19: #{conditional_seq2seq_forward.1} parent=1 // pred_check_branch
      %64 = sbr.rel (0) target = $region21
    $region20: #{conditional_seq2seq_forward.1} parent=1 // pred_region
      _
    $region21: #{conditional_seq2seq_forward.1} parent=1 // pred_fallthru
      _
    // Predicated region
    $region22: #{conditional_seq2seq_forward.1} parent=1 // pred_check
      _
    $region23: #{conditional_seq2seq_forward.1} parent=1 // pred_check_branch
      %66 = sbr.rel (0) target = $region25
    $region24: #{conditional_seq2seq_forward.1} parent=1 // pred_region
      _
    $region25: #{conditional_seq2seq_forward.1} parent=1 // pred_fallthru
      _
    // Predicated region
    $region26: #{conditional_seq2seq_forward.1} parent=1 // pred_check
      _
    $region27: #{conditional_seq2seq_forward.1} parent=1 // pred_check_branch
      %68 = sbr.rel (0) target = $region29
    $region28: #{conditional_seq2seq_forward.1} parent=1 // pred_region
      _
    $region29: #{conditional_seq2seq_forward.1} parent=1 // pred_fallthru
      _
    // Predicated region
    $region30: #{conditional_seq2seq_forward.1} parent=1 // pred_check
      _
    $region31: #{conditional_seq2seq_forward.1} parent=1 // pred_check_branch
      %70 = sbr.rel (0) target = $region33
    $region32: #{conditional_seq2seq_forward.1} parent=1 // pred_region
      %s72 = ssub.s32 16, 16
      %73 = vsyncadd [#allocation5], %s72
      %s75 = sshll.u32 [#allocation6], 4
      %s76 = int_to_ptr.vmem [resolvable:$true] %s75
      %78 = dma.hbm_to_vmem [thread:$0]  %s7, 16, %s76, [#allocation5]
    $region33: #{conditional_seq2seq_forward.1} parent=1 // pred_fallthru
      _
    // Predicated region
    $region34: #{conditional_seq2seq_forward.1} parent=1 // pred_check
      _
    $region35: #{conditional_seq2seq_forward.1} parent=1 // pred_check_branch
      %80 = sbr.rel (0) target = $region37
    $region36: #{conditional_seq2seq_forward.1} parent=1 // pred_region
      %s82 = ssub.s32 256, 256
      %83 = vsyncadd [#allocation8], %s82
      %s84 = sshll.u32 [#allocation7], 4
      %s85 = int_to_ptr.vmem [resolvable:$true] %s84
      %90 = dma.hbm_to_vmem [thread:$0]  %s8, 256, %s85, [#allocation8], 128, 128, 8
    $region37: #{conditional_seq2seq_forward.1} parent=1 // pred_fallthru
      _
    // Predicated region
    $region38: #{conditional_seq2seq_forward.1} parent=1 // pred_check
      _
    $region39: #{conditional_seq2seq_forward.1} parent=1 // pred_check_branch
      %92 = sbr.rel (0) target = $region41
    $region40: #{conditional_seq2seq_forward.1} parent=1 // pred_region
      %s94 = ssub.s32 256, 256
      %95 = vsyncadd [#allocation8], %s94
      %s96 = sshll.u32 [#allocation9], 4
      %s97 = int_to_ptr.vmem [resolvable:$true] %s96
      %102 = dma.hbm_to_vmem [thread:$0]  %s9, 256, %s97, [#allocation8], 128, 128, 8
    $region41: #{conditional_seq2seq_forward.1} parent=1 // pred_fallthru
      _
    // Predicated region
    $region42: #{conditional_seq2seq_forward.1} parent=1 // pred_check
      _
    $region43: #{conditional_seq2seq_forward.1} parent=1 // pred_check_branch
      %104 = sbr.rel (0) target = $region45
    $region44: #{conditional_seq2seq_forward.1} parent=1 // pred_region
      %s106 = ssub.s32 512, 512
      %107 = vsyncadd [#allocation11], %s106
      %s108 = sshll.u32 [#allocation10], 4
      %s109 = int_to_ptr.vmem [resolvable:$true] %s108
      %114 = dma.hbm_to_vmem [thread:$0]  %s10, 512, %s109, [#allocation11], 128, 128, 8
    $region45: #{conditional_seq2seq_forward.1} parent=1 // pred_fallthru
      _
    // Predicated region
    $region46: #{conditional_seq2seq_forward.1} parent=1 // pred_check
      _
    $region47: #{conditional_seq2seq_forward.1} parent=1 // pred_check_branch
      %116 = sbr.rel (0) target = $region49
    $region48: #{conditional_seq2seq_forward.1} parent=1 // pred_region
      %s118 = ssub.s32 16, 16
      %119 = vsyncadd [#allocation11], %s118
      %s121 = sshll.u32 [#allocation12], 4
      %s122 = int_to_ptr.vmem [resolvable:$true] %s121
      %124 = dma.hbm_to_vmem [thread:$0]  %s11, 16, %s122, [#allocation11]
    $region49: #{conditional_seq2seq_forward.1} parent=1 // pred_fallthru
      _
    // Predicated region
    $region50: #{conditional_seq2seq_forward.1} parent=1 // pred_check
      _
    $region51: #{conditional_seq2seq_forward.1} parent=1 // pred_check_branch
      %126 = sbr.rel (0) target = $region53
    $region52: #{conditional_seq2seq_forward.1} parent=1 // pred_region
      %s128 = ssub.s32 16, 16
      %129 = vsyncadd [#allocation14], %s128
      %s131 = sshll.u32 [#allocation13], 4
      %s132 = int_to_ptr.vmem [resolvable:$true] %s131
      %134 = dma.hbm_to_vmem [thread:$0]  %s12, 16, %s132, [#allocation14]
    $region53: #{conditional_seq2seq_forward.1} parent=1 // pred_fallthru
      _
    // Predicated region
    $region54: #{conditional_seq2seq_forward.1} parent=1 // pred_check
      _
    $region55: #{conditional_seq2seq_forward.1} parent=1 // pred_check_branch
      %136 = sbr.rel (0) target = $region57
    $region56: #{conditional_seq2seq_forward.1} parent=1 // pred_region
      %s138 = ssub.s32 512, 512
      %139 = vsyncadd [#allocation14], %s138
      %s140 = sshll.u32 [#allocation15], 4
      %s141 = int_to_ptr.vmem [resolvable:$true] %s140
      %146 = dma.hbm_to_vmem [thread:$0]  %s13, 512, %s141, [#allocation14], 128, 128, 8
    $region57: #{conditional_seq2seq_forward.1} parent=1 // pred_fallthru
      _
    // Predicated region
    $region58: #{conditional_seq2seq_forward.1} parent=1 // pred_check
      _
    $region59: #{conditional_seq2seq_forward.1} parent=1 // pred_check_branch
      %148 = sbr.rel (0) target = $region61
    $region60: #{conditional_seq2seq_forward.1} parent=1 // pred_region
      %s150 = ssub.s32 512, 512
      %151 = vsyncadd [#allocation17], %s150
      %s152 = sshll.u32 [#allocation16], 4
      %s153 = int_to_ptr.vmem [resolvable:$true] %s152
      %158 = dma.hbm_to_vmem [thread:$0]  %s14, 512, %s153, [#allocation17], 128, 128, 8
    $region61: #{conditional_seq2seq_forward.1} parent=1 // pred_fallthru
      _
    // Predicated region
    $region62: #{conditional_seq2seq_forward.1} parent=1 // pred_check
      _
    $region63: #{conditional_seq2seq_forward.1} parent=1 // pred_check_branch
      %160 = sbr.rel (0) target = $region65
    $region64: #{conditional_seq2seq_forward.1} parent=1 // pred_region
      %s162 = ssub.s32 512, 512
      %163 = vsyncadd [#allocation17], %s162
      %s164 = sshll.u32 [#allocation18], 4
      %s165 = int_to_ptr.vmem [resolvable:$true] %s164
      %170 = dma.hbm_to_vmem [thread:$0]  %s15, 512, %s165, [#allocation17], 128, 128, 8
    $region65: #{conditional_seq2seq_forward.1} parent=1 // pred_fallthru
      _
    // Predicated region
    $region66: #{conditional_seq2seq_forward.1} parent=1 // pred_check
      _
    $region67: #{conditional_seq2seq_forward.1} parent=1 // pred_check_branch
      %172 = sbr.rel (0) target = $region69
    $region68: #{conditional_seq2seq_forward.1} parent=1 // pred_region
      %s174 = ssub.s32 16, 16
      %175 = vsyncadd [#allocation20], %s174
      %s177 = sshll.u32 [#allocation19], 4
      %s178 = int_to_ptr.vmem [resolvable:$true] %s177
      %180 = dma.hbm_to_vmem [thread:$0]  %s16, 16, %s178, [#allocation20]
    $region69: #{conditional_seq2seq_forward.1} parent=1 // pred_fallthru
      _
    // Predicated region
    $region70: #{conditional_seq2seq_forward.1} parent=1 // pred_check
      _
    $region71: #{conditional_seq2seq_forward.1} parent=1 // pred_check_branch
      %182 = sbr.rel (0) target = $region73
    $region72: #{conditional_seq2seq_forward.1} parent=1 // pred_region
      %s184 = ssub.s32 16, 16
      %185 = vsyncadd [#allocation20], %s184
      %s187 = sshll.u32 [#allocation21], 4
      %s188 = int_to_ptr.vmem [resolvable:$true] %s187
      %190 = dma.hbm_to_vmem [thread:$0]  %s17, 16, %s188, [#allocation20]
    $region73: #{conditional_seq2seq_forward.1} parent=1 // pred_fallthru
      _
    // Predicated region
    $region74: #{conditional_seq2seq_forward.1} parent=1 // pred_check
      _
    $region75: #{conditional_seq2seq_forward.1} parent=1 // pred_check_branch
      %192 = sbr.rel (0) target = $region77
    $region76: #{conditional_seq2seq_forward.1} parent=1 // pred_region
      _
    $region77: #{conditional_seq2seq_forward.1} parent=1 // pred_fallthru
      _
    // Predicated region
    $region78: #{conditional_seq2seq_forward.1} parent=1 // pred_check
      _
    $region79: #{conditional_seq2seq_forward.1} parent=1 // pred_check_branch
      %194 = sbr.rel (0) target = $region81
    $region80: #{conditional_seq2seq_forward.1} parent=1 // pred_region
      %s196 = ssub.s32 16, 16
      %197 = vsyncadd [#allocation23], %s196
      %s199 = sshll.u32 [#allocation22], 4
      %s200 = int_to_ptr.vmem [resolvable:$true] %s199
      %202 = dma.hbm_to_vmem [thread:$0]  %s19, 16, %s200, [#allocation23]
    $region81: #{conditional_seq2seq_forward.1} parent=1 // pred_fallthru
      _
    // Predicated region
    $region82: #{conditional_seq2seq_forward.1} parent=1 // pred_check
      _
    $region83: #{conditional_seq2seq_forward.1} parent=1 // pred_check_branch
      %204 = sbr.rel (0) target = $region85
    $region84: #{conditional_seq2seq_forward.1} parent=1 // pred_region
      %205 = dma.done [#allocation3], 256
    $region85: #{conditional_seq2seq_forward.1} parent=1 // pred_fallthru
      _
    // Predicated region
    $region86: #{conditional_seq2seq_forward.1} parent=1 // pred_check
      _
    $region87: #{conditional_seq2seq_forward.1} parent=1 // pred_check_branch
      %207 = sbr.rel (0) target = $region89
    $region88: #{conditional_seq2seq_forward.1} parent=1 // pred_region
      %208 = dma.done [#allocation5], 256
    $region89: #{conditional_seq2seq_forward.1} parent=1 // pred_fallthru
      _
    // Predicated region
    $region90: #{conditional_seq2seq_forward.1} parent=1 // pred_check
      _
    $region91: #{conditional_seq2seq_forward.1} parent=1 // pred_check_branch
      %210 = sbr.rel (0) target = $region93
    $region92: #{conditional_seq2seq_forward.1} parent=1 // pred_region
      %211 = dma.done [#allocation5], 16
    $region93: #{conditional_seq2seq_forward.1} parent=1 // pred_fallthru
      _
    // Predicated region
    $region94: #{conditional_seq2seq_forward.1} parent=1 // pred_check
      _
    $region95: #{conditional_seq2seq_forward.1} parent=1 // pred_check_branch
      %213 = sbr.rel (0) target = $region97
    $region96: #{conditional_seq2seq_forward.1} parent=1 // pred_region
      %214 = dma.done [#allocation8], 256
    $region97: #{conditional_seq2seq_forward.1} parent=1 // pred_fallthru
      _
    // Predicated region
    $region98: #{conditional_seq2seq_forward.1} parent=1 // pred_check
      _
    $region99: #{conditional_seq2seq_forward.1} parent=1 // pred_check_branch
      %216 = sbr.rel (0) target = $region101
    $region100: #{conditional_seq2seq_forward.1} parent=1 // pred_region
      %217 = dma.done [#allocation8], 256
    $region101: #{conditional_seq2seq_forward.1} parent=1 // pred_fallthru
      _
    // Predicated region
    $region102: #{conditional_seq2seq_forward.1} parent=1 // pred_check
      _
    $region103: #{conditional_seq2seq_forward.1} parent=1 // pred_check_branch
      %219 = sbr.rel (0) target = $region105
    $region104: #{conditional_seq2seq_forward.1} parent=1 // pred_region
      %220 = dma.done [#allocation11], 512
    $region105: #{conditional_seq2seq_forward.1} parent=1 // pred_fallthru
      _
    // Predicated region
    $region106: #{conditional_seq2seq_forward.1} parent=1 // pred_check
      _
    $region107: #{conditional_seq2seq_forward.1} parent=1 // pred_check_branch
      %222 = sbr.rel (0) target = $region109
    $region108: #{conditional_seq2seq_forward.1} parent=1 // pred_region
      %223 = dma.done [#allocation11], 16
    $region109: #{conditional_seq2seq_forward.1} parent=1 // pred_fallthru
      _
    // Predicated region
    $region110: #{conditional_seq2seq_forward.1} parent=1 // pred_check
      _
    $region111: #{conditional_seq2seq_forward.1} parent=1 // pred_check_branch
      %225 = sbr.rel (0) target = $region113
    $region112: #{conditional_seq2seq_forward.1} parent=1 // pred_region
      %226 = dma.done [#allocation14], 16
    $region113: #{conditional_seq2seq_forward.1} parent=1 // pred_fallthru
      _
    // Predicated region
    $region114: #{conditional_seq2seq_forward.1} parent=1 // pred_check
      _
    $region115: #{conditional_seq2seq_forward.1} parent=1 // pred_check_branch
      %228 = sbr.rel (0) target = $region117
    $region116: #{conditional_seq2seq_forward.1} parent=1 // pred_region
      %229 = dma.done [#allocation14], 512
    $region117: #{conditional_seq2seq_forward.1} parent=1 // pred_fallthru
      _
    // Predicated region
    $region118: #{conditional_seq2seq_forward.1} parent=1 // pred_check
      _
    $region119: #{conditional_seq2seq_forward.1} parent=1 // pred_check_branch
      %231 = sbr.rel (0) target = $region121
    $region120: #{conditional_seq2seq_forward.1} parent=1 // pred_region
      %232 = dma.done [#allocation17], 512
    $region121: #{conditional_seq2seq_forward.1} parent=1 // pred_fallthru
      _
    // Predicated region
    $region122: #{conditional_seq2seq_forward.1} parent=1 // pred_check
      _
    $region123: #{conditional_seq2seq_forward.1} parent=1 // pred_check_branch
      %234 = sbr.rel (0) target = $region125
    $region124: #{conditional_seq2seq_forward.1} parent=1 // pred_region
      %235 = dma.done [#allocation17], 512
    $region125: #{conditional_seq2seq_forward.1} parent=1 // pred_fallthru
      _
    // Predicated region
    $region126: #{conditional_seq2seq_forward.1} parent=1 // pred_check
      _
    $region127: #{conditional_seq2seq_forward.1} parent=1 // pred_check_branch
      %237 = sbr.rel (0) target = $region129
    $region128: #{conditional_seq2seq_forward.1} parent=1 // pred_region
      %238 = dma.done [#allocation20], 16
    $region129: #{conditional_seq2seq_forward.1} parent=1 // pred_fallthru
      _
    // Predicated region
    $region130: #{conditional_seq2seq_forward.1} parent=1 // pred_check
      _
    $region131: #{conditional_seq2seq_forward.1} parent=1 // pred_check_branch
      %240 = sbr.rel (0) target = $region133
    $region132: #{conditional_seq2seq_forward.1} parent=1 // pred_region
      %241 = dma.done [#allocation20], 16
    $region133: #{conditional_seq2seq_forward.1} parent=1 // pred_fallthru
      _
    // Predicated region
    $region134: #{conditional_seq2seq_forward.1} parent=1 // pred_check
      _
    $region135: #{conditional_seq2seq_forward.1} parent=1 // pred_check_branch
      %243 = sbr.rel (0) target = $region137
    $region136: #{conditional_seq2seq_forward.1} parent=1 // pred_region
      %244 = dma.done [#allocation23], 16
    $region137: #{conditional_seq2seq_forward.1} parent=1 // pred_fallthru
      _
    %v246 = vld [vmem:[%s3] sm:$0xff]
    %v247 = vld [vmem:[%s3 + $0x8] sm:$0xff]
    %v248 = vld [vmem:[%s3 + $0x10] sm:$0xff]
    %v249 = vld [vmem:[%s3 + $0x18] sm:$0xff]
    %v250 = vpack.c.bf16 %v247, %v246
    %v251 = vpack.c.bf16 %v249, %v248
    %v252 = vld [vmem:[#allocation10] sm:$0xff]
    %v253 = vld [vmem:[#allocation10 + $0x8] sm:$0xff]
    %v254 = vld [vmem:[#allocation10 + $0x10] sm:$0xff]
    %v255 = vld [vmem:[#allocation10 + $0x18] sm:$0xff]
    %v256 = vpack.c.bf16 %v253, %v252
    %v257 = vpack.c.bf16 %v255, %v254
    %v258 = vld [vmem:[#allocation18] sm:$0xff]
    %v259 = vld [vmem:[#allocation18 + $0x8] sm:$0xff]
    %v260 = vld [vmem:[#allocation18 + $0x10] sm:$0xff]
    %v261 = vld [vmem:[#allocation18 + $0x18] sm:$0xff]
    %v262 = vpack.c.bf16 %v259, %v258
    %v263 = vpack.c.bf16 %v261, %v260
    %v264 = vld [vmem:[#allocation16] sm:$0xff]
    %v265 = vld [vmem:[#allocation16 + $0x8] sm:$0xff]
    %v266 = vld [vmem:[#allocation16 + $0x10] sm:$0xff]
    %v267 = vld [vmem:[#allocation16 + $0x18] sm:$0xff]
    %v268 = vpack.c.bf16 %v265, %v264
    %v269 = vpack.c.bf16 %v267, %v266
    %v270 = vld [vmem:[%s18] sm:$0xff]
    %v271 = vld [vmem:[%s18 + $0x8] sm:$0xff]
    %v272 = vld [vmem:[%s18 + $0x10] sm:$0xff]
    %v273 = vld [vmem:[%s18 + $0x18] sm:$0xff]
    %v274 = vpack.c.bf16 %v271, %v270
    %v275 = vpack.c.bf16 %v273, %v272
    %v276 = vld [vmem:[%s6] sm:$0xff]
    %v277 = vld [vmem:[%s6 + $0x8] sm:$0xff]
    %v278 = vld [vmem:[%s6 + $0x10] sm:$0xff]
    %v279 = vld [vmem:[%s6 + $0x18] sm:$0xff]
    %v280 = vpack.c.bf16 %v277, %v276
    %v281 = vpack.c.bf16 %v279, %v278
    %v282 = vld [vmem:[#allocation15] sm:$0xff]
    %v283 = vld [vmem:[#allocation15 + $0x8] sm:$0xff]
    %v284 = vld [vmem:[#allocation15 + $0x10] sm:$0xff]
    %v285 = vld [vmem:[#allocation15 + $0x18] sm:$0xff]
    %286 = vxpose.xlu0.b32.start [1/16] %v282, 128
    %287 = vxpose.xlu0.b32.cont [2/16] %v283, 128
    %288 = vxpose.xlu0.b32.cont [3/16] %v284, 128
    %289 = vxpose.xlu0.b32.cont [4/16] %v285, 128
    %290 = vxpose.xlu0.b32.cont [5/16] 0.0, 128
    %291 = vxpose.xlu0.b32.cont [6/16] 0.0, 128
    %292 = vxpose.xlu0.b32.cont [7/16] 0.0, 128
    %293 = vxpose.xlu0.b32.cont [8/16] 0.0, 128
    %294 = vxpose.xlu0.b32.cont [9/16] 0.0, 128
    %295 = vxpose.xlu0.b32.cont [10/16] 0.0, 128
    %296 = vxpose.xlu0.b32.cont [11/16] 0.0, 128
    %297 = vxpose.xlu0.b32.cont [12/16] 0.0, 128
    %298 = vxpose.xlu0.b32.cont [13/16] 0.0, 128
    %299 = vxpose.xlu0.b32.cont [14/16] 0.0, 128
    %300 = vxpose.xlu0.b32.cont [15/16] 0.0, 128
    %301 = vxpose.xlu0.b32.end [16/16] 0.0, 128
    %v302 = vpop.trf.xlu0
    %v303 = vpop.trf.xlu0
    %v304 = vpop.trf.xlu0
    %v305 = vpop.trf.xlu0
    %v306 = vpop.trf.xlu0
    %v307 = vpop.trf.xlu0
    %v308 = vpop.trf.xlu0
    %v309 = vpop.trf.xlu0
    %v310 = vpop.trf.xlu0
    %v311 = vpop.trf.xlu0
    %v312 = vpop.trf.xlu0
    %v313 = vpop.trf.xlu0
    %v314 = vpop.trf.xlu0
    %v315 = vpop.trf.xlu0
    %v316 = vpop.trf.xlu0
    %v317 = vpop.trf.xlu0
    %v318 = vpack.c.bf16 %v303, %v302
    %v319 = vpack.c.bf16 %v305, %v304
    %v320 = vld [vmem:[%s4] sm:$0x1]
    %v321 = vld [vmem:[%s5] sm:$0x1]
    %v322 = vadd.f32 %v320, %v321
    %vm323 = vcmask 523264
    %v324 = vsel %vm323, %v322, %v320
    %v326 = vlaneseq
    %v327 = vshrl.u32 %v326, 7
    %v328 = vsub.s32 0, %v327
    %v329 = vrot.slane %v321, %v328
    %v331 = vld [vmem:[#allocation13] sm:$0x1]
    %v333 = vlaneseq
    %v334 = vshrl.u32 %v333, 7
    %v335 = vsub.s32 0, %v334
    %v336 = vrot.slane %v331, %v335
    %v338 = vld [vmem:[#allocation21] sm:$0x1]
    %v340 = vlaneseq
    %v341 = vshrl.u32 %v340, 7
    %v342 = vsub.s32 0, %v341
    %v343 = vrot.slane %v338, %v342
    %v345 = vld [vmem:[#allocation19] sm:$0x1]
    %v346 = vadd.f32 %v345, %v338
    %v347 = vsel %vm323, %v346, %v345
    %v348 = vlaneseq
    %v349 = vshrl.u32 %v348, 7
    %v350 = vsub.s32 0, %v349
    %v351 = vrot.slane %v347, %v350
    %v352 = vld [vmem:[#allocation22] sm:$0x1]
    %v354 = vlaneseq
    %v355 = vshrl.u32 %v354, 7
    %v356 = vsub.s32 0, %v355
    %v357 = vrot.slane %v352, %v356
    %v359 = vld [vmem:[#allocation6] sm:$0x1]
    %v361 = vlaneseq
    %v362 = vshrl.u32 %v361, 7
    %v363 = vsub.s32 0, %v362
    %v364 = vrot.slane %v359, %v363
    %v366 = vld [vmem:[%s0] sm:$0xff]
    %v367 = vlaneseq
    %v368 = vand.u32 %v367, 127
    %v369 = vlaneseq
    %v370 = vshrl.u32 %v369, 7
    %v371 = vsub.s32 0, %v370
    %v372 = vrot.slane %v366, %v371
    %374 = vbcast.lane.b32.xlu0 %v372, 256
    %v375 = vpop.permute.xlu0 %374
    %v376 = vlaneseq
    %v377 = vshrl.u32 %v376, 7
    %v378 = vsub.s32 1, %v377
    %v379 = vrot.slane %v366, %v378
    %381 = vbcast.lane.b32.xlu0 %v379, 256
    %v382 = vpop.permute.xlu0 %381
    %v383 = vlaneseq
    %v384 = vshrl.u32 %v383, 7
    %v385 = vsub.s32 2, %v384
    %v386 = vrot.slane %v366, %v385
    %388 = vbcast.lane.b32.xlu0 %v386, 256
    %v389 = vpop.permute.xlu0 %388
    %v390 = vlaneseq
    %v391 = vshrl.u32 %v390, 7
    %v392 = vsub.s32 3, %v391
    %v393 = vrot.slane %v366, %v392
    %395 = vbcast.lane.b32.xlu0 %v393, 256
    %v396 = vpop.permute.xlu0 %395
    %v397 = vlaneseq
    %v398 = vshrl.u32 %v397, 7
    %v399 = vsub.s32 4, %v398
    %v400 = vrot.slane %v366, %v399
    %402 = vbcast.lane.b32.xlu0 %v400, 256
    %v403 = vpop.permute.xlu0 %402
    %v404 = vlaneseq
    %v405 = vshrl.u32 %v404, 7
    %v406 = vsub.s32 5, %v405
    %v407 = vrot.slane %v366, %v406
    %409 = vbcast.lane.b32.xlu0 %v407, 256
    %v410 = vpop.permute.xlu0 %409
    %v411 = vlaneseq
    %v412 = vshrl.u32 %v411, 7
    %v413 = vsub.s32 6, %v412
    %v414 = vrot.slane %v366, %v413
    %416 = vbcast.lane.b32.xlu0 %v414, 256
    %v417 = vpop.permute.xlu0 %416
    %v418 = vlaneseq
    %v419 = vshrl.u32 %v418, 7
    %v420 = vsub.s32 7, %v419
    %v421 = vrot.slane %v366, %v420
    %423 = vbcast.lane.b32.xlu0 %v421, 256
    %v424 = vpop.permute.xlu0 %423
    %vm425 = vcmp.eq.s32.totalorder %v368, %v375
    %vm426 = vcmp.eq.s32.totalorder %v368, %v382
    %vm427 = vcmp.eq.s32.totalorder %v368, %v389
    %vm428 = vcmp.eq.s32.totalorder %v368, %v396
    %vm429 = vcmp.eq.s32.totalorder %v368, %v403
    %vm430 = vcmp.eq.s32.totalorder %v368, %v410
    %vm431 = vcmp.eq.s32.totalorder %v368, %v417
    %vm432 = vcmp.eq.s32.totalorder %v368, %v424
    %v433 = vsel %vm425, 1, 0
    %v434 = vsel %vm426, 1, 0
    %v435 = vsel %vm427, 1, 0
    %v436 = vsel %vm428, 1, 0
    %v437 = vsel %vm429, 1, 0
    %v438 = vsel %vm430, 1, 0
    %v439 = vsel %vm431, 1, 0
    %v440 = vsel %vm432, 1, 0
    %v441 = vcvt.s32.f32 %v433
    %v442 = vcvt.s32.f32 %v434
    %v443 = vcvt.s32.f32 %v435
    %v444 = vcvt.s32.f32 %v436
    %v445 = vcvt.s32.f32 %v437
    %v446 = vcvt.s32.f32 %v438
    %v447 = vcvt.s32.f32 %v439
    %v448 = vcvt.s32.f32 %v440
    %v449 = vld [vmem:[#allocation2] sm:$0xff]
    %v450 = vld [vmem:[#allocation2 + $0x8] sm:$0xff]
    %v451 = vld [vmem:[#allocation4] sm:$0xff]
    %v452 = vld [vmem:[#allocation4 + $0x8] sm:$0xff]
    %v453 = vpack.c.bf16 %v450, %v449
    %v454 = vpack.c.bf16 %v452, %v451
    %vm455 = vcmask 130048
    %v457 = vsel %vm455, %v453, 0
    %459 = vmatprep.subr.bf16.mxu0 0
    %460 = vmatpush1.bf16.msra.mxu0 0
    %461 = vmatprep.subr.bf16.mxu0 0
    %462 = vmatpush1.bf16.msra.mxu0 0
    %463 = vmatprep.subr.bf16.mxu0 0
    %464 = vmatpush1.bf16.msra.mxu0 0
    %465 = vmatprep.subr.bf16.mxu0 0
    %466 = vmatpush1.bf16.msra.mxu0 0
    %467 = vmatprep.subr.bf16.mxu0 0
    %468 = vmatpush1.bf16.msra.mxu0 0
    %469 = vmatprep.subr.bf16.mxu0 0
    %470 = vmatpush1.bf16.msra.mxu0 0
    %471 = vmatprep.subr.bf16.mxu0 0
    %472 = vmatpush1.bf16.msra.mxu0 0
    %473 = vmatprep.subr.bf16.mxu0 0
    %474 = vmatpush1.bf16.msra.mxu0 %v454
    %475 = vmatprep.subr.bf16.mxu0 0
    %476 = vmatpush2.bf16.msra.mxu0 0
    %477 = vmatprep.subr.bf16.mxu0 0
    %478 = vmatpush2.bf16.msra.mxu0 0
    %479 = vmatprep.subr.bf16.mxu0 0
    %480 = vmatpush2.bf16.msra.mxu0 0
    %481 = vmatprep.subr.bf16.mxu0 0
    %482 = vmatpush2.bf16.msra.mxu0 0
    %483 = vmatprep.subr.bf16.mxu0 0
    %484 = vmatpush2.bf16.msra.mxu0 0
    %485 = vmatprep.subr.bf16.mxu0 0
    %486 = vmatpush2.bf16.msra.mxu0 0
    %487 = vmatprep.subr.bf16.mxu0 0
    %488 = vmatpush2.bf16.msra.mxu0 0
    %489 = vmatprep.subr.bf16.mxu0 0
    %490 = vmatpush2.bf16.msra.mxu0 0
    %491 = vmatprep.mubr.bf16.mxu0 0
    %492 = vmatmul.mubr.bf16.gmra.mxu0 %v457
    %v493 = vpop.f32.mrf.mxu0
    %v494 = vadd.f32 0.0, %v493
    %v495 = vpop.f32.mrf.mxu0
    %v496 = vpop.f32.mrf.mxu0
    %v497 = vadd.f32 0.0, %v496
    %v498 = vpop.f32.mrf.mxu0
    %499 = vdwg.mxu0
    %v508 = vcombine.low %v441, %v442
    %v509 = vcombine.low %v443, %v444
    %v511 = vunpack.c.l.s4 1983009808
    %v512 = vunpack.c.0.s8 %v511
    %v513 = vlaneseq
    %v514 = vshrl.u32 %v513, 7
    %v515 = vsub.s32 %v512, %v514
    %v516 = vrot.slane %v508, %v515
    %v518 = vunpack.c.l.s4 1983009808
    %v519 = vunpack.c.0.s8 %v518
    %v520 = vlaneseq
    %v521 = vshrl.u32 %v520, 7
    %v522 = vsub.s32 %v519, %v521
    %v523 = vrot.slane %v509, %v522
    %v524 = vcombine.low %v516, %v523
    %v525 = vcombine.low %v445, %v446
    %v526 = vcombine.low %v447, %v448
    %v528 = vunpack.c.l.s4 1983009808
    %v529 = vunpack.c.0.s8 %v528
    %v530 = vlaneseq
    %v531 = vshrl.u32 %v530, 7
    %v532 = vsub.s32 %v529, %v531
    %v533 = vrot.slane %v525, %v532
    %v535 = vunpack.c.l.s4 1983009808
    %v536 = vunpack.c.0.s8 %v535
    %v537 = vlaneseq
    %v538 = vshrl.u32 %v537, 7
    %v539 = vsub.s32 %v536, %v538
    %v540 = vrot.slane %v526, %v539
    %v541 = vcombine.low %v533, %v540
    %v544 = vpack.c.bf16 %v541, %v524
    %v545 = vpack.c.bf16 %v497, %v494
    %v546 = vlaneseq
    %v547 = vshrl.u32 %v546, 7
    %v548 = vsub.s32 0, %v547
    %v549 = vrot.slane %v324, %v548
    %v551 = vsel %vm455, %v544, 0
    %553 = vmatprep.subr.bf16.mxu0 0
    %554 = vmatpush1.bf16.msra.mxu0 0
    %555 = vmatprep.subr.bf16.mxu0 0
    %556 = vmatpush1.bf16.msra.mxu0 0
    %557 = vmatprep.subr.bf16.mxu0 0
    %558 = vmatpush1.bf16.msra.mxu0 0
    %559 = vmatprep.subr.bf16.mxu0 0
    %560 = vmatpush1.bf16.msra.mxu0 0
    %561 = vmatprep.subr.bf16.mxu0 0
    %562 = vmatpush1.bf16.msra.mxu0 0
    %563 = vmatprep.subr.bf16.mxu0 0
    %564 = vmatpush1.bf16.msra.mxu0 0
    %565 = vmatprep.subr.bf16.mxu0 0
    %566 = vmatpush1.bf16.msra.mxu0 0
    %567 = vmatprep.subr.bf16.mxu0 0
    %568 = vmatpush1.bf16.msra.mxu0 %v545
    %569 = vmatprep.subr.bf16.mxu0 0
    %570 = vmatpush2.bf16.msra.mxu0 0
    %571 = vmatprep.subr.bf16.mxu0 0
    %572 = vmatpush2.bf16.msra.mxu0 0
    %573 = vmatprep.subr.bf16.mxu0 0
    %574 = vmatpush2.bf16.msra.mxu0 0
    %575 = vmatprep.subr.bf16.mxu0 0
    %576 = vmatpush2.bf16.msra.mxu0 0
    %577 = vmatprep.subr.bf16.mxu0 0
    %578 = vmatpush2.bf16.msra.mxu0 0
    %579 = vmatprep.subr.bf16.mxu0 0
    %580 = vmatpush2.bf16.msra.mxu0 0
    %581 = vmatprep.subr.bf16.mxu0 0
    %582 = vmatpush2.bf16.msra.mxu0 0
    %583 = vmatprep.subr.bf16.mxu0 0
    %584 = vmatpush2.bf16.msra.mxu0 0
    %585 = vmatprep.mubr.bf16.mxu0 0
    %586 = vmatmul.mubr.bf16.gmra.mxu0 %v551
    %v587 = vpop.f32.mrf.mxu0
    %v588 = vadd.f32 %v549, %v587
    %v589 = vpop.f32.mrf.mxu0
    %v590 = vpop.f32.mrf.mxu0
    %v591 = vadd.f32 %v549, %v590
    %v592 = vpop.f32.mrf.mxu0
    %593 = vdwg.mxu0
    %v596 = vcombine.high %v588, %v588
    %v598 = vunpack.c.l.s4 1983009808
    %v599 = vunpack.c.0.s8 %v598
    %v600 = vlaneseq
    %v601 = vshrl.u32 %v600, 7
    %v602 = vsub.s32 %v599, %v601
    %v603 = vrot.slane %v588, %v602
    %v605 = vunpack.c.l.s4 1983009808
    %v606 = vunpack.c.0.s8 %v605
    %v607 = vlaneseq
    %v608 = vshrl.u32 %v607, 7
    %v609 = vsub.s32 %v606, %v608
    %v610 = vrot.slane %v596, %v609
    %v611 = vcombine.high %v603, %v603
    %v612 = vcombine.high %v610, %v610
    %v613 = vcombine.high %v591, %v591
    %v615 = vunpack.c.l.s4 1983009808
    %v616 = vunpack.c.0.s8 %v615
    %v617 = vlaneseq
    %v618 = vshrl.u32 %v617, 7
    %v619 = vsub.s32 %v616, %v618
    %v620 = vrot.slane %v591, %v619
    %v622 = vunpack.c.l.s4 1983009808
    %v623 = vunpack.c.0.s8 %v622
    %v624 = vlaneseq
    %v625 = vshrl.u32 %v624, 7
    %v626 = vsub.s32 %v623, %v625
    %v627 = vrot.slane %v613, %v626
    %v628 = vcombine.high %v620, %v620
    %v629 = vcombine.high %v627, %v627
    %vm638 = vcmask 261120
    %v640 = vsel %vm638, 0, 0
    %642 = vmatprep.subr.bf16.mxu0 0
    %643 = vmatpush1.bf16.msra.mxu0 0
    %644 = vmatprep.subr.bf16.mxu0 0
    %645 = vmatpush1.bf16.msra.mxu0 0
    %646 = vmatprep.subr.bf16.mxu0 0
    %647 = vmatpush1.bf16.msra.mxu0 0
    %648 = vmatprep.subr.bf16.mxu0 0
    %649 = vmatpush1.bf16.msra.mxu0 0
    %650 = vmatprep.subr.bf16.mxu0 0
    %651 = vmatpush1.bf16.msra.mxu0 0
    %652 = vmatprep.subr.bf16.mxu0 0
    %653 = vmatpush1.bf16.msra.mxu0 0
    %654 = vmatprep.subr.bf16.mxu0 0
    %655 = vmatpush1.bf16.msra.mxu0 %v251
    %656 = vmatprep.subr.bf16.mxu0 0
    %657 = vmatpush1.bf16.msra.mxu0 %v250
    %658 = vmatprep.subr.bf16.mxu0 0
    %659 = vmatpush2.bf16.msra.mxu0 0
    %660 = vmatprep.subr.bf16.mxu0 0
    %661 = vmatpush2.bf16.msra.mxu0 0
    %662 = vmatprep.subr.bf16.mxu0 0
    %663 = vmatpush2.bf16.msra.mxu0 0
    %664 = vmatprep.subr.bf16.mxu0 0
    %665 = vmatpush2.bf16.msra.mxu0 0
    %666 = vmatprep.subr.bf16.mxu0 0
    %667 = vmatpush2.bf16.msra.mxu0 0
    %668 = vmatprep.subr.bf16.mxu0 0
    %669 = vmatpush2.bf16.msra.mxu0 0
    %670 = vmatprep.subr.bf16.mxu0 0
    %671 = vmatpush2.bf16.msra.mxu0 0
    %672 = vmatprep.subr.bf16.mxu0 0
    %673 = vmatpush2.bf16.msra.mxu0 0
    %674 = vmatprep.mubr.bf16.mxu0 0
    %675 = vmatmul.mubr.bf16.gmra.mxu0 %v640
    %v676 = vpop.f32.mrf.mxu0
    %v677 = vadd.f32 0.0, %v676
    %v678 = vpop.f32.mrf.mxu0
    %v679 = vpop.f32.mrf.mxu0
    %v680 = vpop.f32.mrf.mxu0
    %681 = vdwg.mxu0
    %v682 = vadd.f32 %v603, %v677
    %v683 = vxor.u32 %v682, 2147483648
    %v684 = vmul.f32 %v683, 1.442695
    %v685 = vpow.pop %v684
    %v686 = vadd.f32 %v685, 1.0
    %v687 = vrcp.pop %v686
    %v688 = vmul.f32 1.0, %v687
    %v689 = vadd.f32 %v677, %v329
    %v692 = vunpack.c.l.s4 1983009808
    %v693 = vunpack.c.0.s8 %v692
    %v694 = vlaneseq
    %v695 = vshrl.u32 %v694, 7
    %v696 = vsub.s32 %v693, %v695
    %v697 = vrot.slane %v689, %v696
    %698 = vrot.lane.b32.xlu0 %v697, 64
    %v699 = vpop.permute.xlu0 %698
    %v701 = vmul.f32 %v688, %v699
    %703 = vrot.lane.b32.xlu0 %v701, 64
    %v704 = vpop.permute.xlu0 %703
    %v706 = vadd.f32 %v603, %v704
    %v707 = vtanh.pop %v706
    %v708 = vsub.f32 1.0, %v688
    %710 = vrot.lane.b32.xlu0 %v707, 96
    %v711 = vpop.permute.xlu0 %710
    %v713 = vmul.f32 %v708, %v711
    %v714 = vmul.f32 %v688, 0.0
    %v715 = vadd.f32 %v713, %v714
    %v716 = vpack.c.bf16 %v715, %v715
    %718 = vrot.lane.b32.xlu0 %v716, 96
    %v719 = vpop.permute.xlu0 %718
    %v721 = vsel %vm638, %v719, 0
    %723 = vmatprep.subr.bf16.mxu0 0
    %724 = vmatpush1.bf16.msra.mxu0 0
    %725 = vmatprep.subr.bf16.mxu0 0
    %726 = vmatpush1.bf16.msra.mxu0 0
    %727 = vmatprep.subr.bf16.mxu0 0
    %728 = vmatpush1.bf16.msra.mxu0 0
    %729 = vmatprep.subr.bf16.mxu0 0
    %730 = vmatpush1.bf16.msra.mxu0 0
    %731 = vmatprep.subr.bf16.mxu0 0
    %732 = vmatpush1.bf16.msra.mxu0 0
    %733 = vmatprep.subr.bf16.mxu0 0
    %734 = vmatpush1.bf16.msra.mxu0 0
    %735 = vmatprep.subr.bf16.mxu0 0
    %736 = vmatpush1.bf16.msra.mxu0 %v319
    %737 = vmatprep.subr.bf16.mxu0 0
    %738 = vmatpush1.bf16.msra.mxu0 %v318
    %739 = vmatprep.subr.bf16.mxu0 0
    %740 = vmatpush2.bf16.msra.mxu0 0
    %741 = vmatprep.subr.bf16.mxu0 0
    %742 = vmatpush2.bf16.msra.mxu0 0
    %743 = vmatprep.subr.bf16.mxu0 0
    %744 = vmatpush2.bf16.msra.mxu0 0
    %745 = vmatprep.subr.bf16.mxu0 0
    %746 = vmatpush2.bf16.msra.mxu0 0
    %747 = vmatprep.subr.bf16.mxu0 0
    %748 = vmatpush2.bf16.msra.mxu0 0
    %749 = vmatprep.subr.bf16.mxu0 0
    %750 = vmatpush2.bf16.msra.mxu0 0
    %751 = vmatprep.subr.bf16.mxu0 0
    %752 = vmatpush2.bf16.msra.mxu0 0
    %753 = vmatprep.subr.bf16.mxu0 0
    %754 = vmatpush2.bf16.msra.mxu0 0
    %755 = vmatprep.mubr.bf16.mxu0 0
    %756 = vmatmul.mubr.bf16.gmra.mxu0 %v721
    %v757 = vpop.f32.mrf.mxu0
    %v758 = vadd.f32 0.0, %v757
    %v759 = vpop.f32.mrf.mxu0
    %v760 = vpop.f32.mrf.mxu0
    %v761 = vpop.f32.mrf.mxu0
    %762 = vdwg.mxu0
    %763 = vmatprep.subr.bf16.mxu0 0
    %764 = vmatpush1.bf16.msra.mxu0 0
    %765 = vmatprep.subr.bf16.mxu0 0
    %766 = vmatpush1.bf16.msra.mxu0 0
    %767 = vmatprep.subr.bf16.mxu0 0
    %768 = vmatpush1.bf16.msra.mxu0 0
    %769 = vmatprep.subr.bf16.mxu0 0
    %770 = vmatpush1.bf16.msra.mxu0 0
    %771 = vmatprep.subr.bf16.mxu0 0
    %772 = vmatpush1.bf16.msra.mxu0 0
    %773 = vmatprep.subr.bf16.mxu0 0
    %774 = vmatpush1.bf16.msra.mxu0 0
    %775 = vmatprep.subr.bf16.mxu0 0
    %776 = vmatpush1.bf16.msra.mxu0 %v269
    %777 = vmatprep.subr.bf16.mxu0 0
    %778 = vmatpush1.bf16.msra.mxu0 %v268
    %779 = vmatprep.subr.bf16.mxu0 0
    %780 = vmatpush2.bf16.msra.mxu0 0
    %781 = vmatprep.subr.bf16.mxu0 0
    %782 = vmatpush2.bf16.msra.mxu0 0
    %783 = vmatprep.subr.bf16.mxu0 0
    %784 = vmatpush2.bf16.msra.mxu0 0
    %785 = vmatprep.subr.bf16.mxu0 0
    %786 = vmatpush2.bf16.msra.mxu0 0
    %787 = vmatprep.subr.bf16.mxu0 0
    %788 = vmatpush2.bf16.msra.mxu0 0
    %789 = vmatprep.subr.bf16.mxu0 0
    %790 = vmatpush2.bf16.msra.mxu0 0
    %791 = vmatprep.subr.bf16.mxu0 0
    %792 = vmatpush2.bf16.msra.mxu0 0
    %793 = vmatprep.subr.bf16.mxu0 0
    %794 = vmatpush2.bf16.msra.mxu0 0
    %795 = vmatprep.mubr.bf16.mxu0 0
    %796 = vmatmul.mubr.bf16.gmra.mxu0 %v721
    %v797 = vpop.f32.mrf.mxu0
    %v798 = vadd.f32 0.0, %v797
    %v799 = vpop.f32.mrf.mxu0
    %v800 = vpop.f32.mrf.mxu0
    %v801 = vpop.f32.mrf.mxu0
    %802 = vdwg.mxu0
    %803 = vmatprep.subr.bf16.mxu0 0
    %804 = vmatpush1.bf16.msra.mxu0 0
    %805 = vmatprep.subr.bf16.mxu0 0
    %806 = vmatpush1.bf16.msra.mxu0 0
    %807 = vmatprep.subr.bf16.mxu0 0
    %808 = vmatpush1.bf16.msra.mxu0 0
    %809 = vmatprep.subr.bf16.mxu0 0
    %810 = vmatpush1.bf16.msra.mxu0 0
    %811 = vmatprep.subr.bf16.mxu0 0
    %812 = vmatpush1.bf16.msra.mxu0 0
    %813 = vmatprep.subr.bf16.mxu0 0
    %814 = vmatpush1.bf16.msra.mxu0 0
    %815 = vmatprep.subr.bf16.mxu0 0
    %816 = vmatpush1.bf16.msra.mxu0 %v251
    %817 = vmatprep.subr.bf16.mxu0 0
    %818 = vmatpush1.bf16.msra.mxu0 %v250
    %819 = vmatprep.subr.bf16.mxu0 0
    %820 = vmatpush2.bf16.msra.mxu0 0
    %821 = vmatprep.subr.bf16.mxu0 0
    %822 = vmatpush2.bf16.msra.mxu0 0
    %823 = vmatprep.subr.bf16.mxu0 0
    %824 = vmatpush2.bf16.msra.mxu0 0
    %825 = vmatprep.subr.bf16.mxu0 0
    %826 = vmatpush2.bf16.msra.mxu0 0
    %827 = vmatprep.subr.bf16.mxu0 0
    %828 = vmatpush2.bf16.msra.mxu0 0
    %829 = vmatprep.subr.bf16.mxu0 0
    %830 = vmatpush2.bf16.msra.mxu0 0
    %831 = vmatprep.subr.bf16.mxu0 0
    %832 = vmatpush2.bf16.msra.mxu0 0
    %833 = vmatprep.subr.bf16.mxu0 0
    %834 = vmatpush2.bf16.msra.mxu0 0
    %835 = vmatprep.mubr.bf16.mxu0 0
    %836 = vmatmul.mubr.bf16.gmra.mxu0 %v721
    %v837 = vpop.f32.mrf.mxu0
    %v838 = vadd.f32 0.0, %v837
    %v839 = vpop.f32.mrf.mxu0
    %v840 = vpop.f32.mrf.mxu0
    %v841 = vpop.f32.mrf.mxu0
    %842 = vdwg.mxu0
    %v843 = vadd.f32 %v611, %v838
    %v844 = vxor.u32 %v843, 2147483648
    %v845 = vmul.f32 %v844, 1.442695
    %v846 = vpow.pop %v845
    %v847 = vadd.f32 %v846, 1.0
    %v848 = vrcp.pop %v847
    %v849 = vmul.f32 1.0, %v848
    %v850 = vadd.f32 %v838, %v329
    %v853 = vunpack.c.l.s4 1983009808
    %v854 = vunpack.c.0.s8 %v853
    %v855 = vlaneseq
    %v856 = vshrl.u32 %v855, 7
    %v857 = vsub.s32 %v854, %v856
    %v858 = vrot.slane %v850, %v857
    %859 = vrot.lane.b32.xlu0 %v858, 64
    %v860 = vpop.permute.xlu0 %859
    %v862 = vmul.f32 %v849, %v860
    %864 = vrot.lane.b32.xlu0 %v862, 64
    %v865 = vpop.permute.xlu0 %864
    %v867 = vadd.f32 %v611, %v865
    %v868 = vtanh.pop %v867
    %v869 = vsub.f32 1.0, %v849
    %871 = vrot.lane.b32.xlu0 %v868, 96
    %v872 = vpop.permute.xlu0 %871
    %v874 = vmul.f32 %v869, %v872
    %v875 = vmul.f32 %v849, %v715
    %v876 = vadd.f32 %v874, %v875
    %v877 = vpack.c.bf16 %v876, %v876
    %879 = vrot.lane.b32.xlu0 %v877, 96
    %v880 = vpop.permute.xlu0 %879
    %v882 = vsel %vm638, %v880, 0
    %884 = vmatprep.subr.bf16.mxu0 0
    %885 = vmatpush1.bf16.msra.mxu0 0
    %886 = vmatprep.subr.bf16.mxu0 0
    %887 = vmatpush1.bf16.msra.mxu0 0
    %888 = vmatprep.subr.bf16.mxu0 0
    %889 = vmatpush1.bf16.msra.mxu0 0
    %890 = vmatprep.subr.bf16.mxu0 0
    %891 = vmatpush1.bf16.msra.mxu0 0
    %892 = vmatprep.subr.bf16.mxu0 0
    %893 = vmatpush1.bf16.msra.mxu0 0
    %894 = vmatprep.subr.bf16.mxu0 0
    %895 = vmatpush1.bf16.msra.mxu0 0
    %896 = vmatprep.subr.bf16.mxu0 0
    %897 = vmatpush1.bf16.msra.mxu0 %v319
    %898 = vmatprep.subr.bf16.mxu0 0
    %899 = vmatpush1.bf16.msra.mxu0 %v318
    %900 = vmatprep.subr.bf16.mxu0 0
    %901 = vmatpush2.bf16.msra.mxu0 0
    %902 = vmatprep.subr.bf16.mxu0 0
    %903 = vmatpush2.bf16.msra.mxu0 0
    %904 = vmatprep.subr.bf16.mxu0 0
    %905 = vmatpush2.bf16.msra.mxu0 0
    %906 = vmatprep.subr.bf16.mxu0 0
    %907 = vmatpush2.bf16.msra.mxu0 0
    %908 = vmatprep.subr.bf16.mxu0 0
    %909 = vmatpush2.bf16.msra.mxu0 0
    %910 = vmatprep.subr.bf16.mxu0 0
    %911 = vmatpush2.bf16.msra.mxu0 0
    %912 = vmatprep.subr.bf16.mxu0 0
    %913 = vmatpush2.bf16.msra.mxu0 0
    %914 = vmatprep.subr.bf16.mxu0 0
    %915 = vmatpush2.bf16.msra.mxu0 0
    %916 = vmatprep.mubr.bf16.mxu0 0
    %917 = vmatmul.mubr.bf16.gmra.mxu0 %v882
    %v918 = vpop.f32.mrf.mxu0
    %v919 = vadd.f32 0.0, %v918
    %v920 = vpop.f32.mrf.mxu0
    %v921 = vpop.f32.mrf.mxu0
    %v922 = vpop.f32.mrf.mxu0
    %923 = vdwg.mxu0
    %924 = vmatprep.subr.bf16.mxu0 0
    %925 = vmatpush1.bf16.msra.mxu0 0
    %926 = vmatprep.subr.bf16.mxu0 0
    %927 = vmatpush1.bf16.msra.mxu0 0
    %928 = vmatprep.subr.bf16.mxu0 0
    %929 = vmatpush1.bf16.msra.mxu0 0
    %930 = vmatprep.subr.bf16.mxu0 0
    %931 = vmatpush1.bf16.msra.mxu0 0
    %932 = vmatprep.subr.bf16.mxu0 0
    %933 = vmatpush1.bf16.msra.mxu0 0
    %934 = vmatprep.subr.bf16.mxu0 0
    %935 = vmatpush1.bf16.msra.mxu0 0
    %936 = vmatprep.subr.bf16.mxu0 0
    %937 = vmatpush1.bf16.msra.mxu0 %v269
    %938 = vmatprep.subr.bf16.mxu0 0
    %939 = vmatpush1.bf16.msra.mxu0 %v268
    %940 = vmatprep.subr.bf16.mxu0 0
    %941 = vmatpush2.bf16.msra.mxu0 0
    %942 = vmatprep.subr.bf16.mxu0 0
    %943 = vmatpush2.bf16.msra.mxu0 0
    %944 = vmatprep.subr.bf16.mxu0 0
    %945 = vmatpush2.bf16.msra.mxu0 0
    %946 = vmatprep.subr.bf16.mxu0 0
    %947 = vmatpush2.bf16.msra.mxu0 0
    %948 = vmatprep.subr.bf16.mxu0 0
    %949 = vmatpush2.bf16.msra.mxu0 0
    %950 = vmatprep.subr.bf16.mxu0 0
    %951 = vmatpush2.bf16.msra.mxu0 0
    %952 = vmatprep.subr.bf16.mxu0 0
    %953 = vmatpush2.bf16.msra.mxu0 0
    %954 = vmatprep.subr.bf16.mxu0 0
    %955 = vmatpush2.bf16.msra.mxu0 0
    %956 = vmatprep.mubr.bf16.mxu0 0
    %957 = vmatmul.mubr.bf16.gmra.mxu0 %v882
    %v958 = vpop.f32.mrf.mxu0
    %v959 = vadd.f32 0.0, %v958
    %v960 = vpop.f32.mrf.mxu0
    %v961 = vpop.f32.mrf.mxu0
    %v962 = vpop.f32.mrf.mxu0
    %963 = vdwg.mxu0
    %964 = vmatprep.subr.bf16.mxu0 0
    %965 = vmatpush1.bf16.msra.mxu0 0
    %966 = vmatprep.subr.bf16.mxu0 0
    %967 = vmatpush1.bf16.msra.mxu0 0
    %968 = vmatprep.subr.bf16.mxu0 0
    %969 = vmatpush1.bf16.msra.mxu0 0
    %970 = vmatprep.subr.bf16.mxu0 0
    %971 = vmatpush1.bf16.msra.mxu0 0
    %972 = vmatprep.subr.bf16.mxu0 0
    %973 = vmatpush1.bf16.msra.mxu0 0
    %974 = vmatprep.subr.bf16.mxu0 0
    %975 = vmatpush1.bf16.msra.mxu0 0
    %976 = vmatprep.subr.bf16.mxu0 0
    %977 = vmatpush1.bf16.msra.mxu0 %v251
    %978 = vmatprep.subr.bf16.mxu0 0
    %979 = vmatpush1.bf16.msra.mxu0 %v250
    %980 = vmatprep.subr.bf16.mxu0 0
    %981 = vmatpush2.bf16.msra.mxu0 0
    %982 = vmatprep.subr.bf16.mxu0 0
    %983 = vmatpush2.bf16.msra.mxu0 0
    %984 = vmatprep.subr.bf16.mxu0 0
    %985 = vmatpush2.bf16.msra.mxu0 0
    %986 = vmatprep.subr.bf16.mxu0 0
    %987 = vmatpush2.bf16.msra.mxu0 0
    %988 = vmatprep.subr.bf16.mxu0 0
    %989 = vmatpush2.bf16.msra.mxu0 0
    %990 = vmatprep.subr.bf16.mxu0 0
    %991 = vmatpush2.bf16.msra.mxu0 0
    %992 = vmatprep.subr.bf16.mxu0 0
    %993 = vmatpush2.bf16.msra.mxu0 0
    %994 = vmatprep.subr.bf16.mxu0 0
    %995 = vmatpush2.bf16.msra.mxu0 0
    %996 = vmatprep.mubr.bf16.mxu0 0
    %997 = vmatmul.mubr.bf16.gmra.mxu0 %v882
    %v998 = vpop.f32.mrf.mxu0
    %v999 = vadd.f32 0.0, %v998
    %v1000 = vpop.f32.mrf.mxu0
    %v1001 = vpop.f32.mrf.mxu0
    %v1002 = vpop.f32.mrf.mxu0
    %1003 = vdwg.mxu0
    %v1004 = vadd.f32 %v610, %v999
    %v1005 = vxor.u32 %v1004, 2147483648
    %v1006 = vmul.f32 %v1005, 1.442695
    %v1007 = vpow.pop %v1006
    %v1008 = vadd.f32 %v1007, 1.0
    %v1009 = vrcp.pop %v1008
    %v1010 = vmul.f32 1.0, %v1009
    %v1011 = vadd.f32 %v999, %v329
    %v1014 = vunpack.c.l.s4 1983009808
    %v1015 = vunpack.c.0.s8 %v1014
    %v1016 = vlaneseq
    %v1017 = vshrl.u32 %v1016, 7
    %v1018 = vsub.s32 %v1015, %v1017
    %v1019 = vrot.slane %v1011, %v1018
    %1020 = vrot.lane.b32.xlu0 %v1019, 64
    %v1021 = vpop.permute.xlu0 %1020
    %v1023 = vmul.f32 %v1010, %v1021
    %1025 = vrot.lane.b32.xlu0 %v1023, 64
    %v1026 = vpop.permute.xlu0 %1025
    %v1028 = vadd.f32 %v610, %v1026
    %v1029 = vtanh.pop %v1028
    %v1030 = vsub.f32 1.0, %v1010
    %1032 = vrot.lane.b32.xlu0 %v1029, 96
    %v1033 = vpop.permute.xlu0 %1032
    %v1035 = vmul.f32 %v1030, %v1033
    %v1036 = vmul.f32 %v1010, %v876
    %v1037 = vadd.f32 %v1035, %v1036
    %v1038 = vpack.c.bf16 %v1037, %v1037
    %1040 = vrot.lane.b32.xlu0 %v1038, 96
    %v1041 = vpop.permute.xlu0 %1040
    %v1043 = vsel %vm638, %v1041, 0
    %1045 = vmatprep.subr.bf16.mxu0 0
    %1046 = vmatpush1.bf16.msra.mxu0 0
    %1047 = vmatprep.subr.bf16.mxu0 0
    %1048 = vmatpush1.bf16.msra.mxu0 0
    %1049 = vmatprep.subr.bf16.mxu0 0
    %1050 = vmatpush1.bf16.msra.mxu0 0
    %1051 = vmatprep.subr.bf16.mxu0 0
    %1052 = vmatpush1.bf16.msra.mxu0 0
    %1053 = vmatprep.subr.bf16.mxu0 0
    %1054 = vmatpush1.bf16.msra.mxu0 0
    %1055 = vmatprep.subr.bf16.mxu0 0
    %1056 = vmatpush1.bf16.msra.mxu0 0
    %1057 = vmatprep.subr.bf16.mxu0 0
    %1058 = vmatpush1.bf16.msra.mxu0 %v319
    %1059 = vmatprep.subr.bf16.mxu0 0
    %1060 = vmatpush1.bf16.msra.mxu0 %v318
    %1061 = vmatprep.subr.bf16.mxu0 0
    %1062 = vmatpush2.bf16.msra.mxu0 0
    %1063 = vmatprep.subr.bf16.mxu0 0
    %1064 = vmatpush2.bf16.msra.mxu0 0
    %1065 = vmatprep.subr.bf16.mxu0 0
    %1066 = vmatpush2.bf16.msra.mxu0 0
    %1067 = vmatprep.subr.bf16.mxu0 0
    %1068 = vmatpush2.bf16.msra.mxu0 0
    %1069 = vmatprep.subr.bf16.mxu0 0
    %1070 = vmatpush2.bf16.msra.mxu0 0
    %1071 = vmatprep.subr.bf16.mxu0 0
    %1072 = vmatpush2.bf16.msra.mxu0 0
    %1073 = vmatprep.subr.bf16.mxu0 0
    %1074 = vmatpush2.bf16.msra.mxu0 0
    %1075 = vmatprep.subr.bf16.mxu0 0
    %1076 = vmatpush2.bf16.msra.mxu0 0
    %1077 = vmatprep.mubr.bf16.mxu0 0
    %1078 = vmatmul.mubr.bf16.gmra.mxu0 %v1043
    %v1079 = vpop.f32.mrf.mxu0
    %v1080 = vadd.f32 0.0, %v1079
    %v1081 = vpop.f32.mrf.mxu0
    %v1082 = vpop.f32.mrf.mxu0
    %v1083 = vpop.f32.mrf.mxu0
    %1084 = vdwg.mxu0
    %1085 = vmatprep.subr.bf16.mxu0 0
    %1086 = vmatpush1.bf16.msra.mxu0 0
    %1087 = vmatprep.subr.bf16.mxu0 0
    %1088 = vmatpush1.bf16.msra.mxu0 0
    %1089 = vmatprep.subr.bf16.mxu0 0
    %1090 = vmatpush1.bf16.msra.mxu0 0
    %1091 = vmatprep.subr.bf16.mxu0 0
    %1092 = vmatpush1.bf16.msra.mxu0 0
    %1093 = vmatprep.subr.bf16.mxu0 0
    %1094 = vmatpush1.bf16.msra.mxu0 0
    %1095 = vmatprep.subr.bf16.mxu0 0
    %1096 = vmatpush1.bf16.msra.mxu0 0
    %1097 = vmatprep.subr.bf16.mxu0 0
    %1098 = vmatpush1.bf16.msra.mxu0 %v269
    %1099 = vmatprep.subr.bf16.mxu0 0
    %1100 = vmatpush1.bf16.msra.mxu0 %v268
    %1101 = vmatprep.subr.bf16.mxu0 0
    %1102 = vmatpush2.bf16.msra.mxu0 0
    %1103 = vmatprep.subr.bf16.mxu0 0
    %1104 = vmatpush2.bf16.msra.mxu0 0
    %1105 = vmatprep.subr.bf16.mxu0 0
    %1106 = vmatpush2.bf16.msra.mxu0 0
    %1107 = vmatprep.subr.bf16.mxu0 0
    %1108 = vmatpush2.bf16.msra.mxu0 0
    %1109 = vmatprep.subr.bf16.mxu0 0
    %1110 = vmatpush2.bf16.msra.mxu0 0
    %1111 = vmatprep.subr.bf16.mxu0 0
    %1112 = vmatpush2.bf16.msra.mxu0 0
    %1113 = vmatprep.subr.bf16.mxu0 0
    %1114 = vmatpush2.bf16.msra.mxu0 0
    %1115 = vmatprep.subr.bf16.mxu0 0
    %1116 = vmatpush2.bf16.msra.mxu0 0
    %1117 = vmatprep.mubr.bf16.mxu0 0
    %1118 = vmatmul.mubr.bf16.gmra.mxu0 %v1043
    %v1119 = vpop.f32.mrf.mxu0
    %v1120 = vadd.f32 0.0, %v1119
    %v1121 = vpop.f32.mrf.mxu0
    %v1122 = vpop.f32.mrf.mxu0
    %v1123 = vpop.f32.mrf.mxu0
    %1124 = vdwg.mxu0
    %1125 = vmatprep.subr.bf16.mxu0 0
    %1126 = vmatpush1.bf16.msra.mxu0 0
    %1127 = vmatprep.subr.bf16.mxu0 0
    %1128 = vmatpush1.bf16.msra.mxu0 0
    %1129 = vmatprep.subr.bf16.mxu0 0
    %1130 = vmatpush1.bf16.msra.mxu0 0
    %1131 = vmatprep.subr.bf16.mxu0 0
    %1132 = vmatpush1.bf16.msra.mxu0 0
    %1133 = vmatprep.subr.bf16.mxu0 0
    %1134 = vmatpush1.bf16.msra.mxu0 0
    %1135 = vmatprep.subr.bf16.mxu0 0
    %1136 = vmatpush1.bf16.msra.mxu0 0
    %1137 = vmatprep.subr.bf16.mxu0 0
    %1138 = vmatpush1.bf16.msra.mxu0 %v251
    %1139 = vmatprep.subr.bf16.mxu0 0
    %1140 = vmatpush1.bf16.msra.mxu0 %v250
    %1141 = vmatprep.subr.bf16.mxu0 0
    %1142 = vmatpush2.bf16.msra.mxu0 0
    %1143 = vmatprep.subr.bf16.mxu0 0
    %1144 = vmatpush2.bf16.msra.mxu0 0
    %1145 = vmatprep.subr.bf16.mxu0 0
    %1146 = vmatpush2.bf16.msra.mxu0 0
    %1147 = vmatprep.subr.bf16.mxu0 0
    %1148 = vmatpush2.bf16.msra.mxu0 0
    %1149 = vmatprep.subr.bf16.mxu0 0
    %1150 = vmatpush2.bf16.msra.mxu0 0
    %1151 = vmatprep.subr.bf16.mxu0 0
    %1152 = vmatpush2.bf16.msra.mxu0 0
    %1153 = vmatprep.subr.bf16.mxu0 0
    %1154 = vmatpush2.bf16.msra.mxu0 0
    %1155 = vmatprep.subr.bf16.mxu0 0
    %1156 = vmatpush2.bf16.msra.mxu0 0
    %1157 = vmatprep.mubr.bf16.mxu0 0
    %1158 = vmatmul.mubr.bf16.gmra.mxu0 %v1043
    %v1159 = vpop.f32.mrf.mxu0
    %v1160 = vadd.f32 0.0, %v1159
    %v1161 = vpop.f32.mrf.mxu0
    %v1162 = vpop.f32.mrf.mxu0
    %v1163 = vpop.f32.mrf.mxu0
    %1164 = vdwg.mxu0
    %v1165 = vadd.f32 %v612, %v1160
    %v1166 = vxor.u32 %v1165, 2147483648
    %v1167 = vmul.f32 %v1166, 1.442695
    %v1168 = vpow.pop %v1167
    %v1169 = vadd.f32 %v1168, 1.0
    %v1170 = vrcp.pop %v1169
    %v1171 = vmul.f32 1.0, %v1170
    %v1172 = vadd.f32 %v1160, %v329
    %v1175 = vunpack.c.l.s4 1983009808
    %v1176 = vunpack.c.0.s8 %v1175
    %v1177 = vlaneseq
    %v1178 = vshrl.u32 %v1177, 7
    %v1179 = vsub.s32 %v1176, %v1178
    %v1180 = vrot.slane %v1172, %v1179
    %1181 = vrot.lane.b32.xlu0 %v1180, 64
    %v1182 = vpop.permute.xlu0 %1181
    %v1184 = vmul.f32 %v1171, %v1182
    %1186 = vrot.lane.b32.xlu0 %v1184, 64
    %v1187 = vpop.permute.xlu0 %1186
    %v1189 = vadd.f32 %v612, %v1187
    %v1190 = vtanh.pop %v1189
    %v1191 = vsub.f32 1.0, %v1171
    %1193 = vrot.lane.b32.xlu0 %v1190, 96
    %v1194 = vpop.permute.xlu0 %1193
    %v1196 = vmul.f32 %v1191, %v1194
    %v1197 = vmul.f32 %v1171, %v1037
    %v1198 = vadd.f32 %v1196, %v1197
    %v1199 = vpack.c.bf16 %v1198, %v1198
    %1201 = vrot.lane.b32.xlu0 %v1199, 96
    %v1202 = vpop.permute.xlu0 %1201
    %v1204 = vsel %vm638, %v1202, 0
    %1206 = vmatprep.subr.bf16.mxu0 0
    %1207 = vmatpush1.bf16.msra.mxu0 0
    %1208 = vmatprep.subr.bf16.mxu0 0
    %1209 = vmatpush1.bf16.msra.mxu0 0
    %1210 = vmatprep.subr.bf16.mxu0 0
    %1211 = vmatpush1.bf16.msra.mxu0 0
    %1212 = vmatprep.subr.bf16.mxu0 0
    %1213 = vmatpush1.bf16.msra.mxu0 0
    %1214 = vmatprep.subr.bf16.mxu0 0
    %1215 = vmatpush1.bf16.msra.mxu0 0
    %1216 = vmatprep.subr.bf16.mxu0 0
    %1217 = vmatpush1.bf16.msra.mxu0 0
    %1218 = vmatprep.subr.bf16.mxu0 0
    %1219 = vmatpush1.bf16.msra.mxu0 %v319
    %1220 = vmatprep.subr.bf16.mxu0 0
    %1221 = vmatpush1.bf16.msra.mxu0 %v318
    %1222 = vmatprep.subr.bf16.mxu0 0
    %1223 = vmatpush2.bf16.msra.mxu0 0
    %1224 = vmatprep.subr.bf16.mxu0 0
    %1225 = vmatpush2.bf16.msra.mxu0 0
    %1226 = vmatprep.subr.bf16.mxu0 0
    %1227 = vmatpush2.bf16.msra.mxu0 0
    %1228 = vmatprep.subr.bf16.mxu0 0
    %1229 = vmatpush2.bf16.msra.mxu0 0
    %1230 = vmatprep.subr.bf16.mxu0 0
    %1231 = vmatpush2.bf16.msra.mxu0 0
    %1232 = vmatprep.subr.bf16.mxu0 0
    %1233 = vmatpush2.bf16.msra.mxu0 0
    %1234 = vmatprep.subr.bf16.mxu0 0
    %1235 = vmatpush2.bf16.msra.mxu0 0
    %1236 = vmatprep.subr.bf16.mxu0 0
    %1237 = vmatpush2.bf16.msra.mxu0 0
    %1238 = vmatprep.mubr.bf16.mxu0 0
    %1239 = vmatmul.mubr.bf16.gmra.mxu0 %v1204
    %v1240 = vpop.f32.mrf.mxu0
    %v1241 = vadd.f32 0.0, %v1240
    %v1242 = vpop.f32.mrf.mxu0
    %v1243 = vpop.f32.mrf.mxu0
    %v1244 = vpop.f32.mrf.mxu0
    %1245 = vdwg.mxu0
    %1246 = vmatprep.subr.bf16.mxu0 0
    %1247 = vmatpush1.bf16.msra.mxu0 0
    %1248 = vmatprep.subr.bf16.mxu0 0
    %1249 = vmatpush1.bf16.msra.mxu0 0
    %1250 = vmatprep.subr.bf16.mxu0 0
    %1251 = vmatpush1.bf16.msra.mxu0 0
    %1252 = vmatprep.subr.bf16.mxu0 0
    %1253 = vmatpush1.bf16.msra.mxu0 0
    %1254 = vmatprep.subr.bf16.mxu0 0
    %1255 = vmatpush1.bf16.msra.mxu0 0
    %1256 = vmatprep.subr.bf16.mxu0 0
    %1257 = vmatpush1.bf16.msra.mxu0 0
    %1258 = vmatprep.subr.bf16.mxu0 0
    %1259 = vmatpush1.bf16.msra.mxu0 %v269
    %1260 = vmatprep.subr.bf16.mxu0 0
    %1261 = vmatpush1.bf16.msra.mxu0 %v268
    %1262 = vmatprep.subr.bf16.mxu0 0
    %1263 = vmatpush2.bf16.msra.mxu0 0
    %1264 = vmatprep.subr.bf16.mxu0 0
    %1265 = vmatpush2.bf16.msra.mxu0 0
    %1266 = vmatprep.subr.bf16.mxu0 0
    %1267 = vmatpush2.bf16.msra.mxu0 0
    %1268 = vmatprep.subr.bf16.mxu0 0
    %1269 = vmatpush2.bf16.msra.mxu0 0
    %1270 = vmatprep.subr.bf16.mxu0 0
    %1271 = vmatpush2.bf16.msra.mxu0 0
    %1272 = vmatprep.subr.bf16.mxu0 0
    %1273 = vmatpush2.bf16.msra.mxu0 0
    %1274 = vmatprep.subr.bf16.mxu0 0
    %1275 = vmatpush2.bf16.msra.mxu0 0
    %1276 = vmatprep.subr.bf16.mxu0 0
    %1277 = vmatpush2.bf16.msra.mxu0 0
    %1278 = vmatprep.mubr.bf16.mxu0 0
    %1279 = vmatmul.mubr.bf16.gmra.mxu0 %v1204
    %v1280 = vpop.f32.mrf.mxu0
    %v1281 = vadd.f32 0.0, %v1280
    %v1282 = vpop.f32.mrf.mxu0
    %v1283 = vpop.f32.mrf.mxu0
    %v1284 = vpop.f32.mrf.mxu0
    %1285 = vdwg.mxu0
    %1286 = vmatprep.subr.bf16.mxu0 0
    %1287 = vmatpush1.bf16.msra.mxu0 0
    %1288 = vmatprep.subr.bf16.mxu0 0
    %1289 = vmatpush1.bf16.msra.mxu0 0
    %1290 = vmatprep.subr.bf16.mxu0 0
    %1291 = vmatpush1.bf16.msra.mxu0 0
    %1292 = vmatprep.subr.bf16.mxu0 0
    %1293 = vmatpush1.bf16.msra.mxu0 0
    %1294 = vmatprep.subr.bf16.mxu0 0
    %1295 = vmatpush1.bf16.msra.mxu0 0
    %1296 = vmatprep.subr.bf16.mxu0 0
    %1297 = vmatpush1.bf16.msra.mxu0 0
    %1298 = vmatprep.subr.bf16.mxu0 0
    %1299 = vmatpush1.bf16.msra.mxu0 %v251
    %1300 = vmatprep.subr.bf16.mxu0 0
    %1301 = vmatpush1.bf16.msra.mxu0 %v250
    %1302 = vmatprep.subr.bf16.mxu0 0
    %1303 = vmatpush2.bf16.msra.mxu0 0
    %1304 = vmatprep.subr.bf16.mxu0 0
    %1305 = vmatpush2.bf16.msra.mxu0 0
    %1306 = vmatprep.subr.bf16.mxu0 0
    %1307 = vmatpush2.bf16.msra.mxu0 0
    %1308 = vmatprep.subr.bf16.mxu0 0
    %1309 = vmatpush2.bf16.msra.mxu0 0
    %1310 = vmatprep.subr.bf16.mxu0 0
    %1311 = vmatpush2.bf16.msra.mxu0 0
    %1312 = vmatprep.subr.bf16.mxu0 0
    %1313 = vmatpush2.bf16.msra.mxu0 0
    %1314 = vmatprep.subr.bf16.mxu0 0
    %1315 = vmatpush2.bf16.msra.mxu0 0
    %1316 = vmatprep.subr.bf16.mxu0 0
    %1317 = vmatpush2.bf16.msra.mxu0 0
    %1318 = vmatprep.mubr.bf16.mxu0 0
    %1319 = vmatmul.mubr.bf16.gmra.mxu0 %v1204
    %v1320 = vpop.f32.mrf.mxu0
    %v1321 = vadd.f32 0.0, %v1320
    %v1322 = vpop.f32.mrf.mxu0
    %v1323 = vpop.f32.mrf.mxu0
    %v1324 = vpop.f32.mrf.mxu0
    %1325 = vdwg.mxu0
    %v1326 = vadd.f32 %v620, %v1321
    %v1327 = vxor.u32 %v1326, 2147483648
    %v1328 = vmul.f32 %v1327, 1.442695
    %v1329 = vpow.pop %v1328
    %v1330 = vadd.f32 %v1329, 1.0
    %v1331 = vrcp.pop %v1330
    %v1332 = vmul.f32 1.0, %v1331
    %v1333 = vadd.f32 %v1321, %v329
    %v1336 = vunpack.c.l.s4 1983009808
    %v1337 = vunpack.c.0.s8 %v1336
    %v1338 = vlaneseq
    %v1339 = vshrl.u32 %v1338, 7
    %v1340 = vsub.s32 %v1337, %v1339
    %v1341 = vrot.slane %v1333, %v1340
    %1342 = vrot.lane.b32.xlu0 %v1341, 64
    %v1343 = vpop.permute.xlu0 %1342
    %v1345 = vmul.f32 %v1332, %v1343
    %1347 = vrot.lane.b32.xlu0 %v1345, 64
    %v1348 = vpop.permute.xlu0 %1347
    %v1350 = vadd.f32 %v620, %v1348
    %v1351 = vtanh.pop %v1350
    %v1352 = vsub.f32 1.0, %v1332
    %1354 = vrot.lane.b32.xlu0 %v1351, 96
    %v1355 = vpop.permute.xlu0 %1354
    %v1357 = vmul.f32 %v1352, %v1355
    %v1358 = vmul.f32 %v1332, %v1198
    %v1359 = vadd.f32 %v1357, %v1358
    %v1360 = vpack.c.bf16 %v1359, %v1359
    %1362 = vrot.lane.b32.xlu0 %v1360, 96
    %v1363 = vpop.permute.xlu0 %1362
    %v1365 = vsel %vm638, %v1363, 0
    %1367 = vmatprep.subr.bf16.mxu0 0
    %1368 = vmatpush1.bf16.msra.mxu0 0
    %1369 = vmatprep.subr.bf16.mxu0 0
    %1370 = vmatpush1.bf16.msra.mxu0 0
    %1371 = vmatprep.subr.bf16.mxu0 0
    %1372 = vmatpush1.bf16.msra.mxu0 0
    %1373 = vmatprep.subr.bf16.mxu0 0
    %1374 = vmatpush1.bf16.msra.mxu0 0
    %1375 = vmatprep.subr.bf16.mxu0 0
    %1376 = vmatpush1.bf16.msra.mxu0 0
    %1377 = vmatprep.subr.bf16.mxu0 0
    %1378 = vmatpush1.bf16.msra.mxu0 0
    %1379 = vmatprep.subr.bf16.mxu0 0
    %1380 = vmatpush1.bf16.msra.mxu0 %v319
    %1381 = vmatprep.subr.bf16.mxu0 0
    %1382 = vmatpush1.bf16.msra.mxu0 %v318
    %1383 = vmatprep.subr.bf16.mxu0 0
    %1384 = vmatpush2.bf16.msra.mxu0 0
    %1385 = vmatprep.subr.bf16.mxu0 0
    %1386 = vmatpush2.bf16.msra.mxu0 0
    %1387 = vmatprep.subr.bf16.mxu0 0
    %1388 = vmatpush2.bf16.msra.mxu0 0
    %1389 = vmatprep.subr.bf16.mxu0 0
    %1390 = vmatpush2.bf16.msra.mxu0 0
    %1391 = vmatprep.subr.bf16.mxu0 0
    %1392 = vmatpush2.bf16.msra.mxu0 0
    %1393 = vmatprep.subr.bf16.mxu0 0
    %1394 = vmatpush2.bf16.msra.mxu0 0
    %1395 = vmatprep.subr.bf16.mxu0 0
    %1396 = vmatpush2.bf16.msra.mxu0 0
    %1397 = vmatprep.subr.bf16.mxu0 0
    %1398 = vmatpush2.bf16.msra.mxu0 0
    %1399 = vmatprep.mubr.bf16.mxu0 0
    %1400 = vmatmul.mubr.bf16.gmra.mxu0 %v1365
    %v1401 = vpop.f32.mrf.mxu0
    %v1402 = vadd.f32 0.0, %v1401
    %v1403 = vpop.f32.mrf.mxu0
    %v1404 = vpop.f32.mrf.mxu0
    %v1405 = vpop.f32.mrf.mxu0
    %1406 = vdwg.mxu0
    %1407 = vmatprep.subr.bf16.mxu0 0
    %1408 = vmatpush1.bf16.msra.mxu0 0
    %1409 = vmatprep.subr.bf16.mxu0 0
    %1410 = vmatpush1.bf16.msra.mxu0 0
    %1411 = vmatprep.subr.bf16.mxu0 0
    %1412 = vmatpush1.bf16.msra.mxu0 0
    %1413 = vmatprep.subr.bf16.mxu0 0
    %1414 = vmatpush1.bf16.msra.mxu0 0
    %1415 = vmatprep.subr.bf16.mxu0 0
    %1416 = vmatpush1.bf16.msra.mxu0 0
    %1417 = vmatprep.subr.bf16.mxu0 0
    %1418 = vmatpush1.bf16.msra.mxu0 0
    %1419 = vmatprep.subr.bf16.mxu0 0
    %1420 = vmatpush1.bf16.msra.mxu0 %v269
    %1421 = vmatprep.subr.bf16.mxu0 0
    %1422 = vmatpush1.bf16.msra.mxu0 %v268
    %1423 = vmatprep.subr.bf16.mxu0 0
    %1424 = vmatpush2.bf16.msra.mxu0 0
    %1425 = vmatprep.subr.bf16.mxu0 0
    %1426 = vmatpush2.bf16.msra.mxu0 0
    %1427 = vmatprep.subr.bf16.mxu0 0
    %1428 = vmatpush2.bf16.msra.mxu0 0
    %1429 = vmatprep.subr.bf16.mxu0 0
    %1430 = vmatpush2.bf16.msra.mxu0 0
    %1431 = vmatprep.subr.bf16.mxu0 0
    %1432 = vmatpush2.bf16.msra.mxu0 0
    %1433 = vmatprep.subr.bf16.mxu0 0
    %1434 = vmatpush2.bf16.msra.mxu0 0
    %1435 = vmatprep.subr.bf16.mxu0 0
    %1436 = vmatpush2.bf16.msra.mxu0 0
    %1437 = vmatprep.subr.bf16.mxu0 0
    %1438 = vmatpush2.bf16.msra.mxu0 0
    %1439 = vmatprep.mubr.bf16.mxu0 0
    %1440 = vmatmul.mubr.bf16.gmra.mxu0 %v1365
    %v1441 = vpop.f32.mrf.mxu0
    %v1442 = vadd.f32 0.0, %v1441
    %v1443 = vpop.f32.mrf.mxu0
    %v1444 = vpop.f32.mrf.mxu0
    %v1445 = vpop.f32.mrf.mxu0
    %1446 = vdwg.mxu0
    %1447 = vmatprep.subr.bf16.mxu0 0
    %1448 = vmatpush1.bf16.msra.mxu0 0
    %1449 = vmatprep.subr.bf16.mxu0 0
    %1450 = vmatpush1.bf16.msra.mxu0 0
    %1451 = vmatprep.subr.bf16.mxu0 0
    %1452 = vmatpush1.bf16.msra.mxu0 0
    %1453 = vmatprep.subr.bf16.mxu0 0
    %1454 = vmatpush1.bf16.msra.mxu0 0
    %1455 = vmatprep.subr.bf16.mxu0 0
    %1456 = vmatpush1.bf16.msra.mxu0 0
    %1457 = vmatprep.subr.bf16.mxu0 0
    %1458 = vmatpush1.bf16.msra.mxu0 0
    %1459 = vmatprep.subr.bf16.mxu0 0
    %1460 = vmatpush1.bf16.msra.mxu0 %v251
    %1461 = vmatprep.subr.bf16.mxu0 0
    %1462 = vmatpush1.bf16.msra.mxu0 %v250
    %1463 = vmatprep.subr.bf16.mxu0 0
    %1464 = vmatpush2.bf16.msra.mxu0 0
    %1465 = vmatprep.subr.bf16.mxu0 0
    %1466 = vmatpush2.bf16.msra.mxu0 0
    %1467 = vmatprep.subr.bf16.mxu0 0
    %1468 = vmatpush2.bf16.msra.mxu0 0
    %1469 = vmatprep.subr.bf16.mxu0 0
    %1470 = vmatpush2.bf16.msra.mxu0 0
    %1471 = vmatprep.subr.bf16.mxu0 0
    %1472 = vmatpush2.bf16.msra.mxu0 0
    %1473 = vmatprep.subr.bf16.mxu0 0
    %1474 = vmatpush2.bf16.msra.mxu0 0
    %1475 = vmatprep.subr.bf16.mxu0 0
    %1476 = vmatpush2.bf16.msra.mxu0 0
    %1477 = vmatprep.subr.bf16.mxu0 0
    %1478 = vmatpush2.bf16.msra.mxu0 0
    %1479 = vmatprep.mubr.bf16.mxu0 0
    %1480 = vmatmul.mubr.bf16.gmra.mxu0 %v1365
    %v1481 = vpop.f32.mrf.mxu0
    %v1482 = vadd.f32 0.0, %v1481
    %v1483 = vpop.f32.mrf.mxu0
    %v1484 = vpop.f32.mrf.mxu0
    %v1485 = vpop.f32.mrf.mxu0
    %1486 = vdwg.mxu0
    %v1487 = vadd.f32 %v628, %v1482
    %v1488 = vxor.u32 %v1487, 2147483648
    %v1489 = vmul.f32 %v1488, 1.442695
    %v1490 = vpow.pop %v1489
    %v1491 = vadd.f32 %v1490, 1.0
    %v1492 = vrcp.pop %v1491
    %v1493 = vmul.f32 1.0, %v1492
    %v1494 = vadd.f32 %v1482, %v329
    %v1497 = vunpack.c.l.s4 1983009808
    %v1498 = vunpack.c.0.s8 %v1497
    %v1499 = vlaneseq
    %v1500 = vshrl.u32 %v1499, 7
    %v1501 = vsub.s32 %v1498, %v1500
    %v1502 = vrot.slane %v1494, %v1501
    %1503 = vrot.lane.b32.xlu0 %v1502, 64
    %v1504 = vpop.permute.xlu0 %1503
    %v1506 = vmul.f32 %v1493, %v1504
    %1508 = vrot.lane.b32.xlu0 %v1506, 64
    %v1509 = vpop.permute.xlu0 %1508
    %v1511 = vadd.f32 %v628, %v1509
    %v1512 = vtanh.pop %v1511
    %v1513 = vsub.f32 1.0, %v1493
    %1515 = vrot.lane.b32.xlu0 %v1512, 96
    %v1516 = vpop.permute.xlu0 %1515
    %v1518 = vmul.f32 %v1513, %v1516
    %v1519 = vmul.f32 %v1493, %v1359
    %v1520 = vadd.f32 %v1518, %v1519
    %v1521 = vpack.c.bf16 %v1520, %v1520
    %1523 = vrot.lane.b32.xlu0 %v1521, 96
    %v1524 = vpop.permute.xlu0 %1523
    %v1526 = vsel %vm638, %v1524, 0
    %1528 = vmatprep.subr.bf16.mxu0 0
    %1529 = vmatpush1.bf16.msra.mxu0 0
    %1530 = vmatprep.subr.bf16.mxu0 0
    %1531 = vmatpush1.bf16.msra.mxu0 0
    %1532 = vmatprep.subr.bf16.mxu0 0
    %1533 = vmatpush1.bf16.msra.mxu0 0
    %1534 = vmatprep.subr.bf16.mxu0 0
    %1535 = vmatpush1.bf16.msra.mxu0 0
    %1536 = vmatprep.subr.bf16.mxu0 0
    %1537 = vmatpush1.bf16.msra.mxu0 0
    %1538 = vmatprep.subr.bf16.mxu0 0
    %1539 = vmatpush1.bf16.msra.mxu0 0
    %1540 = vmatprep.subr.bf16.mxu0 0
    %1541 = vmatpush1.bf16.msra.mxu0 %v319
    %1542 = vmatprep.subr.bf16.mxu0 0
    %1543 = vmatpush1.bf16.msra.mxu0 %v318
    %1544 = vmatprep.subr.bf16.mxu0 0
    %1545 = vmatpush2.bf16.msra.mxu0 0
    %1546 = vmatprep.subr.bf16.mxu0 0
    %1547 = vmatpush2.bf16.msra.mxu0 0
    %1548 = vmatprep.subr.bf16.mxu0 0
    %1549 = vmatpush2.bf16.msra.mxu0 0
    %1550 = vmatprep.subr.bf16.mxu0 0
    %1551 = vmatpush2.bf16.msra.mxu0 0
    %1552 = vmatprep.subr.bf16.mxu0 0
    %1553 = vmatpush2.bf16.msra.mxu0 0
    %1554 = vmatprep.subr.bf16.mxu0 0
    %1555 = vmatpush2.bf16.msra.mxu0 0
    %1556 = vmatprep.subr.bf16.mxu0 0
    %1557 = vmatpush2.bf16.msra.mxu0 0
    %1558 = vmatprep.subr.bf16.mxu0 0
    %1559 = vmatpush2.bf16.msra.mxu0 0
    %1560 = vmatprep.mubr.bf16.mxu0 0
    %1561 = vmatmul.mubr.bf16.gmra.mxu0 %v1526
    %v1562 = vpop.f32.mrf.mxu0
    %v1563 = vadd.f32 0.0, %v1562
    %v1564 = vpop.f32.mrf.mxu0
    %v1565 = vpop.f32.mrf.mxu0
    %v1566 = vpop.f32.mrf.mxu0
    %1567 = vdwg.mxu0
    %1568 = vmatprep.subr.bf16.mxu0 0
    %1569 = vmatpush1.bf16.msra.mxu0 0
    %1570 = vmatprep.subr.bf16.mxu0 0
    %1571 = vmatpush1.bf16.msra.mxu0 0
    %1572 = vmatprep.subr.bf16.mxu0 0
    %1573 = vmatpush1.bf16.msra.mxu0 0
    %1574 = vmatprep.subr.bf16.mxu0 0
    %1575 = vmatpush1.bf16.msra.mxu0 0
    %1576 = vmatprep.subr.bf16.mxu0 0
    %1577 = vmatpush1.bf16.msra.mxu0 0
    %1578 = vmatprep.subr.bf16.mxu0 0
    %1579 = vmatpush1.bf16.msra.mxu0 0
    %1580 = vmatprep.subr.bf16.mxu0 0
    %1581 = vmatpush1.bf16.msra.mxu0 %v269
    %1582 = vmatprep.subr.bf16.mxu0 0
    %1583 = vmatpush1.bf16.msra.mxu0 %v268
    %1584 = vmatprep.subr.bf16.mxu0 0
    %1585 = vmatpush2.bf16.msra.mxu0 0
    %1586 = vmatprep.subr.bf16.mxu0 0
    %1587 = vmatpush2.bf16.msra.mxu0 0
    %1588 = vmatprep.subr.bf16.mxu0 0
    %1589 = vmatpush2.bf16.msra.mxu0 0
    %1590 = vmatprep.subr.bf16.mxu0 0
    %1591 = vmatpush2.bf16.msra.mxu0 0
    %1592 = vmatprep.subr.bf16.mxu0 0
    %1593 = vmatpush2.bf16.msra.mxu0 0
    %1594 = vmatprep.subr.bf16.mxu0 0
    %1595 = vmatpush2.bf16.msra.mxu0 0
    %1596 = vmatprep.subr.bf16.mxu0 0
    %1597 = vmatpush2.bf16.msra.mxu0 0
    %1598 = vmatprep.subr.bf16.mxu0 0
    %1599 = vmatpush2.bf16.msra.mxu0 0
    %1600 = vmatprep.mubr.bf16.mxu0 0
    %1601 = vmatmul.mubr.bf16.gmra.mxu0 %v1526
    %v1602 = vpop.f32.mrf.mxu0
    %v1603 = vadd.f32 0.0, %v1602
    %v1604 = vpop.f32.mrf.mxu0
    %v1605 = vpop.f32.mrf.mxu0
    %v1606 = vpop.f32.mrf.mxu0
    %1607 = vdwg.mxu0
    %1608 = vmatprep.subr.bf16.mxu0 0
    %1609 = vmatpush1.bf16.msra.mxu0 0
    %1610 = vmatprep.subr.bf16.mxu0 0
    %1611 = vmatpush1.bf16.msra.mxu0 0
    %1612 = vmatprep.subr.bf16.mxu0 0
    %1613 = vmatpush1.bf16.msra.mxu0 0
    %1614 = vmatprep.subr.bf16.mxu0 0
    %1615 = vmatpush1.bf16.msra.mxu0 0
    %1616 = vmatprep.subr.bf16.mxu0 0
    %1617 = vmatpush1.bf16.msra.mxu0 0
    %1618 = vmatprep.subr.bf16.mxu0 0
    %1619 = vmatpush1.bf16.msra.mxu0 0
    %1620 = vmatprep.subr.bf16.mxu0 0
    %1621 = vmatpush1.bf16.msra.mxu0 %v251
    %1622 = vmatprep.subr.bf16.mxu0 0
    %1623 = vmatpush1.bf16.msra.mxu0 %v250
    %1624 = vmatprep.subr.bf16.mxu0 0
    %1625 = vmatpush2.bf16.msra.mxu0 0
    %1626 = vmatprep.subr.bf16.mxu0 0
    %1627 = vmatpush2.bf16.msra.mxu0 0
    %1628 = vmatprep.subr.bf16.mxu0 0
    %1629 = vmatpush2.bf16.msra.mxu0 0
    %1630 = vmatprep.subr.bf16.mxu0 0
    %1631 = vmatpush2.bf16.msra.mxu0 0
    %1632 = vmatprep.subr.bf16.mxu0 0
    %1633 = vmatpush2.bf16.msra.mxu0 0
    %1634 = vmatprep.subr.bf16.mxu0 0
    %1635 = vmatpush2.bf16.msra.mxu0 0
    %1636 = vmatprep.subr.bf16.mxu0 0
    %1637 = vmatpush2.bf16.msra.mxu0 0
    %1638 = vmatprep.subr.bf16.mxu0 0
    %1639 = vmatpush2.bf16.msra.mxu0 0
    %1640 = vmatprep.mubr.bf16.mxu0 0
    %1641 = vmatmul.mubr.bf16.gmra.mxu0 %v1526
    %v1642 = vpop.f32.mrf.mxu0
    %v1643 = vadd.f32 0.0, %v1642
    %v1644 = vpop.f32.mrf.mxu0
    %v1645 = vpop.f32.mrf.mxu0
    %v1646 = vpop.f32.mrf.mxu0
    %1647 = vdwg.mxu0
    %v1648 = vadd.f32 %v627, %v1643
    %v1649 = vxor.u32 %v1648, 2147483648
    %v1650 = vmul.f32 %v1649, 1.442695
    %v1651 = vpow.pop %v1650
    %v1652 = vadd.f32 %v1651, 1.0
    %v1653 = vrcp.pop %v1652
    %v1654 = vmul.f32 1.0, %v1653
    %v1655 = vadd.f32 %v1643, %v329
    %v1658 = vunpack.c.l.s4 1983009808
    %v1659 = vunpack.c.0.s8 %v1658
    %v1660 = vlaneseq
    %v1661 = vshrl.u32 %v1660, 7
    %v1662 = vsub.s32 %v1659, %v1661
    %v1663 = vrot.slane %v1655, %v1662
    %1664 = vrot.lane.b32.xlu0 %v1663, 64
    %v1665 = vpop.permute.xlu0 %1664
    %v1667 = vmul.f32 %v1654, %v1665
    %1669 = vrot.lane.b32.xlu0 %v1667, 64
    %v1670 = vpop.permute.xlu0 %1669
    %v1672 = vadd.f32 %v627, %v1670
    %v1673 = vtanh.pop %v1672
    %v1674 = vsub.f32 1.0, %v1654
    %1676 = vrot.lane.b32.xlu0 %v1673, 96
    %v1677 = vpop.permute.xlu0 %1676
    %v1679 = vmul.f32 %v1674, %v1677
    %v1680 = vmul.f32 %v1654, %v1520
    %v1681 = vadd.f32 %v1679, %v1680
    %v1682 = vpack.c.bf16 %v1681, %v1681
    %1684 = vrot.lane.b32.xlu0 %v1682, 96
    %v1685 = vpop.permute.xlu0 %1684
    %v1687 = vsel %vm638, %v1685, 0
    %1689 = vmatprep.subr.bf16.mxu0 0
    %1690 = vmatpush1.bf16.msra.mxu0 0
    %1691 = vmatprep.subr.bf16.mxu0 0
    %1692 = vmatpush1.bf16.msra.mxu0 0
    %1693 = vmatprep.subr.bf16.mxu0 0
    %1694 = vmatpush1.bf16.msra.mxu0 0
    %1695 = vmatprep.subr.bf16.mxu0 0
    %1696 = vmatpush1.bf16.msra.mxu0 0
    %1697 = vmatprep.subr.bf16.mxu0 0
    %1698 = vmatpush1.bf16.msra.mxu0 0
    %1699 = vmatprep.subr.bf16.mxu0 0
    %1700 = vmatpush1.bf16.msra.mxu0 0
    %1701 = vmatprep.subr.bf16.mxu0 0
    %1702 = vmatpush1.bf16.msra.mxu0 %v319
    %1703 = vmatprep.subr.bf16.mxu0 0
    %1704 = vmatpush1.bf16.msra.mxu0 %v318
    %1705 = vmatprep.subr.bf16.mxu0 0
    %1706 = vmatpush2.bf16.msra.mxu0 0
    %1707 = vmatprep.subr.bf16.mxu0 0
    %1708 = vmatpush2.bf16.msra.mxu0 0
    %1709 = vmatprep.subr.bf16.mxu0 0
    %1710 = vmatpush2.bf16.msra.mxu0 0
    %1711 = vmatprep.subr.bf16.mxu0 0
    %1712 = vmatpush2.bf16.msra.mxu0 0
    %1713 = vmatprep.subr.bf16.mxu0 0
    %1714 = vmatpush2.bf16.msra.mxu0 0
    %1715 = vmatprep.subr.bf16.mxu0 0
    %1716 = vmatpush2.bf16.msra.mxu0 0
    %1717 = vmatprep.subr.bf16.mxu0 0
    %1718 = vmatpush2.bf16.msra.mxu0 0
    %1719 = vmatprep.subr.bf16.mxu0 0
    %1720 = vmatpush2.bf16.msra.mxu0 0
    %1721 = vmatprep.mubr.bf16.mxu0 0
    %1722 = vmatmul.mubr.bf16.gmra.mxu0 %v1687
    %v1723 = vpop.f32.mrf.mxu0
    %v1724 = vadd.f32 0.0, %v1723
    %v1725 = vpop.f32.mrf.mxu0
    %v1726 = vpop.f32.mrf.mxu0
    %v1727 = vpop.f32.mrf.mxu0
    %1728 = vdwg.mxu0
    %1729 = vmatprep.subr.bf16.mxu0 0
    %1730 = vmatpush1.bf16.msra.mxu0 0
    %1731 = vmatprep.subr.bf16.mxu0 0
    %1732 = vmatpush1.bf16.msra.mxu0 0
    %1733 = vmatprep.subr.bf16.mxu0 0
    %1734 = vmatpush1.bf16.msra.mxu0 0
    %1735 = vmatprep.subr.bf16.mxu0 0
    %1736 = vmatpush1.bf16.msra.mxu0 0
    %1737 = vmatprep.subr.bf16.mxu0 0
    %1738 = vmatpush1.bf16.msra.mxu0 0
    %1739 = vmatprep.subr.bf16.mxu0 0
    %1740 = vmatpush1.bf16.msra.mxu0 0
    %1741 = vmatprep.subr.bf16.mxu0 0
    %1742 = vmatpush1.bf16.msra.mxu0 %v269
    %1743 = vmatprep.subr.bf16.mxu0 0
    %1744 = vmatpush1.bf16.msra.mxu0 %v268
    %1745 = vmatprep.subr.bf16.mxu0 0
    %1746 = vmatpush2.bf16.msra.mxu0 0
    %1747 = vmatprep.subr.bf16.mxu0 0
    %1748 = vmatpush2.bf16.msra.mxu0 0
    %1749 = vmatprep.subr.bf16.mxu0 0
    %1750 = vmatpush2.bf16.msra.mxu0 0
    %1751 = vmatprep.subr.bf16.mxu0 0
    %1752 = vmatpush2.bf16.msra.mxu0 0
    %1753 = vmatprep.subr.bf16.mxu0 0
    %1754 = vmatpush2.bf16.msra.mxu0 0
    %1755 = vmatprep.subr.bf16.mxu0 0
    %1756 = vmatpush2.bf16.msra.mxu0 0
    %1757 = vmatprep.subr.bf16.mxu0 0
    %1758 = vmatpush2.bf16.msra.mxu0 0
    %1759 = vmatprep.subr.bf16.mxu0 0
    %1760 = vmatpush2.bf16.msra.mxu0 0
    %1761 = vmatprep.mubr.bf16.mxu0 0
    %1762 = vmatmul.mubr.bf16.gmra.mxu0 %v1687
    %v1763 = vpop.f32.mrf.mxu0
    %v1764 = vadd.f32 0.0, %v1763
    %v1765 = vpop.f32.mrf.mxu0
    %v1766 = vpop.f32.mrf.mxu0
    %v1767 = vpop.f32.mrf.mxu0
    %1768 = vdwg.mxu0
    %1769 = vmatprep.subr.bf16.mxu0 0
    %1770 = vmatpush1.bf16.msra.mxu0 0
    %1771 = vmatprep.subr.bf16.mxu0 0
    %1772 = vmatpush1.bf16.msra.mxu0 0
    %1773 = vmatprep.subr.bf16.mxu0 0
    %1774 = vmatpush1.bf16.msra.mxu0 0
    %1775 = vmatprep.subr.bf16.mxu0 0
    %1776 = vmatpush1.bf16.msra.mxu0 0
    %1777 = vmatprep.subr.bf16.mxu0 0
    %1778 = vmatpush1.bf16.msra.mxu0 0
    %1779 = vmatprep.subr.bf16.mxu0 0
    %1780 = vmatpush1.bf16.msra.mxu0 0
    %1781 = vmatprep.subr.bf16.mxu0 0
    %1782 = vmatpush1.bf16.msra.mxu0 %v251
    %1783 = vmatprep.subr.bf16.mxu0 0
    %1784 = vmatpush1.bf16.msra.mxu0 %v250
    %1785 = vmatprep.subr.bf16.mxu0 0
    %1786 = vmatpush2.bf16.msra.mxu0 0
    %1787 = vmatprep.subr.bf16.mxu0 0
    %1788 = vmatpush2.bf16.msra.mxu0 0
    %1789 = vmatprep.subr.bf16.mxu0 0
    %1790 = vmatpush2.bf16.msra.mxu0 0
    %1791 = vmatprep.subr.bf16.mxu0 0
    %1792 = vmatpush2.bf16.msra.mxu0 0
    %1793 = vmatprep.subr.bf16.mxu0 0
    %1794 = vmatpush2.bf16.msra.mxu0 0
    %1795 = vmatprep.subr.bf16.mxu0 0
    %1796 = vmatpush2.bf16.msra.mxu0 0
    %1797 = vmatprep.subr.bf16.mxu0 0
    %1798 = vmatpush2.bf16.msra.mxu0 0
    %1799 = vmatprep.subr.bf16.mxu0 0
    %1800 = vmatpush2.bf16.msra.mxu0 0
    %1801 = vmatprep.mubr.bf16.mxu0 0
    %1802 = vmatmul.mubr.bf16.gmra.mxu0 %v1687
    %v1803 = vpop.f32.mrf.mxu0
    %v1804 = vadd.f32 0.0, %v1803
    %v1805 = vpop.f32.mrf.mxu0
    %v1806 = vpop.f32.mrf.mxu0
    %v1807 = vpop.f32.mrf.mxu0
    %1808 = vdwg.mxu0
    %v1809 = vadd.f32 %v629, %v1804
    %v1810 = vxor.u32 %v1809, 2147483648
    %v1811 = vmul.f32 %v1810, 1.442695
    %v1812 = vpow.pop %v1811
    %v1813 = vadd.f32 %v1812, 1.0
    %v1814 = vrcp.pop %v1813
    %v1815 = vmul.f32 1.0, %v1814
    %v1816 = vadd.f32 %v1804, %v329
    %v1819 = vunpack.c.l.s4 1983009808
    %v1820 = vunpack.c.0.s8 %v1819
    %v1821 = vlaneseq
    %v1822 = vshrl.u32 %v1821, 7
    %v1823 = vsub.s32 %v1820, %v1822
    %v1824 = vrot.slane %v1816, %v1823
    %1825 = vrot.lane.b32.xlu0 %v1824, 64
    %v1826 = vpop.permute.xlu0 %1825
    %v1828 = vmul.f32 %v1815, %v1826
    %1830 = vrot.lane.b32.xlu0 %v1828, 64
    %v1831 = vpop.permute.xlu0 %1830
    %v1833 = vadd.f32 %v629, %v1831
    %v1834 = vtanh.pop %v1833
    %v1835 = vsub.f32 1.0, %v1815
    %1837 = vrot.lane.b32.xlu0 %v1834, 96
    %v1838 = vpop.permute.xlu0 %1837
    %v1840 = vmul.f32 %v1835, %v1838
    %v1841 = vmul.f32 %v1815, %v1681
    %v1842 = vadd.f32 %v1840, %v1841
    %v1843 = vpack.c.bf16 %v1842, %v1842
    %1845 = vrot.lane.b32.xlu0 %v1843, 96
    %v1846 = vpop.permute.xlu0 %1845
    %v1848 = vsel %vm638, %v1846, 0
    %1850 = vmatprep.subr.bf16.mxu0 0
    %1851 = vmatpush1.bf16.msra.mxu0 0
    %1852 = vmatprep.subr.bf16.mxu0 0
    %1853 = vmatpush1.bf16.msra.mxu0 0
    %1854 = vmatprep.subr.bf16.mxu0 0
    %1855 = vmatpush1.bf16.msra.mxu0 0
    %1856 = vmatprep.subr.bf16.mxu0 0
    %1857 = vmatpush1.bf16.msra.mxu0 0
    %1858 = vmatprep.subr.bf16.mxu0 0
    %1859 = vmatpush1.bf16.msra.mxu0 0
    %1860 = vmatprep.subr.bf16.mxu0 0
    %1861 = vmatpush1.bf16.msra.mxu0 0
    %1862 = vmatprep.subr.bf16.mxu0 0
    %1863 = vmatpush1.bf16.msra.mxu0 %v319
    %1864 = vmatprep.subr.bf16.mxu0 0
    %1865 = vmatpush1.bf16.msra.mxu0 %v318
    %1866 = vmatprep.subr.bf16.mxu0 0
    %1867 = vmatpush2.bf16.msra.mxu0 0
    %1868 = vmatprep.subr.bf16.mxu0 0
    %1869 = vmatpush2.bf16.msra.mxu0 0
    %1870 = vmatprep.subr.bf16.mxu0 0
    %1871 = vmatpush2.bf16.msra.mxu0 0
    %1872 = vmatprep.subr.bf16.mxu0 0
    %1873 = vmatpush2.bf16.msra.mxu0 0
    %1874 = vmatprep.subr.bf16.mxu0 0
    %1875 = vmatpush2.bf16.msra.mxu0 0
    %1876 = vmatprep.subr.bf16.mxu0 0
    %1877 = vmatpush2.bf16.msra.mxu0 0
    %1878 = vmatprep.subr.bf16.mxu0 0
    %1879 = vmatpush2.bf16.msra.mxu0 0
    %1880 = vmatprep.subr.bf16.mxu0 0
    %1881 = vmatpush2.bf16.msra.mxu0 0
    %1882 = vmatprep.mubr.bf16.mxu0 0
    %1883 = vmatmul.mubr.bf16.gmra.mxu0 %v1848
    %v1884 = vpop.f32.mrf.mxu0
    %v1885 = vadd.f32 0.0, %v1884
    %v1886 = vpop.f32.mrf.mxu0
    %v1887 = vpop.f32.mrf.mxu0
    %v1888 = vpop.f32.mrf.mxu0
    %1889 = vdwg.mxu0
    %1890 = vmatprep.subr.bf16.mxu0 0
    %1891 = vmatpush1.bf16.msra.mxu0 0
    %1892 = vmatprep.subr.bf16.mxu0 0
    %1893 = vmatpush1.bf16.msra.mxu0 0
    %1894 = vmatprep.subr.bf16.mxu0 0
    %1895 = vmatpush1.bf16.msra.mxu0 0
    %1896 = vmatprep.subr.bf16.mxu0 0
    %1897 = vmatpush1.bf16.msra.mxu0 0
    %1898 = vmatprep.subr.bf16.mxu0 0
    %1899 = vmatpush1.bf16.msra.mxu0 0
    %1900 = vmatprep.subr.bf16.mxu0 0
    %1901 = vmatpush1.bf16.msra.mxu0 0
    %1902 = vmatprep.subr.bf16.mxu0 0
    %1903 = vmatpush1.bf16.msra.mxu0 %v269
    %1904 = vmatprep.subr.bf16.mxu0 0
    %1905 = vmatpush1.bf16.msra.mxu0 %v268
    %1906 = vmatprep.subr.bf16.mxu0 0
    %1907 = vmatpush2.bf16.msra.mxu0 0
    %1908 = vmatprep.subr.bf16.mxu0 0
    %1909 = vmatpush2.bf16.msra.mxu0 0
    %1910 = vmatprep.subr.bf16.mxu0 0
    %1911 = vmatpush2.bf16.msra.mxu0 0
    %1912 = vmatprep.subr.bf16.mxu0 0
    %1913 = vmatpush2.bf16.msra.mxu0 0
    %1914 = vmatprep.subr.bf16.mxu0 0
    %1915 = vmatpush2.bf16.msra.mxu0 0
    %1916 = vmatprep.subr.bf16.mxu0 0
    %1917 = vmatpush2.bf16.msra.mxu0 0
    %1918 = vmatprep.subr.bf16.mxu0 0
    %1919 = vmatpush2.bf16.msra.mxu0 0
    %1920 = vmatprep.subr.bf16.mxu0 0
    %1921 = vmatpush2.bf16.msra.mxu0 0
    %1922 = vmatprep.mubr.bf16.mxu0 0
    %1923 = vmatmul.mubr.bf16.gmra.mxu0 %v1848
    %v1924 = vpop.f32.mrf.mxu0
    %v1925 = vadd.f32 0.0, %v1924
    %v1926 = vpop.f32.mrf.mxu0
    %v1927 = vpop.f32.mrf.mxu0
    %v1928 = vpop.f32.mrf.mxu0
    %1929 = vdwg.mxu0
    %v1930 = vlaneseq
    %v1931 = vshrl.u32 %v1930, 7
    %v1932 = vsub.s32 0, %v1931
    %v1933 = vrot.slane %v758, %v1932
    %1935 = vbcast.lane.b32.xlu0 %v1933, 256
    %v1936 = vpop.permute.xlu0 %1935
    %s1938 = sor.u32 256, 8
    %1939 = vbcast.lane.b32.xlu0 %v1933, %s1938
    %v1940 = vpop.permute.xlu0 %1939
    %s1942 = sor.u32 256, 16
    %1943 = vbcast.lane.b32.xlu0 %v1933, %s1942
    %v1944 = vpop.permute.xlu0 %1943
    %s1946 = sor.u32 256, 24
    %1947 = vbcast.lane.b32.xlu0 %v1933, %s1946
    %v1948 = vpop.permute.xlu0 %1947
    %v1949 = vlaneseq
    %v1950 = vshrl.u32 %v1949, 7
    %v1951 = vsub.s32 1, %v1950
    %v1952 = vrot.slane %v758, %v1951
    %1954 = vbcast.lane.b32.xlu0 %v1952, 256
    %v1955 = vpop.permute.xlu0 %1954
    %s1957 = sor.u32 256, 8
    %1958 = vbcast.lane.b32.xlu0 %v1952, %s1957
    %v1959 = vpop.permute.xlu0 %1958
    %s1961 = sor.u32 256, 16
    %1962 = vbcast.lane.b32.xlu0 %v1952, %s1961
    %v1963 = vpop.permute.xlu0 %1962
    %s1965 = sor.u32 256, 24
    %1966 = vbcast.lane.b32.xlu0 %v1952, %s1965
    %v1967 = vpop.permute.xlu0 %1966
    %v1968 = vlaneseq
    %v1969 = vshrl.u32 %v1968, 7
    %v1970 = vsub.s32 0, %v1969
    %v1971 = vrot.slane %v919, %v1970
    %1973 = vbcast.lane.b32.xlu0 %v1971, 256
    %v1974 = vpop.permute.xlu0 %1973
    %s1976 = sor.u32 256, 8
    %1977 = vbcast.lane.b32.xlu0 %v1971, %s1976
    %v1978 = vpop.permute.xlu0 %1977
    %s1980 = sor.u32 256, 16
    %1981 = vbcast.lane.b32.xlu0 %v1971, %s1980
    %v1982 = vpop.permute.xlu0 %1981
    %s1984 = sor.u32 256, 24
    %1985 = vbcast.lane.b32.xlu0 %v1971, %s1984
    %v1986 = vpop.permute.xlu0 %1985
    %v1987 = vlaneseq
    %v1988 = vshrl.u32 %v1987, 7
    %v1989 = vsub.s32 1, %v1988
    %v1990 = vrot.slane %v919, %v1989
    %1992 = vbcast.lane.b32.xlu0 %v1990, 256
    %v1993 = vpop.permute.xlu0 %1992
    %s1995 = sor.u32 256, 8
    %1996 = vbcast.lane.b32.xlu0 %v1990, %s1995
    %v1997 = vpop.permute.xlu0 %1996
    %s1999 = sor.u32 256, 16
    %2000 = vbcast.lane.b32.xlu0 %v1990, %s1999
    %v2001 = vpop.permute.xlu0 %2000
    %s2003 = sor.u32 256, 24
    %2004 = vbcast.lane.b32.xlu0 %v1990, %s2003
    %v2005 = vpop.permute.xlu0 %2004
    %v2006 = vlaneseq
    %v2007 = vshrl.u32 %v2006, 7
    %v2008 = vsub.s32 0, %v2007
    %v2009 = vrot.slane %v1080, %v2008
    %2011 = vbcast.lane.b32.xlu0 %v2009, 256
    %v2012 = vpop.permute.xlu0 %2011
    %s2014 = sor.u32 256, 8
    %2015 = vbcast.lane.b32.xlu0 %v2009, %s2014
    %v2016 = vpop.permute.xlu0 %2015
    %s2018 = sor.u32 256, 16
    %2019 = vbcast.lane.b32.xlu0 %v2009, %s2018
    %v2020 = vpop.permute.xlu0 %2019
    %s2022 = sor.u32 256, 24
    %2023 = vbcast.lane.b32.xlu0 %v2009, %s2022
    %v2024 = vpop.permute.xlu0 %2023
    %v2025 = vlaneseq
    %v2026 = vshrl.u32 %v2025, 7
    %v2027 = vsub.s32 1, %v2026
    %v2028 = vrot.slane %v1080, %v2027
    %2030 = vbcast.lane.b32.xlu0 %v2028, 256
    %v2031 = vpop.permute.xlu0 %2030
    %s2033 = sor.u32 256, 8
    %2034 = vbcast.lane.b32.xlu0 %v2028, %s2033
    %v2035 = vpop.permute.xlu0 %2034
    %s2037 = sor.u32 256, 16
    %2038 = vbcast.lane.b32.xlu0 %v2028, %s2037
    %v2039 = vpop.permute.xlu0 %2038
    %s2041 = sor.u32 256, 24
    %2042 = vbcast.lane.b32.xlu0 %v2028, %s2041
    %v2043 = vpop.permute.xlu0 %2042
    %v2044 = vlaneseq
    %v2045 = vshrl.u32 %v2044, 7
    %v2046 = vsub.s32 0, %v2045
    %v2047 = vrot.slane %v1241, %v2046
    %2049 = vbcast.lane.b32.xlu0 %v2047, 256
    %v2050 = vpop.permute.xlu0 %2049
    %s2052 = sor.u32 256, 8
    %2053 = vbcast.lane.b32.xlu0 %v2047, %s2052
    %v2054 = vpop.permute.xlu0 %2053
    %s2056 = sor.u32 256, 16
    %2057 = vbcast.lane.b32.xlu0 %v2047, %s2056
    %v2058 = vpop.permute.xlu0 %2057
    %s2060 = sor.u32 256, 24
    %2061 = vbcast.lane.b32.xlu0 %v2047, %s2060
    %v2062 = vpop.permute.xlu0 %2061
    %v2063 = vlaneseq
    %v2064 = vshrl.u32 %v2063, 7
    %v2065 = vsub.s32 1, %v2064
    %v2066 = vrot.slane %v1241, %v2065
    %2068 = vbcast.lane.b32.xlu0 %v2066, 256
    %v2069 = vpop.permute.xlu0 %2068
    %s2071 = sor.u32 256, 8
    %2072 = vbcast.lane.b32.xlu0 %v2066, %s2071
    %v2073 = vpop.permute.xlu0 %2072
    %s2075 = sor.u32 256, 16
    %2076 = vbcast.lane.b32.xlu0 %v2066, %s2075
    %v2077 = vpop.permute.xlu0 %2076
    %s2079 = sor.u32 256, 24
    %2080 = vbcast.lane.b32.xlu0 %v2066, %s2079
    %v2081 = vpop.permute.xlu0 %2080
    %v2082 = vlaneseq
    %v2083 = vshrl.u32 %v2082, 7
    %v2084 = vsub.s32 0, %v2083
    %v2085 = vrot.slane %v1402, %v2084
    %2087 = vbcast.lane.b32.xlu0 %v2085, 256
    %v2088 = vpop.permute.xlu0 %2087
    %s2090 = sor.u32 256, 8
    %2091 = vbcast.lane.b32.xlu0 %v2085, %s2090
    %v2092 = vpop.permute.xlu0 %2091
    %s2094 = sor.u32 256, 16
    %2095 = vbcast.lane.b32.xlu0 %v2085, %s2094
    %v2096 = vpop.permute.xlu0 %2095
    %s2098 = sor.u32 256, 24
    %2099 = vbcast.lane.b32.xlu0 %v2085, %s2098
    %v2100 = vpop.permute.xlu0 %2099
    %v2101 = vlaneseq
    %v2102 = vshrl.u32 %v2101, 7
    %v2103 = vsub.s32 1, %v2102
    %v2104 = vrot.slane %v1402, %v2103
    %2106 = vbcast.lane.b32.xlu0 %v2104, 256
    %v2107 = vpop.permute.xlu0 %2106
    %s2109 = sor.u32 256, 8
    %2110 = vbcast.lane.b32.xlu0 %v2104, %s2109
    %v2111 = vpop.permute.xlu0 %2110
    %s2113 = sor.u32 256, 16
    %2114 = vbcast.lane.b32.xlu0 %v2104, %s2113
    %v2115 = vpop.permute.xlu0 %2114
    %s2117 = sor.u32 256, 24
    %2118 = vbcast.lane.b32.xlu0 %v2104, %s2117
    %v2119 = vpop.permute.xlu0 %2118
    %v2120 = vlaneseq
    %v2121 = vshrl.u32 %v2120, 7
    %v2122 = vsub.s32 0, %v2121
    %v2123 = vrot.slane %v1563, %v2122
    %2125 = vbcast.lane.b32.xlu0 %v2123, 256
    %v2126 = vpop.permute.xlu0 %2125
    %s2128 = sor.u32 256, 8
    %2129 = vbcast.lane.b32.xlu0 %v2123, %s2128
    %v2130 = vpop.permute.xlu0 %2129
    %s2132 = sor.u32 256, 16
    %2133 = vbcast.lane.b32.xlu0 %v2123, %s2132
    %v2134 = vpop.permute.xlu0 %2133
    %s2136 = sor.u32 256, 24
    %2137 = vbcast.lane.b32.xlu0 %v2123, %s2136
    %v2138 = vpop.permute.xlu0 %2137
    %v2139 = vlaneseq
    %v2140 = vshrl.u32 %v2139, 7
    %v2141 = vsub.s32 1, %v2140
    %v2142 = vrot.slane %v1563, %v2141
    %2144 = vbcast.lane.b32.xlu0 %v2142, 256
    %v2145 = vpop.permute.xlu0 %2144
    %s2147 = sor.u32 256, 8
    %2148 = vbcast.lane.b32.xlu0 %v2142, %s2147
    %v2149 = vpop.permute.xlu0 %2148
    %s2151 = sor.u32 256, 16
    %2152 = vbcast.lane.b32.xlu0 %v2142, %s2151
    %v2153 = vpop.permute.xlu0 %2152
    %s2155 = sor.u32 256, 24
    %2156 = vbcast.lane.b32.xlu0 %v2142, %s2155
    %v2157 = vpop.permute.xlu0 %2156
    %v2158 = vlaneseq
    %v2159 = vshrl.u32 %v2158, 7
    %v2160 = vsub.s32 0, %v2159
    %v2161 = vrot.slane %v1724, %v2160
    %2163 = vbcast.lane.b32.xlu0 %v2161, 256
    %v2164 = vpop.permute.xlu0 %2163
    %s2166 = sor.u32 256, 8
    %2167 = vbcast.lane.b32.xlu0 %v2161, %s2166
    %v2168 = vpop.permute.xlu0 %2167
    %s2170 = sor.u32 256, 16
    %2171 = vbcast.lane.b32.xlu0 %v2161, %s2170
    %v2172 = vpop.permute.xlu0 %2171
    %s2174 = sor.u32 256, 24
    %2175 = vbcast.lane.b32.xlu0 %v2161, %s2174
    %v2176 = vpop.permute.xlu0 %2175
    %v2177 = vlaneseq
    %v2178 = vshrl.u32 %v2177, 7
    %v2179 = vsub.s32 1, %v2178
    %v2180 = vrot.slane %v1724, %v2179
    %2182 = vbcast.lane.b32.xlu0 %v2180, 256
    %v2183 = vpop.permute.xlu0 %2182
    %s2185 = sor.u32 256, 8
    %2186 = vbcast.lane.b32.xlu0 %v2180, %s2185
    %v2187 = vpop.permute.xlu0 %2186
    %s2189 = sor.u32 256, 16
    %2190 = vbcast.lane.b32.xlu0 %v2180, %s2189
    %v2191 = vpop.permute.xlu0 %2190
    %s2193 = sor.u32 256, 24
    %2194 = vbcast.lane.b32.xlu0 %v2180, %s2193
    %v2195 = vpop.permute.xlu0 %2194
    %v2196 = vlaneseq
    %v2197 = vshrl.u32 %v2196, 7
    %v2198 = vsub.s32 0, %v2197
    %v2199 = vrot.slane %v1885, %v2198
    %2201 = vbcast.lane.b32.xlu0 %v2199, 256
    %v2202 = vpop.permute.xlu0 %2201
    %s2204 = sor.u32 256, 8
    %2205 = vbcast.lane.b32.xlu0 %v2199, %s2204
    %v2206 = vpop.permute.xlu0 %2205
    %s2208 = sor.u32 256, 16
    %2209 = vbcast.lane.b32.xlu0 %v2199, %s2208
    %v2210 = vpop.permute.xlu0 %2209
    %s2212 = sor.u32 256, 24
    %2213 = vbcast.lane.b32.xlu0 %v2199, %s2212
    %v2214 = vpop.permute.xlu0 %2213
    %v2215 = vlaneseq
    %v2216 = vshrl.u32 %v2215, 7
    %v2217 = vsub.s32 1, %v2216
    %v2218 = vrot.slane %v1885, %v2217
    %2220 = vbcast.lane.b32.xlu0 %v2218, 256
    %v2221 = vpop.permute.xlu0 %2220
    %s2223 = sor.u32 256, 8
    %2224 = vbcast.lane.b32.xlu0 %v2218, %s2223
    %v2225 = vpop.permute.xlu0 %2224
    %s2227 = sor.u32 256, 16
    %2228 = vbcast.lane.b32.xlu0 %v2218, %s2227
    %v2229 = vpop.permute.xlu0 %2228
    %s2231 = sor.u32 256, 24
    %2232 = vbcast.lane.b32.xlu0 %v2218, %s2231
    %v2233 = vpop.permute.xlu0 %2232
    %vm2234 = vcmask 7168
    %v2235 = vsel %vm2234, %v1936, %v1974
    %v2236 = vsel %vm2234, %v1940, %v1978
    %v2237 = vsel %vm2234, %v1944, %v1982
    %v2238 = vsel %vm2234, %v1948, %v1986
    %v2239 = vsel %vm2234, %v1955, %v1993
    %v2240 = vsel %vm2234, %v1959, %v1997
    %v2241 = vsel %vm2234, %v1963, %v2001
    %v2242 = vsel %vm2234, %v1967, %v2005
    %vm2243 = vcmask 15360
    %v2244 = vsel %vm2243, %v2235, %v2012
    %v2245 = vsel %vm2243, %v2236, %v2016
    %v2246 = vsel %vm2243, %v2237, %v2020
    %v2247 = vsel %vm2243, %v2238, %v2024
    %v2248 = vsel %vm2243, %v2239, %v2031
    %v2249 = vsel %vm2243, %v2240, %v2035
    %v2250 = vsel %vm2243, %v2241, %v2039
    %v2251 = vsel %vm2243, %v2242, %v2043
    %vm2252 = vcmask 23552
    %v2253 = vsel %vm2252, %v2244, %v2050
    %v2254 = vsel %vm2252, %v2245, %v2054
    %v2255 = vsel %vm2252, %v2246, %v2058
    %v2256 = vsel %vm2252, %v2247, %v2062
    %v2257 = vsel %vm2252, %v2248, %v2069
    %v2258 = vsel %vm2252, %v2249, %v2073
    %v2259 = vsel %vm2252, %v2250, %v2077
    %v2260 = vsel %vm2252, %v2251, %v2081
    %vm2261 = vcmask 31744
    %v2262 = vsel %vm2261, %v2253, %v2088
    %v2263 = vsel %vm2261, %v2254, %v2092
    %v2264 = vsel %vm2261, %v2255, %v2096
    %v2265 = vsel %vm2261, %v2256, %v2100
    %v2266 = vsel %vm2261, %v2257, %v2107
    %v2267 = vsel %vm2261, %v2258, %v2111
    %v2268 = vsel %vm2261, %v2259, %v2115
    %v2269 = vsel %vm2261, %v2260, %v2119
    %vm2270 = vcmask 39936
    %v2271 = vsel %vm2270, %v2262, %v2126
    %v2272 = vsel %vm2270, %v2263, %v2130
    %v2273 = vsel %vm2270, %v2264, %v2134
    %v2274 = vsel %vm2270, %v2265, %v2138
    %v2275 = vsel %vm2270, %v2266, %v2145
    %v2276 = vsel %vm2270, %v2267, %v2149
    %v2277 = vsel %vm2270, %v2268, %v2153
    %v2278 = vsel %vm2270, %v2269, %v2157
    %vm2279 = vcmask 48128
    %v2280 = vsel %vm2279, %v2271, %v2164
    %v2281 = vsel %vm2279, %v2272, %v2168
    %v2282 = vsel %vm2279, %v2273, %v2172
    %v2283 = vsel %vm2279, %v2274, %v2176
    %v2284 = vsel %vm2279, %v2275, %v2183
    %v2285 = vsel %vm2279, %v2276, %v2187
    %v2286 = vsel %vm2279, %v2277, %v2191
    %v2287 = vsel %vm2279, %v2278, %v2195
    %vm2288 = vcmask 56320
    %v2289 = vsel %vm2288, %v2280, %v2202
    %v2290 = vsel %vm2288, %v2281, %v2206
    %v2291 = vsel %vm2288, %v2282, %v2210
    %v2292 = vsel %vm2288, %v2283, %v2214
    %v2293 = vsel %vm2288, %v2284, %v2221
    %v2294 = vsel %vm2288, %v2285, %v2225
    %v2295 = vsel %vm2288, %v2286, %v2229
    %v2296 = vsel %vm2288, %v2287, %v2233
    %v2297 = vpack.c.bf16 %v2290, %v2289
    %v2298 = vpack.c.bf16 %v2292, %v2291
    %v2299 = vpack.c.bf16 %v2294, %v2293
    %v2300 = vpack.c.bf16 %v2296, %v2295
    %v2303 = vunpack.c.l.s4 1966171168
    %v2304 = vunpack.c.0.s8 %v2303
    %v2305 = vlaneseq
    %v2306 = vshrl.u32 %v2305, 7
    %v2307 = vsub.s32 %v2304, %v2306
    %v2308 = vrot.slane %v798, %v2307
    %v2309 = vcombine.high %v2308, %v2308
    %v2311 = vunpack.c.l.s4 1966171168
    %v2312 = vunpack.c.0.s8 %v2311
    %v2313 = vlaneseq
    %v2314 = vshrl.u32 %v2313, 7
    %v2315 = vsub.s32 %v2312, %v2314
    %v2316 = vrot.slane %v2308, %v2315
    %v2318 = vunpack.c.l.s4 1966171168
    %v2319 = vunpack.c.0.s8 %v2318
    %v2320 = vlaneseq
    %v2321 = vshrl.u32 %v2320, 7
    %v2322 = vsub.s32 %v2319, %v2321
    %v2323 = vrot.slane %v2309, %v2322
    %v2328 = vunpack.c.l.s4 1966171168
    %v2329 = vunpack.c.0.s8 %v2328
    %v2330 = vlaneseq
    %v2331 = vshrl.u32 %v2330, 7
    %v2332 = vsub.s32 %v2329, %v2331
    %v2333 = vrot.slane %v959, %v2332
    %v2334 = vcombine.high %v2333, %v2333
    %v2336 = vunpack.c.l.s4 1966171168
    %v2337 = vunpack.c.0.s8 %v2336
    %v2338 = vlaneseq
    %v2339 = vshrl.u32 %v2338, 7
    %v2340 = vsub.s32 %v2337, %v2339
    %v2341 = vrot.slane %v2333, %v2340
    %v2343 = vunpack.c.l.s4 1966171168
    %v2344 = vunpack.c.0.s8 %v2343
    %v2345 = vlaneseq
    %v2346 = vshrl.u32 %v2345, 7
    %v2347 = vsub.s32 %v2344, %v2346
    %v2348 = vrot.slane %v2334, %v2347
    %v2351 = vunpack.c.l.s4 1966171168
    %v2352 = vunpack.c.0.s8 %v2351
    %v2353 = vlaneseq
    %v2354 = vshrl.u32 %v2353, 7
    %v2355 = vsub.s32 %v2352, %v2354
    %v2356 = vrot.slane %v1120, %v2355
    %v2357 = vcombine.high %v2356, %v2356
    %v2359 = vunpack.c.l.s4 1966171168
    %v2360 = vunpack.c.0.s8 %v2359
    %v2361 = vlaneseq
    %v2362 = vshrl.u32 %v2361, 7
    %v2363 = vsub.s32 %v2360, %v2362
    %v2364 = vrot.slane %v2356, %v2363
    %v2366 = vunpack.c.l.s4 1966171168
    %v2367 = vunpack.c.0.s8 %v2366
    %v2368 = vlaneseq
    %v2369 = vshrl.u32 %v2368, 7
    %v2370 = vsub.s32 %v2367, %v2369
    %v2371 = vrot.slane %v2357, %v2370
    %v2374 = vunpack.c.l.s4 1966171168
    %v2375 = vunpack.c.0.s8 %v2374
    %v2376 = vlaneseq
    %v2377 = vshrl.u32 %v2376, 7
    %v2378 = vsub.s32 %v2375, %v2377
    %v2379 = vrot.slane %v1281, %v2378
    %v2380 = vcombine.high %v2379, %v2379
    %v2382 = vunpack.c.l.s4 1966171168
    %v2383 = vunpack.c.0.s8 %v2382
    %v2384 = vlaneseq
    %v2385 = vshrl.u32 %v2384, 7
    %v2386 = vsub.s32 %v2383, %v2385
    %v2387 = vrot.slane %v2379, %v2386
    %v2389 = vunpack.c.l.s4 1966171168
    %v2390 = vunpack.c.0.s8 %v2389
    %v2391 = vlaneseq
    %v2392 = vshrl.u32 %v2391, 7
    %v2393 = vsub.s32 %v2390, %v2392
    %v2394 = vrot.slane %v2380, %v2393
    %v2397 = vunpack.c.l.s4 1966171168
    %v2398 = vunpack.c.0.s8 %v2397
    %v2399 = vlaneseq
    %v2400 = vshrl.u32 %v2399, 7
    %v2401 = vsub.s32 %v2398, %v2400
    %v2402 = vrot.slane %v1442, %v2401
    %v2403 = vcombine.high %v2402, %v2402
    %v2405 = vunpack.c.l.s4 1966171168
    %v2406 = vunpack.c.0.s8 %v2405
    %v2407 = vlaneseq
    %v2408 = vshrl.u32 %v2407, 7
    %v2409 = vsub.s32 %v2406, %v2408
    %v2410 = vrot.slane %v2402, %v2409
    %v2412 = vunpack.c.l.s4 1966171168
    %v2413 = vunpack.c.0.s8 %v2412
    %v2414 = vlaneseq
    %v2415 = vshrl.u32 %v2414, 7
    %v2416 = vsub.s32 %v2413, %v2415
    %v2417 = vrot.slane %v2403, %v2416
    %v2420 = vunpack.c.l.s4 1966171168
    %v2421 = vunpack.c.0.s8 %v2420
    %v2422 = vlaneseq
    %v2423 = vshrl.u32 %v2422, 7
    %v2424 = vsub.s32 %v2421, %v2423
    %v2425 = vrot.slane %v1603, %v2424
    %v2426 = vcombine.high %v2425, %v2425
    %v2428 = vunpack.c.l.s4 1966171168
    %v2429 = vunpack.c.0.s8 %v2428
    %v2430 = vlaneseq
    %v2431 = vshrl.u32 %v2430, 7
    %v2432 = vsub.s32 %v2429, %v2431
    %v2433 = vrot.slane %v2425, %v2432
    %v2435 = vunpack.c.l.s4 1966171168
    %v2436 = vunpack.c.0.s8 %v2435
    %v2437 = vlaneseq
    %v2438 = vshrl.u32 %v2437, 7
    %v2439 = vsub.s32 %v2436, %v2438
    %v2440 = vrot.slane %v2426, %v2439
    %v2443 = vunpack.c.l.s4 1966171168
    %v2444 = vunpack.c.0.s8 %v2443
    %v2445 = vlaneseq
    %v2446 = vshrl.u32 %v2445, 7
    %v2447 = vsub.s32 %v2444, %v2446
    %v2448 = vrot.slane %v1764, %v2447
    %v2449 = vcombine.high %v2448, %v2448
    %v2451 = vunpack.c.l.s4 1966171168
    %v2452 = vunpack.c.0.s8 %v2451
    %v2453 = vlaneseq
    %v2454 = vshrl.u32 %v2453, 7
    %v2455 = vsub.s32 %v2452, %v2454
    %v2456 = vrot.slane %v2448, %v2455
    %v2458 = vunpack.c.l.s4 1966171168
    %v2459 = vunpack.c.0.s8 %v2458
    %v2460 = vlaneseq
    %v2461 = vshrl.u32 %v2460, 7
    %v2462 = vsub.s32 %v2459, %v2461
    %v2463 = vrot.slane %v2449, %v2462
    %v2466 = vunpack.c.l.s4 1966171168
    %v2467 = vunpack.c.0.s8 %v2466
    %v2468 = vlaneseq
    %v2469 = vshrl.u32 %v2468, 7
    %v2470 = vsub.s32 %v2467, %v2469
    %v2471 = vrot.slane %v1925, %v2470
    %v2472 = vcombine.high %v2471, %v2471
    %v2474 = vunpack.c.l.s4 1966171168
    %v2475 = vunpack.c.0.s8 %v2474
    %v2476 = vlaneseq
    %v2477 = vshrl.u32 %v2476, 7
    %v2478 = vsub.s32 %v2475, %v2477
    %v2479 = vrot.slane %v2471, %v2478
    %v2481 = vunpack.c.l.s4 1966171168
    %v2482 = vunpack.c.0.s8 %v2481
    %v2483 = vlaneseq
    %v2484 = vshrl.u32 %v2483, 7
    %v2485 = vsub.s32 %v2482, %v2484
    %v2486 = vrot.slane %v2472, %v2485
    %v2487 = vlaneseq
    %v2488 = vshrl.u32 %v2487, 7
    %v2489 = vsub.s32 0, %v2488
    %v2490 = vrot.slane %v2341, %v2489
    %v2491 = vlaneseq
    %v2492 = vshrl.u32 %v2491, 7
    %v2493 = vsub.s32 0, %v2492
    %v2494 = vrot.slane %v2348, %v2493
    %v2497 = vlaneseq
    %v2498 = vshrl.u32 %v2497, 7
    %v2499 = vsub.s32 0, %v2498
    %v2500 = vrot.slane %v2364, %v2499
    %v2501 = vlaneseq
    %v2502 = vshrl.u32 %v2501, 7
    %v2503 = vsub.s32 0, %v2502
    %v2504 = vrot.slane %v2371, %v2503
    %v2507 = vlaneseq
    %v2508 = vshrl.u32 %v2507, 7
    %v2509 = vsub.s32 0, %v2508
    %v2510 = vrot.slane %v2387, %v2509
    %v2511 = vlaneseq
    %v2512 = vshrl.u32 %v2511, 7
    %v2513 = vsub.s32 0, %v2512
    %v2514 = vrot.slane %v2394, %v2513
    %v2517 = vlaneseq
    %v2518 = vshrl.u32 %v2517, 7
    %v2519 = vsub.s32 0, %v2518
    %v2520 = vrot.slane %v2410, %v2519
    %v2521 = vlaneseq
    %v2522 = vshrl.u32 %v2521, 7
    %v2523 = vsub.s32 0, %v2522
    %v2524 = vrot.slane %v2417, %v2523
    %v2527 = vlaneseq
    %v2528 = vshrl.u32 %v2527, 7
    %v2529 = vsub.s32 0, %v2528
    %v2530 = vrot.slane %v2433, %v2529
    %v2531 = vlaneseq
    %v2532 = vshrl.u32 %v2531, 7
    %v2533 = vsub.s32 0, %v2532
    %v2534 = vrot.slane %v2440, %v2533
    %v2537 = vlaneseq
    %v2538 = vshrl.u32 %v2537, 7
    %v2539 = vsub.s32 0, %v2538
    %v2540 = vrot.slane %v2456, %v2539
    %v2541 = vlaneseq
    %v2542 = vshrl.u32 %v2541, 7
    %v2543 = vsub.s32 0, %v2542
    %v2544 = vrot.slane %v2463, %v2543
    %v2547 = vlaneseq
    %v2548 = vshrl.u32 %v2547, 7
    %v2549 = vsub.s32 0, %v2548
    %v2550 = vrot.slane %v2479, %v2549
    %v2551 = vlaneseq
    %v2552 = vshrl.u32 %v2551, 7
    %v2553 = vsub.s32 0, %v2552
    %v2554 = vrot.slane %v2486, %v2553
    %vm2557 = vcmask 1040384
    %v2558 = vsel %vm2557, %v2316, %v2490
    %v2559 = vsel %vm2557, %v2323, %v2494
    %vm2560 = vcmask 1041408
    %v2561 = vsel %vm2560, %v2558, %v2500
    %v2562 = vsel %vm2560, %v2559, %v2504
    %vm2563 = vcmask 1042432
    %v2564 = vsel %vm2563, %v2561, %v2510
    %v2565 = vsel %vm2563, %v2562, %v2514
    %vm2566 = vcmask 1043456
    %v2567 = vsel %vm2566, %v2564, %v2520
    %v2568 = vsel %vm2566, %v2565, %v2524
    %vm2569 = vcmask 1044480
    %v2570 = vsel %vm2569, %v2567, %v2530
    %v2571 = vsel %vm2569, %v2568, %v2534
    %vm2572 = vcmask 1045504
    %v2573 = vsel %vm2572, %v2570, %v2540
    %v2574 = vsel %vm2572, %v2571, %v2544
    %vm2575 = vcmask 1046528
    %v2576 = vsel %vm2575, %v2573, %v2550
    %v2577 = vsel %vm2575, %v2574, %v2554
    %v2578 = vpack.c.bf16 %v2576, %v2576
    %v2579 = vpack.c.bf16 %v2577, %v2577
    %2580 = vmatprep.subr.bf16.mxu0 0
    %2581 = vmatpush1.bf16.msra.mxu0 0
    %2582 = vmatprep.subr.bf16.mxu0 0
    %2583 = vmatpush1.bf16.msra.mxu0 0
    %2584 = vmatprep.subr.bf16.mxu0 0
    %2585 = vmatpush1.bf16.msra.mxu0 0
    %2586 = vmatprep.subr.bf16.mxu0 0
    %2587 = vmatpush1.bf16.msra.mxu0 0
    %2588 = vmatprep.subr.bf16.mxu0 0
    %2589 = vmatpush1.bf16.msra.mxu0 0
    %2590 = vmatprep.subr.bf16.mxu0 0
    %2591 = vmatpush1.bf16.msra.mxu0 0
    %2592 = vmatprep.subr.bf16.mxu0 0
    %2593 = vmatpush1.bf16.msra.mxu0 %v281
    %2594 = vmatprep.subr.bf16.mxu0 0
    %2595 = vmatpush1.bf16.msra.mxu0 %v280
    %2596 = vmatprep.subr.bf16.mxu0 0
    %2597 = vmatpush2.bf16.msra.mxu0 0
    %2598 = vmatprep.subr.bf16.mxu0 0
    %2599 = vmatpush2.bf16.msra.mxu0 0
    %2600 = vmatprep.subr.bf16.mxu0 0
    %2601 = vmatpush2.bf16.msra.mxu0 0
    %2602 = vmatprep.subr.bf16.mxu0 0
    %2603 = vmatpush2.bf16.msra.mxu0 0
    %2604 = vmatprep.subr.bf16.mxu0 0
    %2605 = vmatpush2.bf16.msra.mxu0 0
    %2606 = vmatprep.subr.bf16.mxu0 0
    %2607 = vmatpush2.bf16.msra.mxu0 0
    %2608 = vmatprep.subr.bf16.mxu0 0
    %2609 = vmatpush2.bf16.msra.mxu0 0
    %2610 = vmatprep.subr.bf16.mxu0 0
    %2611 = vmatpush2.bf16.msra.mxu0 0
    %2612 = vmatprep.mubr.bf16.mxu0 0
    %2613 = vmatmul.mubr.bf16.gmra.mxu0 %v1848
    %v2614 = vpop.f32.mrf.mxu0
    %v2615 = vadd.f32 %v364, %v2614
    %v2616 = vpop.f32.mrf.mxu0
    %v2617 = vpop.f32.mrf.mxu0
    %v2618 = vpop.f32.mrf.mxu0
    %2619 = vdwg.mxu0
    %v2620 = vtanh.pop %v2615
    %v2621 = vld [vmem:[#allocation7] sm:$0xff]
    %v2622 = vld [vmem:[#allocation7 + $0x8] sm:$0xff]
    %v2623 = vld [vmem:[#allocation9] sm:$0xff]
    %v2624 = vld [vmem:[#allocation9 + $0x8] sm:$0xff]
    %v2625 = vpack.c.bf16 %v2622, %v2621
    %v2626 = vpack.c.bf16 %v2624, %v2623
    %v2627 = vld [vmem:[#allocation12] sm:$0x1]
    %v2628 = vld [vmem:[#allocation13] sm:$0x1]
    %v2629 = vadd.f32 %v2627, %v2628
    %v2630 = vsel %vm323, %v2629, %v2627
    %v2631 = vlaneseq
    %v2632 = vshrl.u32 %v2631, 7
    %v2633 = vsub.s32 0, %v2632
    %v2634 = vrot.slane %v2630, %v2633
    %v2636 = vsel %vm455, %v2625, 0
    %2638 = vmatprep.subr.bf16.mxu0 0
    %2639 = vmatpush1.bf16.msra.mxu0 0
    %2640 = vmatprep.subr.bf16.mxu0 0
    %2641 = vmatpush1.bf16.msra.mxu0 0
    %2642 = vmatprep.subr.bf16.mxu0 0
    %2643 = vmatpush1.bf16.msra.mxu0 0
    %2644 = vmatprep.subr.bf16.mxu0 0
    %2645 = vmatpush1.bf16.msra.mxu0 0
    %2646 = vmatprep.subr.bf16.mxu0 0
    %2647 = vmatpush1.bf16.msra.mxu0 0
    %2648 = vmatprep.subr.bf16.mxu0 0
    %2649 = vmatpush1.bf16.msra.mxu0 0
    %2650 = vmatprep.subr.bf16.mxu0 0
    %2651 = vmatpush1.bf16.msra.mxu0 0
    %2652 = vmatprep.subr.bf16.mxu0 0
    %2653 = vmatpush1.bf16.msra.mxu0 %v2626
    %2654 = vmatprep.subr.bf16.mxu0 0
    %2655 = vmatpush2.bf16.msra.mxu0 0
    %2656 = vmatprep.subr.bf16.mxu0 0
    %2657 = vmatpush2.bf16.msra.mxu0 0
    %2658 = vmatprep.subr.bf16.mxu0 0
    %2659 = vmatpush2.bf16.msra.mxu0 0
    %2660 = vmatprep.subr.bf16.mxu0 0
    %2661 = vmatpush2.bf16.msra.mxu0 0
    %2662 = vmatprep.subr.bf16.mxu0 0
    %2663 = vmatpush2.bf16.msra.mxu0 0
    %2664 = vmatprep.subr.bf16.mxu0 0
    %2665 = vmatpush2.bf16.msra.mxu0 0
    %2666 = vmatprep.subr.bf16.mxu0 0
    %2667 = vmatpush2.bf16.msra.mxu0 0
    %2668 = vmatprep.subr.bf16.mxu0 0
    %2669 = vmatpush2.bf16.msra.mxu0 0
    %2670 = vmatprep.mubr.bf16.mxu0 0
    %2671 = vmatmul.mubr.bf16.gmra.mxu0 %v2636
    %v2672 = vpop.f32.mrf.mxu0
    %v2673 = vadd.f32 %v2634, %v2672
    %v2674 = vpop.f32.mrf.mxu0
    %v2675 = vpop.f32.mrf.mxu0
    %v2676 = vadd.f32 %v2634, %v2675
    %v2677 = vpop.f32.mrf.mxu0
    %2678 = vdwg.mxu0
    %v2679 = vpack.c.bf16 %v2676, %v2673
    %vm2680 = vcmp.eq.s32.totalorder %v368, 1
    %v2681 = vsel %vm2680, 1, 0
    %v2682 = vcvt.s32.f32 %v2681
    %v2683 = vpack.c.bf16 %v2682, %v2682
    %v2685 = vsel %vm455, %v2683, 0
    %2687 = vmatprep.subr.bf16.mxu0 0
    %2688 = vmatpush1.bf16.msra.mxu0 0
    %2689 = vmatprep.subr.bf16.mxu0 0
    %2690 = vmatpush1.bf16.msra.mxu0 0
    %2691 = vmatprep.subr.bf16.mxu0 0
    %2692 = vmatpush1.bf16.msra.mxu0 0
    %2693 = vmatprep.subr.bf16.mxu0 0
    %2694 = vmatpush1.bf16.msra.mxu0 0
    %2695 = vmatprep.subr.bf16.mxu0 0
    %2696 = vmatpush1.bf16.msra.mxu0 0
    %2697 = vmatprep.subr.bf16.mxu0 0
    %2698 = vmatpush1.bf16.msra.mxu0 0
    %2699 = vmatprep.subr.bf16.mxu0 0
    %2700 = vmatpush1.bf16.msra.mxu0 0
    %2701 = vmatprep.subr.bf16.mxu0 0
    %2702 = vmatpush1.bf16.msra.mxu0 %v2679
    %2703 = vmatprep.subr.bf16.mxu0 0
    %2704 = vmatpush2.bf16.msra.mxu0 0
    %2705 = vmatprep.subr.bf16.mxu0 0
    %2706 = vmatpush2.bf16.msra.mxu0 0
    %2707 = vmatprep.subr.bf16.mxu0 0
    %2708 = vmatpush2.bf16.msra.mxu0 0
    %2709 = vmatprep.subr.bf16.mxu0 0
    %2710 = vmatpush2.bf16.msra.mxu0 0
    %2711 = vmatprep.subr.bf16.mxu0 0
    %2712 = vmatpush2.bf16.msra.mxu0 0
    %2713 = vmatprep.subr.bf16.mxu0 0
    %2714 = vmatpush2.bf16.msra.mxu0 0
    %2715 = vmatprep.subr.bf16.mxu0 0
    %2716 = vmatpush2.bf16.msra.mxu0 0
    %2717 = vmatprep.subr.bf16.mxu0 0
    %2718 = vmatpush2.bf16.msra.mxu0 0
    %2719 = vmatprep.mubr.bf16.mxu0 0
    %2720 = vmatmul.mubr.bf16.gmra.mxu0 %v2685
    %v2721 = vpop.f32.mrf.mxu0
    %v2722 = vadd.f32 0.0, %v2721
    %v2723 = vpop.f32.mrf.mxu0
    %v2724 = vpop.f32.mrf.mxu0
    %v2725 = vpop.f32.mrf.mxu0
    %2726 = vdwg.mxu0
    %v2727 = vpack.c.bf16 %v2620, %v2620
    %v2729 = vsel %vm638, %v2727, 0
    %2731 = vmatprep.subr.bf16.mxu0 0
    %2732 = vmatpush1.bf16.msra.mxu0 0
    %2733 = vmatprep.subr.bf16.mxu0 0
    %2734 = vmatpush1.bf16.msra.mxu0 0
    %2735 = vmatprep.subr.bf16.mxu0 0
    %2736 = vmatpush1.bf16.msra.mxu0 0
    %2737 = vmatprep.subr.bf16.mxu0 0
    %2738 = vmatpush1.bf16.msra.mxu0 0
    %2739 = vmatprep.subr.bf16.mxu0 0
    %2740 = vmatpush1.bf16.msra.mxu0 0
    %2741 = vmatprep.subr.bf16.mxu0 0
    %2742 = vmatpush1.bf16.msra.mxu0 0
    %2743 = vmatprep.subr.bf16.mxu0 0
    %2744 = vmatpush1.bf16.msra.mxu0 %v257
    %2745 = vmatprep.subr.bf16.mxu0 0
    %2746 = vmatpush1.bf16.msra.mxu0 %v256
    %2747 = vmatprep.subr.bf16.mxu0 0
    %2748 = vmatpush2.bf16.msra.mxu0 0
    %2749 = vmatprep.subr.bf16.mxu0 0
    %2750 = vmatpush2.bf16.msra.mxu0 0
    %2751 = vmatprep.subr.bf16.mxu0 0
    %2752 = vmatpush2.bf16.msra.mxu0 0
    %2753 = vmatprep.subr.bf16.mxu0 0
    %2754 = vmatpush2.bf16.msra.mxu0 0
    %2755 = vmatprep.subr.bf16.mxu0 0
    %2756 = vmatpush2.bf16.msra.mxu0 0
    %2757 = vmatprep.subr.bf16.mxu0 0
    %2758 = vmatpush2.bf16.msra.mxu0 0
    %2759 = vmatprep.subr.bf16.mxu0 0
    %2760 = vmatpush2.bf16.msra.mxu0 0
    %2761 = vmatprep.subr.bf16.mxu0 0
    %2762 = vmatpush2.bf16.msra.mxu0 0
    %2763 = vmatprep.mubr.bf16.mxu0 0
    %2764 = vmatmul.mubr.bf16.gmra.mxu0 %v2729
    %v2765 = vpop.f32.mrf.mxu0
    %v2766 = vadd.f32 0.0, %v2765
    %v2767 = vpop.f32.mrf.mxu0
    %v2768 = vpop.f32.mrf.mxu0
    %v2769 = vpop.f32.mrf.mxu0
    %2770 = vdwg.mxu0
    %v2771 = vadd.f32 %v2722, %v2766
    %v2772 = vxor.u32 %v2771, 2147483648
    %v2773 = vmul.f32 %v2772, 1.442695
    %v2774 = vpow.pop %v2773
    %v2775 = vadd.f32 %v2774, 1.0
    %v2776 = vrcp.pop %v2775
    %v2777 = vmul.f32 1.0, %v2776
    %v2778 = vadd.f32 %v2766, %v336
    %2780 = vrot.lane.b32.xlu0 %v2778, 64
    %v2781 = vpop.permute.xlu0 %2780
    %v2783 = vmul.f32 %v2777, %v2781
    %2785 = vrot.lane.b32.xlu0 %v2783, 64
    %v2786 = vpop.permute.xlu0 %2785
    %v2788 = vadd.f32 %v2722, %v2786
    %v2789 = vtanh.pop %v2788
    %v2790 = vsub.f32 1.0, %v2777
    %2792 = vrot.lane.b32.xlu0 %v2789, 96
    %v2793 = vpop.permute.xlu0 %2792
    %v2795 = vmul.f32 %v2790, %v2793
    %2797 = vrot.lane.b32.xlu0 %v2620, 32
    %v2798 = vpop.permute.xlu0 %2797
    %v2800 = vmul.f32 %v2777, %v2798
    %v2801 = vadd.f32 %v2795, %v2800
    %v2804 = vunpack.c.l.s4 1966171168
    %v2805 = vunpack.c.0.s8 %v2804
    %v2806 = vlaneseq
    %v2807 = vshrl.u32 %v2806, 7
    %v2808 = vsub.s32 %v2805, %v2807
    %v2809 = vrot.slane %v2801, %v2808
    %v2810 = vcombine.high %v2809, %v2809
    %v2812 = vunpack.c.l.s4 1966171168
    %v2813 = vunpack.c.0.s8 %v2812
    %v2814 = vlaneseq
    %v2815 = vshrl.u32 %v2814, 7
    %v2816 = vsub.s32 %v2813, %v2815
    %v2817 = vrot.slane %v2809, %v2816
    %v2819 = vunpack.c.l.s4 1966171168
    %v2820 = vunpack.c.0.s8 %v2819
    %v2821 = vlaneseq
    %v2822 = vshrl.u32 %v2821, 7
    %v2823 = vsub.s32 %v2820, %v2822
    %v2824 = vrot.slane %v2810, %v2823
    %v2827 = vpack.c.bf16 %v2817, %v2817
    %v2828 = vpack.c.bf16 %v2824, %v2824
    %2830 = vrot.lane.b32.xlu0 %v2827, 96
    %v2831 = vpop.permute.xlu0 %2830
    %v2833 = vsel %vm638, %v2831, 0
    %2835 = vmatprep.subr.bf16.mxu0 0
    %2836 = vmatpush1.bf16.msra.mxu0 0
    %2837 = vmatprep.subr.bf16.mxu0 0
    %2838 = vmatpush1.bf16.msra.mxu0 0
    %2839 = vmatprep.subr.bf16.mxu0 0
    %2840 = vmatpush1.bf16.msra.mxu0 0
    %2841 = vmatprep.subr.bf16.mxu0 0
    %2842 = vmatpush1.bf16.msra.mxu0 0
    %2843 = vmatprep.subr.bf16.mxu0 0
    %2844 = vmatpush1.bf16.msra.mxu0 0
    %2845 = vmatprep.subr.bf16.mxu0 0
    %2846 = vmatpush1.bf16.msra.mxu0 0
    %2847 = vmatprep.subr.bf16.mxu0 0
    %2848 = vmatpush1.bf16.msra.mxu0 %v2298
    %2849 = vmatprep.subr.bf16.mxu0 0
    %2850 = vmatpush1.bf16.msra.mxu0 %v2297
    %2851 = vmatprep.subr.bf16.mxu0 0
    %2852 = vmatpush2.bf16.msra.mxu0 0
    %2853 = vmatprep.subr.bf16.mxu0 0
    %2854 = vmatpush2.bf16.msra.mxu0 0
    %2855 = vmatprep.subr.bf16.mxu0 0
    %2856 = vmatpush2.bf16.msra.mxu0 0
    %2857 = vmatprep.subr.bf16.mxu0 0
    %2858 = vmatpush2.bf16.msra.mxu0 0
    %2859 = vmatprep.subr.bf16.mxu0 0
    %2860 = vmatpush2.bf16.msra.mxu0 0
    %2861 = vmatprep.subr.bf16.mxu0 0
    %2862 = vmatpush2.bf16.msra.mxu0 0
    %2863 = vmatprep.subr.bf16.mxu0 0
    %2864 = vmatpush2.bf16.msra.mxu0 0
    %2865 = vmatprep.subr.bf16.mxu0 0
    %2866 = vmatpush2.bf16.msra.mxu0 0
    %2867 = vmatprep.mubr.bf16.mxu0 0
    %2868 = vmatmul.mubr.bf16.gmra.mxu0 %v2833
    %v2869 = vpop.f32.mrf.mxu0
    %v2870 = vadd.f32 0.0, %v2869
    %v2871 = vpop.f32.mrf.mxu0
    %v2872 = vpop.f32.mrf.mxu0
    %v2873 = vpop.f32.mrf.mxu0
    %2874 = vdwg.mxu0
    %2876 = vrot.lane.b32.xlu0 %v2828, 96
    %v2877 = vpop.permute.xlu0 %2876
    %v2879 = vsel %vm638, %v2877, 0
    %2881 = vmatprep.subr.bf16.mxu0 0
    %2882 = vmatpush1.bf16.msra.mxu0 0
    %2883 = vmatprep.subr.bf16.mxu0 0
    %2884 = vmatpush1.bf16.msra.mxu0 0
    %2885 = vmatprep.subr.bf16.mxu0 0
    %2886 = vmatpush1.bf16.msra.mxu0 0
    %2887 = vmatprep.subr.bf16.mxu0 0
    %2888 = vmatpush1.bf16.msra.mxu0 0
    %2889 = vmatprep.subr.bf16.mxu0 0
    %2890 = vmatpush1.bf16.msra.mxu0 0
    %2891 = vmatprep.subr.bf16.mxu0 0
    %2892 = vmatpush1.bf16.msra.mxu0 0
    %2893 = vmatprep.subr.bf16.mxu0 0
    %2894 = vmatpush1.bf16.msra.mxu0 %v2300
    %2895 = vmatprep.subr.bf16.mxu0 0
    %2896 = vmatpush1.bf16.msra.mxu0 %v2299
    %2897 = vmatprep.subr.bf16.mxu0 0
    %2898 = vmatpush2.bf16.msra.mxu0 0
    %2899 = vmatprep.subr.bf16.mxu0 0
    %2900 = vmatpush2.bf16.msra.mxu0 0
    %2901 = vmatprep.subr.bf16.mxu0 0
    %2902 = vmatpush2.bf16.msra.mxu0 0
    %2903 = vmatprep.subr.bf16.mxu0 0
    %2904 = vmatpush2.bf16.msra.mxu0 0
    %2905 = vmatprep.subr.bf16.mxu0 0
    %2906 = vmatpush2.bf16.msra.mxu0 0
    %2907 = vmatprep.subr.bf16.mxu0 0
    %2908 = vmatpush2.bf16.msra.mxu0 0
    %2909 = vmatprep.subr.bf16.mxu0 0
    %2910 = vmatpush2.bf16.msra.mxu0 0
    %2911 = vmatprep.subr.bf16.mxu0 0
    %2912 = vmatpush2.bf16.msra.mxu0 0
    %2913 = vmatprep.mubr.bf16.mxu0 0
    %2914 = vmatmul.mubr.bf16.gmra.mxu0 %v2879
    %v2915 = vpop.f32.mrf.mxu0
    %v2916 = vadd.f32 0.0, %v2915
    %v2917 = vpop.f32.mrf.mxu0
    %v2918 = vpop.f32.mrf.mxu0
    %v2919 = vpop.f32.mrf.mxu0
    %2920 = vdwg.mxu0
    %v2921 = vmul.f32 %v2870, 0.17677669
    %v2922 = vmul.f32 %v2916, 0.17677669
    %v2925 = vrot.slane %v2922, 7
    %vm2926 = vcmask 1041409
    %v2927 = vsel %vm2926, %v2925, %v2921
    %vm2929 = vcmask 58368
    %v2930 = vsel %vm2929, %v2927, -inf
    %2931 = vmax.xlane.f32.xlu0 %v2930
    %v2932 = vpop.xlane.xlu0 %2931
    %v2934 = vrot.slane %v2932, 1
    %v2937 = vsub.f32 %v2921, %v2932
    %v2938 = vsub.f32 %v2922, %v2934
    %v2939 = vmul.f32 %v2937, 1.442695
    %v2940 = vpow.pop %v2939
    %v2941 = vmul.f32 %v2938, 1.442695
    %v2942 = vpow.pop %v2941
    %v2945 = vrot.slane %v2942, 7
    %v2946 = vsel %vm2926, %v2945, %v2940
    %v2948 = vsel %vm2929, %v2946, 0.0
    %2949 = vadd.xlane.f32.xlu0 %v2948
    %v2950 = vpop.xlane.xlu0 %2949
    %v2951 = vrcp.pop %v2950
    %v2953 = vrot.slane %v2951, 1
    %v2956 = vmul.f32 %v2940, %v2951
    %v2957 = vmul.f32 %v2942, %v2953
    %v2958 = vpack.c.bf16 %v2956, %v2956
    %v2959 = vpack.c.bf16 %v2957, %v2957
    %vm2960 = vcmask 64512
    %v2962 = vsel %vm2960, %v2958, 0
    %v2965 = vsel %vm2566, %v2578, 0
    %2967 = vmatprep.subr.bf16.mxu0 0
    %2968 = vmatpush1.bf16.msra.mxu0 0
    %2969 = vmatprep.subr.bf16.mxu0 0
    %2970 = vmatpush1.bf16.msra.mxu0 0
    %2971 = vmatprep.subr.bf16.mxu0 0
    %2972 = vmatpush1.bf16.msra.mxu0 0
    %2973 = vmatprep.subr.bf16.mxu0 0
    %2974 = vmatpush1.bf16.msra.mxu0 0
    %2975 = vmatprep.subr.bf16.mxu0 0
    %2976 = vmatpush1.bf16.msra.mxu0 0
    %2977 = vmatprep.subr.bf16.mxu0 0
    %2978 = vmatpush1.bf16.msra.mxu0 0
    %2979 = vmatprep.subr.bf16.mxu0 0
    %2980 = vmatpush1.bf16.msra.mxu0 0
    %2981 = vmatprep.subr.bf16.mxu0 0
    %2982 = vmatpush1.bf16.msra.mxu0 %v2965
    %2983 = vmatprep.subr.bf16.mxu0 0
    %2984 = vmatpush2.bf16.msra.mxu0 0
    %2985 = vmatprep.subr.bf16.mxu0 0
    %2986 = vmatpush2.bf16.msra.mxu0 0
    %2987 = vmatprep.subr.bf16.mxu0 0
    %2988 = vmatpush2.bf16.msra.mxu0 0
    %2989 = vmatprep.subr.bf16.mxu0 0
    %2990 = vmatpush2.bf16.msra.mxu0 0
    %2991 = vmatprep.subr.bf16.mxu0 0
    %2992 = vmatpush2.bf16.msra.mxu0 0
    %2993 = vmatprep.subr.bf16.mxu0 0
    %2994 = vmatpush2.bf16.msra.mxu0 0
    %2995 = vmatprep.subr.bf16.mxu0 0
    %2996 = vmatpush2.bf16.msra.mxu0 0
    %2997 = vmatprep.subr.bf16.mxu0 0
    %2998 = vmatpush2.bf16.msra.mxu0 0
    %2999 = vmatprep.mubr.bf16.mxu0 0
    %3000 = vmatmul.mubr.bf16.gmra.mxu0 %v2962
    %v3001 = vpop.f32.mrf.mxu0
    %v3002 = vadd.f32 0.0, %v3001
    %v3003 = vpop.f32.mrf.mxu0
    %v3004 = vpop.f32.mrf.mxu0
    %v3005 = vpop.f32.mrf.mxu0
    %3006 = vdwg.mxu0
    %v3008 = vsel %vm2960, %v2959, 0
    %v3011 = vsel %vm2566, %v2579, 0
    %3013 = vmatprep.subr.bf16.mxu0 0
    %3014 = vmatpush1.bf16.msra.mxu0 0
    %3015 = vmatprep.subr.bf16.mxu0 0
    %3016 = vmatpush1.bf16.msra.mxu0 0
    %3017 = vmatprep.subr.bf16.mxu0 0
    %3018 = vmatpush1.bf16.msra.mxu0 0
    %3019 = vmatprep.subr.bf16.mxu0 0
    %3020 = vmatpush1.bf16.msra.mxu0 0
    %3021 = vmatprep.subr.bf16.mxu0 0
    %3022 = vmatpush1.bf16.msra.mxu0 0
    %3023 = vmatprep.subr.bf16.mxu0 0
    %3024 = vmatpush1.bf16.msra.mxu0 0
    %3025 = vmatprep.subr.bf16.mxu0 0
    %3026 = vmatpush1.bf16.msra.mxu0 0
    %3027 = vmatprep.subr.bf16.mxu0 0
    %3028 = vmatpush1.bf16.msra.mxu0 %v3011
    %3029 = vmatprep.subr.bf16.mxu0 0
    %3030 = vmatpush2.bf16.msra.mxu0 0
    %3031 = vmatprep.subr.bf16.mxu0 0
    %3032 = vmatpush2.bf16.msra.mxu0 0
    %3033 = vmatprep.subr.bf16.mxu0 0
    %3034 = vmatpush2.bf16.msra.mxu0 0
    %3035 = vmatprep.subr.bf16.mxu0 0
    %3036 = vmatpush2.bf16.msra.mxu0 0
    %3037 = vmatprep.subr.bf16.mxu0 0
    %3038 = vmatpush2.bf16.msra.mxu0 0
    %3039 = vmatprep.subr.bf16.mxu0 0
    %3040 = vmatpush2.bf16.msra.mxu0 0
    %3041 = vmatprep.subr.bf16.mxu0 0
    %3042 = vmatpush2.bf16.msra.mxu0 0
    %3043 = vmatprep.subr.bf16.mxu0 0
    %3044 = vmatpush2.bf16.msra.mxu0 0
    %3045 = vmatprep.mubr.bf16.mxu0 0
    %3046 = vmatmul.mubr.bf16.gmra.mxu0 %v3008
    %v3047 = vpop.f32.mrf.mxu0
    %v3048 = vadd.f32 0.0, %v3047
    %v3049 = vpop.f32.mrf.mxu0
    %v3050 = vpop.f32.mrf.mxu0
    %v3051 = vpop.f32.mrf.mxu0
    %3052 = vdwg.mxu0
    %v3053 = vadd.f32 %v3002, %v351
    %v3054 = vadd.f32 %v3048, %v351
    %v3055 = vpack.c.bf16 %v2801, %v2801
    %3057 = vrot.lane.b32.xlu0 %v3055, 96
    %v3058 = vpop.permute.xlu0 %3057
    %v3060 = vsel %vm638, %v3058, 0
    %3062 = vmatprep.subr.bf16.mxu0 0
    %3063 = vmatpush1.bf16.msra.mxu0 0
    %3064 = vmatprep.subr.bf16.mxu0 0
    %3065 = vmatpush1.bf16.msra.mxu0 0
    %3066 = vmatprep.subr.bf16.mxu0 0
    %3067 = vmatpush1.bf16.msra.mxu0 0
    %3068 = vmatprep.subr.bf16.mxu0 0
    %3069 = vmatpush1.bf16.msra.mxu0 0
    %3070 = vmatprep.subr.bf16.mxu0 0
    %3071 = vmatpush1.bf16.msra.mxu0 0
    %3072 = vmatprep.subr.bf16.mxu0 0
    %3073 = vmatpush1.bf16.msra.mxu0 0
    %3074 = vmatprep.subr.bf16.mxu0 0
    %3075 = vmatpush1.bf16.msra.mxu0 %v263
    %3076 = vmatprep.subr.bf16.mxu0 0
    %3077 = vmatpush1.bf16.msra.mxu0 %v262
    %3078 = vmatprep.subr.bf16.mxu0 0
    %3079 = vmatpush2.bf16.msra.mxu0 0
    %3080 = vmatprep.subr.bf16.mxu0 0
    %3081 = vmatpush2.bf16.msra.mxu0 0
    %3082 = vmatprep.subr.bf16.mxu0 0
    %3083 = vmatpush2.bf16.msra.mxu0 0
    %3084 = vmatprep.subr.bf16.mxu0 0
    %3085 = vmatpush2.bf16.msra.mxu0 0
    %3086 = vmatprep.subr.bf16.mxu0 0
    %3087 = vmatpush2.bf16.msra.mxu0 0
    %3088 = vmatprep.subr.bf16.mxu0 0
    %3089 = vmatpush2.bf16.msra.mxu0 0
    %3090 = vmatprep.subr.bf16.mxu0 0
    %3091 = vmatpush2.bf16.msra.mxu0 0
    %3092 = vmatprep.subr.bf16.mxu0 0
    %3093 = vmatpush2.bf16.msra.mxu0 0
    %3094 = vmatprep.mubr.bf16.mxu0 0
    %3095 = vmatmul.mubr.bf16.gmra.mxu0 %v3060
    %v3096 = vpop.f32.mrf.mxu0
    %v3097 = vadd.f32 0.0, %v3096
    %v3098 = vpop.f32.mrf.mxu0
    %v3099 = vpop.f32.mrf.mxu0
    %v3100 = vpop.f32.mrf.mxu0
    %3101 = vdwg.mxu0
    %v3103 = vrot.slane %v3097, 1
    %v3106 = vadd.f32 %v3053, %v3097
    %v3107 = vadd.f32 %v3054, %v3103
    %v3108 = vxor.u32 %v3106, 2147483648
    %v3109 = vxor.u32 %v3107, 2147483648
    %v3110 = vmul.f32 %v3108, 1.442695
    %v3111 = vpow.pop %v3110
    %v3112 = vmul.f32 %v3109, 1.442695
    %v3113 = vpow.pop %v3112
    %v3114 = vadd.f32 %v3111, 1.0
    %v3115 = vadd.f32 %v3113, 1.0
    %v3116 = vrcp.pop %v3114
    %v3117 = vmul.f32 1.0, %v3116
    %v3118 = vrcp.pop %v3115
    %v3119 = vmul.f32 1.0, %v3118
    %v3120 = vadd.f32 %v3097, %v343
    %v3122 = vrot.slane %v3120, 1
    %3123 = vrot.lane.b32.xlu0 %v3120, 64
    %v3124 = vpop.permute.xlu0 %3123
    %3125 = vrot.lane.b32.xlu0 %v3122, 64
    %v3126 = vpop.permute.xlu0 %3125
    %v3129 = vmul.f32 %v3117, %v3124
    %v3130 = vmul.f32 %v3119, %v3126
    %3133 = vrot.lane.b32.xlu0 %v3129, 64
    %v3134 = vpop.permute.xlu0 %3133
    %3135 = vrot.lane.b32.xlu0 %v3130, 64
    %v3136 = vpop.permute.xlu0 %3135
    %v3139 = vadd.f32 %v3053, %v3134
    %v3140 = vadd.f32 %v3054, %v3136
    %v3141 = vtanh.pop %v3139
    %v3142 = vtanh.pop %v3140
    %v3143 = vsub.f32 1.0, %v3117
    %v3144 = vsub.f32 1.0, %v3119
    %3147 = vrot.lane.b32.xlu0 %v3141, 96
    %v3148 = vpop.permute.xlu0 %3147
    %3149 = vrot.lane.b32.xlu0 %v3142, 96
    %v3150 = vpop.permute.xlu0 %3149
    %v3153 = vmul.f32 %v3143, %v3148
    %v3154 = vmul.f32 %v3144, %v3150
    %v3155 = vrot.slane %v2801, 1
    %v3158 = vmul.f32 %v3117, %v2801
    %v3159 = vmul.f32 %v3119, %v3155
    %v3160 = vadd.f32 %v3153, %v3158
    %v3161 = vadd.f32 %v3154, %v3159
    %v3162 = vpack.c.bf16 %v3160, %v3160
    %v3163 = vpack.c.bf16 %v3161, %v3161
    %v3166 = vunpack.c.l.b16 %v3162
    %v3167 = vunpack.c.l.b16 %v3163
    %v3168 = vrot.slane %v3167, 7
    %v3169 = vsel %vm2926, %v3168, %v3166
    %v3170 = vpack.c.b16 %v3169, %v3169
    %3171 = vrot.lane.b32.xlu0 %v3170, 96
    %v3172 = vpop.permute.xlu0 %3171
    %v3174 = vsel %vm638, %v3172, 0
    %3176 = vmatprep.subr.bf16.mxu0 0
    %3177 = vmatpush1.bf16.msra.mxu0 0
    %3178 = vmatprep.subr.bf16.mxu0 0
    %3179 = vmatpush1.bf16.msra.mxu0 0
    %3180 = vmatprep.subr.bf16.mxu0 0
    %3181 = vmatpush1.bf16.msra.mxu0 0
    %3182 = vmatprep.subr.bf16.mxu0 0
    %3183 = vmatpush1.bf16.msra.mxu0 0
    %3184 = vmatprep.subr.bf16.mxu0 0
    %3185 = vmatpush1.bf16.msra.mxu0 0
    %3186 = vmatprep.subr.bf16.mxu0 0
    %3187 = vmatpush1.bf16.msra.mxu0 0
    %3188 = vmatprep.subr.bf16.mxu0 0
    %3189 = vmatpush1.bf16.msra.mxu0 %v275
    %3190 = vmatprep.subr.bf16.mxu0 0
    %3191 = vmatpush1.bf16.msra.mxu0 %v274
    %3192 = vmatprep.subr.bf16.mxu0 0
    %3193 = vmatpush2.bf16.msra.mxu0 0
    %3194 = vmatprep.subr.bf16.mxu0 0
    %3195 = vmatpush2.bf16.msra.mxu0 0
    %3196 = vmatprep.subr.bf16.mxu0 0
    %3197 = vmatpush2.bf16.msra.mxu0 0
    %3198 = vmatprep.subr.bf16.mxu0 0
    %3199 = vmatpush2.bf16.msra.mxu0 0
    %3200 = vmatprep.subr.bf16.mxu0 0
    %3201 = vmatpush2.bf16.msra.mxu0 0
    %3202 = vmatprep.subr.bf16.mxu0 0
    %3203 = vmatpush2.bf16.msra.mxu0 0
    %3204 = vmatprep.subr.bf16.mxu0 0
    %3205 = vmatpush2.bf16.msra.mxu0 0
    %3206 = vmatprep.subr.bf16.mxu0 0
    %3207 = vmatpush2.bf16.msra.mxu0 0
    %3208 = vmatprep.mubr.bf16.mxu0 0
    %3209 = vmatmul.mubr.bf16.gmra.mxu0 %v3174
    %v3210 = vpop.f32.mrf.mxu0
    %v3211 = vadd.f32 %v357, %v3210
    %v3212 = vpop.f32.mrf.mxu0
    %v3213 = vpop.f32.mrf.mxu0
    %v3214 = vpop.f32.mrf.mxu0
    %3215 = vdwg.mxu0
    %vm3216 = vcmask 123904
    %v3217 = vsel %vm3216, %v3211, -inf
    %3218 = vmax.xlane.f32.xlu0 %v3217
    %v3219 = vpop.xlane.xlu0 %3218
    %vm3220 = vcmp.eq.f32.partialorder %v3211, %v3219
    %v3221 = vsel %vm3220, %v368, 16
    %v3222 = vsel %vm3216, %v3221, 2147483647
    %v3223 = vand.u32 %v3222, 65535
    %v3224 = vshra.s32 %v3222, 16
    %v3225 = vcvt.s32.f32 %v3223
    %v3226 = vcvt.s32.f32 %v3224
    %3227 = vmin.xlane.f32.xlu0 %v3226
    %v3228 = vpop.xlane.xlu0 %3227
    %vm3229 = vcmp.eq.f32.partialorder %v3226, %v3228
    %v3230 = vsel %vm3229, %v3225, inf
    %3231 = vmin.xlane.f32.xlu0 %v3230
    %v3232 = vpop.xlane.xlu0 %3231
    %v3233 = vcvt.f32.s32 %v3232
    %v3234 = vcvt.f32.s32 %v3228
    %v3235 = vshll.u32 %v3234, 16
    %v3236 = vadd.s32 %v3235, %v3233
    %vm3237 = vcmp.eq.s32.totalorder %v368, %v3236
    %v3238 = vsel %vm3237, 1, 0
    %v3239 = vcvt.s32.f32 %v3238
    %v3240 = vpack.c.bf16 %v3239, %v3239
    %v3242 = vsel %vm455, %v3240, 0
    %3244 = vmatprep.subr.bf16.mxu0 0
    %3245 = vmatpush1.bf16.msra.mxu0 0
    %3246 = vmatprep.subr.bf16.mxu0 0
    %3247 = vmatpush1.bf16.msra.mxu0 0
    %3248 = vmatprep.subr.bf16.mxu0 0
    %3249 = vmatpush1.bf16.msra.mxu0 0
    %3250 = vmatprep.subr.bf16.mxu0 0
    %3251 = vmatpush1.bf16.msra.mxu0 0
    %3252 = vmatprep.subr.bf16.mxu0 0
    %3253 = vmatpush1.bf16.msra.mxu0 0
    %3254 = vmatprep.subr.bf16.mxu0 0
    %3255 = vmatpush1.bf16.msra.mxu0 0
    %3256 = vmatprep.subr.bf16.mxu0 0
    %3257 = vmatpush1.bf16.msra.mxu0 0
    %3258 = vmatprep.subr.bf16.mxu0 0
    %3259 = vmatpush1.bf16.msra.mxu0 %v2679
    %3260 = vmatprep.subr.bf16.mxu0 0
    %3261 = vmatpush2.bf16.msra.mxu0 0
    %3262 = vmatprep.subr.bf16.mxu0 0
    %3263 = vmatpush2.bf16.msra.mxu0 0
    %3264 = vmatprep.subr.bf16.mxu0 0
    %3265 = vmatpush2.bf16.msra.mxu0 0
    %3266 = vmatprep.subr.bf16.mxu0 0
    %3267 = vmatpush2.bf16.msra.mxu0 0
    %3268 = vmatprep.subr.bf16.mxu0 0
    %3269 = vmatpush2.bf16.msra.mxu0 0
    %3270 = vmatprep.subr.bf16.mxu0 0
    %3271 = vmatpush2.bf16.msra.mxu0 0
    %3272 = vmatprep.subr.bf16.mxu0 0
    %3273 = vmatpush2.bf16.msra.mxu0 0
    %3274 = vmatprep.subr.bf16.mxu0 0
    %3275 = vmatpush2.bf16.msra.mxu0 0
    %3276 = vmatprep.mubr.bf16.mxu0 0
    %3277 = vmatmul.mubr.bf16.gmra.mxu0 %v3242
    %v3278 = vpop.f32.mrf.mxu0
    %v3279 = vadd.f32 0.0, %v3278
    %v3280 = vpop.f32.mrf.mxu0
    %v3281 = vpop.f32.mrf.mxu0
    %v3282 = vpop.f32.mrf.mxu0
    %3283 = vdwg.mxu0
    %3284 = vmatprep.subr.bf16.mxu0 0
    %3285 = vmatpush1.bf16.msra.mxu0 0
    %3286 = vmatprep.subr.bf16.mxu0 0
    %3287 = vmatpush1.bf16.msra.mxu0 0
    %3288 = vmatprep.subr.bf16.mxu0 0
    %3289 = vmatpush1.bf16.msra.mxu0 0
    %3290 = vmatprep.subr.bf16.mxu0 0
    %3291 = vmatpush1.bf16.msra.mxu0 0
    %3292 = vmatprep.subr.bf16.mxu0 0
    %3293 = vmatpush1.bf16.msra.mxu0 0
    %3294 = vmatprep.subr.bf16.mxu0 0
    %3295 = vmatpush1.bf16.msra.mxu0 0
    %3296 = vmatprep.subr.bf16.mxu0 0
    %3297 = vmatpush1.bf16.msra.mxu0 %v257
    %3298 = vmatprep.subr.bf16.mxu0 0
    %3299 = vmatpush1.bf16.msra.mxu0 %v256
    %3300 = vmatprep.subr.bf16.mxu0 0
    %3301 = vmatpush2.bf16.msra.mxu0 0
    %3302 = vmatprep.subr.bf16.mxu0 0
    %3303 = vmatpush2.bf16.msra.mxu0 0
    %3304 = vmatprep.subr.bf16.mxu0 0
    %3305 = vmatpush2.bf16.msra.mxu0 0
    %3306 = vmatprep.subr.bf16.mxu0 0
    %3307 = vmatpush2.bf16.msra.mxu0 0
    %3308 = vmatprep.subr.bf16.mxu0 0
    %3309 = vmatpush2.bf16.msra.mxu0 0
    %3310 = vmatprep.subr.bf16.mxu0 0
    %3311 = vmatpush2.bf16.msra.mxu0 0
    %3312 = vmatprep.subr.bf16.mxu0 0
    %3313 = vmatpush2.bf16.msra.mxu0 0
    %3314 = vmatprep.subr.bf16.mxu0 0
    %3315 = vmatpush2.bf16.msra.mxu0 0
    %3316 = vmatprep.mubr.bf16.mxu0 0
    %3317 = vmatmul.mubr.bf16.gmra.mxu0 %v3174
    %v3318 = vpop.f32.mrf.mxu0
    %v3319 = vadd.f32 0.0, %v3318
    %v3320 = vpop.f32.mrf.mxu0
    %v3321 = vpop.f32.mrf.mxu0
    %v3322 = vpop.f32.mrf.mxu0
    %3323 = vdwg.mxu0
    %v3324 = vadd.f32 %v3279, %v3319
    %v3325 = vxor.u32 %v3324, 2147483648
    %v3326 = vmul.f32 %v3325, 1.442695
    %v3327 = vpow.pop %v3326
    %v3328 = vadd.f32 %v3327, 1.0
    %v3329 = vrcp.pop %v3328
    %v3330 = vmul.f32 1.0, %v3329
    %v3331 = vadd.f32 %v3319, %v336
    %3333 = vrot.lane.b32.xlu0 %v3331, 64
    %v3334 = vpop.permute.xlu0 %3333
    %v3336 = vmul.f32 %v3330, %v3334
    %3338 = vrot.lane.b32.xlu0 %v3336, 64
    %v3339 = vpop.permute.xlu0 %3338
    %v3341 = vadd.f32 %v3279, %v3339
    %v3342 = vtanh.pop %v3341
    %v3343 = vsub.f32 1.0, %v3330
    %3345 = vrot.lane.b32.xlu0 %v3342, 96
    %v3346 = vpop.permute.xlu0 %3345
    %v3348 = vmul.f32 %v3343, %v3346
    %v3351 = vrot.slane %v3161, 7
    %v3352 = vsel %vm2926, %v3351, %v3160
    %v3354 = vmul.f32 %v3330, %v3352
    %v3355 = vadd.f32 %v3348, %v3354
    %v3358 = vunpack.c.l.s4 1966171168
    %v3359 = vunpack.c.0.s8 %v3358
    %v3360 = vlaneseq
    %v3361 = vshrl.u32 %v3360, 7
    %v3362 = vsub.s32 %v3359, %v3361
    %v3363 = vrot.slane %v3355, %v3362
    %v3364 = vcombine.high %v3363, %v3363
    %v3366 = vunpack.c.l.s4 1966171168
    %v3367 = vunpack.c.0.s8 %v3366
    %v3368 = vlaneseq
    %v3369 = vshrl.u32 %v3368, 7
    %v3370 = vsub.s32 %v3367, %v3369
    %v3371 = vrot.slane %v3363, %v3370
    %v3373 = vunpack.c.l.s4 1966171168
    %v3374 = vunpack.c.0.s8 %v3373
    %v3375 = vlaneseq
    %v3376 = vshrl.u32 %v3375, 7
    %v3377 = vsub.s32 %v3374, %v3376
    %v3378 = vrot.slane %v3364, %v3377
    %v3381 = vpack.c.bf16 %v3371, %v3371
    %v3382 = vpack.c.bf16 %v3378, %v3378
    %3384 = vrot.lane.b32.xlu0 %v3381, 96
    %v3385 = vpop.permute.xlu0 %3384
    %v3387 = vsel %vm638, %v3385, 0
    %3389 = vmatprep.subr.bf16.mxu0 0
    %3390 = vmatpush1.bf16.msra.mxu0 0
    %3391 = vmatprep.subr.bf16.mxu0 0
    %3392 = vmatpush1.bf16.msra.mxu0 0
    %3393 = vmatprep.subr.bf16.mxu0 0
    %3394 = vmatpush1.bf16.msra.mxu0 0
    %3395 = vmatprep.subr.bf16.mxu0 0
    %3396 = vmatpush1.bf16.msra.mxu0 0
    %3397 = vmatprep.subr.bf16.mxu0 0
    %3398 = vmatpush1.bf16.msra.mxu0 0
    %3399 = vmatprep.subr.bf16.mxu0 0
    %3400 = vmatpush1.bf16.msra.mxu0 0
    %3401 = vmatprep.subr.bf16.mxu0 0
    %3402 = vmatpush1.bf16.msra.mxu0 %v2298
    %3403 = vmatprep.subr.bf16.mxu0 0
    %3404 = vmatpush1.bf16.msra.mxu0 %v2297
    %3405 = vmatprep.subr.bf16.mxu0 0
    %3406 = vmatpush2.bf16.msra.mxu0 0
    %3407 = vmatprep.subr.bf16.mxu0 0
    %3408 = vmatpush2.bf16.msra.mxu0 0
    %3409 = vmatprep.subr.bf16.mxu0 0
    %3410 = vmatpush2.bf16.msra.mxu0 0
    %3411 = vmatprep.subr.bf16.mxu0 0
    %3412 = vmatpush2.bf16.msra.mxu0 0
    %3413 = vmatprep.subr.bf16.mxu0 0
    %3414 = vmatpush2.bf16.msra.mxu0 0
    %3415 = vmatprep.subr.bf16.mxu0 0
    %3416 = vmatpush2.bf16.msra.mxu0 0
    %3417 = vmatprep.subr.bf16.mxu0 0
    %3418 = vmatpush2.bf16.msra.mxu0 0
    %3419 = vmatprep.subr.bf16.mxu0 0
    %3420 = vmatpush2.bf16.msra.mxu0 0
    %3421 = vmatprep.mubr.bf16.mxu0 0
    %3422 = vmatmul.mubr.bf16.gmra.mxu0 %v3387
    %v3423 = vpop.f32.mrf.mxu0
    %v3424 = vadd.f32 0.0, %v3423
    %v3425 = vpop.f32.mrf.mxu0
    %v3426 = vpop.f32.mrf.mxu0
    %v3427 = vpop.f32.mrf.mxu0
    %3428 = vdwg.mxu0
    %3430 = vrot.lane.b32.xlu0 %v3382, 96
    %v3431 = vpop.permute.xlu0 %3430
    %v3433 = vsel %vm638, %v3431, 0
    %3435 = vmatprep.subr.bf16.mxu0 0
    %3436 = vmatpush1.bf16.msra.mxu0 0
    %3437 = vmatprep.subr.bf16.mxu0 0
    %3438 = vmatpush1.bf16.msra.mxu0 0
    %3439 = vmatprep.subr.bf16.mxu0 0
    %3440 = vmatpush1.bf16.msra.mxu0 0
    %3441 = vmatprep.subr.bf16.mxu0 0
    %3442 = vmatpush1.bf16.msra.mxu0 0
    %3443 = vmatprep.subr.bf16.mxu0 0
    %3444 = vmatpush1.bf16.msra.mxu0 0
    %3445 = vmatprep.subr.bf16.mxu0 0
    %3446 = vmatpush1.bf16.msra.mxu0 0
    %3447 = vmatprep.subr.bf16.mxu0 0
    %3448 = vmatpush1.bf16.msra.mxu0 %v2300
    %3449 = vmatprep.subr.bf16.mxu0 0
    %3450 = vmatpush1.bf16.msra.mxu0 %v2299
    %3451 = vmatprep.subr.bf16.mxu0 0
    %3452 = vmatpush2.bf16.msra.mxu0 0
    %3453 = vmatprep.subr.bf16.mxu0 0
    %3454 = vmatpush2.bf16.msra.mxu0 0
    %3455 = vmatprep.subr.bf16.mxu0 0
    %3456 = vmatpush2.bf16.msra.mxu0 0
    %3457 = vmatprep.subr.bf16.mxu0 0
    %3458 = vmatpush2.bf16.msra.mxu0 0
    %3459 = vmatprep.subr.bf16.mxu0 0
    %3460 = vmatpush2.bf16.msra.mxu0 0
    %3461 = vmatprep.subr.bf16.mxu0 0
    %3462 = vmatpush2.bf16.msra.mxu0 0
    %3463 = vmatprep.subr.bf16.mxu0 0
    %3464 = vmatpush2.bf16.msra.mxu0 0
    %3465 = vmatprep.subr.bf16.mxu0 0
    %3466 = vmatpush2.bf16.msra.mxu0 0
    %3467 = vmatprep.mubr.bf16.mxu0 0
    %3468 = vmatmul.mubr.bf16.gmra.mxu0 %v3433
    %v3469 = vpop.f32.mrf.mxu0
    %v3470 = vadd.f32 0.0, %v3469
    %v3471 = vpop.f32.mrf.mxu0
    %v3472 = vpop.f32.mrf.mxu0
    %v3473 = vpop.f32.mrf.mxu0
    %3474 = vdwg.mxu0
    %v3475 = vmul.f32 %v3424, 0.17677669
    %v3476 = vmul.f32 %v3470, 0.17677669
    %v3479 = vrot.slane %v3476, 7
    %v3480 = vsel %vm2926, %v3479, %v3475
    %v3482 = vsel %vm2929, %v3480, -inf
    %3483 = vmax.xlane.f32.xlu0 %v3482
    %v3484 = vpop.xlane.xlu0 %3483
    %v3486 = vrot.slane %v3484, 1
    %v3489 = vsub.f32 %v3475, %v3484
    %v3490 = vsub.f32 %v3476, %v3486
    %v3491 = vmul.f32 %v3489, 1.442695
    %v3492 = vpow.pop %v3491
    %v3493 = vmul.f32 %v3490, 1.442695
    %v3494 = vpow.pop %v3493
    %v3497 = vrot.slane %v3494, 7
    %v3498 = vsel %vm2926, %v3497, %v3492
    %v3500 = vsel %vm2929, %v3498, 0.0
    %3501 = vadd.xlane.f32.xlu0 %v3500
    %v3502 = vpop.xlane.xlu0 %3501
    %v3503 = vrcp.pop %v3502
    %v3505 = vrot.slane %v3503, 1
    %v3508 = vmul.f32 %v3492, %v3503
    %v3509 = vmul.f32 %v3494, %v3505
    %v3510 = vpack.c.bf16 %v3508, %v3508
    %v3511 = vpack.c.bf16 %v3509, %v3509
    %v3513 = vsel %vm2960, %v3510, 0
    %3515 = vmatprep.subr.bf16.mxu0 0
    %3516 = vmatpush1.bf16.msra.mxu0 0
    %3517 = vmatprep.subr.bf16.mxu0 0
    %3518 = vmatpush1.bf16.msra.mxu0 0
    %3519 = vmatprep.subr.bf16.mxu0 0
    %3520 = vmatpush1.bf16.msra.mxu0 0
    %3521 = vmatprep.subr.bf16.mxu0 0
    %3522 = vmatpush1.bf16.msra.mxu0 0
    %3523 = vmatprep.subr.bf16.mxu0 0
    %3524 = vmatpush1.bf16.msra.mxu0 0
    %3525 = vmatprep.subr.bf16.mxu0 0
    %3526 = vmatpush1.bf16.msra.mxu0 0
    %3527 = vmatprep.subr.bf16.mxu0 0
    %3528 = vmatpush1.bf16.msra.mxu0 0
    %3529 = vmatprep.subr.bf16.mxu0 0
    %3530 = vmatpush1.bf16.msra.mxu0 %v2965
    %3531 = vmatprep.subr.bf16.mxu0 0
    %3532 = vmatpush2.bf16.msra.mxu0 0
    %3533 = vmatprep.subr.bf16.mxu0 0
    %3534 = vmatpush2.bf16.msra.mxu0 0
    %3535 = vmatprep.subr.bf16.mxu0 0
    %3536 = vmatpush2.bf16.msra.mxu0 0
    %3537 = vmatprep.subr.bf16.mxu0 0
    %3538 = vmatpush2.bf16.msra.mxu0 0
    %3539 = vmatprep.subr.bf16.mxu0 0
    %3540 = vmatpush2.bf16.msra.mxu0 0
    %3541 = vmatprep.subr.bf16.mxu0 0
    %3542 = vmatpush2.bf16.msra.mxu0 0
    %3543 = vmatprep.subr.bf16.mxu0 0
    %3544 = vmatpush2.bf16.msra.mxu0 0
    %3545 = vmatprep.subr.bf16.mxu0 0
    %3546 = vmatpush2.bf16.msra.mxu0 0
    %3547 = vmatprep.mubr.bf16.mxu0 0
    %3548 = vmatmul.mubr.bf16.gmra.mxu0 %v3513
    %v3549 = vpop.f32.mrf.mxu0
    %v3550 = vadd.f32 0.0, %v3549
    %v3551 = vpop.f32.mrf.mxu0
    %v3552 = vpop.f32.mrf.mxu0
    %v3553 = vpop.f32.mrf.mxu0
    %3554 = vdwg.mxu0
    %v3556 = vsel %vm2960, %v3511, 0
    %3558 = vmatprep.subr.bf16.mxu0 0
    %3559 = vmatpush1.bf16.msra.mxu0 0
    %3560 = vmatprep.subr.bf16.mxu0 0
    %3561 = vmatpush1.bf16.msra.mxu0 0
    %3562 = vmatprep.subr.bf16.mxu0 0
    %3563 = vmatpush1.bf16.msra.mxu0 0
    %3564 = vmatprep.subr.bf16.mxu0 0
    %3565 = vmatpush1.bf16.msra.mxu0 0
    %3566 = vmatprep.subr.bf16.mxu0 0
    %3567 = vmatpush1.bf16.msra.mxu0 0
    %3568 = vmatprep.subr.bf16.mxu0 0
    %3569 = vmatpush1.bf16.msra.mxu0 0
    %3570 = vmatprep.subr.bf16.mxu0 0
    %3571 = vmatpush1.bf16.msra.mxu0 0
    %3572 = vmatprep.subr.bf16.mxu0 0
    %3573 = vmatpush1.bf16.msra.mxu0 %v3011
    %3574 = vmatprep.subr.bf16.mxu0 0
    %3575 = vmatpush2.bf16.msra.mxu0 0
    %3576 = vmatprep.subr.bf16.mxu0 0
    %3577 = vmatpush2.bf16.msra.mxu0 0
    %3578 = vmatprep.subr.bf16.mxu0 0
    %3579 = vmatpush2.bf16.msra.mxu0 0
    %3580 = vmatprep.subr.bf16.mxu0 0
    %3581 = vmatpush2.bf16.msra.mxu0 0
    %3582 = vmatprep.subr.bf16.mxu0 0
    %3583 = vmatpush2.bf16.msra.mxu0 0
    %3584 = vmatprep.subr.bf16.mxu0 0
    %3585 = vmatpush2.bf16.msra.mxu0 0
    %3586 = vmatprep.subr.bf16.mxu0 0
    %3587 = vmatpush2.bf16.msra.mxu0 0
    %3588 = vmatprep.subr.bf16.mxu0 0
    %3589 = vmatpush2.bf16.msra.mxu0 0
    %3590 = vmatprep.mubr.bf16.mxu0 0
    %3591 = vmatmul.mubr.bf16.gmra.mxu0 %v3556
    %v3592 = vpop.f32.mrf.mxu0
    %v3593 = vadd.f32 0.0, %v3592
    %v3594 = vpop.f32.mrf.mxu0
    %v3595 = vpop.f32.mrf.mxu0
    %v3596 = vpop.f32.mrf.mxu0
    %3597 = vdwg.mxu0
    %v3598 = vadd.f32 %v3550, %v351
    %v3599 = vadd.f32 %v3593, %v351
    %v3600 = vpack.c.bf16 %v3355, %v3355
    %3602 = vrot.lane.b32.xlu0 %v3600, 96
    %v3603 = vpop.permute.xlu0 %3602
    %v3605 = vsel %vm638, %v3603, 0
    %3607 = vmatprep.subr.bf16.mxu0 0
    %3608 = vmatpush1.bf16.msra.mxu0 0
    %3609 = vmatprep.subr.bf16.mxu0 0
    %3610 = vmatpush1.bf16.msra.mxu0 0
    %3611 = vmatprep.subr.bf16.mxu0 0
    %3612 = vmatpush1.bf16.msra.mxu0 0
    %3613 = vmatprep.subr.bf16.mxu0 0
    %3614 = vmatpush1.bf16.msra.mxu0 0
    %3615 = vmatprep.subr.bf16.mxu0 0
    %3616 = vmatpush1.bf16.msra.mxu0 0
    %3617 = vmatprep.subr.bf16.mxu0 0
    %3618 = vmatpush1.bf16.msra.mxu0 0
    %3619 = vmatprep.subr.bf16.mxu0 0
    %3620 = vmatpush1.bf16.msra.mxu0 %v263
    %3621 = vmatprep.subr.bf16.mxu0 0
    %3622 = vmatpush1.bf16.msra.mxu0 %v262
    %3623 = vmatprep.subr.bf16.mxu0 0
    %3624 = vmatpush2.bf16.msra.mxu0 0
    %3625 = vmatprep.subr.bf16.mxu0 0
    %3626 = vmatpush2.bf16.msra.mxu0 0
    %3627 = vmatprep.subr.bf16.mxu0 0
    %3628 = vmatpush2.bf16.msra.mxu0 0
    %3629 = vmatprep.subr.bf16.mxu0 0
    %3630 = vmatpush2.bf16.msra.mxu0 0
    %3631 = vmatprep.subr.bf16.mxu0 0
    %3632 = vmatpush2.bf16.msra.mxu0 0
    %3633 = vmatprep.subr.bf16.mxu0 0
    %3634 = vmatpush2.bf16.msra.mxu0 0
    %3635 = vmatprep.subr.bf16.mxu0 0
    %3636 = vmatpush2.bf16.msra.mxu0 0
    %3637 = vmatprep.subr.bf16.mxu0 0
    %3638 = vmatpush2.bf16.msra.mxu0 0
    %3639 = vmatprep.mubr.bf16.mxu0 0
    %3640 = vmatmul.mubr.bf16.gmra.mxu0 %v3605
    %v3641 = vpop.f32.mrf.mxu0
    %v3642 = vadd.f32 0.0, %v3641
    %v3643 = vpop.f32.mrf.mxu0
    %v3644 = vpop.f32.mrf.mxu0
    %v3645 = vpop.f32.mrf.mxu0
    %3646 = vdwg.mxu0
    %v3648 = vrot.slane %v3642, 1
    %v3651 = vadd.f32 %v3598, %v3642
    %v3652 = vadd.f32 %v3599, %v3648
    %v3653 = vxor.u32 %v3651, 2147483648
    %v3654 = vxor.u32 %v3652, 2147483648
    %v3655 = vmul.f32 %v3653, 1.442695
    %v3656 = vpow.pop %v3655
    %v3657 = vmul.f32 %v3654, 1.442695
    %v3658 = vpow.pop %v3657
    %v3659 = vadd.f32 %v3656, 1.0
    %v3660 = vadd.f32 %v3658, 1.0
    %v3661 = vrcp.pop %v3659
    %v3662 = vmul.f32 1.0, %v3661
    %v3663 = vrcp.pop %v3660
    %v3664 = vmul.f32 1.0, %v3663
    %v3665 = vadd.f32 %v3642, %v343
    %v3667 = vrot.slane %v3665, 1
    %3668 = vrot.lane.b32.xlu0 %v3665, 64
    %v3669 = vpop.permute.xlu0 %3668
    %3670 = vrot.lane.b32.xlu0 %v3667, 64
    %v3671 = vpop.permute.xlu0 %3670
    %v3674 = vmul.f32 %v3662, %v3669
    %v3675 = vmul.f32 %v3664, %v3671
    %3678 = vrot.lane.b32.xlu0 %v3674, 64
    %v3679 = vpop.permute.xlu0 %3678
    %3680 = vrot.lane.b32.xlu0 %v3675, 64
    %v3681 = vpop.permute.xlu0 %3680
    %v3684 = vadd.f32 %v3598, %v3679
    %v3685 = vadd.f32 %v3599, %v3681
    %v3686 = vtanh.pop %v3684
    %v3687 = vtanh.pop %v3685
    %v3688 = vsub.f32 1.0, %v3662
    %v3689 = vsub.f32 1.0, %v3664
    %3692 = vrot.lane.b32.xlu0 %v3686, 96
    %v3693 = vpop.permute.xlu0 %3692
    %3694 = vrot.lane.b32.xlu0 %v3687, 96
    %v3695 = vpop.permute.xlu0 %3694
    %v3698 = vmul.f32 %v3688, %v3693
    %v3699 = vmul.f32 %v3689, %v3695
    %v3700 = vrot.slane %v3355, 1
    %v3703 = vmul.f32 %v3662, %v3355
    %v3704 = vmul.f32 %v3664, %v3700
    %v3705 = vadd.f32 %v3698, %v3703
    %v3706 = vadd.f32 %v3699, %v3704
    %v3707 = vpack.c.bf16 %v3705, %v3705
    %v3708 = vpack.c.bf16 %v3706, %v3706
    %v3711 = vunpack.c.l.b16 %v3707
    %v3712 = vunpack.c.l.b16 %v3708
    %v3713 = vrot.slane %v3712, 7
    %v3714 = vsel %vm2926, %v3713, %v3711
    %v3715 = vpack.c.b16 %v3714, %v3714
    %3716 = vrot.lane.b32.xlu0 %v3715, 96
    %v3717 = vpop.permute.xlu0 %3716
    %v3719 = vsel %vm638, %v3717, 0
    %3721 = vmatprep.subr.bf16.mxu0 0
    %3722 = vmatpush1.bf16.msra.mxu0 0
    %3723 = vmatprep.subr.bf16.mxu0 0
    %3724 = vmatpush1.bf16.msra.mxu0 0
    %3725 = vmatprep.subr.bf16.mxu0 0
    %3726 = vmatpush1.bf16.msra.mxu0 0
    %3727 = vmatprep.subr.bf16.mxu0 0
    %3728 = vmatpush1.bf16.msra.mxu0 0
    %3729 = vmatprep.subr.bf16.mxu0 0
    %3730 = vmatpush1.bf16.msra.mxu0 0
    %3731 = vmatprep.subr.bf16.mxu0 0
    %3732 = vmatpush1.bf16.msra.mxu0 0
    %3733 = vmatprep.subr.bf16.mxu0 0
    %3734 = vmatpush1.bf16.msra.mxu0 %v275
    %3735 = vmatprep.subr.bf16.mxu0 0
    %3736 = vmatpush1.bf16.msra.mxu0 %v274
    %3737 = vmatprep.subr.bf16.mxu0 0
    %3738 = vmatpush2.bf16.msra.mxu0 0
    %3739 = vmatprep.subr.bf16.mxu0 0
    %3740 = vmatpush2.bf16.msra.mxu0 0
    %3741 = vmatprep.subr.bf16.mxu0 0
    %3742 = vmatpush2.bf16.msra.mxu0 0
    %3743 = vmatprep.subr.bf16.mxu0 0
    %3744 = vmatpush2.bf16.msra.mxu0 0
    %3745 = vmatprep.subr.bf16.mxu0 0
    %3746 = vmatpush2.bf16.msra.mxu0 0
    %3747 = vmatprep.subr.bf16.mxu0 0
    %3748 = vmatpush2.bf16.msra.mxu0 0
    %3749 = vmatprep.subr.bf16.mxu0 0
    %3750 = vmatpush2.bf16.msra.mxu0 0
    %3751 = vmatprep.subr.bf16.mxu0 0
    %3752 = vmatpush2.bf16.msra.mxu0 0
    %3753 = vmatprep.mubr.bf16.mxu0 0
    %3754 = vmatmul.mubr.bf16.gmra.mxu0 %v3719
    %v3755 = vpop.f32.mrf.mxu0
    %v3756 = vadd.f32 %v357, %v3755
    %v3757 = vpop.f32.mrf.mxu0
    %v3758 = vpop.f32.mrf.mxu0
    %v3759 = vpop.f32.mrf.mxu0
    %3760 = vdwg.mxu0
    %v3761 = vsel %vm3216, %v3756, -inf
    %3762 = vmax.xlane.f32.xlu0 %v3761
    %v3763 = vpop.xlane.xlu0 %3762
    %vm3764 = vcmp.eq.f32.partialorder %v3756, %v3763
    %v3765 = vsel %vm3764, %v368, 16
    %v3766 = vsel %vm3216, %v3765, 2147483647
    %v3767 = vand.u32 %v3766, 65535
    %v3768 = vshra.s32 %v3766, 16
    %v3769 = vcvt.s32.f32 %v3767
    %v3770 = vcvt.s32.f32 %v3768
    %3771 = vmin.xlane.f32.xlu0 %v3770
    %v3772 = vpop.xlane.xlu0 %3771
    %vm3773 = vcmp.eq.f32.partialorder %v3770, %v3772
    %v3774 = vsel %vm3773, %v3769, inf
    %3775 = vmin.xlane.f32.xlu0 %v3774
    %v3776 = vpop.xlane.xlu0 %3775
    %v3777 = vcvt.f32.s32 %v3776
    %v3778 = vcvt.f32.s32 %v3772
    %v3779 = vshll.u32 %v3778, 16
    %v3780 = vadd.s32 %v3779, %v3777
    %vm3781 = vcmp.eq.s32.totalorder %v368, %v3780
    %v3782 = vsel %vm3781, 1, 0
    %v3783 = vcvt.s32.f32 %v3782
    %v3784 = vpack.c.bf16 %v3783, %v3783
    %v3786 = vsel %vm455, %v3784, 0
    %3788 = vmatprep.subr.bf16.mxu0 0
    %3789 = vmatpush1.bf16.msra.mxu0 0
    %3790 = vmatprep.subr.bf16.mxu0 0
    %3791 = vmatpush1.bf16.msra.mxu0 0
    %3792 = vmatprep.subr.bf16.mxu0 0
    %3793 = vmatpush1.bf16.msra.mxu0 0
    %3794 = vmatprep.subr.bf16.mxu0 0
    %3795 = vmatpush1.bf16.msra.mxu0 0
    %3796 = vmatprep.subr.bf16.mxu0 0
    %3797 = vmatpush1.bf16.msra.mxu0 0
    %3798 = vmatprep.subr.bf16.mxu0 0
    %3799 = vmatpush1.bf16.msra.mxu0 0
    %3800 = vmatprep.subr.bf16.mxu0 0
    %3801 = vmatpush1.bf16.msra.mxu0 0
    %3802 = vmatprep.subr.bf16.mxu0 0
    %3803 = vmatpush1.bf16.msra.mxu0 %v2679
    %3804 = vmatprep.subr.bf16.mxu0 0
    %3805 = vmatpush2.bf16.msra.mxu0 0
    %3806 = vmatprep.subr.bf16.mxu0 0
    %3807 = vmatpush2.bf16.msra.mxu0 0
    %3808 = vmatprep.subr.bf16.mxu0 0
    %3809 = vmatpush2.bf16.msra.mxu0 0
    %3810 = vmatprep.subr.bf16.mxu0 0
    %3811 = vmatpush2.bf16.msra.mxu0 0
    %3812 = vmatprep.subr.bf16.mxu0 0
    %3813 = vmatpush2.bf16.msra.mxu0 0
    %3814 = vmatprep.subr.bf16.mxu0 0
    %3815 = vmatpush2.bf16.msra.mxu0 0
    %3816 = vmatprep.subr.bf16.mxu0 0
    %3817 = vmatpush2.bf16.msra.mxu0 0
    %3818 = vmatprep.subr.bf16.mxu0 0
    %3819 = vmatpush2.bf16.msra.mxu0 0
    %3820 = vmatprep.mubr.bf16.mxu0 0
    %3821 = vmatmul.mubr.bf16.gmra.mxu0 %v3786
    %v3822 = vpop.f32.mrf.mxu0
    %v3823 = vadd.f32 0.0, %v3822
    %v3824 = vpop.f32.mrf.mxu0
    %v3825 = vpop.f32.mrf.mxu0
    %v3826 = vpop.f32.mrf.mxu0
    %3827 = vdwg.mxu0
    %3828 = vmatprep.subr.bf16.mxu0 0
    %3829 = vmatpush1.bf16.msra.mxu0 0
    %3830 = vmatprep.subr.bf16.mxu0 0
    %3831 = vmatpush1.bf16.msra.mxu0 0
    %3832 = vmatprep.subr.bf16.mxu0 0
    %3833 = vmatpush1.bf16.msra.mxu0 0
    %3834 = vmatprep.subr.bf16.mxu0 0
    %3835 = vmatpush1.bf16.msra.mxu0 0
    %3836 = vmatprep.subr.bf16.mxu0 0
    %3837 = vmatpush1.bf16.msra.mxu0 0
    %3838 = vmatprep.subr.bf16.mxu0 0
    %3839 = vmatpush1.bf16.msra.mxu0 0
    %3840 = vmatprep.subr.bf16.mxu0 0
    %3841 = vmatpush1.bf16.msra.mxu0 %v257
    %3842 = vmatprep.subr.bf16.mxu0 0
    %3843 = vmatpush1.bf16.msra.mxu0 %v256
    %3844 = vmatprep.subr.bf16.mxu0 0
    %3845 = vmatpush2.bf16.msra.mxu0 0
    %3846 = vmatprep.subr.bf16.mxu0 0
    %3847 = vmatpush2.bf16.msra.mxu0 0
    %3848 = vmatprep.subr.bf16.mxu0 0
    %3849 = vmatpush2.bf16.msra.mxu0 0
    %3850 = vmatprep.subr.bf16.mxu0 0
    %3851 = vmatpush2.bf16.msra.mxu0 0
    %3852 = vmatprep.subr.bf16.mxu0 0
    %3853 = vmatpush2.bf16.msra.mxu0 0
    %3854 = vmatprep.subr.bf16.mxu0 0
    %3855 = vmatpush2.bf16.msra.mxu0 0
    %3856 = vmatprep.subr.bf16.mxu0 0
    %3857 = vmatpush2.bf16.msra.mxu0 0
    %3858 = vmatprep.subr.bf16.mxu0 0
    %3859 = vmatpush2.bf16.msra.mxu0 0
    %3860 = vmatprep.mubr.bf16.mxu0 0
    %3861 = vmatmul.mubr.bf16.gmra.mxu0 %v3719
    %v3862 = vpop.f32.mrf.mxu0
    %v3863 = vadd.f32 0.0, %v3862
    %v3864 = vpop.f32.mrf.mxu0
    %v3865 = vpop.f32.mrf.mxu0
    %v3866 = vpop.f32.mrf.mxu0
    %3867 = vdwg.mxu0
    %v3868 = vadd.f32 %v3823, %v3863
    %v3869 = vxor.u32 %v3868, 2147483648
    %v3870 = vmul.f32 %v3869, 1.442695
    %v3871 = vpow.pop %v3870
    %v3872 = vadd.f32 %v3871, 1.0
    %v3873 = vrcp.pop %v3872
    %v3874 = vmul.f32 1.0, %v3873
    %v3875 = vadd.f32 %v3863, %v336
    %3877 = vrot.lane.b32.xlu0 %v3875, 64
    %v3878 = vpop.permute.xlu0 %3877
    %v3880 = vmul.f32 %v3874, %v3878
    %3882 = vrot.lane.b32.xlu0 %v3880, 64
    %v3883 = vpop.permute.xlu0 %3882
    %v3885 = vadd.f32 %v3823, %v3883
    %v3886 = vtanh.pop %v3885
    %v3887 = vsub.f32 1.0, %v3874
    %3889 = vrot.lane.b32.xlu0 %v3886, 96
    %v3890 = vpop.permute.xlu0 %3889
    %v3892 = vmul.f32 %v3887, %v3890
    %v3895 = vrot.slane %v3706, 7
    %v3896 = vsel %vm2926, %v3895, %v3705
    %v3898 = vmul.f32 %v3874, %v3896
    %v3899 = vadd.f32 %v3892, %v3898
    %v3902 = vunpack.c.l.s4 1966171168
    %v3903 = vunpack.c.0.s8 %v3902
    %v3904 = vlaneseq
    %v3905 = vshrl.u32 %v3904, 7
    %v3906 = vsub.s32 %v3903, %v3905
    %v3907 = vrot.slane %v3899, %v3906
    %v3908 = vcombine.high %v3907, %v3907
    %v3910 = vunpack.c.l.s4 1966171168
    %v3911 = vunpack.c.0.s8 %v3910
    %v3912 = vlaneseq
    %v3913 = vshrl.u32 %v3912, 7
    %v3914 = vsub.s32 %v3911, %v3913
    %v3915 = vrot.slane %v3907, %v3914
    %v3917 = vunpack.c.l.s4 1966171168
    %v3918 = vunpack.c.0.s8 %v3917
    %v3919 = vlaneseq
    %v3920 = vshrl.u32 %v3919, 7
    %v3921 = vsub.s32 %v3918, %v3920
    %v3922 = vrot.slane %v3908, %v3921
    %v3925 = vpack.c.bf16 %v3915, %v3915
    %v3926 = vpack.c.bf16 %v3922, %v3922
    %3928 = vrot.lane.b32.xlu0 %v3925, 96
    %v3929 = vpop.permute.xlu0 %3928
    %v3931 = vsel %vm638, %v3929, 0
    %3933 = vmatprep.subr.bf16.mxu0 0
    %3934 = vmatpush1.bf16.msra.mxu0 0
    %3935 = vmatprep.subr.bf16.mxu0 0
    %3936 = vmatpush1.bf16.msra.mxu0 0
    %3937 = vmatprep.subr.bf16.mxu0 0
    %3938 = vmatpush1.bf16.msra.mxu0 0
    %3939 = vmatprep.subr.bf16.mxu0 0
    %3940 = vmatpush1.bf16.msra.mxu0 0
    %3941 = vmatprep.subr.bf16.mxu0 0
    %3942 = vmatpush1.bf16.msra.mxu0 0
    %3943 = vmatprep.subr.bf16.mxu0 0
    %3944 = vmatpush1.bf16.msra.mxu0 0
    %3945 = vmatprep.subr.bf16.mxu0 0
    %3946 = vmatpush1.bf16.msra.mxu0 %v2298
    %3947 = vmatprep.subr.bf16.mxu0 0
    %3948 = vmatpush1.bf16.msra.mxu0 %v2297
    %3949 = vmatprep.subr.bf16.mxu0 0
    %3950 = vmatpush2.bf16.msra.mxu0 0
    %3951 = vmatprep.subr.bf16.mxu0 0
    %3952 = vmatpush2.bf16.msra.mxu0 0
    %3953 = vmatprep.subr.bf16.mxu0 0
    %3954 = vmatpush2.bf16.msra.mxu0 0
    %3955 = vmatprep.subr.bf16.mxu0 0
    %3956 = vmatpush2.bf16.msra.mxu0 0
    %3957 = vmatprep.subr.bf16.mxu0 0
    %3958 = vmatpush2.bf16.msra.mxu0 0
    %3959 = vmatprep.subr.bf16.mxu0 0
    %3960 = vmatpush2.bf16.msra.mxu0 0
    %3961 = vmatprep.subr.bf16.mxu0 0
    %3962 = vmatpush2.bf16.msra.mxu0 0
    %3963 = vmatprep.subr.bf16.mxu0 0
    %3964 = vmatpush2.bf16.msra.mxu0 0
    %3965 = vmatprep.mubr.bf16.mxu0 0
    %3966 = vmatmul.mubr.bf16.gmra.mxu0 %v3931
    %v3967 = vpop.f32.mrf.mxu0
    %v3968 = vadd.f32 0.0, %v3967
    %v3969 = vpop.f32.mrf.mxu0
    %v3970 = vpop.f32.mrf.mxu0
    %v3971 = vpop.f32.mrf.mxu0
    %3972 = vdwg.mxu0
    %3974 = vrot.lane.b32.xlu0 %v3926, 96
    %v3975 = vpop.permute.xlu0 %3974
    %v3977 = vsel %vm638, %v3975, 0
    %3979 = vmatprep.subr.bf16.mxu0 0
    %3980 = vmatpush1.bf16.msra.mxu0 0
    %3981 = vmatprep.subr.bf16.mxu0 0
    %3982 = vmatpush1.bf16.msra.mxu0 0
    %3983 = vmatprep.subr.bf16.mxu0 0
    %3984 = vmatpush1.bf16.msra.mxu0 0
    %3985 = vmatprep.subr.bf16.mxu0 0
    %3986 = vmatpush1.bf16.msra.mxu0 0
    %3987 = vmatprep.subr.bf16.mxu0 0
    %3988 = vmatpush1.bf16.msra.mxu0 0
    %3989 = vmatprep.subr.bf16.mxu0 0
    %3990 = vmatpush1.bf16.msra.mxu0 0
    %3991 = vmatprep.subr.bf16.mxu0 0
    %3992 = vmatpush1.bf16.msra.mxu0 %v2300
    %3993 = vmatprep.subr.bf16.mxu0 0
    %3994 = vmatpush1.bf16.msra.mxu0 %v2299
    %3995 = vmatprep.subr.bf16.mxu0 0
    %3996 = vmatpush2.bf16.msra.mxu0 0
    %3997 = vmatprep.subr.bf16.mxu0 0
    %3998 = vmatpush2.bf16.msra.mxu0 0
    %3999 = vmatprep.subr.bf16.mxu0 0
    %4000 = vmatpush2.bf16.msra.mxu0 0
    %4001 = vmatprep.subr.bf16.mxu0 0
    %4002 = vmatpush2.bf16.msra.mxu0 0
    %4003 = vmatprep.subr.bf16.mxu0 0
    %4004 = vmatpush2.bf16.msra.mxu0 0
    %4005 = vmatprep.subr.bf16.mxu0 0
    %4006 = vmatpush2.bf16.msra.mxu0 0
    %4007 = vmatprep.subr.bf16.mxu0 0
    %4008 = vmatpush2.bf16.msra.mxu0 0
    %4009 = vmatprep.subr.bf16.mxu0 0
    %4010 = vmatpush2.bf16.msra.mxu0 0
    %4011 = vmatprep.mubr.bf16.mxu0 0
    %4012 = vmatmul.mubr.bf16.gmra.mxu0 %v3977
    %v4013 = vpop.f32.mrf.mxu0
    %v4014 = vadd.f32 0.0, %v4013
    %v4015 = vpop.f32.mrf.mxu0
    %v4016 = vpop.f32.mrf.mxu0
    %v4017 = vpop.f32.mrf.mxu0
    %4018 = vdwg.mxu0
    %v4019 = vmul.f32 %v3968, 0.17677669
    %v4020 = vmul.f32 %v4014, 0.17677669
    %v4023 = vrot.slane %v4020, 7
    %v4024 = vsel %vm2926, %v4023, %v4019
    %v4026 = vsel %vm2929, %v4024, -inf
    %4027 = vmax.xlane.f32.xlu0 %v4026
    %v4028 = vpop.xlane.xlu0 %4027
    %v4030 = vrot.slane %v4028, 1
    %v4033 = vsub.f32 %v4019, %v4028
    %v4034 = vsub.f32 %v4020, %v4030
    %v4035 = vmul.f32 %v4033, 1.442695
    %v4036 = vpow.pop %v4035
    %v4037 = vmul.f32 %v4034, 1.442695
    %v4038 = vpow.pop %v4037
    %v4041 = vrot.slane %v4038, 7
    %v4042 = vsel %vm2926, %v4041, %v4036
    %v4044 = vsel %vm2929, %v4042, 0.0
    %4045 = vadd.xlane.f32.xlu0 %v4044
    %v4046 = vpop.xlane.xlu0 %4045
    %v4047 = vrcp.pop %v4046
    %v4049 = vrot.slane %v4047, 1
    %v4052 = vmul.f32 %v4036, %v4047
    %v4053 = vmul.f32 %v4038, %v4049
    %v4054 = vpack.c.bf16 %v4052, %v4052
    %v4055 = vpack.c.bf16 %v4053, %v4053
    %v4057 = vsel %vm2960, %v4054, 0
    %4059 = vmatprep.subr.bf16.mxu0 0
    %4060 = vmatpush1.bf16.msra.mxu0 0
    %4061 = vmatprep.subr.bf16.mxu0 0
    %4062 = vmatpush1.bf16.msra.mxu0 0
    %4063 = vmatprep.subr.bf16.mxu0 0
    %4064 = vmatpush1.bf16.msra.mxu0 0
    %4065 = vmatprep.subr.bf16.mxu0 0
    %4066 = vmatpush1.bf16.msra.mxu0 0
    %4067 = vmatprep.subr.bf16.mxu0 0
    %4068 = vmatpush1.bf16.msra.mxu0 0
    %4069 = vmatprep.subr.bf16.mxu0 0
    %4070 = vmatpush1.bf16.msra.mxu0 0
    %4071 = vmatprep.subr.bf16.mxu0 0
    %4072 = vmatpush1.bf16.msra.mxu0 0
    %4073 = vmatprep.subr.bf16.mxu0 0
    %4074 = vmatpush1.bf16.msra.mxu0 %v2965
    %4075 = vmatprep.subr.bf16.mxu0 0
    %4076 = vmatpush2.bf16.msra.mxu0 0
    %4077 = vmatprep.subr.bf16.mxu0 0
    %4078 = vmatpush2.bf16.msra.mxu0 0
    %4079 = vmatprep.subr.bf16.mxu0 0
    %4080 = vmatpush2.bf16.msra.mxu0 0
    %4081 = vmatprep.subr.bf16.mxu0 0
    %4082 = vmatpush2.bf16.msra.mxu0 0
    %4083 = vmatprep.subr.bf16.mxu0 0
    %4084 = vmatpush2.bf16.msra.mxu0 0
    %4085 = vmatprep.subr.bf16.mxu0 0
    %4086 = vmatpush2.bf16.msra.mxu0 0
    %4087 = vmatprep.subr.bf16.mxu0 0
    %4088 = vmatpush2.bf16.msra.mxu0 0
    %4089 = vmatprep.subr.bf16.mxu0 0
    %4090 = vmatpush2.bf16.msra.mxu0 0
    %4091 = vmatprep.mubr.bf16.mxu0 0
    %4092 = vmatmul.mubr.bf16.gmra.mxu0 %v4057
    %v4093 = vpop.f32.mrf.mxu0
    %v4094 = vadd.f32 0.0, %v4093
    %v4095 = vpop.f32.mrf.mxu0
    %v4096 = vpop.f32.mrf.mxu0
    %v4097 = vpop.f32.mrf.mxu0
    %4098 = vdwg.mxu0
    %v4100 = vsel %vm2960, %v4055, 0
    %4102 = vmatprep.subr.bf16.mxu0 0
    %4103 = vmatpush1.bf16.msra.mxu0 0
    %4104 = vmatprep.subr.bf16.mxu0 0
    %4105 = vmatpush1.bf16.msra.mxu0 0
    %4106 = vmatprep.subr.bf16.mxu0 0
    %4107 = vmatpush1.bf16.msra.mxu0 0
    %4108 = vmatprep.subr.bf16.mxu0 0
    %4109 = vmatpush1.bf16.msra.mxu0 0
    %4110 = vmatprep.subr.bf16.mxu0 0
    %4111 = vmatpush1.bf16.msra.mxu0 0
    %4112 = vmatprep.subr.bf16.mxu0 0
    %4113 = vmatpush1.bf16.msra.mxu0 0
    %4114 = vmatprep.subr.bf16.mxu0 0
    %4115 = vmatpush1.bf16.msra.mxu0 0
    %4116 = vmatprep.subr.bf16.mxu0 0
    %4117 = vmatpush1.bf16.msra.mxu0 %v3011
    %4118 = vmatprep.subr.bf16.mxu0 0
    %4119 = vmatpush2.bf16.msra.mxu0 0
    %4120 = vmatprep.subr.bf16.mxu0 0
    %4121 = vmatpush2.bf16.msra.mxu0 0
    %4122 = vmatprep.subr.bf16.mxu0 0
    %4123 = vmatpush2.bf16.msra.mxu0 0
    %4124 = vmatprep.subr.bf16.mxu0 0
    %4125 = vmatpush2.bf16.msra.mxu0 0
    %4126 = vmatprep.subr.bf16.mxu0 0
    %4127 = vmatpush2.bf16.msra.mxu0 0
    %4128 = vmatprep.subr.bf16.mxu0 0
    %4129 = vmatpush2.bf16.msra.mxu0 0
    %4130 = vmatprep.subr.bf16.mxu0 0
    %4131 = vmatpush2.bf16.msra.mxu0 0
    %4132 = vmatprep.subr.bf16.mxu0 0
    %4133 = vmatpush2.bf16.msra.mxu0 0
    %4134 = vmatprep.mubr.bf16.mxu0 0
    %4135 = vmatmul.mubr.bf16.gmra.mxu0 %v4100
    %v4136 = vpop.f32.mrf.mxu0
    %v4137 = vadd.f32 0.0, %v4136
    %v4138 = vpop.f32.mrf.mxu0
    %v4139 = vpop.f32.mrf.mxu0
    %v4140 = vpop.f32.mrf.mxu0
    %4141 = vdwg.mxu0
    %v4142 = vadd.f32 %v4094, %v351
    %v4143 = vadd.f32 %v4137, %v351
    %v4144 = vpack.c.bf16 %v3899, %v3899
    %4146 = vrot.lane.b32.xlu0 %v4144, 96
    %v4147 = vpop.permute.xlu0 %4146
    %v4149 = vsel %vm638, %v4147, 0
    %4151 = vmatprep.subr.bf16.mxu0 0
    %4152 = vmatpush1.bf16.msra.mxu0 0
    %4153 = vmatprep.subr.bf16.mxu0 0
    %4154 = vmatpush1.bf16.msra.mxu0 0
    %4155 = vmatprep.subr.bf16.mxu0 0
    %4156 = vmatpush1.bf16.msra.mxu0 0
    %4157 = vmatprep.subr.bf16.mxu0 0
    %4158 = vmatpush1.bf16.msra.mxu0 0
    %4159 = vmatprep.subr.bf16.mxu0 0
    %4160 = vmatpush1.bf16.msra.mxu0 0
    %4161 = vmatprep.subr.bf16.mxu0 0
    %4162 = vmatpush1.bf16.msra.mxu0 0
    %4163 = vmatprep.subr.bf16.mxu0 0
    %4164 = vmatpush1.bf16.msra.mxu0 %v263
    %4165 = vmatprep.subr.bf16.mxu0 0
    %4166 = vmatpush1.bf16.msra.mxu0 %v262
    %4167 = vmatprep.subr.bf16.mxu0 0
    %4168 = vmatpush2.bf16.msra.mxu0 0
    %4169 = vmatprep.subr.bf16.mxu0 0
    %4170 = vmatpush2.bf16.msra.mxu0 0
    %4171 = vmatprep.subr.bf16.mxu0 0
    %4172 = vmatpush2.bf16.msra.mxu0 0
    %4173 = vmatprep.subr.bf16.mxu0 0
    %4174 = vmatpush2.bf16.msra.mxu0 0
    %4175 = vmatprep.subr.bf16.mxu0 0
    %4176 = vmatpush2.bf16.msra.mxu0 0
    %4177 = vmatprep.subr.bf16.mxu0 0
    %4178 = vmatpush2.bf16.msra.mxu0 0
    %4179 = vmatprep.subr.bf16.mxu0 0
    %4180 = vmatpush2.bf16.msra.mxu0 0
    %4181 = vmatprep.subr.bf16.mxu0 0
    %4182 = vmatpush2.bf16.msra.mxu0 0
    %4183 = vmatprep.mubr.bf16.mxu0 0
    %4184 = vmatmul.mubr.bf16.gmra.mxu0 %v4149
    %v4185 = vpop.f32.mrf.mxu0
    %v4186 = vadd.f32 0.0, %v4185
    %v4187 = vpop.f32.mrf.mxu0
    %v4188 = vpop.f32.mrf.mxu0
    %v4189 = vpop.f32.mrf.mxu0
    %4190 = vdwg.mxu0
    %v4192 = vrot.slane %v4186, 1
    %v4195 = vadd.f32 %v4142, %v4186
    %v4196 = vadd.f32 %v4143, %v4192
    %v4197 = vxor.u32 %v4195, 2147483648
    %v4198 = vxor.u32 %v4196, 2147483648
    %v4199 = vmul.f32 %v4197, 1.442695
    %v4200 = vpow.pop %v4199
    %v4201 = vmul.f32 %v4198, 1.442695
    %v4202 = vpow.pop %v4201
    %v4203 = vadd.f32 %v4200, 1.0
    %v4204 = vadd.f32 %v4202, 1.0
    %v4205 = vrcp.pop %v4203
    %v4206 = vmul.f32 1.0, %v4205
    %v4207 = vrcp.pop %v4204
    %v4208 = vmul.f32 1.0, %v4207
    %v4209 = vadd.f32 %v4186, %v343
    %v4211 = vrot.slane %v4209, 1
    %4212 = vrot.lane.b32.xlu0 %v4209, 64
    %v4213 = vpop.permute.xlu0 %4212
    %4214 = vrot.lane.b32.xlu0 %v4211, 64
    %v4215 = vpop.permute.xlu0 %4214
    %v4218 = vmul.f32 %v4206, %v4213
    %v4219 = vmul.f32 %v4208, %v4215
    %4222 = vrot.lane.b32.xlu0 %v4218, 64
    %v4223 = vpop.permute.xlu0 %4222
    %4224 = vrot.lane.b32.xlu0 %v4219, 64
    %v4225 = vpop.permute.xlu0 %4224
    %v4228 = vadd.f32 %v4142, %v4223
    %v4229 = vadd.f32 %v4143, %v4225
    %v4230 = vtanh.pop %v4228
    %v4231 = vtanh.pop %v4229
    %v4232 = vsub.f32 1.0, %v4206
    %v4233 = vsub.f32 1.0, %v4208
    %4236 = vrot.lane.b32.xlu0 %v4230, 96
    %v4237 = vpop.permute.xlu0 %4236
    %4238 = vrot.lane.b32.xlu0 %v4231, 96
    %v4239 = vpop.permute.xlu0 %4238
    %v4242 = vmul.f32 %v4232, %v4237
    %v4243 = vmul.f32 %v4233, %v4239
    %v4244 = vrot.slane %v3899, 1
    %v4247 = vmul.f32 %v4206, %v3899
    %v4248 = vmul.f32 %v4208, %v4244
    %v4249 = vadd.f32 %v4242, %v4247
    %v4250 = vadd.f32 %v4243, %v4248
    %v4251 = vpack.c.bf16 %v4249, %v4249
    %v4252 = vpack.c.bf16 %v4250, %v4250
    %v4255 = vunpack.c.l.b16 %v4251
    %v4256 = vunpack.c.l.b16 %v4252
    %v4257 = vrot.slane %v4256, 7
    %v4258 = vsel %vm2926, %v4257, %v4255
    %v4259 = vpack.c.b16 %v4258, %v4258
    %4260 = vrot.lane.b32.xlu0 %v4259, 96
    %v4261 = vpop.permute.xlu0 %4260
    %v4263 = vsel %vm638, %v4261, 0
    %4265 = vmatprep.subr.bf16.mxu0 0
    %4266 = vmatpush1.bf16.msra.mxu0 0
    %4267 = vmatprep.subr.bf16.mxu0 0
    %4268 = vmatpush1.bf16.msra.mxu0 0
    %4269 = vmatprep.subr.bf16.mxu0 0
    %4270 = vmatpush1.bf16.msra.mxu0 0
    %4271 = vmatprep.subr.bf16.mxu0 0
    %4272 = vmatpush1.bf16.msra.mxu0 0
    %4273 = vmatprep.subr.bf16.mxu0 0
    %4274 = vmatpush1.bf16.msra.mxu0 0
    %4275 = vmatprep.subr.bf16.mxu0 0
    %4276 = vmatpush1.bf16.msra.mxu0 0
    %4277 = vmatprep.subr.bf16.mxu0 0
    %4278 = vmatpush1.bf16.msra.mxu0 %v275
    %4279 = vmatprep.subr.bf16.mxu0 0
    %4280 = vmatpush1.bf16.msra.mxu0 %v274
    %4281 = vmatprep.subr.bf16.mxu0 0
    %4282 = vmatpush2.bf16.msra.mxu0 0
    %4283 = vmatprep.subr.bf16.mxu0 0
    %4284 = vmatpush2.bf16.msra.mxu0 0
    %4285 = vmatprep.subr.bf16.mxu0 0
    %4286 = vmatpush2.bf16.msra.mxu0 0
    %4287 = vmatprep.subr.bf16.mxu0 0
    %4288 = vmatpush2.bf16.msra.mxu0 0
    %4289 = vmatprep.subr.bf16.mxu0 0
    %4290 = vmatpush2.bf16.msra.mxu0 0
    %4291 = vmatprep.subr.bf16.mxu0 0
    %4292 = vmatpush2.bf16.msra.mxu0 0
    %4293 = vmatprep.subr.bf16.mxu0 0
    %4294 = vmatpush2.bf16.msra.mxu0 0
    %4295 = vmatprep.subr.bf16.mxu0 0
    %4296 = vmatpush2.bf16.msra.mxu0 0
    %4297 = vmatprep.mubr.bf16.mxu0 0
    %4298 = vmatmul.mubr.bf16.gmra.mxu0 %v4263
    %v4299 = vpop.f32.mrf.mxu0
    %v4300 = vadd.f32 %v357, %v4299
    %v4301 = vpop.f32.mrf.mxu0
    %v4302 = vpop.f32.mrf.mxu0
    %v4303 = vpop.f32.mrf.mxu0
    %4304 = vdwg.mxu0
    %v4305 = vsel %vm3216, %v4300, -inf
    %4306 = vmax.xlane.f32.xlu0 %v4305
    %v4307 = vpop.xlane.xlu0 %4306
    %vm4308 = vcmp.eq.f32.partialorder %v4300, %v4307
    %v4309 = vsel %vm4308, %v368, 16
    %v4310 = vsel %vm3216, %v4309, 2147483647
    %v4311 = vand.u32 %v4310, 65535
    %v4312 = vshra.s32 %v4310, 16
    %v4313 = vcvt.s32.f32 %v4311
    %v4314 = vcvt.s32.f32 %v4312
    %4315 = vmin.xlane.f32.xlu0 %v4314
    %v4316 = vpop.xlane.xlu0 %4315
    %vm4317 = vcmp.eq.f32.partialorder %v4314, %v4316
    %v4318 = vsel %vm4317, %v4313, inf
    %4319 = vmin.xlane.f32.xlu0 %v4318
    %v4320 = vpop.xlane.xlu0 %4319
    %v4321 = vcvt.f32.s32 %v4320
    %v4322 = vcvt.f32.s32 %v4316
    %v4323 = vshll.u32 %v4322, 16
    %v4324 = vadd.s32 %v4323, %v4321
    %vm4325 = vcmp.eq.s32.totalorder %v368, %v4324
    %v4326 = vsel %vm4325, 1, 0
    %v4327 = vcvt.s32.f32 %v4326
    %v4328 = vpack.c.bf16 %v4327, %v4327
    %v4330 = vsel %vm455, %v4328, 0
    %4332 = vmatprep.subr.bf16.mxu0 0
    %4333 = vmatpush1.bf16.msra.mxu0 0
    %4334 = vmatprep.subr.bf16.mxu0 0
    %4335 = vmatpush1.bf16.msra.mxu0 0
    %4336 = vmatprep.subr.bf16.mxu0 0
    %4337 = vmatpush1.bf16.msra.mxu0 0
    %4338 = vmatprep.subr.bf16.mxu0 0
    %4339 = vmatpush1.bf16.msra.mxu0 0
    %4340 = vmatprep.subr.bf16.mxu0 0
    %4341 = vmatpush1.bf16.msra.mxu0 0
    %4342 = vmatprep.subr.bf16.mxu0 0
    %4343 = vmatpush1.bf16.msra.mxu0 0
    %4344 = vmatprep.subr.bf16.mxu0 0
    %4345 = vmatpush1.bf16.msra.mxu0 0
    %4346 = vmatprep.subr.bf16.mxu0 0
    %4347 = vmatpush1.bf16.msra.mxu0 %v2679
    %4348 = vmatprep.subr.bf16.mxu0 0
    %4349 = vmatpush2.bf16.msra.mxu0 0
    %4350 = vmatprep.subr.bf16.mxu0 0
    %4351 = vmatpush2.bf16.msra.mxu0 0
    %4352 = vmatprep.subr.bf16.mxu0 0
    %4353 = vmatpush2.bf16.msra.mxu0 0
    %4354 = vmatprep.subr.bf16.mxu0 0
    %4355 = vmatpush2.bf16.msra.mxu0 0
    %4356 = vmatprep.subr.bf16.mxu0 0
    %4357 = vmatpush2.bf16.msra.mxu0 0
    %4358 = vmatprep.subr.bf16.mxu0 0
    %4359 = vmatpush2.bf16.msra.mxu0 0
    %4360 = vmatprep.subr.bf16.mxu0 0
    %4361 = vmatpush2.bf16.msra.mxu0 0
    %4362 = vmatprep.subr.bf16.mxu0 0
    %4363 = vmatpush2.bf16.msra.mxu0 0
    %4364 = vmatprep.mubr.bf16.mxu0 0
    %4365 = vmatmul.mubr.bf16.gmra.mxu0 %v4330
    %v4366 = vpop.f32.mrf.mxu0
    %v4367 = vadd.f32 0.0, %v4366
    %v4368 = vpop.f32.mrf.mxu0
    %v4369 = vpop.f32.mrf.mxu0
    %v4370 = vpop.f32.mrf.mxu0
    %4371 = vdwg.mxu0
    %4372 = vmatprep.subr.bf16.mxu0 0
    %4373 = vmatpush1.bf16.msra.mxu0 0
    %4374 = vmatprep.subr.bf16.mxu0 0
    %4375 = vmatpush1.bf16.msra.mxu0 0
    %4376 = vmatprep.subr.bf16.mxu0 0
    %4377 = vmatpush1.bf16.msra.mxu0 0
    %4378 = vmatprep.subr.bf16.mxu0 0
    %4379 = vmatpush1.bf16.msra.mxu0 0
    %4380 = vmatprep.subr.bf16.mxu0 0
    %4381 = vmatpush1.bf16.msra.mxu0 0
    %4382 = vmatprep.subr.bf16.mxu0 0
    %4383 = vmatpush1.bf16.msra.mxu0 0
    %4384 = vmatprep.subr.bf16.mxu0 0
    %4385 = vmatpush1.bf16.msra.mxu0 %v257
    %4386 = vmatprep.subr.bf16.mxu0 0
    %4387 = vmatpush1.bf16.msra.mxu0 %v256
    %4388 = vmatprep.subr.bf16.mxu0 0
    %4389 = vmatpush2.bf16.msra.mxu0 0
    %4390 = vmatprep.subr.bf16.mxu0 0
    %4391 = vmatpush2.bf16.msra.mxu0 0
    %4392 = vmatprep.subr.bf16.mxu0 0
    %4393 = vmatpush2.bf16.msra.mxu0 0
    %4394 = vmatprep.subr.bf16.mxu0 0
    %4395 = vmatpush2.bf16.msra.mxu0 0
    %4396 = vmatprep.subr.bf16.mxu0 0
    %4397 = vmatpush2.bf16.msra.mxu0 0
    %4398 = vmatprep.subr.bf16.mxu0 0
    %4399 = vmatpush2.bf16.msra.mxu0 0
    %4400 = vmatprep.subr.bf16.mxu0 0
    %4401 = vmatpush2.bf16.msra.mxu0 0
    %4402 = vmatprep.subr.bf16.mxu0 0
    %4403 = vmatpush2.bf16.msra.mxu0 0
    %4404 = vmatprep.mubr.bf16.mxu0 0
    %4405 = vmatmul.mubr.bf16.gmra.mxu0 %v4263
    %v4406 = vpop.f32.mrf.mxu0
    %v4407 = vadd.f32 0.0, %v4406
    %v4408 = vpop.f32.mrf.mxu0
    %v4409 = vpop.f32.mrf.mxu0
    %v4410 = vpop.f32.mrf.mxu0
    %4411 = vdwg.mxu0
    %v4412 = vadd.f32 %v4367, %v4407
    %v4413 = vxor.u32 %v4412, 2147483648
    %v4414 = vmul.f32 %v4413, 1.442695
    %v4415 = vpow.pop %v4414
    %v4416 = vadd.f32 %v4415, 1.0
    %v4417 = vrcp.pop %v4416
    %v4418 = vmul.f32 1.0, %v4417
    %v4419 = vadd.f32 %v4407, %v336
    %4421 = vrot.lane.b32.xlu0 %v4419, 64
    %v4422 = vpop.permute.xlu0 %4421
    %v4424 = vmul.f32 %v4418, %v4422
    %4426 = vrot.lane.b32.xlu0 %v4424, 64
    %v4427 = vpop.permute.xlu0 %4426
    %v4429 = vadd.f32 %v4367, %v4427
    %v4430 = vtanh.pop %v4429
    %v4431 = vsub.f32 1.0, %v4418
    %4433 = vrot.lane.b32.xlu0 %v4430, 96
    %v4434 = vpop.permute.xlu0 %4433
    %v4436 = vmul.f32 %v4431, %v4434
    %v4439 = vrot.slane %v4250, 7
    %v4440 = vsel %vm2926, %v4439, %v4249
    %v4442 = vmul.f32 %v4418, %v4440
    %v4443 = vadd.f32 %v4436, %v4442
    %v4446 = vunpack.c.l.s4 1966171168
    %v4447 = vunpack.c.0.s8 %v4446
    %v4448 = vlaneseq
    %v4449 = vshrl.u32 %v4448, 7
    %v4450 = vsub.s32 %v4447, %v4449
    %v4451 = vrot.slane %v4443, %v4450
    %v4452 = vcombine.high %v4451, %v4451
    %v4454 = vunpack.c.l.s4 1966171168
    %v4455 = vunpack.c.0.s8 %v4454
    %v4456 = vlaneseq
    %v4457 = vshrl.u32 %v4456, 7
    %v4458 = vsub.s32 %v4455, %v4457
    %v4459 = vrot.slane %v4451, %v4458
    %v4461 = vunpack.c.l.s4 1966171168
    %v4462 = vunpack.c.0.s8 %v4461
    %v4463 = vlaneseq
    %v4464 = vshrl.u32 %v4463, 7
    %v4465 = vsub.s32 %v4462, %v4464
    %v4466 = vrot.slane %v4452, %v4465
    %v4469 = vpack.c.bf16 %v4459, %v4459
    %v4470 = vpack.c.bf16 %v4466, %v4466
    %4472 = vrot.lane.b32.xlu0 %v4469, 96
    %v4473 = vpop.permute.xlu0 %4472
    %v4475 = vsel %vm638, %v4473, 0
    %4477 = vmatprep.subr.bf16.mxu0 0
    %4478 = vmatpush1.bf16.msra.mxu0 0
    %4479 = vmatprep.subr.bf16.mxu0 0
    %4480 = vmatpush1.bf16.msra.mxu0 0
    %4481 = vmatprep.subr.bf16.mxu0 0
    %4482 = vmatpush1.bf16.msra.mxu0 0
    %4483 = vmatprep.subr.bf16.mxu0 0
    %4484 = vmatpush1.bf16.msra.mxu0 0
    %4485 = vmatprep.subr.bf16.mxu0 0
    %4486 = vmatpush1.bf16.msra.mxu0 0
    %4487 = vmatprep.subr.bf16.mxu0 0
    %4488 = vmatpush1.bf16.msra.mxu0 0
    %4489 = vmatprep.subr.bf16.mxu0 0
    %4490 = vmatpush1.bf16.msra.mxu0 %v2298
    %4491 = vmatprep.subr.bf16.mxu0 0
    %4492 = vmatpush1.bf16.msra.mxu0 %v2297
    %4493 = vmatprep.subr.bf16.mxu0 0
    %4494 = vmatpush2.bf16.msra.mxu0 0
    %4495 = vmatprep.subr.bf16.mxu0 0
    %4496 = vmatpush2.bf16.msra.mxu0 0
    %4497 = vmatprep.subr.bf16.mxu0 0
    %4498 = vmatpush2.bf16.msra.mxu0 0
    %4499 = vmatprep.subr.bf16.mxu0 0
    %4500 = vmatpush2.bf16.msra.mxu0 0
    %4501 = vmatprep.subr.bf16.mxu0 0
    %4502 = vmatpush2.bf16.msra.mxu0 0
    %4503 = vmatprep.subr.bf16.mxu0 0
    %4504 = vmatpush2.bf16.msra.mxu0 0
    %4505 = vmatprep.subr.bf16.mxu0 0
    %4506 = vmatpush2.bf16.msra.mxu0 0
    %4507 = vmatprep.subr.bf16.mxu0 0
    %4508 = vmatpush2.bf16.msra.mxu0 0
    %4509 = vmatprep.mubr.bf16.mxu0 0
    %4510 = vmatmul.mubr.bf16.gmra.mxu0 %v4475
    %v4511 = vpop.f32.mrf.mxu0
    %v4512 = vadd.f32 0.0, %v4511
    %v4513 = vpop.f32.mrf.mxu0
    %v4514 = vpop.f32.mrf.mxu0
    %v4515 = vpop.f32.mrf.mxu0
    %4516 = vdwg.mxu0
    %4518 = vrot.lane.b32.xlu0 %v4470, 96
    %v4519 = vpop.permute.xlu0 %4518
    %v4521 = vsel %vm638, %v4519, 0
    %4523 = vmatprep.subr.bf16.mxu0 0
    %4524 = vmatpush1.bf16.msra.mxu0 0
    %4525 = vmatprep.subr.bf16.mxu0 0
    %4526 = vmatpush1.bf16.msra.mxu0 0
    %4527 = vmatprep.subr.bf16.mxu0 0
    %4528 = vmatpush1.bf16.msra.mxu0 0
    %4529 = vmatprep.subr.bf16.mxu0 0
    %4530 = vmatpush1.bf16.msra.mxu0 0
    %4531 = vmatprep.subr.bf16.mxu0 0
    %4532 = vmatpush1.bf16.msra.mxu0 0
    %4533 = vmatprep.subr.bf16.mxu0 0
    %4534 = vmatpush1.bf16.msra.mxu0 0
    %4535 = vmatprep.subr.bf16.mxu0 0
    %4536 = vmatpush1.bf16.msra.mxu0 %v2300
    %4537 = vmatprep.subr.bf16.mxu0 0
    %4538 = vmatpush1.bf16.msra.mxu0 %v2299
    %4539 = vmatprep.subr.bf16.mxu0 0
    %4540 = vmatpush2.bf16.msra.mxu0 0
    %4541 = vmatprep.subr.bf16.mxu0 0
    %4542 = vmatpush2.bf16.msra.mxu0 0
    %4543 = vmatprep.subr.bf16.mxu0 0
    %4544 = vmatpush2.bf16.msra.mxu0 0
    %4545 = vmatprep.subr.bf16.mxu0 0
    %4546 = vmatpush2.bf16.msra.mxu0 0
    %4547 = vmatprep.subr.bf16.mxu0 0
    %4548 = vmatpush2.bf16.msra.mxu0 0
    %4549 = vmatprep.subr.bf16.mxu0 0
    %4550 = vmatpush2.bf16.msra.mxu0 0
    %4551 = vmatprep.subr.bf16.mxu0 0
    %4552 = vmatpush2.bf16.msra.mxu0 0
    %4553 = vmatprep.subr.bf16.mxu0 0
    %4554 = vmatpush2.bf16.msra.mxu0 0
    %4555 = vmatprep.mubr.bf16.mxu0 0
    %4556 = vmatmul.mubr.bf16.gmra.mxu0 %v4521
    %v4557 = vpop.f32.mrf.mxu0
    %v4558 = vadd.f32 0.0, %v4557
    %v4559 = vpop.f32.mrf.mxu0
    %v4560 = vpop.f32.mrf.mxu0
    %v4561 = vpop.f32.mrf.mxu0
    %4562 = vdwg.mxu0
    %v4563 = vmul.f32 %v4512, 0.17677669
    %v4564 = vmul.f32 %v4558, 0.17677669
    %v4567 = vrot.slane %v4564, 7
    %v4568 = vsel %vm2926, %v4567, %v4563
    %v4570 = vsel %vm2929, %v4568, -inf
    %4571 = vmax.xlane.f32.xlu0 %v4570
    %v4572 = vpop.xlane.xlu0 %4571
    %v4574 = vrot.slane %v4572, 1
    %v4577 = vsub.f32 %v4563, %v4572
    %v4578 = vsub.f32 %v4564, %v4574
    %v4579 = vmul.f32 %v4577, 1.442695
    %v4580 = vpow.pop %v4579
    %v4581 = vmul.f32 %v4578, 1.442695
    %v4582 = vpow.pop %v4581
    %v4585 = vrot.slane %v4582, 7
    %v4586 = vsel %vm2926, %v4585, %v4580
    %v4588 = vsel %vm2929, %v4586, 0.0
    %4589 = vadd.xlane.f32.xlu0 %v4588
    %v4590 = vpop.xlane.xlu0 %4589
    %v4591 = vrcp.pop %v4590
    %v4593 = vrot.slane %v4591, 1
    %v4596 = vmul.f32 %v4580, %v4591
    %v4597 = vmul.f32 %v4582, %v4593
    %v4598 = vpack.c.bf16 %v4596, %v4596
    %v4599 = vpack.c.bf16 %v4597, %v4597
    %v4601 = vsel %vm2960, %v4598, 0
    %4603 = vmatprep.subr.bf16.mxu0 0
    %4604 = vmatpush1.bf16.msra.mxu0 0
    %4605 = vmatprep.subr.bf16.mxu0 0
    %4606 = vmatpush1.bf16.msra.mxu0 0
    %4607 = vmatprep.subr.bf16.mxu0 0
    %4608 = vmatpush1.bf16.msra.mxu0 0
    %4609 = vmatprep.subr.bf16.mxu0 0
    %4610 = vmatpush1.bf16.msra.mxu0 0
    %4611 = vmatprep.subr.bf16.mxu0 0
    %4612 = vmatpush1.bf16.msra.mxu0 0
    %4613 = vmatprep.subr.bf16.mxu0 0
    %4614 = vmatpush1.bf16.msra.mxu0 0
    %4615 = vmatprep.subr.bf16.mxu0 0
    %4616 = vmatpush1.bf16.msra.mxu0 0
    %4617 = vmatprep.subr.bf16.mxu0 0
    %4618 = vmatpush1.bf16.msra.mxu0 %v2965
    %4619 = vmatprep.subr.bf16.mxu0 0
    %4620 = vmatpush2.bf16.msra.mxu0 0
    %4621 = vmatprep.subr.bf16.mxu0 0
    %4622 = vmatpush2.bf16.msra.mxu0 0
    %4623 = vmatprep.subr.bf16.mxu0 0
    %4624 = vmatpush2.bf16.msra.mxu0 0
    %4625 = vmatprep.subr.bf16.mxu0 0
    %4626 = vmatpush2.bf16.msra.mxu0 0
    %4627 = vmatprep.subr.bf16.mxu0 0
    %4628 = vmatpush2.bf16.msra.mxu0 0
    %4629 = vmatprep.subr.bf16.mxu0 0
    %4630 = vmatpush2.bf16.msra.mxu0 0
    %4631 = vmatprep.subr.bf16.mxu0 0
    %4632 = vmatpush2.bf16.msra.mxu0 0
    %4633 = vmatprep.subr.bf16.mxu0 0
    %4634 = vmatpush2.bf16.msra.mxu0 0
    %4635 = vmatprep.mubr.bf16.mxu0 0
    %4636 = vmatmul.mubr.bf16.gmra.mxu0 %v4601
    %v4637 = vpop.f32.mrf.mxu0
    %v4638 = vadd.f32 0.0, %v4637
    %v4639 = vpop.f32.mrf.mxu0
    %v4640 = vpop.f32.mrf.mxu0
    %v4641 = vpop.f32.mrf.mxu0
    %4642 = vdwg.mxu0
    %v4644 = vsel %vm2960, %v4599, 0
    %4646 = vmatprep.subr.bf16.mxu0 0
    %4647 = vmatpush1.bf16.msra.mxu0 0
    %4648 = vmatprep.subr.bf16.mxu0 0
    %4649 = vmatpush1.bf16.msra.mxu0 0
    %4650 = vmatprep.subr.bf16.mxu0 0
    %4651 = vmatpush1.bf16.msra.mxu0 0
    %4652 = vmatprep.subr.bf16.mxu0 0
    %4653 = vmatpush1.bf16.msra.mxu0 0
    %4654 = vmatprep.subr.bf16.mxu0 0
    %4655 = vmatpush1.bf16.msra.mxu0 0
    %4656 = vmatprep.subr.bf16.mxu0 0
    %4657 = vmatpush1.bf16.msra.mxu0 0
    %4658 = vmatprep.subr.bf16.mxu0 0
    %4659 = vmatpush1.bf16.msra.mxu0 0
    %4660 = vmatprep.subr.bf16.mxu0 0
    %4661 = vmatpush1.bf16.msra.mxu0 %v3011
    %4662 = vmatprep.subr.bf16.mxu0 0
    %4663 = vmatpush2.bf16.msra.mxu0 0
    %4664 = vmatprep.subr.bf16.mxu0 0
    %4665 = vmatpush2.bf16.msra.mxu0 0
    %4666 = vmatprep.subr.bf16.mxu0 0
    %4667 = vmatpush2.bf16.msra.mxu0 0
    %4668 = vmatprep.subr.bf16.mxu0 0
    %4669 = vmatpush2.bf16.msra.mxu0 0
    %4670 = vmatprep.subr.bf16.mxu0 0
    %4671 = vmatpush2.bf16.msra.mxu0 0
    %4672 = vmatprep.subr.bf16.mxu0 0
    %4673 = vmatpush2.bf16.msra.mxu0 0
    %4674 = vmatprep.subr.bf16.mxu0 0
    %4675 = vmatpush2.bf16.msra.mxu0 0
    %4676 = vmatprep.subr.bf16.mxu0 0
    %4677 = vmatpush2.bf16.msra.mxu0 0
    %4678 = vmatprep.mubr.bf16.mxu0 0
    %4679 = vmatmul.mubr.bf16.gmra.mxu0 %v4644
    %v4680 = vpop.f32.mrf.mxu0
    %v4681 = vadd.f32 0.0, %v4680
    %v4682 = vpop.f32.mrf.mxu0
    %v4683 = vpop.f32.mrf.mxu0
    %v4684 = vpop.f32.mrf.mxu0
    %4685 = vdwg.mxu0
    %v4686 = vadd.f32 %v4638, %v351
    %v4687 = vadd.f32 %v4681, %v351
    %v4688 = vpack.c.bf16 %v4443, %v4443
    %4690 = vrot.lane.b32.xlu0 %v4688, 96
    %v4691 = vpop.permute.xlu0 %4690
    %v4693 = vsel %vm638, %v4691, 0
    %4695 = vmatprep.subr.bf16.mxu0 0
    %4696 = vmatpush1.bf16.msra.mxu0 0
    %4697 = vmatprep.subr.bf16.mxu0 0
    %4698 = vmatpush1.bf16.msra.mxu0 0
    %4699 = vmatprep.subr.bf16.mxu0 0
    %4700 = vmatpush1.bf16.msra.mxu0 0
    %4701 = vmatprep.subr.bf16.mxu0 0
    %4702 = vmatpush1.bf16.msra.mxu0 0
    %4703 = vmatprep.subr.bf16.mxu0 0
    %4704 = vmatpush1.bf16.msra.mxu0 0
    %4705 = vmatprep.subr.bf16.mxu0 0
    %4706 = vmatpush1.bf16.msra.mxu0 0
    %4707 = vmatprep.subr.bf16.mxu0 0
    %4708 = vmatpush1.bf16.msra.mxu0 %v263
    %4709 = vmatprep.subr.bf16.mxu0 0
    %4710 = vmatpush1.bf16.msra.mxu0 %v262
    %4711 = vmatprep.subr.bf16.mxu0 0
    %4712 = vmatpush2.bf16.msra.mxu0 0
    %4713 = vmatprep.subr.bf16.mxu0 0
    %4714 = vmatpush2.bf16.msra.mxu0 0
    %4715 = vmatprep.subr.bf16.mxu0 0
    %4716 = vmatpush2.bf16.msra.mxu0 0
    %4717 = vmatprep.subr.bf16.mxu0 0
    %4718 = vmatpush2.bf16.msra.mxu0 0
    %4719 = vmatprep.subr.bf16.mxu0 0
    %4720 = vmatpush2.bf16.msra.mxu0 0
    %4721 = vmatprep.subr.bf16.mxu0 0
    %4722 = vmatpush2.bf16.msra.mxu0 0
    %4723 = vmatprep.subr.bf16.mxu0 0
    %4724 = vmatpush2.bf16.msra.mxu0 0
    %4725 = vmatprep.subr.bf16.mxu0 0
    %4726 = vmatpush2.bf16.msra.mxu0 0
    %4727 = vmatprep.mubr.bf16.mxu0 0
    %4728 = vmatmul.mubr.bf16.gmra.mxu0 %v4693
    %v4729 = vpop.f32.mrf.mxu0
    %v4730 = vadd.f32 0.0, %v4729
    %v4731 = vpop.f32.mrf.mxu0
    %v4732 = vpop.f32.mrf.mxu0
    %v4733 = vpop.f32.mrf.mxu0
    %4734 = vdwg.mxu0
    %v4736 = vrot.slane %v4730, 1
    %v4739 = vadd.f32 %v4686, %v4730
    %v4740 = vadd.f32 %v4687, %v4736
    %v4741 = vxor.u32 %v4739, 2147483648
    %v4742 = vxor.u32 %v4740, 2147483648
    %v4743 = vmul.f32 %v4741, 1.442695
    %v4744 = vpow.pop %v4743
    %v4745 = vmul.f32 %v4742, 1.442695
    %v4746 = vpow.pop %v4745
    %v4747 = vadd.f32 %v4744, 1.0
    %v4748 = vadd.f32 %v4746, 1.0
    %v4749 = vrcp.pop %v4747
    %v4750 = vmul.f32 1.0, %v4749
    %v4751 = vrcp.pop %v4748
    %v4752 = vmul.f32 1.0, %v4751
    %v4753 = vadd.f32 %v4730, %v343
    %v4755 = vrot.slane %v4753, 1
    %4756 = vrot.lane.b32.xlu0 %v4753, 64
    %v4757 = vpop.permute.xlu0 %4756
    %4758 = vrot.lane.b32.xlu0 %v4755, 64
    %v4759 = vpop.permute.xlu0 %4758
    %v4762 = vmul.f32 %v4750, %v4757
    %v4763 = vmul.f32 %v4752, %v4759
    %4766 = vrot.lane.b32.xlu0 %v4762, 64
    %v4767 = vpop.permute.xlu0 %4766
    %4768 = vrot.lane.b32.xlu0 %v4763, 64
    %v4769 = vpop.permute.xlu0 %4768
    %v4772 = vadd.f32 %v4686, %v4767
    %v4773 = vadd.f32 %v4687, %v4769
    %v4774 = vtanh.pop %v4772
    %v4775 = vtanh.pop %v4773
    %v4776 = vsub.f32 1.0, %v4750
    %v4777 = vsub.f32 1.0, %v4752
    %4780 = vrot.lane.b32.xlu0 %v4774, 96
    %v4781 = vpop.permute.xlu0 %4780
    %4782 = vrot.lane.b32.xlu0 %v4775, 96
    %v4783 = vpop.permute.xlu0 %4782
    %v4786 = vmul.f32 %v4776, %v4781
    %v4787 = vmul.f32 %v4777, %v4783
    %v4788 = vrot.slane %v4443, 1
    %v4791 = vmul.f32 %v4750, %v4443
    %v4792 = vmul.f32 %v4752, %v4788
    %v4793 = vadd.f32 %v4786, %v4791
    %v4794 = vadd.f32 %v4787, %v4792
    %v4795 = vpack.c.bf16 %v4793, %v4793
    %v4796 = vpack.c.bf16 %v4794, %v4794
    %v4799 = vunpack.c.l.b16 %v4795
    %v4800 = vunpack.c.l.b16 %v4796
    %v4801 = vrot.slane %v4800, 7
    %v4802 = vsel %vm2926, %v4801, %v4799
    %v4803 = vpack.c.b16 %v4802, %v4802
    %4804 = vrot.lane.b32.xlu0 %v4803, 96
    %v4805 = vpop.permute.xlu0 %4804
    %v4807 = vsel %vm638, %v4805, 0
    %4809 = vmatprep.subr.bf16.mxu0 0
    %4810 = vmatpush1.bf16.msra.mxu0 0
    %4811 = vmatprep.subr.bf16.mxu0 0
    %4812 = vmatpush1.bf16.msra.mxu0 0
    %4813 = vmatprep.subr.bf16.mxu0 0
    %4814 = vmatpush1.bf16.msra.mxu0 0
    %4815 = vmatprep.subr.bf16.mxu0 0
    %4816 = vmatpush1.bf16.msra.mxu0 0
    %4817 = vmatprep.subr.bf16.mxu0 0
    %4818 = vmatpush1.bf16.msra.mxu0 0
    %4819 = vmatprep.subr.bf16.mxu0 0
    %4820 = vmatpush1.bf16.msra.mxu0 0
    %4821 = vmatprep.subr.bf16.mxu0 0
    %4822 = vmatpush1.bf16.msra.mxu0 %v275
    %4823 = vmatprep.subr.bf16.mxu0 0
    %4824 = vmatpush1.bf16.msra.mxu0 %v274
    %4825 = vmatprep.subr.bf16.mxu0 0
    %4826 = vmatpush2.bf16.msra.mxu0 0
    %4827 = vmatprep.subr.bf16.mxu0 0
    %4828 = vmatpush2.bf16.msra.mxu0 0
    %4829 = vmatprep.subr.bf16.mxu0 0
    %4830 = vmatpush2.bf16.msra.mxu0 0
    %4831 = vmatprep.subr.bf16.mxu0 0
    %4832 = vmatpush2.bf16.msra.mxu0 0
    %4833 = vmatprep.subr.bf16.mxu0 0
    %4834 = vmatpush2.bf16.msra.mxu0 0
    %4835 = vmatprep.subr.bf16.mxu0 0
    %4836 = vmatpush2.bf16.msra.mxu0 0
    %4837 = vmatprep.subr.bf16.mxu0 0
    %4838 = vmatpush2.bf16.msra.mxu0 0
    %4839 = vmatprep.subr.bf16.mxu0 0
    %4840 = vmatpush2.bf16.msra.mxu0 0
    %4841 = vmatprep.mubr.bf16.mxu0 0
    %4842 = vmatmul.mubr.bf16.gmra.mxu0 %v4807
    %v4843 = vpop.f32.mrf.mxu0
    %v4844 = vadd.f32 %v357, %v4843
    %v4845 = vpop.f32.mrf.mxu0
    %v4846 = vpop.f32.mrf.mxu0
    %v4847 = vpop.f32.mrf.mxu0
    %4848 = vdwg.mxu0
    %v4849 = vsel %vm3216, %v4844, -inf
    %4850 = vmax.xlane.f32.xlu0 %v4849
    %v4851 = vpop.xlane.xlu0 %4850
    %vm4852 = vcmp.eq.f32.partialorder %v4844, %v4851
    %v4853 = vsel %vm4852, %v368, 16
    %v4854 = vsel %vm3216, %v4853, 2147483647
    %v4855 = vand.u32 %v4854, 65535
    %v4856 = vshra.s32 %v4854, 16
    %v4857 = vcvt.s32.f32 %v4855
    %v4858 = vcvt.s32.f32 %v4856
    %4859 = vmin.xlane.f32.xlu0 %v4858
    %v4860 = vpop.xlane.xlu0 %4859
    %vm4861 = vcmp.eq.f32.partialorder %v4858, %v4860
    %v4862 = vsel %vm4861, %v4857, inf
    %4863 = vmin.xlane.f32.xlu0 %v4862
    %v4864 = vpop.xlane.xlu0 %4863
    %v4865 = vcvt.f32.s32 %v4864
    %v4866 = vcvt.f32.s32 %v4860
    %v4867 = vshll.u32 %v4866, 16
    %v4868 = vadd.s32 %v4867, %v4865
    %vm4869 = vcmp.eq.s32.totalorder %v368, %v4868
    %v4870 = vsel %vm4869, 1, 0
    %v4871 = vcvt.s32.f32 %v4870
    %v4872 = vpack.c.bf16 %v4871, %v4871
    %v4874 = vsel %vm455, %v4872, 0
    %4876 = vmatprep.subr.bf16.mxu0 0
    %4877 = vmatpush1.bf16.msra.mxu0 0
    %4878 = vmatprep.subr.bf16.mxu0 0
    %4879 = vmatpush1.bf16.msra.mxu0 0
    %4880 = vmatprep.subr.bf16.mxu0 0
    %4881 = vmatpush1.bf16.msra.mxu0 0
    %4882 = vmatprep.subr.bf16.mxu0 0
    %4883 = vmatpush1.bf16.msra.mxu0 0
    %4884 = vmatprep.subr.bf16.mxu0 0
    %4885 = vmatpush1.bf16.msra.mxu0 0
    %4886 = vmatprep.subr.bf16.mxu0 0
    %4887 = vmatpush1.bf16.msra.mxu0 0
    %4888 = vmatprep.subr.bf16.mxu0 0
    %4889 = vmatpush1.bf16.msra.mxu0 0
    %4890 = vmatprep.subr.bf16.mxu0 0
    %4891 = vmatpush1.bf16.msra.mxu0 %v2679
    %4892 = vmatprep.subr.bf16.mxu0 0
    %4893 = vmatpush2.bf16.msra.mxu0 0
    %4894 = vmatprep.subr.bf16.mxu0 0
    %4895 = vmatpush2.bf16.msra.mxu0 0
    %4896 = vmatprep.subr.bf16.mxu0 0
    %4897 = vmatpush2.bf16.msra.mxu0 0
    %4898 = vmatprep.subr.bf16.mxu0 0
    %4899 = vmatpush2.bf16.msra.mxu0 0
    %4900 = vmatprep.subr.bf16.mxu0 0
    %4901 = vmatpush2.bf16.msra.mxu0 0
    %4902 = vmatprep.subr.bf16.mxu0 0
    %4903 = vmatpush2.bf16.msra.mxu0 0
    %4904 = vmatprep.subr.bf16.mxu0 0
    %4905 = vmatpush2.bf16.msra.mxu0 0
    %4906 = vmatprep.subr.bf16.mxu0 0
    %4907 = vmatpush2.bf16.msra.mxu0 0
    %4908 = vmatprep.mubr.bf16.mxu0 0
    %4909 = vmatmul.mubr.bf16.gmra.mxu0 %v4874
    %v4910 = vpop.f32.mrf.mxu0
    %v4911 = vadd.f32 0.0, %v4910
    %v4912 = vpop.f32.mrf.mxu0
    %v4913 = vpop.f32.mrf.mxu0
    %v4914 = vpop.f32.mrf.mxu0
    %4915 = vdwg.mxu0
    %4916 = vmatprep.subr.bf16.mxu0 0
    %4917 = vmatpush1.bf16.msra.mxu0 0
    %4918 = vmatprep.subr.bf16.mxu0 0
    %4919 = vmatpush1.bf16.msra.mxu0 0
    %4920 = vmatprep.subr.bf16.mxu0 0
    %4921 = vmatpush1.bf16.msra.mxu0 0
    %4922 = vmatprep.subr.bf16.mxu0 0
    %4923 = vmatpush1.bf16.msra.mxu0 0
    %4924 = vmatprep.subr.bf16.mxu0 0
    %4925 = vmatpush1.bf16.msra.mxu0 0
    %4926 = vmatprep.subr.bf16.mxu0 0
    %4927 = vmatpush1.bf16.msra.mxu0 0
    %4928 = vmatprep.subr.bf16.mxu0 0
    %4929 = vmatpush1.bf16.msra.mxu0 %v257
    %4930 = vmatprep.subr.bf16.mxu0 0
    %4931 = vmatpush1.bf16.msra.mxu0 %v256
    %4932 = vmatprep.subr.bf16.mxu0 0
    %4933 = vmatpush2.bf16.msra.mxu0 0
    %4934 = vmatprep.subr.bf16.mxu0 0
    %4935 = vmatpush2.bf16.msra.mxu0 0
    %4936 = vmatprep.subr.bf16.mxu0 0
    %4937 = vmatpush2.bf16.msra.mxu0 0
    %4938 = vmatprep.subr.bf16.mxu0 0
    %4939 = vmatpush2.bf16.msra.mxu0 0
    %4940 = vmatprep.subr.bf16.mxu0 0
    %4941 = vmatpush2.bf16.msra.mxu0 0
    %4942 = vmatprep.subr.bf16.mxu0 0
    %4943 = vmatpush2.bf16.msra.mxu0 0
    %4944 = vmatprep.subr.bf16.mxu0 0
    %4945 = vmatpush2.bf16.msra.mxu0 0
    %4946 = vmatprep.subr.bf16.mxu0 0
    %4947 = vmatpush2.bf16.msra.mxu0 0
    %4948 = vmatprep.mubr.bf16.mxu0 0
    %4949 = vmatmul.mubr.bf16.gmra.mxu0 %v4807
    %v4950 = vpop.f32.mrf.mxu0
    %v4951 = vadd.f32 0.0, %v4950
    %v4952 = vpop.f32.mrf.mxu0
    %v4953 = vpop.f32.mrf.mxu0
    %v4954 = vpop.f32.mrf.mxu0
    %4955 = vdwg.mxu0
    %v4956 = vadd.f32 %v4911, %v4951
    %v4957 = vxor.u32 %v4956, 2147483648
    %v4958 = vmul.f32 %v4957, 1.442695
    %v4959 = vpow.pop %v4958
    %v4960 = vadd.f32 %v4959, 1.0
    %v4961 = vrcp.pop %v4960
    %v4962 = vmul.f32 1.0, %v4961
    %v4963 = vadd.f32 %v4951, %v336
    %4965 = vrot.lane.b32.xlu0 %v4963, 64
    %v4966 = vpop.permute.xlu0 %4965
    %v4968 = vmul.f32 %v4962, %v4966
    %4970 = vrot.lane.b32.xlu0 %v4968, 64
    %v4971 = vpop.permute.xlu0 %4970
    %v4973 = vadd.f32 %v4911, %v4971
    %v4974 = vtanh.pop %v4973
    %v4975 = vsub.f32 1.0, %v4962
    %4977 = vrot.lane.b32.xlu0 %v4974, 96
    %v4978 = vpop.permute.xlu0 %4977
    %v4980 = vmul.f32 %v4975, %v4978
    %v4983 = vrot.slane %v4794, 7
    %v4984 = vsel %vm2926, %v4983, %v4793
    %v4986 = vmul.f32 %v4962, %v4984
    %v4987 = vadd.f32 %v4980, %v4986
    %v4990 = vunpack.c.l.s4 1966171168
    %v4991 = vunpack.c.0.s8 %v4990
    %v4992 = vlaneseq
    %v4993 = vshrl.u32 %v4992, 7
    %v4994 = vsub.s32 %v4991, %v4993
    %v4995 = vrot.slane %v4987, %v4994
    %v4996 = vcombine.high %v4995, %v4995
    %v4998 = vunpack.c.l.s4 1966171168
    %v4999 = vunpack.c.0.s8 %v4998
    %v5000 = vlaneseq
    %v5001 = vshrl.u32 %v5000, 7
    %v5002 = vsub.s32 %v4999, %v5001
    %v5003 = vrot.slane %v4995, %v5002
    %v5005 = vunpack.c.l.s4 1966171168
    %v5006 = vunpack.c.0.s8 %v5005
    %v5007 = vlaneseq
    %v5008 = vshrl.u32 %v5007, 7
    %v5009 = vsub.s32 %v5006, %v5008
    %v5010 = vrot.slane %v4996, %v5009
    %v5013 = vpack.c.bf16 %v5003, %v5003
    %v5014 = vpack.c.bf16 %v5010, %v5010
    %5016 = vrot.lane.b32.xlu0 %v5013, 96
    %v5017 = vpop.permute.xlu0 %5016
    %v5019 = vsel %vm638, %v5017, 0
    %5021 = vmatprep.subr.bf16.mxu0 0
    %5022 = vmatpush1.bf16.msra.mxu0 0
    %5023 = vmatprep.subr.bf16.mxu0 0
    %5024 = vmatpush1.bf16.msra.mxu0 0
    %5025 = vmatprep.subr.bf16.mxu0 0
    %5026 = vmatpush1.bf16.msra.mxu0 0
    %5027 = vmatprep.subr.bf16.mxu0 0
    %5028 = vmatpush1.bf16.msra.mxu0 0
    %5029 = vmatprep.subr.bf16.mxu0 0
    %5030 = vmatpush1.bf16.msra.mxu0 0
    %5031 = vmatprep.subr.bf16.mxu0 0
    %5032 = vmatpush1.bf16.msra.mxu0 0
    %5033 = vmatprep.subr.bf16.mxu0 0
    %5034 = vmatpush1.bf16.msra.mxu0 %v2298
    %5035 = vmatprep.subr.bf16.mxu0 0
    %5036 = vmatpush1.bf16.msra.mxu0 %v2297
    %5037 = vmatprep.subr.bf16.mxu0 0
    %5038 = vmatpush2.bf16.msra.mxu0 0
    %5039 = vmatprep.subr.bf16.mxu0 0
    %5040 = vmatpush2.bf16.msra.mxu0 0
    %5041 = vmatprep.subr.bf16.mxu0 0
    %5042 = vmatpush2.bf16.msra.mxu0 0
    %5043 = vmatprep.subr.bf16.mxu0 0
    %5044 = vmatpush2.bf16.msra.mxu0 0
    %5045 = vmatprep.subr.bf16.mxu0 0
    %5046 = vmatpush2.bf16.msra.mxu0 0
    %5047 = vmatprep.subr.bf16.mxu0 0
    %5048 = vmatpush2.bf16.msra.mxu0 0
    %5049 = vmatprep.subr.bf16.mxu0 0
    %5050 = vmatpush2.bf16.msra.mxu0 0
    %5051 = vmatprep.subr.bf16.mxu0 0
    %5052 = vmatpush2.bf16.msra.mxu0 0
    %5053 = vmatprep.mubr.bf16.mxu0 0
    %5054 = vmatmul.mubr.bf16.gmra.mxu0 %v5019
    %v5055 = vpop.f32.mrf.mxu0
    %v5056 = vadd.f32 0.0, %v5055
    %v5057 = vpop.f32.mrf.mxu0
    %v5058 = vpop.f32.mrf.mxu0
    %v5059 = vpop.f32.mrf.mxu0
    %5060 = vdwg.mxu0
    %5062 = vrot.lane.b32.xlu0 %v5014, 96
    %v5063 = vpop.permute.xlu0 %5062
    %v5065 = vsel %vm638, %v5063, 0
    %5067 = vmatprep.subr.bf16.mxu0 0
    %5068 = vmatpush1.bf16.msra.mxu0 0
    %5069 = vmatprep.subr.bf16.mxu0 0
    %5070 = vmatpush1.bf16.msra.mxu0 0
    %5071 = vmatprep.subr.bf16.mxu0 0
    %5072 = vmatpush1.bf16.msra.mxu0 0
    %5073 = vmatprep.subr.bf16.mxu0 0
    %5074 = vmatpush1.bf16.msra.mxu0 0
    %5075 = vmatprep.subr.bf16.mxu0 0
    %5076 = vmatpush1.bf16.msra.mxu0 0
    %5077 = vmatprep.subr.bf16.mxu0 0
    %5078 = vmatpush1.bf16.msra.mxu0 0
    %5079 = vmatprep.subr.bf16.mxu0 0
    %5080 = vmatpush1.bf16.msra.mxu0 %v2300
    %5081 = vmatprep.subr.bf16.mxu0 0
    %5082 = vmatpush1.bf16.msra.mxu0 %v2299
    %5083 = vmatprep.subr.bf16.mxu0 0
    %5084 = vmatpush2.bf16.msra.mxu0 0
    %5085 = vmatprep.subr.bf16.mxu0 0
    %5086 = vmatpush2.bf16.msra.mxu0 0
    %5087 = vmatprep.subr.bf16.mxu0 0
    %5088 = vmatpush2.bf16.msra.mxu0 0
    %5089 = vmatprep.subr.bf16.mxu0 0
    %5090 = vmatpush2.bf16.msra.mxu0 0
    %5091 = vmatprep.subr.bf16.mxu0 0
    %5092 = vmatpush2.bf16.msra.mxu0 0
    %5093 = vmatprep.subr.bf16.mxu0 0
    %5094 = vmatpush2.bf16.msra.mxu0 0
    %5095 = vmatprep.subr.bf16.mxu0 0
    %5096 = vmatpush2.bf16.msra.mxu0 0
    %5097 = vmatprep.subr.bf16.mxu0 0
    %5098 = vmatpush2.bf16.msra.mxu0 0
    %5099 = vmatprep.mubr.bf16.mxu0 0
    %5100 = vmatmul.mubr.bf16.gmra.mxu0 %v5065
    %v5101 = vpop.f32.mrf.mxu0
    %v5102 = vadd.f32 0.0, %v5101
    %v5103 = vpop.f32.mrf.mxu0
    %v5104 = vpop.f32.mrf.mxu0
    %v5105 = vpop.f32.mrf.mxu0
    %5106 = vdwg.mxu0
    %v5107 = vmul.f32 %v5056, 0.17677669
    %v5108 = vmul.f32 %v5102, 0.17677669
    %v5111 = vrot.slane %v5108, 7
    %v5112 = vsel %vm2926, %v5111, %v5107
    %v5114 = vsel %vm2929, %v5112, -inf
    %5115 = vmax.xlane.f32.xlu0 %v5114
    %v5116 = vpop.xlane.xlu0 %5115
    %v5118 = vrot.slane %v5116, 1
    %v5121 = vsub.f32 %v5107, %v5116
    %v5122 = vsub.f32 %v5108, %v5118
    %v5123 = vmul.f32 %v5121, 1.442695
    %v5124 = vpow.pop %v5123
    %v5125 = vmul.f32 %v5122, 1.442695
    %v5126 = vpow.pop %v5125
    %v5129 = vrot.slane %v5126, 7
    %v5130 = vsel %vm2926, %v5129, %v5124
    %v5132 = vsel %vm2929, %v5130, 0.0
    %5133 = vadd.xlane.f32.xlu0 %v5132
    %v5134 = vpop.xlane.xlu0 %5133
    %v5135 = vrcp.pop %v5134
    %v5137 = vrot.slane %v5135, 1
    %v5140 = vmul.f32 %v5124, %v5135
    %v5141 = vmul.f32 %v5126, %v5137
    %v5142 = vpack.c.bf16 %v5140, %v5140
    %v5143 = vpack.c.bf16 %v5141, %v5141
    %v5145 = vsel %vm2960, %v5142, 0
    %5147 = vmatprep.subr.bf16.mxu0 0
    %5148 = vmatpush1.bf16.msra.mxu0 0
    %5149 = vmatprep.subr.bf16.mxu0 0
    %5150 = vmatpush1.bf16.msra.mxu0 0
    %5151 = vmatprep.subr.bf16.mxu0 0
    %5152 = vmatpush1.bf16.msra.mxu0 0
    %5153 = vmatprep.subr.bf16.mxu0 0
    %5154 = vmatpush1.bf16.msra.mxu0 0
    %5155 = vmatprep.subr.bf16.mxu0 0
    %5156 = vmatpush1.bf16.msra.mxu0 0
    %5157 = vmatprep.subr.bf16.mxu0 0
    %5158 = vmatpush1.bf16.msra.mxu0 0
    %5159 = vmatprep.subr.bf16.mxu0 0
    %5160 = vmatpush1.bf16.msra.mxu0 0
    %5161 = vmatprep.subr.bf16.mxu0 0
    %5162 = vmatpush1.bf16.msra.mxu0 %v2965
    %5163 = vmatprep.subr.bf16.mxu0 0
    %5164 = vmatpush2.bf16.msra.mxu0 0
    %5165 = vmatprep.subr.bf16.mxu0 0
    %5166 = vmatpush2.bf16.msra.mxu0 0
    %5167 = vmatprep.subr.bf16.mxu0 0
    %5168 = vmatpush2.bf16.msra.mxu0 0
    %5169 = vmatprep.subr.bf16.mxu0 0
    %5170 = vmatpush2.bf16.msra.mxu0 0
    %5171 = vmatprep.subr.bf16.mxu0 0
    %5172 = vmatpush2.bf16.msra.mxu0 0
    %5173 = vmatprep.subr.bf16.mxu0 0
    %5174 = vmatpush2.bf16.msra.mxu0 0
    %5175 = vmatprep.subr.bf16.mxu0 0
    %5176 = vmatpush2.bf16.msra.mxu0 0
    %5177 = vmatprep.subr.bf16.mxu0 0
    %5178 = vmatpush2.bf16.msra.mxu0 0
    %5179 = vmatprep.mubr.bf16.mxu0 0
    %5180 = vmatmul.mubr.bf16.gmra.mxu0 %v5145
    %v5181 = vpop.f32.mrf.mxu0
    %v5182 = vadd.f32 0.0, %v5181
    %v5183 = vpop.f32.mrf.mxu0
    %v5184 = vpop.f32.mrf.mxu0
    %v5185 = vpop.f32.mrf.mxu0
    %5186 = vdwg.mxu0
    %v5188 = vsel %vm2960, %v5143, 0
    %5190 = vmatprep.subr.bf16.mxu0 0
    %5191 = vmatpush1.bf16.msra.mxu0 0
    %5192 = vmatprep.subr.bf16.mxu0 0
    %5193 = vmatpush1.bf16.msra.mxu0 0
    %5194 = vmatprep.subr.bf16.mxu0 0
    %5195 = vmatpush1.bf16.msra.mxu0 0
    %5196 = vmatprep.subr.bf16.mxu0 0
    %5197 = vmatpush1.bf16.msra.mxu0 0
    %5198 = vmatprep.subr.bf16.mxu0 0
    %5199 = vmatpush1.bf16.msra.mxu0 0
    %5200 = vmatprep.subr.bf16.mxu0 0
    %5201 = vmatpush1.bf16.msra.mxu0 0
    %5202 = vmatprep.subr.bf16.mxu0 0
    %5203 = vmatpush1.bf16.msra.mxu0 0
    %5204 = vmatprep.subr.bf16.mxu0 0
    %5205 = vmatpush1.bf16.msra.mxu0 %v3011
    %5206 = vmatprep.subr.bf16.mxu0 0
    %5207 = vmatpush2.bf16.msra.mxu0 0
    %5208 = vmatprep.subr.bf16.mxu0 0
    %5209 = vmatpush2.bf16.msra.mxu0 0
    %5210 = vmatprep.subr.bf16.mxu0 0
    %5211 = vmatpush2.bf16.msra.mxu0 0
    %5212 = vmatprep.subr.bf16.mxu0 0
    %5213 = vmatpush2.bf16.msra.mxu0 0
    %5214 = vmatprep.subr.bf16.mxu0 0
    %5215 = vmatpush2.bf16.msra.mxu0 0
    %5216 = vmatprep.subr.bf16.mxu0 0
    %5217 = vmatpush2.bf16.msra.mxu0 0
    %5218 = vmatprep.subr.bf16.mxu0 0
    %5219 = vmatpush2.bf16.msra.mxu0 0
    %5220 = vmatprep.subr.bf16.mxu0 0
    %5221 = vmatpush2.bf16.msra.mxu0 0
    %5222 = vmatprep.mubr.bf16.mxu0 0
    %5223 = vmatmul.mubr.bf16.gmra.mxu0 %v5188
    %v5224 = vpop.f32.mrf.mxu0
    %v5225 = vadd.f32 0.0, %v5224
    %v5226 = vpop.f32.mrf.mxu0
    %v5227 = vpop.f32.mrf.mxu0
    %v5228 = vpop.f32.mrf.mxu0
    %5229 = vdwg.mxu0
    %v5230 = vadd.f32 %v5182, %v351
    %v5231 = vadd.f32 %v5225, %v351
    %v5232 = vpack.c.bf16 %v4987, %v4987
    %5234 = vrot.lane.b32.xlu0 %v5232, 96
    %v5235 = vpop.permute.xlu0 %5234
    %v5237 = vsel %vm638, %v5235, 0
    %5239 = vmatprep.subr.bf16.mxu0 0
    %5240 = vmatpush1.bf16.msra.mxu0 0
    %5241 = vmatprep.subr.bf16.mxu0 0
    %5242 = vmatpush1.bf16.msra.mxu0 0
    %5243 = vmatprep.subr.bf16.mxu0 0
    %5244 = vmatpush1.bf16.msra.mxu0 0
    %5245 = vmatprep.subr.bf16.mxu0 0
    %5246 = vmatpush1.bf16.msra.mxu0 0
    %5247 = vmatprep.subr.bf16.mxu0 0
    %5248 = vmatpush1.bf16.msra.mxu0 0
    %5249 = vmatprep.subr.bf16.mxu0 0
    %5250 = vmatpush1.bf16.msra.mxu0 0
    %5251 = vmatprep.subr.bf16.mxu0 0
    %5252 = vmatpush1.bf16.msra.mxu0 %v263
    %5253 = vmatprep.subr.bf16.mxu0 0
    %5254 = vmatpush1.bf16.msra.mxu0 %v262
    %5255 = vmatprep.subr.bf16.mxu0 0
    %5256 = vmatpush2.bf16.msra.mxu0 0
    %5257 = vmatprep.subr.bf16.mxu0 0
    %5258 = vmatpush2.bf16.msra.mxu0 0
    %5259 = vmatprep.subr.bf16.mxu0 0
    %5260 = vmatpush2.bf16.msra.mxu0 0
    %5261 = vmatprep.subr.bf16.mxu0 0
    %5262 = vmatpush2.bf16.msra.mxu0 0
    %5263 = vmatprep.subr.bf16.mxu0 0
    %5264 = vmatpush2.bf16.msra.mxu0 0
    %5265 = vmatprep.subr.bf16.mxu0 0
    %5266 = vmatpush2.bf16.msra.mxu0 0
    %5267 = vmatprep.subr.bf16.mxu0 0
    %5268 = vmatpush2.bf16.msra.mxu0 0
    %5269 = vmatprep.subr.bf16.mxu0 0
    %5270 = vmatpush2.bf16.msra.mxu0 0
    %5271 = vmatprep.mubr.bf16.mxu0 0
    %5272 = vmatmul.mubr.bf16.gmra.mxu0 %v5237
    %v5273 = vpop.f32.mrf.mxu0
    %v5274 = vadd.f32 0.0, %v5273
    %v5275 = vpop.f32.mrf.mxu0
    %v5276 = vpop.f32.mrf.mxu0
    %v5277 = vpop.f32.mrf.mxu0
    %5278 = vdwg.mxu0
    %v5280 = vrot.slane %v5274, 1
    %v5283 = vadd.f32 %v5230, %v5274
    %v5284 = vadd.f32 %v5231, %v5280
    %v5285 = vxor.u32 %v5283, 2147483648
    %v5286 = vxor.u32 %v5284, 2147483648
    %v5287 = vmul.f32 %v5285, 1.442695
    %v5288 = vpow.pop %v5287
    %v5289 = vmul.f32 %v5286, 1.442695
    %v5290 = vpow.pop %v5289
    %v5291 = vadd.f32 %v5288, 1.0
    %v5292 = vadd.f32 %v5290, 1.0
    %v5293 = vrcp.pop %v5291
    %v5294 = vmul.f32 1.0, %v5293
    %v5295 = vrcp.pop %v5292
    %v5296 = vmul.f32 1.0, %v5295
    %v5297 = vadd.f32 %v5274, %v343
    %v5299 = vrot.slane %v5297, 1
    %5300 = vrot.lane.b32.xlu0 %v5297, 64
    %v5301 = vpop.permute.xlu0 %5300
    %5302 = vrot.lane.b32.xlu0 %v5299, 64
    %v5303 = vpop.permute.xlu0 %5302
    %v5306 = vmul.f32 %v5294, %v5301
    %v5307 = vmul.f32 %v5296, %v5303
    %5310 = vrot.lane.b32.xlu0 %v5306, 64
    %v5311 = vpop.permute.xlu0 %5310
    %5312 = vrot.lane.b32.xlu0 %v5307, 64
    %v5313 = vpop.permute.xlu0 %5312
    %v5316 = vadd.f32 %v5230, %v5311
    %v5317 = vadd.f32 %v5231, %v5313
    %v5318 = vtanh.pop %v5316
    %v5319 = vtanh.pop %v5317
    %v5320 = vsub.f32 1.0, %v5294
    %v5321 = vsub.f32 1.0, %v5296
    %5324 = vrot.lane.b32.xlu0 %v5318, 96
    %v5325 = vpop.permute.xlu0 %5324
    %5326 = vrot.lane.b32.xlu0 %v5319, 96
    %v5327 = vpop.permute.xlu0 %5326
    %v5330 = vmul.f32 %v5320, %v5325
    %v5331 = vmul.f32 %v5321, %v5327
    %v5332 = vrot.slane %v4987, 1
    %v5335 = vmul.f32 %v5294, %v4987
    %v5336 = vmul.f32 %v5296, %v5332
    %v5337 = vadd.f32 %v5330, %v5335
    %v5338 = vadd.f32 %v5331, %v5336
    %v5339 = vpack.c.bf16 %v5337, %v5337
    %v5340 = vpack.c.bf16 %v5338, %v5338
    %v5343 = vunpack.c.l.b16 %v5339
    %v5344 = vunpack.c.l.b16 %v5340
    %v5345 = vrot.slane %v5344, 7
    %v5346 = vsel %vm2926, %v5345, %v5343
    %v5347 = vpack.c.b16 %v5346, %v5346
    %5348 = vrot.lane.b32.xlu0 %v5347, 96
    %v5349 = vpop.permute.xlu0 %5348
    %v5351 = vsel %vm638, %v5349, 0
    %5353 = vmatprep.subr.bf16.mxu0 0
    %5354 = vmatpush1.bf16.msra.mxu0 0
    %5355 = vmatprep.subr.bf16.mxu0 0
    %5356 = vmatpush1.bf16.msra.mxu0 0
    %5357 = vmatprep.subr.bf16.mxu0 0
    %5358 = vmatpush1.bf16.msra.mxu0 0
    %5359 = vmatprep.subr.bf16.mxu0 0
    %5360 = vmatpush1.bf16.msra.mxu0 0
    %5361 = vmatprep.subr.bf16.mxu0 0
    %5362 = vmatpush1.bf16.msra.mxu0 0
    %5363 = vmatprep.subr.bf16.mxu0 0
    %5364 = vmatpush1.bf16.msra.mxu0 0
    %5365 = vmatprep.subr.bf16.mxu0 0
    %5366 = vmatpush1.bf16.msra.mxu0 %v275
    %5367 = vmatprep.subr.bf16.mxu0 0
    %5368 = vmatpush1.bf16.msra.mxu0 %v274
    %5369 = vmatprep.subr.bf16.mxu0 0
    %5370 = vmatpush2.bf16.msra.mxu0 0
    %5371 = vmatprep.subr.bf16.mxu0 0
    %5372 = vmatpush2.bf16.msra.mxu0 0
    %5373 = vmatprep.subr.bf16.mxu0 0
    %5374 = vmatpush2.bf16.msra.mxu0 0
    %5375 = vmatprep.subr.bf16.mxu0 0
    %5376 = vmatpush2.bf16.msra.mxu0 0
    %5377 = vmatprep.subr.bf16.mxu0 0
    %5378 = vmatpush2.bf16.msra.mxu0 0
    %5379 = vmatprep.subr.bf16.mxu0 0
    %5380 = vmatpush2.bf16.msra.mxu0 0
    %5381 = vmatprep.subr.bf16.mxu0 0
    %5382 = vmatpush2.bf16.msra.mxu0 0
    %5383 = vmatprep.subr.bf16.mxu0 0
    %5384 = vmatpush2.bf16.msra.mxu0 0
    %5385 = vmatprep.mubr.bf16.mxu0 0
    %5386 = vmatmul.mubr.bf16.gmra.mxu0 %v5351
    %v5387 = vpop.f32.mrf.mxu0
    %v5388 = vadd.f32 %v357, %v5387
    %v5389 = vpop.f32.mrf.mxu0
    %v5390 = vpop.f32.mrf.mxu0
    %v5391 = vpop.f32.mrf.mxu0
    %5392 = vdwg.mxu0
    %v5393 = vsel %vm3216, %v5388, -inf
    %5394 = vmax.xlane.f32.xlu0 %v5393
    %v5395 = vpop.xlane.xlu0 %5394
    %vm5396 = vcmp.eq.f32.partialorder %v5388, %v5395
    %v5397 = vsel %vm5396, %v368, 16
    %v5398 = vsel %vm3216, %v5397, 2147483647
    %v5399 = vand.u32 %v5398, 65535
    %v5400 = vshra.s32 %v5398, 16
    %v5401 = vcvt.s32.f32 %v5399
    %v5402 = vcvt.s32.f32 %v5400
    %5403 = vmin.xlane.f32.xlu0 %v5402
    %v5404 = vpop.xlane.xlu0 %5403
    %vm5405 = vcmp.eq.f32.partialorder %v5402, %v5404
    %v5406 = vsel %vm5405, %v5401, inf
    %5407 = vmin.xlane.f32.xlu0 %v5406
    %v5408 = vpop.xlane.xlu0 %5407
    %v5409 = vcvt.f32.s32 %v5408
    %v5410 = vcvt.f32.s32 %v5404
    %v5411 = vshll.u32 %v5410, 16
    %v5412 = vadd.s32 %v5411, %v5409
    %vm5413 = vcmp.eq.s32.totalorder %v368, %v5412
    %v5414 = vsel %vm5413, 1, 0
    %v5415 = vcvt.s32.f32 %v5414
    %v5416 = vpack.c.bf16 %v5415, %v5415
    %v5418 = vsel %vm455, %v5416, 0
    %5420 = vmatprep.subr.bf16.mxu0 0
    %5421 = vmatpush1.bf16.msra.mxu0 0
    %5422 = vmatprep.subr.bf16.mxu0 0
    %5423 = vmatpush1.bf16.msra.mxu0 0
    %5424 = vmatprep.subr.bf16.mxu0 0
    %5425 = vmatpush1.bf16.msra.mxu0 0
    %5426 = vmatprep.subr.bf16.mxu0 0
    %5427 = vmatpush1.bf16.msra.mxu0 0
    %5428 = vmatprep.subr.bf16.mxu0 0
    %5429 = vmatpush1.bf16.msra.mxu0 0
    %5430 = vmatprep.subr.bf16.mxu0 0
    %5431 = vmatpush1.bf16.msra.mxu0 0
    %5432 = vmatprep.subr.bf16.mxu0 0
    %5433 = vmatpush1.bf16.msra.mxu0 0
    %5434 = vmatprep.subr.bf16.mxu0 0
    %5435 = vmatpush1.bf16.msra.mxu0 %v2679
    %5436 = vmatprep.subr.bf16.mxu0 0
    %5437 = vmatpush2.bf16.msra.mxu0 0
    %5438 = vmatprep.subr.bf16.mxu0 0
    %5439 = vmatpush2.bf16.msra.mxu0 0
    %5440 = vmatprep.subr.bf16.mxu0 0
    %5441 = vmatpush2.bf16.msra.mxu0 0
    %5442 = vmatprep.subr.bf16.mxu0 0
    %5443 = vmatpush2.bf16.msra.mxu0 0
    %5444 = vmatprep.subr.bf16.mxu0 0
    %5445 = vmatpush2.bf16.msra.mxu0 0
    %5446 = vmatprep.subr.bf16.mxu0 0
    %5447 = vmatpush2.bf16.msra.mxu0 0
    %5448 = vmatprep.subr.bf16.mxu0 0
    %5449 = vmatpush2.bf16.msra.mxu0 0
    %5450 = vmatprep.subr.bf16.mxu0 0
    %5451 = vmatpush2.bf16.msra.mxu0 0
    %5452 = vmatprep.mubr.bf16.mxu0 0
    %5453 = vmatmul.mubr.bf16.gmra.mxu0 %v5418
    %v5454 = vpop.f32.mrf.mxu0
    %v5455 = vadd.f32 0.0, %v5454
    %v5456 = vpop.f32.mrf.mxu0
    %v5457 = vpop.f32.mrf.mxu0
    %v5458 = vpop.f32.mrf.mxu0
    %5459 = vdwg.mxu0
    %5460 = vmatprep.subr.bf16.mxu0 0
    %5461 = vmatpush1.bf16.msra.mxu0 0
    %5462 = vmatprep.subr.bf16.mxu0 0
    %5463 = vmatpush1.bf16.msra.mxu0 0
    %5464 = vmatprep.subr.bf16.mxu0 0
    %5465 = vmatpush1.bf16.msra.mxu0 0
    %5466 = vmatprep.subr.bf16.mxu0 0
    %5467 = vmatpush1.bf16.msra.mxu0 0
    %5468 = vmatprep.subr.bf16.mxu0 0
    %5469 = vmatpush1.bf16.msra.mxu0 0
    %5470 = vmatprep.subr.bf16.mxu0 0
    %5471 = vmatpush1.bf16.msra.mxu0 0
    %5472 = vmatprep.subr.bf16.mxu0 0
    %5473 = vmatpush1.bf16.msra.mxu0 %v257
    %5474 = vmatprep.subr.bf16.mxu0 0
    %5475 = vmatpush1.bf16.msra.mxu0 %v256
    %5476 = vmatprep.subr.bf16.mxu0 0
    %5477 = vmatpush2.bf16.msra.mxu0 0
    %5478 = vmatprep.subr.bf16.mxu0 0
    %5479 = vmatpush2.bf16.msra.mxu0 0
    %5480 = vmatprep.subr.bf16.mxu0 0
    %5481 = vmatpush2.bf16.msra.mxu0 0
    %5482 = vmatprep.subr.bf16.mxu0 0
    %5483 = vmatpush2.bf16.msra.mxu0 0
    %5484 = vmatprep.subr.bf16.mxu0 0
    %5485 = vmatpush2.bf16.msra.mxu0 0
    %5486 = vmatprep.subr.bf16.mxu0 0
    %5487 = vmatpush2.bf16.msra.mxu0 0
    %5488 = vmatprep.subr.bf16.mxu0 0
    %5489 = vmatpush2.bf16.msra.mxu0 0
    %5490 = vmatprep.subr.bf16.mxu0 0
    %5491 = vmatpush2.bf16.msra.mxu0 0
    %5492 = vmatprep.mubr.bf16.mxu0 0
    %5493 = vmatmul.mubr.bf16.gmra.mxu0 %v5351
    %v5494 = vpop.f32.mrf.mxu0
    %v5495 = vadd.f32 0.0, %v5494
    %v5496 = vpop.f32.mrf.mxu0
    %v5497 = vpop.f32.mrf.mxu0
    %v5498 = vpop.f32.mrf.mxu0
    %5499 = vdwg.mxu0
    %v5500 = vadd.f32 %v5455, %v5495
    %v5501 = vxor.u32 %v5500, 2147483648
    %v5502 = vmul.f32 %v5501, 1.442695
    %v5503 = vpow.pop %v5502
    %v5504 = vadd.f32 %v5503, 1.0
    %v5505 = vrcp.pop %v5504
    %v5506 = vmul.f32 1.0, %v5505
    %v5507 = vadd.f32 %v5495, %v336
    %5509 = vrot.lane.b32.xlu0 %v5507, 64
    %v5510 = vpop.permute.xlu0 %5509
    %v5512 = vmul.f32 %v5506, %v5510
    %5514 = vrot.lane.b32.xlu0 %v5512, 64
    %v5515 = vpop.permute.xlu0 %5514
    %v5517 = vadd.f32 %v5455, %v5515
    %v5518 = vtanh.pop %v5517
    %v5519 = vsub.f32 1.0, %v5506
    %5521 = vrot.lane.b32.xlu0 %v5518, 96
    %v5522 = vpop.permute.xlu0 %5521
    %v5524 = vmul.f32 %v5519, %v5522
    %v5527 = vrot.slane %v5338, 7
    %v5528 = vsel %vm2926, %v5527, %v5337
    %v5530 = vmul.f32 %v5506, %v5528
    %v5531 = vadd.f32 %v5524, %v5530
    %v5534 = vunpack.c.l.s4 1966171168
    %v5535 = vunpack.c.0.s8 %v5534
    %v5536 = vlaneseq
    %v5537 = vshrl.u32 %v5536, 7
    %v5538 = vsub.s32 %v5535, %v5537
    %v5539 = vrot.slane %v5531, %v5538
    %v5540 = vcombine.high %v5539, %v5539
    %v5542 = vunpack.c.l.s4 1966171168
    %v5543 = vunpack.c.0.s8 %v5542
    %v5544 = vlaneseq
    %v5545 = vshrl.u32 %v5544, 7
    %v5546 = vsub.s32 %v5543, %v5545
    %v5547 = vrot.slane %v5539, %v5546
    %v5549 = vunpack.c.l.s4 1966171168
    %v5550 = vunpack.c.0.s8 %v5549
    %v5551 = vlaneseq
    %v5552 = vshrl.u32 %v5551, 7
    %v5553 = vsub.s32 %v5550, %v5552
    %v5554 = vrot.slane %v5540, %v5553
    %v5557 = vpack.c.bf16 %v5547, %v5547
    %v5558 = vpack.c.bf16 %v5554, %v5554
    %5560 = vrot.lane.b32.xlu0 %v5557, 96
    %v5561 = vpop.permute.xlu0 %5560
    %v5563 = vsel %vm638, %v5561, 0
    %5565 = vmatprep.subr.bf16.mxu0 0
    %5566 = vmatpush1.bf16.msra.mxu0 0
    %5567 = vmatprep.subr.bf16.mxu0 0
    %5568 = vmatpush1.bf16.msra.mxu0 0
    %5569 = vmatprep.subr.bf16.mxu0 0
    %5570 = vmatpush1.bf16.msra.mxu0 0
    %5571 = vmatprep.subr.bf16.mxu0 0
    %5572 = vmatpush1.bf16.msra.mxu0 0
    %5573 = vmatprep.subr.bf16.mxu0 0
    %5574 = vmatpush1.bf16.msra.mxu0 0
    %5575 = vmatprep.subr.bf16.mxu0 0
    %5576 = vmatpush1.bf16.msra.mxu0 0
    %5577 = vmatprep.subr.bf16.mxu0 0
    %5578 = vmatpush1.bf16.msra.mxu0 %v2298
    %5579 = vmatprep.subr.bf16.mxu0 0
    %5580 = vmatpush1.bf16.msra.mxu0 %v2297
    %5581 = vmatprep.subr.bf16.mxu0 0
    %5582 = vmatpush2.bf16.msra.mxu0 0
    %5583 = vmatprep.subr.bf16.mxu0 0
    %5584 = vmatpush2.bf16.msra.mxu0 0
    %5585 = vmatprep.subr.bf16.mxu0 0
    %5586 = vmatpush2.bf16.msra.mxu0 0
    %5587 = vmatprep.subr.bf16.mxu0 0
    %5588 = vmatpush2.bf16.msra.mxu0 0
    %5589 = vmatprep.subr.bf16.mxu0 0
    %5590 = vmatpush2.bf16.msra.mxu0 0
    %5591 = vmatprep.subr.bf16.mxu0 0
    %5592 = vmatpush2.bf16.msra.mxu0 0
    %5593 = vmatprep.subr.bf16.mxu0 0
    %5594 = vmatpush2.bf16.msra.mxu0 0
    %5595 = vmatprep.subr.bf16.mxu0 0
    %5596 = vmatpush2.bf16.msra.mxu0 0
    %5597 = vmatprep.mubr.bf16.mxu0 0
    %5598 = vmatmul.mubr.bf16.gmra.mxu0 %v5563
    %v5599 = vpop.f32.mrf.mxu0
    %v5600 = vadd.f32 0.0, %v5599
    %v5601 = vpop.f32.mrf.mxu0
    %v5602 = vpop.f32.mrf.mxu0
    %v5603 = vpop.f32.mrf.mxu0
    %5604 = vdwg.mxu0
    %5606 = vrot.lane.b32.xlu0 %v5558, 96
    %v5607 = vpop.permute.xlu0 %5606
    %v5609 = vsel %vm638, %v5607, 0
    %5611 = vmatprep.subr.bf16.mxu0 0
    %5612 = vmatpush1.bf16.msra.mxu0 0
    %5613 = vmatprep.subr.bf16.mxu0 0
    %5614 = vmatpush1.bf16.msra.mxu0 0
    %5615 = vmatprep.subr.bf16.mxu0 0
    %5616 = vmatpush1.bf16.msra.mxu0 0
    %5617 = vmatprep.subr.bf16.mxu0 0
    %5618 = vmatpush1.bf16.msra.mxu0 0
    %5619 = vmatprep.subr.bf16.mxu0 0
    %5620 = vmatpush1.bf16.msra.mxu0 0
    %5621 = vmatprep.subr.bf16.mxu0 0
    %5622 = vmatpush1.bf16.msra.mxu0 0
    %5623 = vmatprep.subr.bf16.mxu0 0
    %5624 = vmatpush1.bf16.msra.mxu0 %v2300
    %5625 = vmatprep.subr.bf16.mxu0 0
    %5626 = vmatpush1.bf16.msra.mxu0 %v2299
    %5627 = vmatprep.subr.bf16.mxu0 0
    %5628 = vmatpush2.bf16.msra.mxu0 0
    %5629 = vmatprep.subr.bf16.mxu0 0
    %5630 = vmatpush2.bf16.msra.mxu0 0
    %5631 = vmatprep.subr.bf16.mxu0 0
    %5632 = vmatpush2.bf16.msra.mxu0 0
    %5633 = vmatprep.subr.bf16.mxu0 0
    %5634 = vmatpush2.bf16.msra.mxu0 0
    %5635 = vmatprep.subr.bf16.mxu0 0
    %5636 = vmatpush2.bf16.msra.mxu0 0
    %5637 = vmatprep.subr.bf16.mxu0 0
    %5638 = vmatpush2.bf16.msra.mxu0 0
    %5639 = vmatprep.subr.bf16.mxu0 0
    %5640 = vmatpush2.bf16.msra.mxu0 0
    %5641 = vmatprep.subr.bf16.mxu0 0
    %5642 = vmatpush2.bf16.msra.mxu0 0
    %5643 = vmatprep.mubr.bf16.mxu0 0
    %5644 = vmatmul.mubr.bf16.gmra.mxu0 %v5609
    %v5645 = vpop.f32.mrf.mxu0
    %v5646 = vadd.f32 0.0, %v5645
    %v5647 = vpop.f32.mrf.mxu0
    %v5648 = vpop.f32.mrf.mxu0
    %v5649 = vpop.f32.mrf.mxu0
    %5650 = vdwg.mxu0
    %v5651 = vmul.f32 %v5600, 0.17677669
    %v5652 = vmul.f32 %v5646, 0.17677669
    %v5655 = vrot.slane %v5652, 7
    %v5656 = vsel %vm2926, %v5655, %v5651
    %v5658 = vsel %vm2929, %v5656, -inf
    %5659 = vmax.xlane.f32.xlu0 %v5658
    %v5660 = vpop.xlane.xlu0 %5659
    %v5662 = vrot.slane %v5660, 1
    %v5665 = vsub.f32 %v5651, %v5660
    %v5666 = vsub.f32 %v5652, %v5662
    %v5667 = vmul.f32 %v5665, 1.442695
    %v5668 = vpow.pop %v5667
    %v5669 = vmul.f32 %v5666, 1.442695
    %v5670 = vpow.pop %v5669
    %v5673 = vrot.slane %v5670, 7
    %v5674 = vsel %vm2926, %v5673, %v5668
    %v5676 = vsel %vm2929, %v5674, 0.0
    %5677 = vadd.xlane.f32.xlu0 %v5676
    %v5678 = vpop.xlane.xlu0 %5677
    %v5679 = vrcp.pop %v5678
    %v5681 = vrot.slane %v5679, 1
    %v5684 = vmul.f32 %v5668, %v5679
    %v5685 = vmul.f32 %v5670, %v5681
    %v5686 = vpack.c.bf16 %v5684, %v5684
    %v5687 = vpack.c.bf16 %v5685, %v5685
    %v5689 = vsel %vm2960, %v5686, 0
    %5691 = vmatprep.subr.bf16.mxu0 0
    %5692 = vmatpush1.bf16.msra.mxu0 0
    %5693 = vmatprep.subr.bf16.mxu0 0
    %5694 = vmatpush1.bf16.msra.mxu0 0
    %5695 = vmatprep.subr.bf16.mxu0 0
    %5696 = vmatpush1.bf16.msra.mxu0 0
    %5697 = vmatprep.subr.bf16.mxu0 0
    %5698 = vmatpush1.bf16.msra.mxu0 0
    %5699 = vmatprep.subr.bf16.mxu0 0
    %5700 = vmatpush1.bf16.msra.mxu0 0
    %5701 = vmatprep.subr.bf16.mxu0 0
    %5702 = vmatpush1.bf16.msra.mxu0 0
    %5703 = vmatprep.subr.bf16.mxu0 0
    %5704 = vmatpush1.bf16.msra.mxu0 0
    %5705 = vmatprep.subr.bf16.mxu0 0
    %5706 = vmatpush1.bf16.msra.mxu0 %v2965
    %5707 = vmatprep.subr.bf16.mxu0 0
    %5708 = vmatpush2.bf16.msra.mxu0 0
    %5709 = vmatprep.subr.bf16.mxu0 0
    %5710 = vmatpush2.bf16.msra.mxu0 0
    %5711 = vmatprep.subr.bf16.mxu0 0
    %5712 = vmatpush2.bf16.msra.mxu0 0
    %5713 = vmatprep.subr.bf16.mxu0 0
    %5714 = vmatpush2.bf16.msra.mxu0 0
    %5715 = vmatprep.subr.bf16.mxu0 0
    %5716 = vmatpush2.bf16.msra.mxu0 0
    %5717 = vmatprep.subr.bf16.mxu0 0
    %5718 = vmatpush2.bf16.msra.mxu0 0
    %5719 = vmatprep.subr.bf16.mxu0 0
    %5720 = vmatpush2.bf16.msra.mxu0 0
    %5721 = vmatprep.subr.bf16.mxu0 0
    %5722 = vmatpush2.bf16.msra.mxu0 0
    %5723 = vmatprep.mubr.bf16.mxu0 0
    %5724 = vmatmul.mubr.bf16.gmra.mxu0 %v5689
    %v5725 = vpop.f32.mrf.mxu0
    %v5726 = vadd.f32 0.0, %v5725
    %v5727 = vpop.f32.mrf.mxu0
    %v5728 = vpop.f32.mrf.mxu0
    %v5729 = vpop.f32.mrf.mxu0
    %5730 = vdwg.mxu0
    %v5732 = vsel %vm2960, %v5687, 0
    %5734 = vmatprep.subr.bf16.mxu0 0
    %5735 = vmatpush1.bf16.msra.mxu0 0
    %5736 = vmatprep.subr.bf16.mxu0 0
    %5737 = vmatpush1.bf16.msra.mxu0 0
    %5738 = vmatprep.subr.bf16.mxu0 0
    %5739 = vmatpush1.bf16.msra.mxu0 0
    %5740 = vmatprep.subr.bf16.mxu0 0
    %5741 = vmatpush1.bf16.msra.mxu0 0
    %5742 = vmatprep.subr.bf16.mxu0 0
    %5743 = vmatpush1.bf16.msra.mxu0 0
    %5744 = vmatprep.subr.bf16.mxu0 0
    %5745 = vmatpush1.bf16.msra.mxu0 0
    %5746 = vmatprep.subr.bf16.mxu0 0
    %5747 = vmatpush1.bf16.msra.mxu0 0
    %5748 = vmatprep.subr.bf16.mxu0 0
    %5749 = vmatpush1.bf16.msra.mxu0 %v3011
    %5750 = vmatprep.subr.bf16.mxu0 0
    %5751 = vmatpush2.bf16.msra.mxu0 0
    %5752 = vmatprep.subr.bf16.mxu0 0
    %5753 = vmatpush2.bf16.msra.mxu0 0
    %5754 = vmatprep.subr.bf16.mxu0 0
    %5755 = vmatpush2.bf16.msra.mxu0 0
    %5756 = vmatprep.subr.bf16.mxu0 0
    %5757 = vmatpush2.bf16.msra.mxu0 0
    %5758 = vmatprep.subr.bf16.mxu0 0
    %5759 = vmatpush2.bf16.msra.mxu0 0
    %5760 = vmatprep.subr.bf16.mxu0 0
    %5761 = vmatpush2.bf16.msra.mxu0 0
    %5762 = vmatprep.subr.bf16.mxu0 0
    %5763 = vmatpush2.bf16.msra.mxu0 0
    %5764 = vmatprep.subr.bf16.mxu0 0
    %5765 = vmatpush2.bf16.msra.mxu0 0
    %5766 = vmatprep.mubr.bf16.mxu0 0
    %5767 = vmatmul.mubr.bf16.gmra.mxu0 %v5732
    %v5768 = vpop.f32.mrf.mxu0
    %v5769 = vadd.f32 0.0, %v5768
    %v5770 = vpop.f32.mrf.mxu0
    %v5771 = vpop.f32.mrf.mxu0
    %v5772 = vpop.f32.mrf.mxu0
    %5773 = vdwg.mxu0
    %v5774 = vadd.f32 %v5726, %v351
    %v5775 = vadd.f32 %v5769, %v351
    %v5776 = vpack.c.bf16 %v5531, %v5531
    %5778 = vrot.lane.b32.xlu0 %v5776, 96
    %v5779 = vpop.permute.xlu0 %5778
    %v5781 = vsel %vm638, %v5779, 0
    %5783 = vmatprep.subr.bf16.mxu0 0
    %5784 = vmatpush1.bf16.msra.mxu0 0
    %5785 = vmatprep.subr.bf16.mxu0 0
    %5786 = vmatpush1.bf16.msra.mxu0 0
    %5787 = vmatprep.subr.bf16.mxu0 0
    %5788 = vmatpush1.bf16.msra.mxu0 0
    %5789 = vmatprep.subr.bf16.mxu0 0
    %5790 = vmatpush1.bf16.msra.mxu0 0
    %5791 = vmatprep.subr.bf16.mxu0 0
    %5792 = vmatpush1.bf16.msra.mxu0 0
    %5793 = vmatprep.subr.bf16.mxu0 0
    %5794 = vmatpush1.bf16.msra.mxu0 0
    %5795 = vmatprep.subr.bf16.mxu0 0
    %5796 = vmatpush1.bf16.msra.mxu0 %v263
    %5797 = vmatprep.subr.bf16.mxu0 0
    %5798 = vmatpush1.bf16.msra.mxu0 %v262
    %5799 = vmatprep.subr.bf16.mxu0 0
    %5800 = vmatpush2.bf16.msra.mxu0 0
    %5801 = vmatprep.subr.bf16.mxu0 0
    %5802 = vmatpush2.bf16.msra.mxu0 0
    %5803 = vmatprep.subr.bf16.mxu0 0
    %5804 = vmatpush2.bf16.msra.mxu0 0
    %5805 = vmatprep.subr.bf16.mxu0 0
    %5806 = vmatpush2.bf16.msra.mxu0 0
    %5807 = vmatprep.subr.bf16.mxu0 0
    %5808 = vmatpush2.bf16.msra.mxu0 0
    %5809 = vmatprep.subr.bf16.mxu0 0
    %5810 = vmatpush2.bf16.msra.mxu0 0
    %5811 = vmatprep.subr.bf16.mxu0 0
    %5812 = vmatpush2.bf16.msra.mxu0 0
    %5813 = vmatprep.subr.bf16.mxu0 0
    %5814 = vmatpush2.bf16.msra.mxu0 0
    %5815 = vmatprep.mubr.bf16.mxu0 0
    %5816 = vmatmul.mubr.bf16.gmra.mxu0 %v5781
    %v5817 = vpop.f32.mrf.mxu0
    %v5818 = vadd.f32 0.0, %v5817
    %v5819 = vpop.f32.mrf.mxu0
    %v5820 = vpop.f32.mrf.mxu0
    %v5821 = vpop.f32.mrf.mxu0
    %5822 = vdwg.mxu0
    %v5824 = vrot.slane %v5818, 1
    %v5827 = vadd.f32 %v5774, %v5818
    %v5828 = vadd.f32 %v5775, %v5824
    %v5829 = vxor.u32 %v5827, 2147483648
    %v5830 = vxor.u32 %v5828, 2147483648
    %v5831 = vmul.f32 %v5829, 1.442695
    %v5832 = vpow.pop %v5831
    %v5833 = vmul.f32 %v5830, 1.442695
    %v5834 = vpow.pop %v5833
    %v5835 = vadd.f32 %v5832, 1.0
    %v5836 = vadd.f32 %v5834, 1.0
    %v5837 = vrcp.pop %v5835
    %v5838 = vmul.f32 1.0, %v5837
    %v5839 = vrcp.pop %v5836
    %v5840 = vmul.f32 1.0, %v5839
    %v5841 = vadd.f32 %v5818, %v343
    %v5843 = vrot.slane %v5841, 1
    %5844 = vrot.lane.b32.xlu0 %v5841, 64
    %v5845 = vpop.permute.xlu0 %5844
    %5846 = vrot.lane.b32.xlu0 %v5843, 64
    %v5847 = vpop.permute.xlu0 %5846
    %v5850 = vmul.f32 %v5838, %v5845
    %v5851 = vmul.f32 %v5840, %v5847
    %5854 = vrot.lane.b32.xlu0 %v5850, 64
    %v5855 = vpop.permute.xlu0 %5854
    %5856 = vrot.lane.b32.xlu0 %v5851, 64
    %v5857 = vpop.permute.xlu0 %5856
    %v5860 = vadd.f32 %v5774, %v5855
    %v5861 = vadd.f32 %v5775, %v5857
    %v5862 = vtanh.pop %v5860
    %v5863 = vtanh.pop %v5861
    %v5864 = vsub.f32 1.0, %v5838
    %v5865 = vsub.f32 1.0, %v5840
    %5868 = vrot.lane.b32.xlu0 %v5862, 96
    %v5869 = vpop.permute.xlu0 %5868
    %5870 = vrot.lane.b32.xlu0 %v5863, 96
    %v5871 = vpop.permute.xlu0 %5870
    %v5874 = vmul.f32 %v5864, %v5869
    %v5875 = vmul.f32 %v5865, %v5871
    %v5876 = vrot.slane %v5531, 1
    %v5879 = vmul.f32 %v5838, %v5531
    %v5880 = vmul.f32 %v5840, %v5876
    %v5881 = vadd.f32 %v5874, %v5879
    %v5882 = vadd.f32 %v5875, %v5880
    %v5883 = vpack.c.bf16 %v5881, %v5881
    %v5884 = vpack.c.bf16 %v5882, %v5882
    %v5887 = vunpack.c.l.b16 %v5883
    %v5888 = vunpack.c.l.b16 %v5884
    %v5889 = vrot.slane %v5888, 7
    %v5890 = vsel %vm2926, %v5889, %v5887
    %v5891 = vpack.c.b16 %v5890, %v5890
    %5892 = vrot.lane.b32.xlu0 %v5891, 96
    %v5893 = vpop.permute.xlu0 %5892
    %v5895 = vsel %vm638, %v5893, 0
    %5897 = vmatprep.subr.bf16.mxu0 0
    %5898 = vmatpush1.bf16.msra.mxu0 0
    %5899 = vmatprep.subr.bf16.mxu0 0
    %5900 = vmatpush1.bf16.msra.mxu0 0
    %5901 = vmatprep.subr.bf16.mxu0 0
    %5902 = vmatpush1.bf16.msra.mxu0 0
    %5903 = vmatprep.subr.bf16.mxu0 0
    %5904 = vmatpush1.bf16.msra.mxu0 0
    %5905 = vmatprep.subr.bf16.mxu0 0
    %5906 = vmatpush1.bf16.msra.mxu0 0
    %5907 = vmatprep.subr.bf16.mxu0 0
    %5908 = vmatpush1.bf16.msra.mxu0 0
    %5909 = vmatprep.subr.bf16.mxu0 0
    %5910 = vmatpush1.bf16.msra.mxu0 %v275
    %5911 = vmatprep.subr.bf16.mxu0 0
    %5912 = vmatpush1.bf16.msra.mxu0 %v274
    %5913 = vmatprep.subr.bf16.mxu0 0
    %5914 = vmatpush2.bf16.msra.mxu0 0
    %5915 = vmatprep.subr.bf16.mxu0 0
    %5916 = vmatpush2.bf16.msra.mxu0 0
    %5917 = vmatprep.subr.bf16.mxu0 0
    %5918 = vmatpush2.bf16.msra.mxu0 0
    %5919 = vmatprep.subr.bf16.mxu0 0
    %5920 = vmatpush2.bf16.msra.mxu0 0
    %5921 = vmatprep.subr.bf16.mxu0 0
    %5922 = vmatpush2.bf16.msra.mxu0 0
    %5923 = vmatprep.subr.bf16.mxu0 0
    %5924 = vmatpush2.bf16.msra.mxu0 0
    %5925 = vmatprep.subr.bf16.mxu0 0
    %5926 = vmatpush2.bf16.msra.mxu0 0
    %5927 = vmatprep.subr.bf16.mxu0 0
    %5928 = vmatpush2.bf16.msra.mxu0 0
    %5929 = vmatprep.mubr.bf16.mxu0 0
    %5930 = vmatmul.mubr.bf16.gmra.mxu0 %v5895
    %v5931 = vpop.f32.mrf.mxu0
    %v5932 = vadd.f32 %v357, %v5931
    %v5933 = vpop.f32.mrf.mxu0
    %v5934 = vpop.f32.mrf.mxu0
    %v5935 = vpop.f32.mrf.mxu0
    %5936 = vdwg.mxu0
    %v5937 = vsel %vm3216, %v5932, -inf
    %5938 = vmax.xlane.f32.xlu0 %v5937
    %v5939 = vpop.xlane.xlu0 %5938
    %vm5940 = vcmp.eq.f32.partialorder %v5932, %v5939
    %v5941 = vsel %vm5940, %v368, 16
    %v5942 = vsel %vm3216, %v5941, 2147483647
    %v5943 = vand.u32 %v5942, 65535
    %v5944 = vshra.s32 %v5942, 16
    %v5945 = vcvt.s32.f32 %v5943
    %v5946 = vcvt.s32.f32 %v5944
    %5947 = vmin.xlane.f32.xlu0 %v5946
    %v5948 = vpop.xlane.xlu0 %5947
    %vm5949 = vcmp.eq.f32.partialorder %v5946, %v5948
    %v5950 = vsel %vm5949, %v5945, inf
    %5951 = vmin.xlane.f32.xlu0 %v5950
    %v5952 = vpop.xlane.xlu0 %5951
    %v5953 = vcvt.f32.s32 %v5952
    %v5954 = vcvt.f32.s32 %v5948
    %v5955 = vshll.u32 %v5954, 16
    %v5956 = vadd.s32 %v5955, %v5953
    %vm5957 = vcmp.eq.s32.totalorder %v368, %v5956
    %v5958 = vsel %vm5957, 1, 0
    %v5959 = vcvt.s32.f32 %v5958
    %v5960 = vpack.c.bf16 %v5959, %v5959
    %v5962 = vsel %vm455, %v5960, 0
    %5964 = vmatprep.subr.bf16.mxu0 0
    %5965 = vmatpush1.bf16.msra.mxu0 0
    %5966 = vmatprep.subr.bf16.mxu0 0
    %5967 = vmatpush1.bf16.msra.mxu0 0
    %5968 = vmatprep.subr.bf16.mxu0 0
    %5969 = vmatpush1.bf16.msra.mxu0 0
    %5970 = vmatprep.subr.bf16.mxu0 0
    %5971 = vmatpush1.bf16.msra.mxu0 0
    %5972 = vmatprep.subr.bf16.mxu0 0
    %5973 = vmatpush1.bf16.msra.mxu0 0
    %5974 = vmatprep.subr.bf16.mxu0 0
    %5975 = vmatpush1.bf16.msra.mxu0 0
    %5976 = vmatprep.subr.bf16.mxu0 0
    %5977 = vmatpush1.bf16.msra.mxu0 0
    %5978 = vmatprep.subr.bf16.mxu0 0
    %5979 = vmatpush1.bf16.msra.mxu0 %v2679
    %5980 = vmatprep.subr.bf16.mxu0 0
    %5981 = vmatpush2.bf16.msra.mxu0 0
    %5982 = vmatprep.subr.bf16.mxu0 0
    %5983 = vmatpush2.bf16.msra.mxu0 0
    %5984 = vmatprep.subr.bf16.mxu0 0
    %5985 = vmatpush2.bf16.msra.mxu0 0
    %5986 = vmatprep.subr.bf16.mxu0 0
    %5987 = vmatpush2.bf16.msra.mxu0 0
    %5988 = vmatprep.subr.bf16.mxu0 0
    %5989 = vmatpush2.bf16.msra.mxu0 0
    %5990 = vmatprep.subr.bf16.mxu0 0
    %5991 = vmatpush2.bf16.msra.mxu0 0
    %5992 = vmatprep.subr.bf16.mxu0 0
    %5993 = vmatpush2.bf16.msra.mxu0 0
    %5994 = vmatprep.subr.bf16.mxu0 0
    %5995 = vmatpush2.bf16.msra.mxu0 0
    %5996 = vmatprep.mubr.bf16.mxu0 0
    %5997 = vmatmul.mubr.bf16.gmra.mxu0 %v5962
    %v5998 = vpop.f32.mrf.mxu0
    %v5999 = vadd.f32 0.0, %v5998
    %v6000 = vpop.f32.mrf.mxu0
    %v6001 = vpop.f32.mrf.mxu0
    %v6002 = vpop.f32.mrf.mxu0
    %6003 = vdwg.mxu0
    %6004 = vmatprep.subr.bf16.mxu0 0
    %6005 = vmatpush1.bf16.msra.mxu0 0
    %6006 = vmatprep.subr.bf16.mxu0 0
    %6007 = vmatpush1.bf16.msra.mxu0 0
    %6008 = vmatprep.subr.bf16.mxu0 0
    %6009 = vmatpush1.bf16.msra.mxu0 0
    %6010 = vmatprep.subr.bf16.mxu0 0
    %6011 = vmatpush1.bf16.msra.mxu0 0
    %6012 = vmatprep.subr.bf16.mxu0 0
    %6013 = vmatpush1.bf16.msra.mxu0 0
    %6014 = vmatprep.subr.bf16.mxu0 0
    %6015 = vmatpush1.bf16.msra.mxu0 0
    %6016 = vmatprep.subr.bf16.mxu0 0
    %6017 = vmatpush1.bf16.msra.mxu0 %v257
    %6018 = vmatprep.subr.bf16.mxu0 0
    %6019 = vmatpush1.bf16.msra.mxu0 %v256
    %6020 = vmatprep.subr.bf16.mxu0 0
    %6021 = vmatpush2.bf16.msra.mxu0 0
    %6022 = vmatprep.subr.bf16.mxu0 0
    %6023 = vmatpush2.bf16.msra.mxu0 0
    %6024 = vmatprep.subr.bf16.mxu0 0
    %6025 = vmatpush2.bf16.msra.mxu0 0
    %6026 = vmatprep.subr.bf16.mxu0 0
    %6027 = vmatpush2.bf16.msra.mxu0 0
    %6028 = vmatprep.subr.bf16.mxu0 0
    %6029 = vmatpush2.bf16.msra.mxu0 0
    %6030 = vmatprep.subr.bf16.mxu0 0
    %6031 = vmatpush2.bf16.msra.mxu0 0
    %6032 = vmatprep.subr.bf16.mxu0 0
    %6033 = vmatpush2.bf16.msra.mxu0 0
    %6034 = vmatprep.subr.bf16.mxu0 0
    %6035 = vmatpush2.bf16.msra.mxu0 0
    %6036 = vmatprep.mubr.bf16.mxu0 0
    %6037 = vmatmul.mubr.bf16.gmra.mxu0 %v5895
    %v6038 = vpop.f32.mrf.mxu0
    %v6039 = vadd.f32 0.0, %v6038
    %v6040 = vpop.f32.mrf.mxu0
    %v6041 = vpop.f32.mrf.mxu0
    %v6042 = vpop.f32.mrf.mxu0
    %6043 = vdwg.mxu0
    %v6044 = vadd.f32 %v5999, %v6039
    %v6045 = vxor.u32 %v6044, 2147483648
    %v6046 = vmul.f32 %v6045, 1.442695
    %v6047 = vpow.pop %v6046
    %v6048 = vadd.f32 %v6047, 1.0
    %v6049 = vrcp.pop %v6048
    %v6050 = vmul.f32 1.0, %v6049
    %v6051 = vadd.f32 %v6039, %v336
    %6053 = vrot.lane.b32.xlu0 %v6051, 64
    %v6054 = vpop.permute.xlu0 %6053
    %v6056 = vmul.f32 %v6050, %v6054
    %6058 = vrot.lane.b32.xlu0 %v6056, 64
    %v6059 = vpop.permute.xlu0 %6058
    %v6061 = vadd.f32 %v5999, %v6059
    %v6062 = vtanh.pop %v6061
    %v6063 = vsub.f32 1.0, %v6050
    %6065 = vrot.lane.b32.xlu0 %v6062, 96
    %v6066 = vpop.permute.xlu0 %6065
    %v6068 = vmul.f32 %v6063, %v6066
    %v6071 = vrot.slane %v5882, 7
    %v6072 = vsel %vm2926, %v6071, %v5881
    %v6074 = vmul.f32 %v6050, %v6072
    %v6075 = vadd.f32 %v6068, %v6074
    %v6078 = vunpack.c.l.s4 1966171168
    %v6079 = vunpack.c.0.s8 %v6078
    %v6080 = vlaneseq
    %v6081 = vshrl.u32 %v6080, 7
    %v6082 = vsub.s32 %v6079, %v6081
    %v6083 = vrot.slane %v6075, %v6082
    %v6084 = vcombine.high %v6083, %v6083
    %v6086 = vunpack.c.l.s4 1966171168
    %v6087 = vunpack.c.0.s8 %v6086
    %v6088 = vlaneseq
    %v6089 = vshrl.u32 %v6088, 7
    %v6090 = vsub.s32 %v6087, %v6089
    %v6091 = vrot.slane %v6083, %v6090
    %v6093 = vunpack.c.l.s4 1966171168
    %v6094 = vunpack.c.0.s8 %v6093
    %v6095 = vlaneseq
    %v6096 = vshrl.u32 %v6095, 7
    %v6097 = vsub.s32 %v6094, %v6096
    %v6098 = vrot.slane %v6084, %v6097
    %v6101 = vpack.c.bf16 %v6091, %v6091
    %v6102 = vpack.c.bf16 %v6098, %v6098
    %6104 = vrot.lane.b32.xlu0 %v6101, 96
    %v6105 = vpop.permute.xlu0 %6104
    %v6107 = vsel %vm638, %v6105, 0
    %6109 = vmatprep.subr.bf16.mxu0 0
    %6110 = vmatpush1.bf16.msra.mxu0 0
    %6111 = vmatprep.subr.bf16.mxu0 0
    %6112 = vmatpush1.bf16.msra.mxu0 0
    %6113 = vmatprep.subr.bf16.mxu0 0
    %6114 = vmatpush1.bf16.msra.mxu0 0
    %6115 = vmatprep.subr.bf16.mxu0 0
    %6116 = vmatpush1.bf16.msra.mxu0 0
    %6117 = vmatprep.subr.bf16.mxu0 0
    %6118 = vmatpush1.bf16.msra.mxu0 0
    %6119 = vmatprep.subr.bf16.mxu0 0
    %6120 = vmatpush1.bf16.msra.mxu0 0
    %6121 = vmatprep.subr.bf16.mxu0 0
    %6122 = vmatpush1.bf16.msra.mxu0 %v2298
    %6123 = vmatprep.subr.bf16.mxu0 0
    %6124 = vmatpush1.bf16.msra.mxu0 %v2297
    %6125 = vmatprep.subr.bf16.mxu0 0
    %6126 = vmatpush2.bf16.msra.mxu0 0
    %6127 = vmatprep.subr.bf16.mxu0 0
    %6128 = vmatpush2.bf16.msra.mxu0 0
    %6129 = vmatprep.subr.bf16.mxu0 0
    %6130 = vmatpush2.bf16.msra.mxu0 0
    %6131 = vmatprep.subr.bf16.mxu0 0
    %6132 = vmatpush2.bf16.msra.mxu0 0
    %6133 = vmatprep.subr.bf16.mxu0 0
    %6134 = vmatpush2.bf16.msra.mxu0 0
    %6135 = vmatprep.subr.bf16.mxu0 0
    %6136 = vmatpush2.bf16.msra.mxu0 0
    %6137 = vmatprep.subr.bf16.mxu0 0
    %6138 = vmatpush2.bf16.msra.mxu0 0
    %6139 = vmatprep.subr.bf16.mxu0 0
    %6140 = vmatpush2.bf16.msra.mxu0 0
    %6141 = vmatprep.mubr.bf16.mxu0 0
    %6142 = vmatmul.mubr.bf16.gmra.mxu0 %v6107
    %v6143 = vpop.f32.mrf.mxu0
    %v6144 = vadd.f32 0.0, %v6143
    %v6145 = vpop.f32.mrf.mxu0
    %v6146 = vpop.f32.mrf.mxu0
    %v6147 = vpop.f32.mrf.mxu0
    %6148 = vdwg.mxu0
    %6150 = vrot.lane.b32.xlu0 %v6102, 96
    %v6151 = vpop.permute.xlu0 %6150
    %v6153 = vsel %vm638, %v6151, 0
    %6155 = vmatprep.subr.bf16.mxu0 0
    %6156 = vmatpush1.bf16.msra.mxu0 0
    %6157 = vmatprep.subr.bf16.mxu0 0
    %6158 = vmatpush1.bf16.msra.mxu0 0
    %6159 = vmatprep.subr.bf16.mxu0 0
    %6160 = vmatpush1.bf16.msra.mxu0 0
    %6161 = vmatprep.subr.bf16.mxu0 0
    %6162 = vmatpush1.bf16.msra.mxu0 0
    %6163 = vmatprep.subr.bf16.mxu0 0
    %6164 = vmatpush1.bf16.msra.mxu0 0
    %6165 = vmatprep.subr.bf16.mxu0 0
    %6166 = vmatpush1.bf16.msra.mxu0 0
    %6167 = vmatprep.subr.bf16.mxu0 0
    %6168 = vmatpush1.bf16.msra.mxu0 %v2300
    %6169 = vmatprep.subr.bf16.mxu0 0
    %6170 = vmatpush1.bf16.msra.mxu0 %v2299
    %6171 = vmatprep.subr.bf16.mxu0 0
    %6172 = vmatpush2.bf16.msra.mxu0 0
    %6173 = vmatprep.subr.bf16.mxu0 0
    %6174 = vmatpush2.bf16.msra.mxu0 0
    %6175 = vmatprep.subr.bf16.mxu0 0
    %6176 = vmatpush2.bf16.msra.mxu0 0
    %6177 = vmatprep.subr.bf16.mxu0 0
    %6178 = vmatpush2.bf16.msra.mxu0 0
    %6179 = vmatprep.subr.bf16.mxu0 0
    %6180 = vmatpush2.bf16.msra.mxu0 0
    %6181 = vmatprep.subr.bf16.mxu0 0
    %6182 = vmatpush2.bf16.msra.mxu0 0
    %6183 = vmatprep.subr.bf16.mxu0 0
    %6184 = vmatpush2.bf16.msra.mxu0 0
    %6185 = vmatprep.subr.bf16.mxu0 0
    %6186 = vmatpush2.bf16.msra.mxu0 0
    %6187 = vmatprep.mubr.bf16.mxu0 0
    %6188 = vmatmul.mubr.bf16.gmra.mxu0 %v6153
    %v6189 = vpop.f32.mrf.mxu0
    %v6190 = vadd.f32 0.0, %v6189
    %v6191 = vpop.f32.mrf.mxu0
    %v6192 = vpop.f32.mrf.mxu0
    %v6193 = vpop.f32.mrf.mxu0
    %6194 = vdwg.mxu0
    %v6195 = vmul.f32 %v6144, 0.17677669
    %v6196 = vmul.f32 %v6190, 0.17677669
    %v6199 = vrot.slane %v6196, 7
    %v6200 = vsel %vm2926, %v6199, %v6195
    %v6202 = vsel %vm2929, %v6200, -inf
    %6203 = vmax.xlane.f32.xlu0 %v6202
    %v6204 = vpop.xlane.xlu0 %6203
    %v6206 = vrot.slane %v6204, 1
    %v6209 = vsub.f32 %v6195, %v6204
    %v6210 = vsub.f32 %v6196, %v6206
    %v6211 = vmul.f32 %v6209, 1.442695
    %v6212 = vpow.pop %v6211
    %v6213 = vmul.f32 %v6210, 1.442695
    %v6214 = vpow.pop %v6213
    %v6217 = vrot.slane %v6214, 7
    %v6218 = vsel %vm2926, %v6217, %v6212
    %v6220 = vsel %vm2929, %v6218, 0.0
    %6221 = vadd.xlane.f32.xlu0 %v6220
    %v6222 = vpop.xlane.xlu0 %6221
    %v6223 = vrcp.pop %v6222
    %v6225 = vrot.slane %v6223, 1
    %v6228 = vmul.f32 %v6212, %v6223
    %v6229 = vmul.f32 %v6214, %v6225
    %v6230 = vpack.c.bf16 %v6228, %v6228
    %v6231 = vpack.c.bf16 %v6229, %v6229
    %v6233 = vsel %vm2960, %v6230, 0
    %6235 = vmatprep.subr.bf16.mxu0 0
    %6236 = vmatpush1.bf16.msra.mxu0 0
    %6237 = vmatprep.subr.bf16.mxu0 0
    %6238 = vmatpush1.bf16.msra.mxu0 0
    %6239 = vmatprep.subr.bf16.mxu0 0
    %6240 = vmatpush1.bf16.msra.mxu0 0
    %6241 = vmatprep.subr.bf16.mxu0 0
    %6242 = vmatpush1.bf16.msra.mxu0 0
    %6243 = vmatprep.subr.bf16.mxu0 0
    %6244 = vmatpush1.bf16.msra.mxu0 0
    %6245 = vmatprep.subr.bf16.mxu0 0
    %6246 = vmatpush1.bf16.msra.mxu0 0
    %6247 = vmatprep.subr.bf16.mxu0 0
    %6248 = vmatpush1.bf16.msra.mxu0 0
    %6249 = vmatprep.subr.bf16.mxu0 0
    %6250 = vmatpush1.bf16.msra.mxu0 %v2965
    %6251 = vmatprep.subr.bf16.mxu0 0
    %6252 = vmatpush2.bf16.msra.mxu0 0
    %6253 = vmatprep.subr.bf16.mxu0 0
    %6254 = vmatpush2.bf16.msra.mxu0 0
    %6255 = vmatprep.subr.bf16.mxu0 0
    %6256 = vmatpush2.bf16.msra.mxu0 0
    %6257 = vmatprep.subr.bf16.mxu0 0
    %6258 = vmatpush2.bf16.msra.mxu0 0
    %6259 = vmatprep.subr.bf16.mxu0 0
    %6260 = vmatpush2.bf16.msra.mxu0 0
    %6261 = vmatprep.subr.bf16.mxu0 0
    %6262 = vmatpush2.bf16.msra.mxu0 0
    %6263 = vmatprep.subr.bf16.mxu0 0
    %6264 = vmatpush2.bf16.msra.mxu0 0
    %6265 = vmatprep.subr.bf16.mxu0 0
    %6266 = vmatpush2.bf16.msra.mxu0 0
    %6267 = vmatprep.mubr.bf16.mxu0 0
    %6268 = vmatmul.mubr.bf16.gmra.mxu0 %v6233
    %v6269 = vpop.f32.mrf.mxu0
    %v6270 = vadd.f32 0.0, %v6269
    %v6271 = vpop.f32.mrf.mxu0
    %v6272 = vpop.f32.mrf.mxu0
    %v6273 = vpop.f32.mrf.mxu0
    %6274 = vdwg.mxu0
    %v6276 = vsel %vm2960, %v6231, 0
    %6278 = vmatprep.subr.bf16.mxu0 0
    %6279 = vmatpush1.bf16.msra.mxu0 0
    %6280 = vmatprep.subr.bf16.mxu0 0
    %6281 = vmatpush1.bf16.msra.mxu0 0
    %6282 = vmatprep.subr.bf16.mxu0 0
    %6283 = vmatpush1.bf16.msra.mxu0 0
    %6284 = vmatprep.subr.bf16.mxu0 0
    %6285 = vmatpush1.bf16.msra.mxu0 0
    %6286 = vmatprep.subr.bf16.mxu0 0
    %6287 = vmatpush1.bf16.msra.mxu0 0
    %6288 = vmatprep.subr.bf16.mxu0 0
    %6289 = vmatpush1.bf16.msra.mxu0 0
    %6290 = vmatprep.subr.bf16.mxu0 0
    %6291 = vmatpush1.bf16.msra.mxu0 0
    %6292 = vmatprep.subr.bf16.mxu0 0
    %6293 = vmatpush1.bf16.msra.mxu0 %v3011
    %6294 = vmatprep.subr.bf16.mxu0 0
    %6295 = vmatpush2.bf16.msra.mxu0 0
    %6296 = vmatprep.subr.bf16.mxu0 0
    %6297 = vmatpush2.bf16.msra.mxu0 0
    %6298 = vmatprep.subr.bf16.mxu0 0
    %6299 = vmatpush2.bf16.msra.mxu0 0
    %6300 = vmatprep.subr.bf16.mxu0 0
    %6301 = vmatpush2.bf16.msra.mxu0 0
    %6302 = vmatprep.subr.bf16.mxu0 0
    %6303 = vmatpush2.bf16.msra.mxu0 0
    %6304 = vmatprep.subr.bf16.mxu0 0
    %6305 = vmatpush2.bf16.msra.mxu0 0
    %6306 = vmatprep.subr.bf16.mxu0 0
    %6307 = vmatpush2.bf16.msra.mxu0 0
    %6308 = vmatprep.subr.bf16.mxu0 0
    %6309 = vmatpush2.bf16.msra.mxu0 0
    %6310 = vmatprep.mubr.bf16.mxu0 0
    %6311 = vmatmul.mubr.bf16.gmra.mxu0 %v6276
    %v6312 = vpop.f32.mrf.mxu0
    %v6313 = vadd.f32 0.0, %v6312
    %v6314 = vpop.f32.mrf.mxu0
    %v6315 = vpop.f32.mrf.mxu0
    %v6316 = vpop.f32.mrf.mxu0
    %6317 = vdwg.mxu0
    %v6318 = vadd.f32 %v6270, %v351
    %v6319 = vadd.f32 %v6313, %v351
    %v6320 = vpack.c.bf16 %v6075, %v6075
    %6322 = vrot.lane.b32.xlu0 %v6320, 96
    %v6323 = vpop.permute.xlu0 %6322
    %v6325 = vsel %vm638, %v6323, 0
    %6327 = vmatprep.subr.bf16.mxu0 0
    %6328 = vmatpush1.bf16.msra.mxu0 0
    %6329 = vmatprep.subr.bf16.mxu0 0
    %6330 = vmatpush1.bf16.msra.mxu0 0
    %6331 = vmatprep.subr.bf16.mxu0 0
    %6332 = vmatpush1.bf16.msra.mxu0 0
    %6333 = vmatprep.subr.bf16.mxu0 0
    %6334 = vmatpush1.bf16.msra.mxu0 0
    %6335 = vmatprep.subr.bf16.mxu0 0
    %6336 = vmatpush1.bf16.msra.mxu0 0
    %6337 = vmatprep.subr.bf16.mxu0 0
    %6338 = vmatpush1.bf16.msra.mxu0 0
    %6339 = vmatprep.subr.bf16.mxu0 0
    %6340 = vmatpush1.bf16.msra.mxu0 %v263
    %6341 = vmatprep.subr.bf16.mxu0 0
    %6342 = vmatpush1.bf16.msra.mxu0 %v262
    %6343 = vmatprep.subr.bf16.mxu0 0
    %6344 = vmatpush2.bf16.msra.mxu0 0
    %6345 = vmatprep.subr.bf16.mxu0 0
    %6346 = vmatpush2.bf16.msra.mxu0 0
    %6347 = vmatprep.subr.bf16.mxu0 0
    %6348 = vmatpush2.bf16.msra.mxu0 0
    %6349 = vmatprep.subr.bf16.mxu0 0
    %6350 = vmatpush2.bf16.msra.mxu0 0
    %6351 = vmatprep.subr.bf16.mxu0 0
    %6352 = vmatpush2.bf16.msra.mxu0 0
    %6353 = vmatprep.subr.bf16.mxu0 0
    %6354 = vmatpush2.bf16.msra.mxu0 0
    %6355 = vmatprep.subr.bf16.mxu0 0
    %6356 = vmatpush2.bf16.msra.mxu0 0
    %6357 = vmatprep.subr.bf16.mxu0 0
    %6358 = vmatpush2.bf16.msra.mxu0 0
    %6359 = vmatprep.mubr.bf16.mxu0 0
    %6360 = vmatmul.mubr.bf16.gmra.mxu0 %v6325
    %v6361 = vpop.f32.mrf.mxu0
    %v6362 = vadd.f32 0.0, %v6361
    %v6363 = vpop.f32.mrf.mxu0
    %v6364 = vpop.f32.mrf.mxu0
    %v6365 = vpop.f32.mrf.mxu0
    %6366 = vdwg.mxu0
    %v6368 = vrot.slane %v6362, 1
    %v6371 = vadd.f32 %v6318, %v6362
    %v6372 = vadd.f32 %v6319, %v6368
    %v6373 = vxor.u32 %v6371, 2147483648
    %v6374 = vxor.u32 %v6372, 2147483648
    %v6375 = vmul.f32 %v6373, 1.442695
    %v6376 = vpow.pop %v6375
    %v6377 = vmul.f32 %v6374, 1.442695
    %v6378 = vpow.pop %v6377
    %v6379 = vadd.f32 %v6376, 1.0
    %v6380 = vadd.f32 %v6378, 1.0
    %v6381 = vrcp.pop %v6379
    %v6382 = vmul.f32 1.0, %v6381
    %v6383 = vrcp.pop %v6380
    %v6384 = vmul.f32 1.0, %v6383
    %v6385 = vadd.f32 %v6362, %v343
    %v6387 = vrot.slane %v6385, 1
    %6388 = vrot.lane.b32.xlu0 %v6385, 64
    %v6389 = vpop.permute.xlu0 %6388
    %6390 = vrot.lane.b32.xlu0 %v6387, 64
    %v6391 = vpop.permute.xlu0 %6390
    %v6394 = vmul.f32 %v6382, %v6389
    %v6395 = vmul.f32 %v6384, %v6391
    %6398 = vrot.lane.b32.xlu0 %v6394, 64
    %v6399 = vpop.permute.xlu0 %6398
    %6400 = vrot.lane.b32.xlu0 %v6395, 64
    %v6401 = vpop.permute.xlu0 %6400
    %v6404 = vadd.f32 %v6318, %v6399
    %v6405 = vadd.f32 %v6319, %v6401
    %v6406 = vtanh.pop %v6404
    %v6407 = vtanh.pop %v6405
    %v6408 = vsub.f32 1.0, %v6382
    %v6409 = vsub.f32 1.0, %v6384
    %6412 = vrot.lane.b32.xlu0 %v6406, 96
    %v6413 = vpop.permute.xlu0 %6412
    %6414 = vrot.lane.b32.xlu0 %v6407, 96
    %v6415 = vpop.permute.xlu0 %6414
    %v6418 = vmul.f32 %v6408, %v6413
    %v6419 = vmul.f32 %v6409, %v6415
    %v6420 = vrot.slane %v6075, 1
    %v6423 = vmul.f32 %v6382, %v6075
    %v6424 = vmul.f32 %v6384, %v6420
    %v6425 = vadd.f32 %v6418, %v6423
    %v6426 = vadd.f32 %v6419, %v6424
    %v6427 = vpack.c.bf16 %v6425, %v6425
    %v6428 = vpack.c.bf16 %v6426, %v6426
    %v6431 = vunpack.c.l.b16 %v6427
    %v6432 = vunpack.c.l.b16 %v6428
    %v6433 = vrot.slane %v6432, 7
    %v6434 = vsel %vm2926, %v6433, %v6431
    %v6435 = vpack.c.b16 %v6434, %v6434
    %6436 = vrot.lane.b32.xlu0 %v6435, 96
    %v6437 = vpop.permute.xlu0 %6436
    %v6439 = vsel %vm638, %v6437, 0
    %6441 = vmatprep.subr.bf16.mxu0 0
    %6442 = vmatpush1.bf16.msra.mxu0 0
    %6443 = vmatprep.subr.bf16.mxu0 0
    %6444 = vmatpush1.bf16.msra.mxu0 0
    %6445 = vmatprep.subr.bf16.mxu0 0
    %6446 = vmatpush1.bf16.msra.mxu0 0
    %6447 = vmatprep.subr.bf16.mxu0 0
    %6448 = vmatpush1.bf16.msra.mxu0 0
    %6449 = vmatprep.subr.bf16.mxu0 0
    %6450 = vmatpush1.bf16.msra.mxu0 0
    %6451 = vmatprep.subr.bf16.mxu0 0
    %6452 = vmatpush1.bf16.msra.mxu0 0
    %6453 = vmatprep.subr.bf16.mxu0 0
    %6454 = vmatpush1.bf16.msra.mxu0 %v275
    %6455 = vmatprep.subr.bf16.mxu0 0
    %6456 = vmatpush1.bf16.msra.mxu0 %v274
    %6457 = vmatprep.subr.bf16.mxu0 0
    %6458 = vmatpush2.bf16.msra.mxu0 0
    %6459 = vmatprep.subr.bf16.mxu0 0
    %6460 = vmatpush2.bf16.msra.mxu0 0
    %6461 = vmatprep.subr.bf16.mxu0 0
    %6462 = vmatpush2.bf16.msra.mxu0 0
    %6463 = vmatprep.subr.bf16.mxu0 0
    %6464 = vmatpush2.bf16.msra.mxu0 0
    %6465 = vmatprep.subr.bf16.mxu0 0
    %6466 = vmatpush2.bf16.msra.mxu0 0
    %6467 = vmatprep.subr.bf16.mxu0 0
    %6468 = vmatpush2.bf16.msra.mxu0 0
    %6469 = vmatprep.subr.bf16.mxu0 0
    %6470 = vmatpush2.bf16.msra.mxu0 0
    %6471 = vmatprep.subr.bf16.mxu0 0
    %6472 = vmatpush2.bf16.msra.mxu0 0
    %6473 = vmatprep.mubr.bf16.mxu0 0
    %6474 = vmatmul.mubr.bf16.gmra.mxu0 %v6439
    %v6475 = vpop.f32.mrf.mxu0
    %v6476 = vadd.f32 %v357, %v6475
    %v6477 = vpop.f32.mrf.mxu0
    %v6478 = vpop.f32.mrf.mxu0
    %v6479 = vpop.f32.mrf.mxu0
    %6480 = vdwg.mxu0
    %v6481 = vsel %vm3216, %v6476, -inf
    %6482 = vmax.xlane.f32.xlu0 %v6481
    %v6483 = vpop.xlane.xlu0 %6482
    %vm6484 = vcmp.eq.f32.partialorder %v6476, %v6483
    %v6485 = vsel %vm6484, %v368, 16
    %v6486 = vsel %vm3216, %v6485, 2147483647
    %v6487 = vand.u32 %v6486, 65535
    %v6488 = vshra.s32 %v6486, 16
    %v6489 = vcvt.s32.f32 %v6487
    %v6490 = vcvt.s32.f32 %v6488
    %6491 = vmin.xlane.f32.xlu0 %v6490
    %v6492 = vpop.xlane.xlu0 %6491
    %vm6493 = vcmp.eq.f32.partialorder %v6490, %v6492
    %v6494 = vsel %vm6493, %v6489, inf
    %6495 = vmin.xlane.f32.xlu0 %v6494
    %v6496 = vpop.xlane.xlu0 %6495
    %v6497 = vcvt.f32.s32 %v6496
    %v6498 = vcvt.f32.s32 %v6492
    %v6499 = vshll.u32 %v6498, 16
    %v6500 = vadd.s32 %v6499, %v6497
    %vm6501 = vcmp.eq.s32.totalorder %v368, %v6500
    %v6502 = vsel %vm6501, 1, 0
    %v6503 = vcvt.s32.f32 %v6502
    %v6504 = vpack.c.bf16 %v6503, %v6503
    %v6506 = vsel %vm455, %v6504, 0
    %6508 = vmatprep.subr.bf16.mxu0 0
    %6509 = vmatpush1.bf16.msra.mxu0 0
    %6510 = vmatprep.subr.bf16.mxu0 0
    %6511 = vmatpush1.bf16.msra.mxu0 0
    %6512 = vmatprep.subr.bf16.mxu0 0
    %6513 = vmatpush1.bf16.msra.mxu0 0
    %6514 = vmatprep.subr.bf16.mxu0 0
    %6515 = vmatpush1.bf16.msra.mxu0 0
    %6516 = vmatprep.subr.bf16.mxu0 0
    %6517 = vmatpush1.bf16.msra.mxu0 0
    %6518 = vmatprep.subr.bf16.mxu0 0
    %6519 = vmatpush1.bf16.msra.mxu0 0
    %6520 = vmatprep.subr.bf16.mxu0 0
    %6521 = vmatpush1.bf16.msra.mxu0 0
    %6522 = vmatprep.subr.bf16.mxu0 0
    %6523 = vmatpush1.bf16.msra.mxu0 %v2679
    %6524 = vmatprep.subr.bf16.mxu0 0
    %6525 = vmatpush2.bf16.msra.mxu0 0
    %6526 = vmatprep.subr.bf16.mxu0 0
    %6527 = vmatpush2.bf16.msra.mxu0 0
    %6528 = vmatprep.subr.bf16.mxu0 0
    %6529 = vmatpush2.bf16.msra.mxu0 0
    %6530 = vmatprep.subr.bf16.mxu0 0
    %6531 = vmatpush2.bf16.msra.mxu0 0
    %6532 = vmatprep.subr.bf16.mxu0 0
    %6533 = vmatpush2.bf16.msra.mxu0 0
    %6534 = vmatprep.subr.bf16.mxu0 0
    %6535 = vmatpush2.bf16.msra.mxu0 0
    %6536 = vmatprep.subr.bf16.mxu0 0
    %6537 = vmatpush2.bf16.msra.mxu0 0
    %6538 = vmatprep.subr.bf16.mxu0 0
    %6539 = vmatpush2.bf16.msra.mxu0 0
    %6540 = vmatprep.mubr.bf16.mxu0 0
    %6541 = vmatmul.mubr.bf16.gmra.mxu0 %v6506
    %v6542 = vpop.f32.mrf.mxu0
    %v6543 = vadd.f32 0.0, %v6542
    %v6544 = vpop.f32.mrf.mxu0
    %v6545 = vpop.f32.mrf.mxu0
    %v6546 = vpop.f32.mrf.mxu0
    %6547 = vdwg.mxu0
    %6548 = vmatprep.subr.bf16.mxu0 0
    %6549 = vmatpush1.bf16.msra.mxu0 0
    %6550 = vmatprep.subr.bf16.mxu0 0
    %6551 = vmatpush1.bf16.msra.mxu0 0
    %6552 = vmatprep.subr.bf16.mxu0 0
    %6553 = vmatpush1.bf16.msra.mxu0 0
    %6554 = vmatprep.subr.bf16.mxu0 0
    %6555 = vmatpush1.bf16.msra.mxu0 0
    %6556 = vmatprep.subr.bf16.mxu0 0
    %6557 = vmatpush1.bf16.msra.mxu0 0
    %6558 = vmatprep.subr.bf16.mxu0 0
    %6559 = vmatpush1.bf16.msra.mxu0 0
    %6560 = vmatprep.subr.bf16.mxu0 0
    %6561 = vmatpush1.bf16.msra.mxu0 %v257
    %6562 = vmatprep.subr.bf16.mxu0 0
    %6563 = vmatpush1.bf16.msra.mxu0 %v256
    %6564 = vmatprep.subr.bf16.mxu0 0
    %6565 = vmatpush2.bf16.msra.mxu0 0
    %6566 = vmatprep.subr.bf16.mxu0 0
    %6567 = vmatpush2.bf16.msra.mxu0 0
    %6568 = vmatprep.subr.bf16.mxu0 0
    %6569 = vmatpush2.bf16.msra.mxu0 0
    %6570 = vmatprep.subr.bf16.mxu0 0
    %6571 = vmatpush2.bf16.msra.mxu0 0
    %6572 = vmatprep.subr.bf16.mxu0 0
    %6573 = vmatpush2.bf16.msra.mxu0 0
    %6574 = vmatprep.subr.bf16.mxu0 0
    %6575 = vmatpush2.bf16.msra.mxu0 0
    %6576 = vmatprep.subr.bf16.mxu0 0
    %6577 = vmatpush2.bf16.msra.mxu0 0
    %6578 = vmatprep.subr.bf16.mxu0 0
    %6579 = vmatpush2.bf16.msra.mxu0 0
    %6580 = vmatprep.mubr.bf16.mxu0 0
    %6581 = vmatmul.mubr.bf16.gmra.mxu0 %v6439
    %v6582 = vpop.f32.mrf.mxu0
    %v6583 = vadd.f32 0.0, %v6582
    %v6584 = vpop.f32.mrf.mxu0
    %v6585 = vpop.f32.mrf.mxu0
    %v6586 = vpop.f32.mrf.mxu0
    %6587 = vdwg.mxu0
    %v6588 = vadd.f32 %v6543, %v6583
    %v6589 = vxor.u32 %v6588, 2147483648
    %v6590 = vmul.f32 %v6589, 1.442695
    %v6591 = vpow.pop %v6590
    %v6592 = vadd.f32 %v6591, 1.0
    %v6593 = vrcp.pop %v6592
    %v6594 = vmul.f32 1.0, %v6593
    %v6595 = vadd.f32 %v6583, %v336
    %6597 = vrot.lane.b32.xlu0 %v6595, 64
    %v6598 = vpop.permute.xlu0 %6597
    %v6600 = vmul.f32 %v6594, %v6598
    %6602 = vrot.lane.b32.xlu0 %v6600, 64
    %v6603 = vpop.permute.xlu0 %6602
    %v6605 = vadd.f32 %v6543, %v6603
    %v6606 = vtanh.pop %v6605
    %v6607 = vsub.f32 1.0, %v6594
    %6609 = vrot.lane.b32.xlu0 %v6606, 96
    %v6610 = vpop.permute.xlu0 %6609
    %v6612 = vmul.f32 %v6607, %v6610
    %v6615 = vrot.slane %v6426, 7
    %v6616 = vsel %vm2926, %v6615, %v6425
    %v6618 = vmul.f32 %v6594, %v6616
    %v6619 = vadd.f32 %v6612, %v6618
    %v6622 = vunpack.c.l.s4 1966171168
    %v6623 = vunpack.c.0.s8 %v6622
    %v6624 = vlaneseq
    %v6625 = vshrl.u32 %v6624, 7
    %v6626 = vsub.s32 %v6623, %v6625
    %v6627 = vrot.slane %v6619, %v6626
    %v6628 = vcombine.high %v6627, %v6627
    %v6630 = vunpack.c.l.s4 1966171168
    %v6631 = vunpack.c.0.s8 %v6630
    %v6632 = vlaneseq
    %v6633 = vshrl.u32 %v6632, 7
    %v6634 = vsub.s32 %v6631, %v6633
    %v6635 = vrot.slane %v6627, %v6634
    %v6637 = vunpack.c.l.s4 1966171168
    %v6638 = vunpack.c.0.s8 %v6637
    %v6639 = vlaneseq
    %v6640 = vshrl.u32 %v6639, 7
    %v6641 = vsub.s32 %v6638, %v6640
    %v6642 = vrot.slane %v6628, %v6641
    %v6645 = vpack.c.bf16 %v6635, %v6635
    %v6646 = vpack.c.bf16 %v6642, %v6642
    %6648 = vrot.lane.b32.xlu0 %v6645, 96
    %v6649 = vpop.permute.xlu0 %6648
    %v6651 = vsel %vm638, %v6649, 0
    %6653 = vmatprep.subr.bf16.mxu0 0
    %6654 = vmatpush1.bf16.msra.mxu0 0
    %6655 = vmatprep.subr.bf16.mxu0 0
    %6656 = vmatpush1.bf16.msra.mxu0 0
    %6657 = vmatprep.subr.bf16.mxu0 0
    %6658 = vmatpush1.bf16.msra.mxu0 0
    %6659 = vmatprep.subr.bf16.mxu0 0
    %6660 = vmatpush1.bf16.msra.mxu0 0
    %6661 = vmatprep.subr.bf16.mxu0 0
    %6662 = vmatpush1.bf16.msra.mxu0 0
    %6663 = vmatprep.subr.bf16.mxu0 0
    %6664 = vmatpush1.bf16.msra.mxu0 0
    %6665 = vmatprep.subr.bf16.mxu0 0
    %6666 = vmatpush1.bf16.msra.mxu0 %v2298
    %6667 = vmatprep.subr.bf16.mxu0 0
    %6668 = vmatpush1.bf16.msra.mxu0 %v2297
    %6669 = vmatprep.subr.bf16.mxu0 0
    %6670 = vmatpush2.bf16.msra.mxu0 0
    %6671 = vmatprep.subr.bf16.mxu0 0
    %6672 = vmatpush2.bf16.msra.mxu0 0
    %6673 = vmatprep.subr.bf16.mxu0 0
    %6674 = vmatpush2.bf16.msra.mxu0 0
    %6675 = vmatprep.subr.bf16.mxu0 0
    %6676 = vmatpush2.bf16.msra.mxu0 0
    %6677 = vmatprep.subr.bf16.mxu0 0
    %6678 = vmatpush2.bf16.msra.mxu0 0
    %6679 = vmatprep.subr.bf16.mxu0 0
    %6680 = vmatpush2.bf16.msra.mxu0 0
    %6681 = vmatprep.subr.bf16.mxu0 0
    %6682 = vmatpush2.bf16.msra.mxu0 0
    %6683 = vmatprep.subr.bf16.mxu0 0
    %6684 = vmatpush2.bf16.msra.mxu0 0
    %6685 = vmatprep.mubr.bf16.mxu0 0
    %6686 = vmatmul.mubr.bf16.gmra.mxu0 %v6651
    %v6687 = vpop.f32.mrf.mxu0
    %v6688 = vadd.f32 0.0, %v6687
    %v6689 = vpop.f32.mrf.mxu0
    %v6690 = vpop.f32.mrf.mxu0
    %v6691 = vpop.f32.mrf.mxu0
    %6692 = vdwg.mxu0
    %6694 = vrot.lane.b32.xlu0 %v6646, 96
    %v6695 = vpop.permute.xlu0 %6694
    %v6697 = vsel %vm638, %v6695, 0
    %6699 = vmatprep.subr.bf16.mxu0 0
    %6700 = vmatpush1.bf16.msra.mxu0 0
    %6701 = vmatprep.subr.bf16.mxu0 0
    %6702 = vmatpush1.bf16.msra.mxu0 0
    %6703 = vmatprep.subr.bf16.mxu0 0
    %6704 = vmatpush1.bf16.msra.mxu0 0
    %6705 = vmatprep.subr.bf16.mxu0 0
    %6706 = vmatpush1.bf16.msra.mxu0 0
    %6707 = vmatprep.subr.bf16.mxu0 0
    %6708 = vmatpush1.bf16.msra.mxu0 0
    %6709 = vmatprep.subr.bf16.mxu0 0
    %6710 = vmatpush1.bf16.msra.mxu0 0
    %6711 = vmatprep.subr.bf16.mxu0 0
    %6712 = vmatpush1.bf16.msra.mxu0 %v2300
    %6713 = vmatprep.subr.bf16.mxu0 0
    %6714 = vmatpush1.bf16.msra.mxu0 %v2299
    %6715 = vmatprep.subr.bf16.mxu0 0
    %6716 = vmatpush2.bf16.msra.mxu0 0
    %6717 = vmatprep.subr.bf16.mxu0 0
    %6718 = vmatpush2.bf16.msra.mxu0 0
    %6719 = vmatprep.subr.bf16.mxu0 0
    %6720 = vmatpush2.bf16.msra.mxu0 0
    %6721 = vmatprep.subr.bf16.mxu0 0
    %6722 = vmatpush2.bf16.msra.mxu0 0
    %6723 = vmatprep.subr.bf16.mxu0 0
    %6724 = vmatpush2.bf16.msra.mxu0 0
    %6725 = vmatprep.subr.bf16.mxu0 0
    %6726 = vmatpush2.bf16.msra.mxu0 0
    %6727 = vmatprep.subr.bf16.mxu0 0
    %6728 = vmatpush2.bf16.msra.mxu0 0
    %6729 = vmatprep.subr.bf16.mxu0 0
    %6730 = vmatpush2.bf16.msra.mxu0 0
    %6731 = vmatprep.mubr.bf16.mxu0 0
    %6732 = vmatmul.mubr.bf16.gmra.mxu0 %v6697
    %v6733 = vpop.f32.mrf.mxu0
    %v6734 = vadd.f32 0.0, %v6733
    %v6735 = vpop.f32.mrf.mxu0
    %v6736 = vpop.f32.mrf.mxu0
    %v6737 = vpop.f32.mrf.mxu0
    %6738 = vdwg.mxu0
    %v6739 = vmul.f32 %v6688, 0.17677669
    %v6740 = vmul.f32 %v6734, 0.17677669
    %v6743 = vrot.slane %v6740, 7
    %v6744 = vsel %vm2926, %v6743, %v6739
    %v6746 = vsel %vm2929, %v6744, -inf
    %6747 = vmax.xlane.f32.xlu0 %v6746
    %v6748 = vpop.xlane.xlu0 %6747
    %v6750 = vrot.slane %v6748, 1
    %v6753 = vsub.f32 %v6739, %v6748
    %v6754 = vsub.f32 %v6740, %v6750
    %v6755 = vmul.f32 %v6753, 1.442695
    %v6756 = vpow.pop %v6755
    %v6757 = vmul.f32 %v6754, 1.442695
    %v6758 = vpow.pop %v6757
    %v6761 = vrot.slane %v6758, 7
    %v6762 = vsel %vm2926, %v6761, %v6756
    %v6764 = vsel %vm2929, %v6762, 0.0
    %6765 = vadd.xlane.f32.xlu0 %v6764
    %v6766 = vpop.xlane.xlu0 %6765
    %v6767 = vrcp.pop %v6766
    %v6769 = vrot.slane %v6767, 1
    %v6772 = vmul.f32 %v6756, %v6767
    %v6773 = vmul.f32 %v6758, %v6769
    %v6774 = vpack.c.bf16 %v6772, %v6772
    %v6775 = vpack.c.bf16 %v6773, %v6773
    %v6777 = vsel %vm2960, %v6774, 0
    %6779 = vmatprep.subr.bf16.mxu0 0
    %6780 = vmatpush1.bf16.msra.mxu0 0
    %6781 = vmatprep.subr.bf16.mxu0 0
    %6782 = vmatpush1.bf16.msra.mxu0 0
    %6783 = vmatprep.subr.bf16.mxu0 0
    %6784 = vmatpush1.bf16.msra.mxu0 0
    %6785 = vmatprep.subr.bf16.mxu0 0
    %6786 = vmatpush1.bf16.msra.mxu0 0
    %6787 = vmatprep.subr.bf16.mxu0 0
    %6788 = vmatpush1.bf16.msra.mxu0 0
    %6789 = vmatprep.subr.bf16.mxu0 0
    %6790 = vmatpush1.bf16.msra.mxu0 0
    %6791 = vmatprep.subr.bf16.mxu0 0
    %6792 = vmatpush1.bf16.msra.mxu0 0
    %6793 = vmatprep.subr.bf16.mxu0 0
    %6794 = vmatpush1.bf16.msra.mxu0 %v2965
    %6795 = vmatprep.subr.bf16.mxu0 0
    %6796 = vmatpush2.bf16.msra.mxu0 0
    %6797 = vmatprep.subr.bf16.mxu0 0
    %6798 = vmatpush2.bf16.msra.mxu0 0
    %6799 = vmatprep.subr.bf16.mxu0 0
    %6800 = vmatpush2.bf16.msra.mxu0 0
    %6801 = vmatprep.subr.bf16.mxu0 0
    %6802 = vmatpush2.bf16.msra.mxu0 0
    %6803 = vmatprep.subr.bf16.mxu0 0
    %6804 = vmatpush2.bf16.msra.mxu0 0
    %6805 = vmatprep.subr.bf16.mxu0 0
    %6806 = vmatpush2.bf16.msra.mxu0 0
    %6807 = vmatprep.subr.bf16.mxu0 0
    %6808 = vmatpush2.bf16.msra.mxu0 0
    %6809 = vmatprep.subr.bf16.mxu0 0
    %6810 = vmatpush2.bf16.msra.mxu0 0
    %6811 = vmatprep.mubr.bf16.mxu0 0
    %6812 = vmatmul.mubr.bf16.gmra.mxu0 %v6777
    %v6813 = vpop.f32.mrf.mxu0
    %v6814 = vadd.f32 0.0, %v6813
    %v6815 = vpop.f32.mrf.mxu0
    %v6816 = vpop.f32.mrf.mxu0
    %v6817 = vpop.f32.mrf.mxu0
    %6818 = vdwg.mxu0
    %v6820 = vsel %vm2960, %v6775, 0
    %6822 = vmatprep.subr.bf16.mxu0 0
    %6823 = vmatpush1.bf16.msra.mxu0 0
    %6824 = vmatprep.subr.bf16.mxu0 0
    %6825 = vmatpush1.bf16.msra.mxu0 0
    %6826 = vmatprep.subr.bf16.mxu0 0
    %6827 = vmatpush1.bf16.msra.mxu0 0
    %6828 = vmatprep.subr.bf16.mxu0 0
    %6829 = vmatpush1.bf16.msra.mxu0 0
    %6830 = vmatprep.subr.bf16.mxu0 0
    %6831 = vmatpush1.bf16.msra.mxu0 0
    %6832 = vmatprep.subr.bf16.mxu0 0
    %6833 = vmatpush1.bf16.msra.mxu0 0
    %6834 = vmatprep.subr.bf16.mxu0 0
    %6835 = vmatpush1.bf16.msra.mxu0 0
    %6836 = vmatprep.subr.bf16.mxu0 0
    %6837 = vmatpush1.bf16.msra.mxu0 %v3011
    %6838 = vmatprep.subr.bf16.mxu0 0
    %6839 = vmatpush2.bf16.msra.mxu0 0
    %6840 = vmatprep.subr.bf16.mxu0 0
    %6841 = vmatpush2.bf16.msra.mxu0 0
    %6842 = vmatprep.subr.bf16.mxu0 0
    %6843 = vmatpush2.bf16.msra.mxu0 0
    %6844 = vmatprep.subr.bf16.mxu0 0
    %6845 = vmatpush2.bf16.msra.mxu0 0
    %6846 = vmatprep.subr.bf16.mxu0 0
    %6847 = vmatpush2.bf16.msra.mxu0 0
    %6848 = vmatprep.subr.bf16.mxu0 0
    %6849 = vmatpush2.bf16.msra.mxu0 0
    %6850 = vmatprep.subr.bf16.mxu0 0
    %6851 = vmatpush2.bf16.msra.mxu0 0
    %6852 = vmatprep.subr.bf16.mxu0 0
    %6853 = vmatpush2.bf16.msra.mxu0 0
    %6854 = vmatprep.mubr.bf16.mxu0 0
    %6855 = vmatmul.mubr.bf16.gmra.mxu0 %v6820
    %v6856 = vpop.f32.mrf.mxu0
    %v6857 = vadd.f32 0.0, %v6856
    %v6858 = vpop.f32.mrf.mxu0
    %v6859 = vpop.f32.mrf.mxu0
    %v6860 = vpop.f32.mrf.mxu0
    %6861 = vdwg.mxu0
    %v6862 = vadd.f32 %v6814, %v351
    %v6863 = vadd.f32 %v6857, %v351
    %v6864 = vpack.c.bf16 %v6619, %v6619
    %6866 = vrot.lane.b32.xlu0 %v6864, 96
    %v6867 = vpop.permute.xlu0 %6866
    %v6869 = vsel %vm638, %v6867, 0
    %6871 = vmatprep.subr.bf16.mxu0 0
    %6872 = vmatpush1.bf16.msra.mxu0 0
    %6873 = vmatprep.subr.bf16.mxu0 0
    %6874 = vmatpush1.bf16.msra.mxu0 0
    %6875 = vmatprep.subr.bf16.mxu0 0
    %6876 = vmatpush1.bf16.msra.mxu0 0
    %6877 = vmatprep.subr.bf16.mxu0 0
    %6878 = vmatpush1.bf16.msra.mxu0 0
    %6879 = vmatprep.subr.bf16.mxu0 0
    %6880 = vmatpush1.bf16.msra.mxu0 0
    %6881 = vmatprep.subr.bf16.mxu0 0
    %6882 = vmatpush1.bf16.msra.mxu0 0
    %6883 = vmatprep.subr.bf16.mxu0 0
    %6884 = vmatpush1.bf16.msra.mxu0 %v263
    %6885 = vmatprep.subr.bf16.mxu0 0
    %6886 = vmatpush1.bf16.msra.mxu0 %v262
    %6887 = vmatprep.subr.bf16.mxu0 0
    %6888 = vmatpush2.bf16.msra.mxu0 0
    %6889 = vmatprep.subr.bf16.mxu0 0
    %6890 = vmatpush2.bf16.msra.mxu0 0
    %6891 = vmatprep.subr.bf16.mxu0 0
    %6892 = vmatpush2.bf16.msra.mxu0 0
    %6893 = vmatprep.subr.bf16.mxu0 0
    %6894 = vmatpush2.bf16.msra.mxu0 0
    %6895 = vmatprep.subr.bf16.mxu0 0
    %6896 = vmatpush2.bf16.msra.mxu0 0
    %6897 = vmatprep.subr.bf16.mxu0 0
    %6898 = vmatpush2.bf16.msra.mxu0 0
    %6899 = vmatprep.subr.bf16.mxu0 0
    %6900 = vmatpush2.bf16.msra.mxu0 0
    %6901 = vmatprep.subr.bf16.mxu0 0
    %6902 = vmatpush2.bf16.msra.mxu0 0
    %6903 = vmatprep.mubr.bf16.mxu0 0
    %6904 = vmatmul.mubr.bf16.gmra.mxu0 %v6869
    %v6905 = vpop.f32.mrf.mxu0
    %v6906 = vadd.f32 0.0, %v6905
    %v6907 = vpop.f32.mrf.mxu0
    %v6908 = vpop.f32.mrf.mxu0
    %v6909 = vpop.f32.mrf.mxu0
    %6910 = vdwg.mxu0
    %v6912 = vrot.slane %v6906, 1
    %v6915 = vadd.f32 %v6862, %v6906
    %v6916 = vadd.f32 %v6863, %v6912
    %v6917 = vxor.u32 %v6915, 2147483648
    %v6918 = vxor.u32 %v6916, 2147483648
    %v6919 = vmul.f32 %v6917, 1.442695
    %v6920 = vpow.pop %v6919
    %v6921 = vmul.f32 %v6918, 1.442695
    %v6922 = vpow.pop %v6921
    %v6923 = vadd.f32 %v6920, 1.0
    %v6924 = vadd.f32 %v6922, 1.0
    %v6925 = vrcp.pop %v6923
    %v6926 = vmul.f32 1.0, %v6925
    %v6927 = vrcp.pop %v6924
    %v6928 = vmul.f32 1.0, %v6927
    %v6929 = vadd.f32 %v6906, %v343
    %v6931 = vrot.slane %v6929, 1
    %6932 = vrot.lane.b32.xlu0 %v6929, 64
    %v6933 = vpop.permute.xlu0 %6932
    %6934 = vrot.lane.b32.xlu0 %v6931, 64
    %v6935 = vpop.permute.xlu0 %6934
    %v6938 = vmul.f32 %v6926, %v6933
    %v6939 = vmul.f32 %v6928, %v6935
    %6942 = vrot.lane.b32.xlu0 %v6938, 64
    %v6943 = vpop.permute.xlu0 %6942
    %6944 = vrot.lane.b32.xlu0 %v6939, 64
    %v6945 = vpop.permute.xlu0 %6944
    %v6948 = vadd.f32 %v6862, %v6943
    %v6949 = vadd.f32 %v6863, %v6945
    %v6950 = vtanh.pop %v6948
    %v6951 = vtanh.pop %v6949
    %v6952 = vsub.f32 1.0, %v6926
    %v6953 = vsub.f32 1.0, %v6928
    %6956 = vrot.lane.b32.xlu0 %v6950, 96
    %v6957 = vpop.permute.xlu0 %6956
    %6958 = vrot.lane.b32.xlu0 %v6951, 96
    %v6959 = vpop.permute.xlu0 %6958
    %v6962 = vmul.f32 %v6952, %v6957
    %v6963 = vmul.f32 %v6953, %v6959
    %v6964 = vrot.slane %v6619, 1
    %v6967 = vmul.f32 %v6926, %v6619
    %v6968 = vmul.f32 %v6928, %v6964
    %v6969 = vadd.f32 %v6962, %v6967
    %v6970 = vadd.f32 %v6963, %v6968
    %v6971 = vpack.c.bf16 %v6969, %v6969
    %v6972 = vpack.c.bf16 %v6970, %v6970
    %v6975 = vunpack.c.l.b16 %v6971
    %v6976 = vunpack.c.l.b16 %v6972
    %v6977 = vrot.slane %v6976, 7
    %v6978 = vsel %vm2926, %v6977, %v6975
    %v6979 = vpack.c.b16 %v6978, %v6978
    %6980 = vrot.lane.b32.xlu0 %v6979, 96
    %v6981 = vpop.permute.xlu0 %6980
    %v6983 = vsel %vm638, %v6981, 0
    %6985 = vmatprep.subr.bf16.mxu0 0
    %6986 = vmatpush1.bf16.msra.mxu0 0
    %6987 = vmatprep.subr.bf16.mxu0 0
    %6988 = vmatpush1.bf16.msra.mxu0 0
    %6989 = vmatprep.subr.bf16.mxu0 0
    %6990 = vmatpush1.bf16.msra.mxu0 0
    %6991 = vmatprep.subr.bf16.mxu0 0
    %6992 = vmatpush1.bf16.msra.mxu0 0
    %6993 = vmatprep.subr.bf16.mxu0 0
    %6994 = vmatpush1.bf16.msra.mxu0 0
    %6995 = vmatprep.subr.bf16.mxu0 0
    %6996 = vmatpush1.bf16.msra.mxu0 0
    %6997 = vmatprep.subr.bf16.mxu0 0
    %6998 = vmatpush1.bf16.msra.mxu0 %v275
    %6999 = vmatprep.subr.bf16.mxu0 0
    %7000 = vmatpush1.bf16.msra.mxu0 %v274
    %7001 = vmatprep.subr.bf16.mxu0 0
    %7002 = vmatpush2.bf16.msra.mxu0 0
    %7003 = vmatprep.subr.bf16.mxu0 0
    %7004 = vmatpush2.bf16.msra.mxu0 0
    %7005 = vmatprep.subr.bf16.mxu0 0
    %7006 = vmatpush2.bf16.msra.mxu0 0
    %7007 = vmatprep.subr.bf16.mxu0 0
    %7008 = vmatpush2.bf16.msra.mxu0 0
    %7009 = vmatprep.subr.bf16.mxu0 0
    %7010 = vmatpush2.bf16.msra.mxu0 0
    %7011 = vmatprep.subr.bf16.mxu0 0
    %7012 = vmatpush2.bf16.msra.mxu0 0
    %7013 = vmatprep.subr.bf16.mxu0 0
    %7014 = vmatpush2.bf16.msra.mxu0 0
    %7015 = vmatprep.subr.bf16.mxu0 0
    %7016 = vmatpush2.bf16.msra.mxu0 0
    %7017 = vmatprep.mubr.bf16.mxu0 0
    %7018 = vmatmul.mubr.bf16.gmra.mxu0 %v6983
    %v7019 = vpop.f32.mrf.mxu0
    %v7020 = vadd.f32 %v357, %v7019
    %v7021 = vpop.f32.mrf.mxu0
    %v7022 = vpop.f32.mrf.mxu0
    %v7023 = vpop.f32.mrf.mxu0
    %7024 = vdwg.mxu0
    %7026 = vrot.lane.b32.xlu0 %v3756, 16
    %v7027 = vpop.permute.xlu0 %7026
    %7030 = vrot.lane.b32.xlu0 %v4300, 32
    %v7031 = vpop.permute.xlu0 %7030
    %7034 = vrot.lane.b32.xlu0 %v4844, 48
    %v7035 = vpop.permute.xlu0 %7034
    %7038 = vrot.lane.b32.xlu0 %v5388, 64
    %v7039 = vpop.permute.xlu0 %7038
    %7042 = vrot.lane.b32.xlu0 %v5932, 80
    %v7043 = vpop.permute.xlu0 %7042
    %7046 = vrot.lane.b32.xlu0 %v6476, 96
    %v7047 = vpop.permute.xlu0 %7046
    %7050 = vrot.lane.b32.xlu0 %v7020, 112
    %v7051 = vpop.permute.xlu0 %7050
    %v7053 = vsel %vm455, %v3211, %v7027
    %v7054 = vsel %vm638, %v7053, %v7031
    %vm7055 = vcmask 392192
    %v7056 = vsel %vm7055, %v7054, %v7035
    %v7057 = vsel %vm323, %v7056, %v7039
    %vm7058 = vcmask 654336
    %v7059 = vsel %vm7058, %v7057, %v7043
    %vm7060 = vcmask 785408
    %v7061 = vsel %vm7060, %v7059, %v7047
    %vm7062 = vcmask 916480
    %v7063 = vsel %vm7062, %v7061, %v7051
    %7064 = vst [vmem:[%s20] sm:$0x3] %v7063
    %v7067 = vrot.slane %v2957, 7
    %v7068 = vsel %vm2926, %v7067, %v2956
    %v7072 = vrot.slane %v3509, 7
    %v7073 = vsel %vm2926, %v7072, %v3508
    %7074 = vrot.lane.b32.xlu0 %v7073, 8
    %v7075 = vpop.permute.xlu0 %7074
    %v7079 = vrot.slane %v4053, 7
    %v7080 = vsel %vm2926, %v7079, %v4052
    %7081 = vrot.lane.b32.xlu0 %v7080, 16
    %v7082 = vpop.permute.xlu0 %7081
    %v7086 = vrot.slane %v4597, 7
    %v7087 = vsel %vm2926, %v7086, %v4596
    %7088 = vrot.lane.b32.xlu0 %v7087, 24
    %v7089 = vpop.permute.xlu0 %7088
    %v7093 = vrot.slane %v5141, 7
    %v7094 = vsel %vm2926, %v7093, %v5140
    %7095 = vrot.lane.b32.xlu0 %v7094, 32
    %v7096 = vpop.permute.xlu0 %7095
    %v7100 = vrot.slane %v5685, 7
    %v7101 = vsel %vm2926, %v7100, %v5684
    %7102 = vrot.lane.b32.xlu0 %v7101, 40
    %v7103 = vpop.permute.xlu0 %7102
    %v7107 = vrot.slane %v6229, 7
    %v7108 = vsel %vm2926, %v7107, %v6228
    %7109 = vrot.lane.b32.xlu0 %v7108, 48
    %v7110 = vpop.permute.xlu0 %7109
    %v7114 = vrot.slane %v6773, 7
    %v7115 = vsel %vm2926, %v7114, %v6772
    %7116 = vrot.lane.b32.xlu0 %v7115, 56
    %v7117 = vpop.permute.xlu0 %7116
    %v7119 = vsel %vm2960, %v7068, %v7075
    %v7120 = vsel %vm455, %v7119, %v7082
    %vm7121 = vcmask 195584
    %v7122 = vsel %vm7121, %v7120, %v7089
    %v7123 = vsel %vm638, %v7122, %v7096
    %vm7124 = vcmask 326656
    %v7125 = vsel %vm7124, %v7123, %v7103
    %v7126 = vsel %vm7055, %v7125, %v7110
    %vm7127 = vcmask 457728
    %v7128 = vsel %vm7127, %v7126, %v7117
    %vm7129 = vcmask 517120
    %7130 = vst.msk [vmem:[%s21] sm:$0x3] %vm7129, %v7128
    // Predicated region
    $region138: #{conditional_seq2seq_forward.1} parent=1 // pred_check
      _
    $region139: #{conditional_seq2seq_forward.1} parent=1 // pred_check_branch
      %7132 = sbr.rel (0) target = $region141
    $region140: #{conditional_seq2seq_forward.1} parent=1 // pred_region
      _
    $region141: #{conditional_seq2seq_forward.1} parent=1 // pred_fallthru
      _
    // Predicated region
    $region142: #{conditional_seq2seq_forward.1} parent=1 // pred_check
      _
    $region143: #{conditional_seq2seq_forward.1} parent=1 // pred_check_branch
      %7134 = sbr.rel (0) target = $region145
    $region144: #{conditional_seq2seq_forward.1} parent=1 // pred_region
      _
    $region145: #{conditional_seq2seq_forward.1} parent=1 // pred_fallthru
      _
    // Predicated region
    $region146: #{conditional_seq2seq_forward.1} parent=1 // pred_check
      _
    $region147: #{conditional_seq2seq_forward.1} parent=1 // pred_check_branch
      %7136 = sbr.rel (0) target = $region149
    $region148: #{conditional_seq2seq_forward.1} parent=1 // pred_region
      _
    $region149: #{conditional_seq2seq_forward.1} parent=1 // pred_fallthru
      _
    // Predicated region
    $region150: #{conditional_seq2seq_forward.1} parent=1 // pred_check
      _
    $region151: #{conditional_seq2seq_forward.1} parent=1 // pred_check_branch
      %7138 = sbr.rel (0) target = $region153
    $region152: #{conditional_seq2seq_forward.1} parent=1 // pred_region
      _
    $region153: #{conditional_seq2seq_forward.1} parent=1 // pred_fallthru
      _
    %7139 = vsyncpa [#allocation3], 1
    %7140 = vsyncpa [#allocation5], 1
    %7141 = vsyncpa [#allocation8], 1
    %7142 = vsyncpa [#allocation11], 1
    %7143 = vsyncpa [#allocation14], 1
    %7144 = vsyncpa [#allocation17], 1
    %7145 = vsyncpa [#allocation20], 1
    %7146 = vsyncpa [#allocation23], 1

</llo_original>
